<compile_context>
chip_gen: v7x
topology: tpu7x:2x2x1
jax: 0.10.0
libtpu: 0.0.40
codegen_flags: <defaults>
</compile_context>

<pallas_src>
import math

import numpy as np

import jax
import jax.numpy as jnp
from jax.experimental import pallas as pl
from jax.experimental.pallas import tpu as pltpu


# ---------------------------------------------------------------------------
# Canvas geometry (row stride is always _CW = 32 lanes).
# ---------------------------------------------------------------------------
_CW = 32
_L0 = 1024    # input canvas      valid 32x32   (stride-1 grid)
_L1 = 958     # conv1 output      valid 30x30   (stride-1 grid)
_L2 = 892     # conv2 output      valid 28x28   (stride-1 grid)
_LP1 = 859    # pool1 output      valid 14x14   (stride-2 grid)
_L3 = 595     # conv3 output      valid 10x10   (stride-2 grid)
_LP2 = 529    # pool2 output      valid 5x5     (stride-4 grid)
_CIN_PAD = 8  # channel padding so sublane concats / matmul K are 8-aligned
_FC_PAD = 128 # FC hidden/output widths padded to a full lane group


# ---------------------------------------------------------------------------
# Fused Pallas kernel: conv1 -> conv2 -> pool -> conv3 -> pool -> 4-layer MLP
# ---------------------------------------------------------------------------
def _lenet_kernel(x_ref, cw1_ref, cb1_ref, cw2_ref, cb2_ref, cw3_ref, cb3_ref,
                  sel_ref, fw1_ref, fb1_ref, fw2_ref, fb2_ref, fw3_ref, fb3_ref,
                  fw4_ref, fb4_ref, o_ref,
                  c1_ref, c2_ref, p1_ref, c3_ref, p2_ref):
    f32 = jnp.float32

    def conv_relu(load, dst_ref, w_ref, b_ref, k, dil, out_len):
        # dst[co, p] = relu(b[co] +
        #   sum_{dy,dx,ci} w[co,(dy,dx,ci)] * src[ci, p + dil*(dy*_CW + dx)])
        acc = None
        for dy in range(k):
            rhs = jnp.concatenate(
                [load(dil * (dy * _CW + dx), out_len) for dx in range(k)],
                axis=0)                                              # [k*8, L]
            w_dy = w_ref[:, dy * k * _CIN_PAD:(dy + 1) * k * _CIN_PAD]
            part = jnp.dot(w_dy, rhs, preferred_element_type=f32)    # [Cout, L]
            acc = part if acc is None else acc + part
        dst_ref[...] = jnp.maximum(acc + b_ref[...], 0.0)

    def pool_max(src_ref, dst_ref, step, out_len):
        # 2x2 max pool; output lives on a grid dilated by `step` vs. its input.
        a = src_ref[:, 0:out_len]
        b = src_ref[:, step:step + out_len]
        c = src_ref[:, step * _CW:step * _CW + out_len]
        d = src_ref[:, step * (_CW + 1):step * (_CW + 1) + out_len]
        dst_ref[...] = jnp.maximum(jnp.maximum(a, b), jnp.maximum(c, d))

    # conv1 (3 -> 6, k=3) straight from the input canvas.
    conv_relu(lambda s, L: x_ref[0, :, s:s + L], c1_ref, cw1_ref, cb1_ref,
              k=3, dil=1, out_len=_L1)
    # conv2 (6 -> 6, k=3)
    conv_relu(lambda s, L: c1_ref[:, s:s + L], c2_ref, cw2_ref, cb2_ref,
              k=3, dil=1, out_len=_L2)
    # pool 2x2  ->  stride-2 grid
    pool_max(c2_ref, p1_ref, step=1, out_len=_LP1)
    # conv3 (6 -> 16, k=5) on the stride-2 grid (canvas dilation 2)
    conv_relu(lambda s, L: p1_ref[:, s:s + L], c3_ref, cw3_ref, cb3_ref,
              k=5, dil=2, out_len=_L3)
    # pool 2x2  ->  stride-4 grid
    pool_max(c3_ref, p2_ref, step=2, out_len=_LP2)

    # ---- fully connected head (all in VMEM / MXU) --------------------------
    # Compact the 16 x (5x5 @ stride-4) activations to [16, 25] with a constant
    # 0/1 selection matmul, then fc1 as 16 accumulated [1,25]@[25,128] dots
    # (channel-major flatten order of the torch .view(-1, 400)).
    fcin = jnp.dot(p2_ref[...], sel_ref[...], preferred_element_type=f32)  # [16, 25]
    h = fb1_ref[...]                                                       # [1, 128]
    for c in range(16):
        h = h + jnp.dot(fcin[c:c + 1, :], fw1_ref[c], preferred_element_type=f32)
    h = jnp.maximum(h, 0.0)
    h = jnp.maximum(jnp.dot(h, fw2_ref[...], preferred_element_type=f32) + fb2_ref[...], 0.0)
    h = jnp.maximum(jnp.dot(h, fw3_ref[...], preferred_element_type=f32) + fb3_ref[...], 0.0)
    o_ref[0] = jnp.dot(h, fw4_ref[...], preferred_element_type=f32) + fb4_ref[...]


# ---------------------------------------------------------------------------
# Host-side parameter packing (cheap, pure layout work)
# ---------------------------------------------------------------------------
def _prep_conv(w, b, cout_pad):
    """Torch-layout conv params [Cout,Cin,k,k] -> padded matmul form."""
    co, ci, k, _ = w.shape
    wt = jnp.transpose(w, (0, 2, 3, 1))                       # [co, k, k, ci]
    wp = jnp.zeros((cout_pad, k, k, _CIN_PAD), w.dtype).at[:co, :, :, :ci].set(wt)
    bp = jnp.zeros((cout_pad, 1), b.dtype).at[:co, 0].set(b)
    return wp.reshape(cout_pad, k * k * _CIN_PAD), bp


def _prep_fc(w, b, k_pad, n_pad):
    """[in,out] fc params zero-padded to lane/sublane-friendly shapes."""
    kin, nout = w.shape
    wp = jnp.zeros((k_pad, n_pad), w.dtype).at[:kin, :nout].set(w)
    bp = jnp.zeros((1, n_pad), b.dtype).at[0, :nout].set(b)
    return wp, bp


def _selection_matrix():
    # P2 canvas position 4*(y*_CW + x)  ->  flat index y*5 + x   (y, x < 5)
    sel = np.zeros((_LP2, 25), np.float32)
    for y in range(5):
        for x in range(5):
            sel[4 * (y * _CW + x), y * 5 + x] = 1.0
    return jnp.asarray(sel)


def _const_spec(arr):
    nd = arr.ndim
    return pl.BlockSpec(arr.shape, lambda b, nd=nd: (0,) * nd)


def lenet5_forward(x, params):
    B = x.shape[0]
    assert x.shape[1:] == (3, 32, 32), "16*5*5 flatten requires 3x32x32 input"

    # Input canvas [B, 8, 1024] (channels zero-padded to 8 sublanes).
    xf = jnp.pad(x.reshape(B, 3, _L0), ((0, 0), (0, _CIN_PAD - 3), (0, 0)))

    cw1, cb1 = _prep_conv(params["conv1_w"], params["conv1_b"], cout_pad=8)
    cw2, cb2 = _prep_conv(params["conv2_w"], params["conv2_b"], cout_pad=8)
    cw3, cb3 = _prep_conv(params["conv3_w"], params["conv3_b"], cout_pad=16)

    sel = _selection_matrix()
    fw1, fb1 = _prep_fc(params["fc1_w"], params["fc1_b"], 400, _FC_PAD)
    fw1 = fw1.reshape(16, 25, _FC_PAD)
    fw2, fb2 = _prep_fc(params["fc2_w"], params["fc2_b"], _FC_PAD, _FC_PAD)
    fw3, fb3 = _prep_fc(params["fc3_w"], params["fc3_b"], _FC_PAD, _FC_PAD)
    fw4, fb4 = _prep_fc(params["fc4_w"], params["fc4_b"], _FC_PAD, _FC_PAD)

    inputs = (xf, cw1, cb1, cw2, cb2, cw3, cb3, sel,
              fw1, fb1, fw2, fb2, fw3, fb3, fw4, fb4)

    in_specs = [pl.BlockSpec((1, _CIN_PAD, _L0), lambda b: (b, 0, 0))]
    in_specs += [_const_spec(a) for a in inputs[1:]]

    out = pl.pallas_call(
        _lenet_kernel,
        out_shape=jax.ShapeDtypeStruct((B, 1, _FC_PAD), jnp.float32),
        grid_spec=pltpu.PrefetchScalarGridSpec(
            num_scalar_prefetch=0,
            grid=(B,),
            in_specs=in_specs,
            out_specs=pl.BlockSpec((1, 1, _FC_PAD), lambda b: (b, 0, 0)),
            scratch_shapes=[
                pltpu.VMEM((_CIN_PAD, _L1), jnp.float32),   # conv1 canvas
                pltpu.VMEM((_CIN_PAD, _L2), jnp.float32),   # conv2 canvas
                pltpu.VMEM((_CIN_PAD, _LP1), jnp.float32),  # pool1 canvas
                pltpu.VMEM((16, _L3), jnp.float32),         # conv3 canvas
                pltpu.VMEM((16, _LP2), jnp.float32),        # pool2 canvas
            ],
        ),
        compiler_params=pltpu.CompilerParams(
            dimension_semantics=("parallel",)),
    )(*inputs)
    return out.reshape(B, _FC_PAD)[:, :10]


# ---------------------------------------------------------------------------
# Deterministic parameter init (PyTorch default-style uniform, 1/sqrt(fan_in))
# ---------------------------------------------------------------------------
def init_params(key):
    def uniform(key, shape, fan_in):
        bound = 1.0 / math.sqrt(fan_in)
        return jax.random.uniform(key, shape, jnp.float32, -bound, bound)

    keys = jax.random.split(key, 14)
    p = {}
    p["conv1_w"] = uniform(keys[0], (6, 3, 3, 3), 3 * 3 * 3)
    p["conv1_b"] = uniform(keys[1], (6,), 3 * 3 * 3)
    p["conv2_w"] = uniform(keys[2], (6, 6, 3, 3), 6 * 3 * 3)
    p["conv2_b"] = uniform(keys[3], (6,), 6 * 3 * 3)
    p["conv3_w"] = uniform(keys[4], (16, 6, 5, 5), 6 * 5 * 5)
    p["conv3_b"] = uniform(keys[5], (16,), 6 * 5 * 5)
    # FC weights stored as [in, out] (transpose of torch's [out, in]).
    p["fc1_w"] = uniform(keys[6], (400, 120), 400)
    p["fc1_b"] = uniform(keys[7], (120,), 400)
    p["fc2_w"] = uniform(keys[8], (120, 60), 120)
    p["fc2_b"] = uniform(keys[9], (60,), 120)
    p["fc3_w"] = uniform(keys[10], (60, 30), 60)
    p["fc3_b"] = uniform(keys[11], (30,), 60)
    p["fc4_w"] = uniform(keys[12], (30, 10), 30)
    p["fc4_b"] = uniform(keys[13], (10,), 30)
    return p


# ---------------------------------------------------------------------------
# Pure-JAX reference (for correctness check)
# ---------------------------------------------------------------------------
def reference_forward(x, p):
    def conv(x, w, b):
        y = jax.lax.conv_general_dilated(
            x, w, window_strides=(1, 1), padding="VALID",
            dimension_numbers=("NCHW", "OIHW", "NCHW"))
        return y + b.reshape(1, -1, 1, 1)

    def pool(x):
        return jax.lax.reduce_window(x, -jnp.inf, jax.lax.max,
                                     (1, 1, 2, 2), (1, 1, 2, 2), "VALID")

    x = jax.nn.relu(conv(x, p["conv1_w"], p["conv1_b"]))
    x = pool(jax.nn.relu(conv(x, p["conv2_w"], p["conv2_b"])))
    x = pool(jax.nn.relu(conv(x, p["conv3_w"], p["conv3_b"])))
    x = x.reshape(x.shape[0], 400)
    x = jax.nn.relu(x @ p["fc1_w"] + p["fc1_b"])
    x = jax.nn.relu(x @ p["fc2_w"] + p["fc2_b"])
    x = jax.nn.relu(x @ p["fc3_w"] + p["fc3_b"])
    return x @ p["fc4_w"] + p["fc4_b"]


if __name__ == "__main__":
    key = jax.random.PRNGKey(0)
    k_x, k_p = jax.random.split(key)

    # CIFAR-10-shaped input: the 16*5*5 flatten in forward() requires 3x32x32.
    x = jax.random.normal(k_x, (2, 3, 32, 32), jnp.float32)
    params = init_params(k_p)

    out = jax.block_until_ready(jax.jit(lenet5_forward)(x, params))
    assert out.shape == (2, 10), out.shape

    ref = jax.block_until_ready(reference_forward(x, params))
    assert jnp.allclose(out, ref, rtol=2e-3, atol=2e-3), (
        "Pallas output does not match JAX reference")

    print("KERNEL_OK")
</pallas_src>

<mosaic_0001>
module attributes {stable_mosaic.version = 11 : i64} {
  func.func @_lenet_kernel(%arg0: i32, %arg1: memref<1x8x1024xf32, #tpu.memory_space<vmem>>, %arg2: memref<8x72xf32, #tpu.memory_space<vmem>>, %arg3: memref<8x1xf32, #tpu.memory_space<vmem>>, %arg4: memref<8x72xf32, #tpu.memory_space<vmem>>, %arg5: memref<8x1xf32, #tpu.memory_space<vmem>>, %arg6: memref<16x200xf32, #tpu.memory_space<vmem>>, %arg7: memref<16x1xf32, #tpu.memory_space<vmem>>, %arg8: memref<529x25xf32, #tpu.memory_space<vmem>>, %arg9: memref<16x25x128xf32, #tpu.memory_space<vmem>>, %arg10: memref<1x128xf32, #tpu.memory_space<vmem>>, %arg11: memref<128x128xf32, #tpu.memory_space<vmem>>, %arg12: memref<1x128xf32, #tpu.memory_space<vmem>>, %arg13: memref<128x128xf32, #tpu.memory_space<vmem>>, %arg14: memref<1x128xf32, #tpu.memory_space<vmem>>, %arg15: memref<128x128xf32, #tpu.memory_space<vmem>>, %arg16: memref<1x128xf32, #tpu.memory_space<vmem>>, %arg17: memref<1x1x128xf32, #tpu.memory_space<vmem>>, %arg18: memref<8x958xf32, #tpu.memory_space<vmem>>, %arg19: memref<8x892xf32, #tpu.memory_space<vmem>>, %arg20: memref<8x859xf32, #tpu.memory_space<vmem>>, %arg21: memref<16x595xf32, #tpu.memory_space<vmem>>, %arg22: memref<16x529xf32, #tpu.memory_space<vmem>>) attributes {dimension_semantics = [#tpu.dimension_semantics<parallel>], iteration_bounds = array<i64: 2>, scalar_prefetch = 0 : i64, scratch_operands = 5 : i64, tpu.core_type = #tpu.core_type<tc>, window_params = [{transform_indices = @transform_0, window_bounds = array<i64: 1, 8, 1024>}, {pipeline_mode = #tpu.pipeline_mode<synchronous>, transform_indices = @transform_1, window_bounds = array<i64: 8, 72>}, {pipeline_mode = #tpu.pipeline_mode<synchronous>, transform_indices = @transform_2, window_bounds = array<i64: 8, 1>}, {pipeline_mode = #tpu.pipeline_mode<synchronous>, transform_indices = @transform_3, window_bounds = array<i64: 8, 72>}, {pipeline_mode = #tpu.pipeline_mode<synchronous>, transform_indices = @transform_4, window_bounds = array<i64: 8, 1>}, {pipeline_mode = #tpu.pipeline_mode<synchronous>, transform_indices = @transform_5, window_bounds = array<i64: 16, 200>}, {pipeline_mode = #tpu.pipeline_mode<synchronous>, transform_indices = @transform_6, window_bounds = array<i64: 16, 1>}, {pipeline_mode = #tpu.pipeline_mode<synchronous>, transform_indices = @transform_7, window_bounds = array<i64: 529, 25>}, {pipeline_mode = #tpu.pipeline_mode<synchronous>, transform_indices = @transform_8, window_bounds = array<i64: 16, 25, 128>}, {pipeline_mode = #tpu.pipeline_mode<synchronous>, transform_indices = @transform_9, window_bounds = array<i64: 1, 128>}, {pipeline_mode = #tpu.pipeline_mode<synchronous>, transform_indices = @transform_10, window_bounds = array<i64: 128, 128>}, {pipeline_mode = #tpu.pipeline_mode<synchronous>, transform_indices = @transform_11, window_bounds = array<i64: 1, 128>}, {pipeline_mode = #tpu.pipeline_mode<synchronous>, transform_indices = @transform_12, window_bounds = array<i64: 128, 128>}, {pipeline_mode = #tpu.pipeline_mode<synchronous>, transform_indices = @transform_13, window_bounds = array<i64: 1, 128>}, {pipeline_mode = #tpu.pipeline_mode<synchronous>, transform_indices = @transform_14, window_bounds = array<i64: 128, 128>}, {pipeline_mode = #tpu.pipeline_mode<synchronous>, transform_indices = @transform_15, window_bounds = array<i64: 1, 128>}, {transform_indices = @transform_16, window_bounds = array<i64: 1, 1, 128>}]} {
    %c0 = arith.constant 0 : index
    %c0_0 = arith.constant 0 : index
    %c0_1 = arith.constant 0 : index
    %0 = vector.load %arg1[%c0, %c0_0, %c0_1] : memref<1x8x1024xf32, #tpu.memory_space<vmem>>, vector<1x8x958xf32>
    %1 = vector.shape_cast %0 : vector<1x8x958xf32> to vector<8x958xf32>
    %c0_2 = arith.constant 0 : index
    %c0_3 = arith.constant 0 : index
    %c1 = arith.constant 1 : index
    %2 = vector.load %arg1[%c0_2, %c0_3, %c1] : memref<1x8x1024xf32, #tpu.memory_space<vmem>>, vector<1x8x958xf32>
    %3 = vector.shape_cast %2 : vector<1x8x958xf32> to vector<8x958xf32>
    %c0_4 = arith.constant 0 : index
    %c0_5 = arith.constant 0 : index
    %c2 = arith.constant 2 : index
    %4 = vector.load %arg1[%c0_4, %c0_5, %c2] : memref<1x8x1024xf32, #tpu.memory_space<vmem>>, vector<1x8x958xf32>
    %5 = vector.shape_cast %4 : vector<1x8x958xf32> to vector<8x958xf32>
    %6 = tpu.concatenate %1, %3, %5 in 0 : vector<8x958xf32>, vector<8x958xf32>, vector<8x958xf32> -> vector<24x958xf32>
    %c0_6 = arith.constant 0 : index
    %c0_7 = arith.constant 0 : index
    %7 = vector.load %arg2[%c0_6, %c0_7] : memref<8x72xf32, #tpu.memory_space<vmem>>, vector<8x24xf32>
    %cst = arith.constant dense<0.000000e+00> : vector<8x958xf32>
    %8 = tpu.matmul %7, %6, %cst {dimension_numbers = #tpu.dot_dimension_numbers<[1], [0], [0], [1], [0, 0, 1, 1], [], []>} : vector<8x24xf32>, vector<24x958xf32>, vector<8x958xf32> -> vector<8x958xf32>
    %c0_8 = arith.constant 0 : index
    %c0_9 = arith.constant 0 : index
    %c32 = arith.constant 32 : index
    %9 = vector.load %arg1[%c0_8, %c0_9, %c32] : memref<1x8x1024xf32, #tpu.memory_space<vmem>>, vector<1x8x958xf32>
    %10 = vector.shape_cast %9 : vector<1x8x958xf32> to vector<8x958xf32>
    %c0_10 = arith.constant 0 : index
    %c0_11 = arith.constant 0 : index
    %c33 = arith.constant 33 : index
    %11 = vector.load %arg1[%c0_10, %c0_11, %c33] : memref<1x8x1024xf32, #tpu.memory_space<vmem>>, vector<1x8x958xf32>
    %12 = vector.shape_cast %11 : vector<1x8x958xf32> to vector<8x958xf32>
    %c0_12 = arith.constant 0 : index
    %c0_13 = arith.constant 0 : index
    %c34 = arith.constant 34 : index
    %13 = vector.load %arg1[%c0_12, %c0_13, %c34] : memref<1x8x1024xf32, #tpu.memory_space<vmem>>, vector<1x8x958xf32>
    %14 = vector.shape_cast %13 : vector<1x8x958xf32> to vector<8x958xf32>
    %15 = tpu.concatenate %10, %12, %14 in 0 : vector<8x958xf32>, vector<8x958xf32>, vector<8x958xf32> -> vector<24x958xf32>
    %c0_14 = arith.constant 0 : index
    %c24 = arith.constant 24 : index
    %16 = vector.load %arg2[%c0_14, %c24] : memref<8x72xf32, #tpu.memory_space<vmem>>, vector<8x24xf32>
    %cst_15 = arith.constant dense<0.000000e+00> : vector<8x958xf32>
    %17 = tpu.matmul %16, %15, %cst_15 {dimension_numbers = #tpu.dot_dimension_numbers<[1], [0], [0], [1], [0, 0, 1, 1], [], []>} : vector<8x24xf32>, vector<24x958xf32>, vector<8x958xf32> -> vector<8x958xf32>
    %18 = arith.addf %8, %17 : vector<8x958xf32>
    %c0_16 = arith.constant 0 : index
    %c0_17 = arith.constant 0 : index
    %c64 = arith.constant 64 : index
    %19 = vector.load %arg1[%c0_16, %c0_17, %c64] : memref<1x8x1024xf32, #tpu.memory_space<vmem>>, vector<1x8x958xf32>
    %20 = vector.shape_cast %19 : vector<1x8x958xf32> to vector<8x958xf32>
    %c0_18 = arith.constant 0 : index
    %c0_19 = arith.constant 0 : index
    %c65 = arith.constant 65 : index
    %21 = vector.load %arg1[%c0_18, %c0_19, %c65] : memref<1x8x1024xf32, #tpu.memory_space<vmem>>, vector<1x8x958xf32>
    %22 = vector.shape_cast %21 : vector<1x8x958xf32> to vector<8x958xf32>
    %c0_20 = arith.constant 0 : index
    %c0_21 = arith.constant 0 : index
    %c66 = arith.constant 66 : index
    %23 = vector.load %arg1[%c0_20, %c0_21, %c66] : memref<1x8x1024xf32, #tpu.memory_space<vmem>>, vector<1x8x958xf32>
    %24 = vector.shape_cast %23 : vector<1x8x958xf32> to vector<8x958xf32>
    %25 = tpu.concatenate %20, %22, %24 in 0 : vector<8x958xf32>, vector<8x958xf32>, vector<8x958xf32> -> vector<24x958xf32>
    %c0_22 = arith.constant 0 : index
    %c48 = arith.constant 48 : index
    %26 = vector.load %arg2[%c0_22, %c48] : memref<8x72xf32, #tpu.memory_space<vmem>>, vector<8x24xf32>
    %cst_23 = arith.constant dense<0.000000e+00> : vector<8x958xf32>
    %27 = tpu.matmul %26, %25, %cst_23 {dimension_numbers = #tpu.dot_dimension_numbers<[1], [0], [0], [1], [0, 0, 1, 1], [], []>} : vector<8x24xf32>, vector<24x958xf32>, vector<8x958xf32> -> vector<8x958xf32>
    %28 = arith.addf %18, %27 : vector<8x958xf32>
    %c0_24 = arith.constant 0 : index
    %c0_25 = arith.constant 0 : index
    %29 = vector.load %arg3[%c0_24, %c0_25] : memref<8x1xf32, #tpu.memory_space<vmem>>, vector<8x1xf32>
    %30 = vector.broadcast %29 : vector<8x1xf32> to vector<8x958xf32>
    %31 = arith.addf %28, %30 : vector<8x958xf32>
    %cst_26 = arith.constant 0.000000e+00 : f32
    %32 = vector.broadcast %cst_26 : f32 to vector<8x958xf32>
    %33 = arith.maximumf %31, %32 : vector<8x958xf32>
    %c0_27 = arith.constant 0 : index
    %c0_28 = arith.constant 0 : index
    %34 = vector.load %arg18[%c0_27, %c0_28] : memref<8x958xf32, #tpu.memory_space<vmem>>, vector<8x958xf32>
    tpu.vector_store %arg18[%c0_27, %c0_28], %33 {strides = array<i32>} : memref<8x958xf32, #tpu.memory_space<vmem>>, vector<8x958xf32>,
    %c0_29 = arith.constant 0 : index
    %c0_30 = arith.constant 0 : index
    %35 = vector.load %arg18[%c0_29, %c0_30] : memref<8x958xf32, #tpu.memory_space<vmem>>, vector<8x892xf32>
    %c0_31 = arith.constant 0 : index
    %c1_32 = arith.constant 1 : index
    %36 = vector.load %arg18[%c0_31, %c1_32] : memref<8x958xf32, #tpu.memory_space<vmem>>, vector<8x892xf32>
    %c0_33 = arith.constant 0 : index
    %c2_34 = arith.constant 2 : index
    %37 = vector.load %arg18[%c0_33, %c2_34] : memref<8x958xf32, #tpu.memory_space<vmem>>, vector<8x892xf32>
    %38 = tpu.concatenate %35, %36, %37 in 0 : vector<8x892xf32>, vector<8x892xf32>, vector<8x892xf32> -> vector<24x892xf32>
    %c0_35 = arith.constant 0 : index
    %c0_36 = arith.constant 0 : index
    %39 = vector.load %arg4[%c0_35, %c0_36] : memref<8x72xf32, #tpu.memory_space<vmem>>, vector<8x24xf32>
    %cst_37 = arith.constant dense<0.000000e+00> : vector<8x892xf32>
    %40 = tpu.matmul %39, %38, %cst_37 {dimension_numbers = #tpu.dot_dimension_numbers<[1], [0], [0], [1], [0, 0, 1, 1], [], []>} : vector<8x24xf32>, vector<24x892xf32>, vector<8x892xf32> -> vector<8x892xf32>
    %c0_38 = arith.constant 0 : index
    %c32_39 = arith.constant 32 : index
    %41 = vector.load %arg18[%c0_38, %c32_39] : memref<8x958xf32, #tpu.memory_space<vmem>>, vector<8x892xf32>
    %c0_40 = arith.constant 0 : index
    %c33_41 = arith.constant 33 : index
    %42 = vector.load %arg18[%c0_40, %c33_41] : memref<8x958xf32, #tpu.memory_space<vmem>>, vector<8x892xf32>
    %c0_42 = arith.constant 0 : index
    %c34_43 = arith.constant 34 : index
    %43 = vector.load %arg18[%c0_42, %c34_43] : memref<8x958xf32, #tpu.memory_space<vmem>>, vector<8x892xf32>
    %44 = tpu.concatenate %41, %42, %43 in 0 : vector<8x892xf32>, vector<8x892xf32>, vector<8x892xf32> -> vector<24x892xf32>
    %c0_44 = arith.constant 0 : index
    %c24_45 = arith.constant 24 : index
    %45 = vector.load %arg4[%c0_44, %c24_45] : memref<8x72xf32, #tpu.memory_space<vmem>>, vector<8x24xf32>
    %cst_46 = arith.constant dense<0.000000e+00> : vector<8x892xf32>
    %46 = tpu.matmul %45, %44, %cst_46 {dimension_numbers = #tpu.dot_dimension_numbers<[1], [0], [0], [1], [0, 0, 1, 1], [], []>} : vector<8x24xf32>, vector<24x892xf32>, vector<8x892xf32> -> vector<8x892xf32>
    %47 = arith.addf %40, %46 : vector<8x892xf32>
    %c0_47 = arith.constant 0 : index
    %c64_48 = arith.constant 64 : index
    %48 = vector.load %arg18[%c0_47, %c64_48] : memref<8x958xf32, #tpu.memory_space<vmem>>, vector<8x892xf32>
    %c0_49 = arith.constant 0 : index
    %c65_50 = arith.constant 65 : index
    %49 = vector.load %arg18[%c0_49, %c65_50] : memref<8x958xf32, #tpu.memory_space<vmem>>, vector<8x892xf32>
    %c0_51 = arith.constant 0 : index
    %c66_52 = arith.constant 66 : index
    %50 = vector.load %arg18[%c0_51, %c66_52] : memref<8x958xf32, #tpu.memory_space<vmem>>, vector<8x892xf32>
    %51 = tpu.concatenate %48, %49, %50 in 0 : vector<8x892xf32>, vector<8x892xf32>, vector<8x892xf32> -> vector<24x892xf32>
    %c0_53 = arith.constant 0 : index
    %c48_54 = arith.constant 48 : index
    %52 = vector.load %arg4[%c0_53, %c48_54] : memref<8x72xf32, #tpu.memory_space<vmem>>, vector<8x24xf32>
    %cst_55 = arith.constant dense<0.000000e+00> : vector<8x892xf32>
    %53 = tpu.matmul %52, %51, %cst_55 {dimension_numbers = #tpu.dot_dimension_numbers<[1], [0], [0], [1], [0, 0, 1, 1], [], []>} : vector<8x24xf32>, vector<24x892xf32>, vector<8x892xf32> -> vector<8x892xf32>
    %54 = arith.addf %47, %53 : vector<8x892xf32>
    %c0_56 = arith.constant 0 : index
    %c0_57 = arith.constant 0 : index
    %55 = vector.load %arg5[%c0_56, %c0_57] : memref<8x1xf32, #tpu.memory_space<vmem>>, vector<8x1xf32>
    %56 = vector.broadcast %55 : vector<8x1xf32> to vector<8x892xf32>
    %57 = arith.addf %54, %56 : vector<8x892xf32>
    %cst_58 = arith.constant 0.000000e+00 : f32
    %58 = vector.broadcast %cst_58 : f32 to vector<8x892xf32>
    %59 = arith.maximumf %57, %58 : vector<8x892xf32>
    %c0_59 = arith.constant 0 : index
    %c0_60 = arith.constant 0 : index
    %60 = vector.load %arg19[%c0_59, %c0_60] : memref<8x892xf32, #tpu.memory_space<vmem>>, vector<8x892xf32>
    tpu.vector_store %arg19[%c0_59, %c0_60], %59 {strides = array<i32>} : memref<8x892xf32, #tpu.memory_space<vmem>>, vector<8x892xf32>,
    %c0_61 = arith.constant 0 : index
    %c0_62 = arith.constant 0 : index
    %61 = vector.load %arg19[%c0_61, %c0_62] : memref<8x892xf32, #tpu.memory_space<vmem>>, vector<8x859xf32>
    %c0_63 = arith.constant 0 : index
    %c1_64 = arith.constant 1 : index
    %62 = vector.load %arg19[%c0_63, %c1_64] : memref<8x892xf32, #tpu.memory_space<vmem>>, vector<8x859xf32>
    %c0_65 = arith.constant 0 : index
    %c32_66 = arith.constant 32 : index
    %63 = vector.load %arg19[%c0_65, %c32_66] : memref<8x892xf32, #tpu.memory_space<vmem>>, vector<8x859xf32>
    %c0_67 = arith.constant 0 : index
    %c33_68 = arith.constant 33 : index
    %64 = vector.load %arg19[%c0_67, %c33_68] : memref<8x892xf32, #tpu.memory_space<vmem>>, vector<8x859xf32>
    %65 = arith.maximumf %61, %62 : vector<8x859xf32>
    %66 = arith.maximumf %63, %64 : vector<8x859xf32>
    %67 = arith.maximumf %65, %66 : vector<8x859xf32>
    %c0_69 = arith.constant 0 : index
    %c0_70 = arith.constant 0 : index
    %68 = vector.load %arg20[%c0_69, %c0_70] : memref<8x859xf32, #tpu.memory_space<vmem>>, vector<8x859xf32>
    tpu.vector_store %arg20[%c0_69, %c0_70], %67 {strides = array<i32>} : memref<8x859xf32, #tpu.memory_space<vmem>>, vector<8x859xf32>,
    %c0_71 = arith.constant 0 : index
    %c0_72 = arith.constant 0 : index
    %69 = vector.load %arg20[%c0_71, %c0_72] : memref<8x859xf32, #tpu.memory_space<vmem>>, vector<8x595xf32>
    %c0_73 = arith.constant 0 : index
    %c2_74 = arith.constant 2 : index
    %70 = vector.load %arg20[%c0_73, %c2_74] : memref<8x859xf32, #tpu.memory_space<vmem>>, vector<8x595xf32>
    %c0_75 = arith.constant 0 : index
    %c4 = arith.constant 4 : index
    %71 = vector.load %arg20[%c0_75, %c4] : memref<8x859xf32, #tpu.memory_space<vmem>>, vector<8x595xf32>
    %c0_76 = arith.constant 0 : index
    %c6 = arith.constant 6 : index
    %72 = vector.load %arg20[%c0_76, %c6] : memref<8x859xf32, #tpu.memory_space<vmem>>, vector<8x595xf32>
    %c0_77 = arith.constant 0 : index
    %c8 = arith.constant 8 : index
    %73 = vector.load %arg20[%c0_77, %c8] : memref<8x859xf32, #tpu.memory_space<vmem>>, vector<8x595xf32>
    %74 = tpu.concatenate %69, %70, %71, %72, %73 in 0 : vector<8x595xf32>, vector<8x595xf32>, vector<8x595xf32>, vector<8x595xf32>, vector<8x595xf32> -> vector<40x595xf32>
    %c0_78 = arith.constant 0 : index
    %c0_79 = arith.constant 0 : index
    %75 = vector.load %arg6[%c0_78, %c0_79] : memref<16x200xf32, #tpu.memory_space<vmem>>, vector<16x40xf32>
    %cst_80 = arith.constant dense<0.000000e+00> : vector<16x595xf32>
    %76 = tpu.matmul %75, %74, %cst_80 {dimension_numbers = #tpu.dot_dimension_numbers<[1], [0], [0], [1], [0, 0, 1, 1], [], []>} : vector<16x40xf32>, vector<40x595xf32>, vector<16x595xf32> -> vector<16x595xf32>
    %c0_81 = arith.constant 0 : index
    %c64_82 = arith.constant 64 : index
    %77 = vector.load %arg20[%c0_81, %c64_82] : memref<8x859xf32, #tpu.memory_space<vmem>>, vector<8x595xf32>
    %c0_83 = arith.constant 0 : index
    %c66_84 = arith.constant 66 : index
    %78 = vector.load %arg20[%c0_83, %c66_84] : memref<8x859xf32, #tpu.memory_space<vmem>>, vector<8x595xf32>
    %c0_85 = arith.constant 0 : index
    %c68 = arith.constant 68 : index
    %79 = vector.load %arg20[%c0_85, %c68] : memref<8x859xf32, #tpu.memory_space<vmem>>, vector<8x595xf32>
    %c0_86 = arith.constant 0 : index
    %c70 = arith.constant 70 : index
    %80 = vector.load %arg20[%c0_86, %c70] : memref<8x859xf32, #tpu.memory_space<vmem>>, vector<8x595xf32>
    %c0_87 = arith.constant 0 : index
    %c72 = arith.constant 72 : index
    %81 = vector.load %arg20[%c0_87, %c72] : memref<8x859xf32, #tpu.memory_space<vmem>>, vector<8x595xf32>
    %82 = tpu.concatenate %77, %78, %79, %80, %81 in 0 : vector<8x595xf32>, vector<8x595xf32>, vector<8x595xf32>, vector<8x595xf32>, vector<8x595xf32> -> vector<40x595xf32>
    %c0_88 = arith.constant 0 : index
    %c40 = arith.constant 40 : index
    %83 = vector.load %arg6[%c0_88, %c40] : memref<16x200xf32, #tpu.memory_space<vmem>>, vector<16x40xf32>
    %cst_89 = arith.constant dense<0.000000e+00> : vector<16x595xf32>
    %84 = tpu.matmul %83, %82, %cst_89 {dimension_numbers = #tpu.dot_dimension_numbers<[1], [0], [0], [1], [0, 0, 1, 1], [], []>} : vector<16x40xf32>, vector<40x595xf32>, vector<16x595xf32> -> vector<16x595xf32>
    %85 = arith.addf %76, %84 : vector<16x595xf32>
    %c0_90 = arith.constant 0 : index
    %c128 = arith.constant 128 : index
    %86 = vector.load %arg20[%c0_90, %c128] : memref<8x859xf32, #tpu.memory_space<vmem>>, vector<8x595xf32>
    %c0_91 = arith.constant 0 : index
    %c130 = arith.constant 130 : index
    %87 = vector.load %arg20[%c0_91, %c130] : memref<8x859xf32, #tpu.memory_space<vmem>>, vector<8x595xf32>
    %c0_92 = arith.constant 0 : index
    %c132 = arith.constant 132 : index
    %88 = vector.load %arg20[%c0_92, %c132] : memref<8x859xf32, #tpu.memory_space<vmem>>, vector<8x595xf32>
    %c0_93 = arith.constant 0 : index
    %c134 = arith.constant 134 : index
    %89 = vector.load %arg20[%c0_93, %c134] : memref<8x859xf32, #tpu.memory_space<vmem>>, vector<8x595xf32>
    %c0_94 = arith.constant 0 : index
    %c136 = arith.constant 136 : index
    %90 = vector.load %arg20[%c0_94, %c136] : memref<8x859xf32, #tpu.memory_space<vmem>>, vector<8x595xf32>
    %91 = tpu.concatenate %86, %87, %88, %89, %90 in 0 : vector<8x595xf32>, vector<8x595xf32>, vector<8x595xf32>, vector<8x595xf32>, vector<8x595xf32> -> vector<40x595xf32>
    %c0_95 = arith.constant 0 : index
    %c80 = arith.constant 80 : index
    %92 = vector.load %arg6[%c0_95, %c80] : memref<16x200xf32, #tpu.memory_space<vmem>>, vector<16x40xf32>
    %cst_96 = arith.constant dense<0.000000e+00> : vector<16x595xf32>
    %93 = tpu.matmul %92, %91, %cst_96 {dimension_numbers = #tpu.dot_dimension_numbers<[1], [0], [0], [1], [0, 0, 1, 1], [], []>} : vector<16x40xf32>, vector<40x595xf32>, vector<16x595xf32> -> vector<16x595xf32>
    %94 = arith.addf %85, %93 : vector<16x595xf32>
    %c0_97 = arith.constant 0 : index
    %c192 = arith.constant 192 : index
    %95 = vector.load %arg20[%c0_97, %c192] : memref<8x859xf32, #tpu.memory_space<vmem>>, vector<8x595xf32>
    %c0_98 = arith.constant 0 : index
    %c194 = arith.constant 194 : index
    %96 = vector.load %arg20[%c0_98, %c194] : memref<8x859xf32, #tpu.memory_space<vmem>>, vector<8x595xf32>
    %c0_99 = arith.constant 0 : index
    %c196 = arith.constant 196 : index
    %97 = vector.load %arg20[%c0_99, %c196] : memref<8x859xf32, #tpu.memory_space<vmem>>, vector<8x595xf32>
    %c0_100 = arith.constant 0 : index
    %c198 = arith.constant 198 : index
    %98 = vector.load %arg20[%c0_100, %c198] : memref<8x859xf32, #tpu.memory_space<vmem>>, vector<8x595xf32>
    %c0_101 = arith.constant 0 : index
    %c200 = arith.constant 200 : index
    %99 = vector.load %arg20[%c0_101, %c200] : memref<8x859xf32, #tpu.memory_space<vmem>>, vector<8x595xf32>
    %100 = tpu.concatenate %95, %96, %97, %98, %99 in 0 : vector<8x595xf32>, vector<8x595xf32>, vector<8x595xf32>, vector<8x595xf32>, vector<8x595xf32> -> vector<40x595xf32>
    %c0_102 = arith.constant 0 : index
    %c120 = arith.constant 120 : index
    %101 = vector.load %arg6[%c0_102, %c120] : memref<16x200xf32, #tpu.memory_space<vmem>>, vector<16x40xf32>
    %cst_103 = arith.constant dense<0.000000e+00> : vector<16x595xf32>
    %102 = tpu.matmul %101, %100, %cst_103 {dimension_numbers = #tpu.dot_dimension_numbers<[1], [0], [0], [1], [0, 0, 1, 1], [], []>} : vector<16x40xf32>, vector<40x595xf32>, vector<16x595xf32> -> vector<16x595xf32>
    %103 = arith.addf %94, %102 : vector<16x595xf32>
    %c0_104 = arith.constant 0 : index
    %c256 = arith.constant 256 : index
    %104 = vector.load %arg20[%c0_104, %c256] : memref<8x859xf32, #tpu.memory_space<vmem>>, vector<8x595xf32>
    %c0_105 = arith.constant 0 : index
    %c258 = arith.constant 258 : index
    %105 = vector.load %arg20[%c0_105, %c258] : memref<8x859xf32, #tpu.memory_space<vmem>>, vector<8x595xf32>
    %c0_106 = arith.constant 0 : index
    %c260 = arith.constant 260 : index
    %106 = vector.load %arg20[%c0_106, %c260] : memref<8x859xf32, #tpu.memory_space<vmem>>, vector<8x595xf32>
    %c0_107 = arith.constant 0 : index
    %c262 = arith.constant 262 : index
    %107 = vector.load %arg20[%c0_107, %c262] : memref<8x859xf32, #tpu.memory_space<vmem>>, vector<8x595xf32>
    %c0_108 = arith.constant 0 : index
    %c264 = arith.constant 264 : index
    %108 = vector.load %arg20[%c0_108, %c264] : memref<8x859xf32, #tpu.memory_space<vmem>>, vector<8x595xf32>
    %109 = tpu.concatenate %104, %105, %106, %107, %108 in 0 : vector<8x595xf32>, vector<8x595xf32>, vector<8x595xf32>, vector<8x595xf32>, vector<8x595xf32> -> vector<40x595xf32>
    %c0_109 = arith.constant 0 : index
    %c160 = arith.constant 160 : index
    %110 = vector.load %arg6[%c0_109, %c160] : memref<16x200xf32, #tpu.memory_space<vmem>>, vector<16x40xf32>
    %cst_110 = arith.constant dense<0.000000e+00> : vector<16x595xf32>
    %111 = tpu.matmul %110, %109, %cst_110 {dimension_numbers = #tpu.dot_dimension_numbers<[1], [0], [0], [1], [0, 0, 1, 1], [], []>} : vector<16x40xf32>, vector<40x595xf32>, vector<16x595xf32> -> vector<16x595xf32>
    %112 = arith.addf %103, %111 : vector<16x595xf32>
    %c0_111 = arith.constant 0 : index
    %c0_112 = arith.constant 0 : index
    %113 = vector.load %arg7[%c0_111, %c0_112] : memref<16x1xf32, #tpu.memory_space<vmem>>, vector<16x1xf32>
    %114 = vector.broadcast %113 : vector<16x1xf32> to vector<16x595xf32>
    %115 = arith.addf %112, %114 : vector<16x595xf32>
    %cst_113 = arith.constant 0.000000e+00 : f32
    %116 = vector.broadcast %cst_113 : f32 to vector<16x595xf32>
    %117 = arith.maximumf %115, %116 : vector<16x595xf32>
    %c0_114 = arith.constant 0 : index
    %c0_115 = arith.constant 0 : index
    %118 = vector.load %arg21[%c0_114, %c0_115] : memref<16x595xf32, #tpu.memory_space<vmem>>, vector<16x595xf32>
    tpu.vector_store %arg21[%c0_114, %c0_115], %117 {strides = array<i32>} : memref<16x595xf32, #tpu.memory_space<vmem>>, vector<16x595xf32>,
    %c0_116 = arith.constant 0 : index
    %c0_117 = arith.constant 0 : index
    %119 = vector.load %arg21[%c0_116, %c0_117] : memref<16x595xf32, #tpu.memory_space<vmem>>, vector<16x529xf32>
    %c0_118 = arith.constant 0 : index
    %c2_119 = arith.constant 2 : index
    %120 = vector.load %arg21[%c0_118, %c2_119] : memref<16x595xf32, #tpu.memory_space<vmem>>, vector<16x529xf32>
    %c0_120 = arith.constant 0 : index
    %c64_121 = arith.constant 64 : index
    %121 = vector.load %arg21[%c0_120, %c64_121] : memref<16x595xf32, #tpu.memory_space<vmem>>, vector<16x529xf32>
    %c0_122 = arith.constant 0 : index
    %c66_123 = arith.constant 66 : index
    %122 = vector.load %arg21[%c0_122, %c66_123] : memref<16x595xf32, #tpu.memory_space<vmem>>, vector<16x529xf32>
    %123 = arith.maximumf %119, %120 : vector<16x529xf32>
    %124 = arith.maximumf %121, %122 : vector<16x529xf32>
    %125 = arith.maximumf %123, %124 : vector<16x529xf32>
    %c0_124 = arith.constant 0 : index
    %c0_125 = arith.constant 0 : index
    %126 = vector.load %arg22[%c0_124, %c0_125] : memref<16x529xf32, #tpu.memory_space<vmem>>, vector<16x529xf32>
    tpu.vector_store %arg22[%c0_124, %c0_125], %125 {strides = array<i32>} : memref<16x529xf32, #tpu.memory_space<vmem>>, vector<16x529xf32>,
    %c0_126 = arith.constant 0 : index
    %c0_127 = arith.constant 0 : index
    %127 = vector.load %arg22[%c0_126, %c0_127] : memref<16x529xf32, #tpu.memory_space<vmem>>, vector<16x529xf32>
    %c0_128 = arith.constant 0 : index
    %c0_129 = arith.constant 0 : index
    %128 = vector.load %arg8[%c0_128, %c0_129] : memref<529x25xf32, #tpu.memory_space<vmem>>, vector<529x25xf32>
    %cst_130 = arith.constant dense<0.000000e+00> : vector<16x25xf32>
    %129 = tpu.matmul %127, %128, %cst_130 {dimension_numbers = #tpu.dot_dimension_numbers<[1], [0], [0], [1], [0, 0, 1, 1], [], []>} : vector<16x529xf32>, vector<529x25xf32>, vector<16x25xf32> -> vector<16x25xf32>
    %c0_131 = arith.constant 0 : index
    %c0_132 = arith.constant 0 : index
    %130 = vector.load %arg10[%c0_131, %c0_132] : memref<1x128xf32, #tpu.memory_space<vmem>>, vector<1x128xf32>
    %131 = vector.extract_strided_slice %129 {offsets = [0, 0], sizes = [1, 25], strides = [1, 1]} : vector<16x25xf32> to vector<1x25xf32>
    %c0_133 = arith.constant 0 : index
    %c0_134 = arith.constant 0 : index
    %c0_135 = arith.constant 0 : index
    %132 = vector.load %arg9[%c0_133, %c0_134, %c0_135] : memref<16x25x128xf32, #tpu.memory_space<vmem>>, vector<1x25x128xf32>
    %133 = vector.shape_cast %132 : vector<1x25x128xf32> to vector<25x128xf32>
    %cst_136 = arith.constant dense<0.000000e+00> : vector<1x128xf32>
    %134 = tpu.matmul %131, %133, %cst_136 {dimension_numbers = #tpu.dot_dimension_numbers<[1], [0], [0], [1], [0, 0, 1, 1], [], []>} : vector<1x25xf32>, vector<25x128xf32>, vector<1x128xf32> -> vector<1x128xf32>
    %135 = arith.addf %130, %134 : vector<1x128xf32>
    %136 = vector.extract_strided_slice %129 {offsets = [1, 0], sizes = [1, 25], strides = [1, 1]} : vector<16x25xf32> to vector<1x25xf32>
    %c1_137 = arith.constant 1 : index
    %c0_138 = arith.constant 0 : index
    %c0_139 = arith.constant 0 : index
    %137 = vector.load %arg9[%c1_137, %c0_138, %c0_139] : memref<16x25x128xf32, #tpu.memory_space<vmem>>, vector<1x25x128xf32>
    %138 = vector.shape_cast %137 : vector<1x25x128xf32> to vector<25x128xf32>
    %cst_140 = arith.constant dense<0.000000e+00> : vector<1x128xf32>
    %139 = tpu.matmul %136, %138, %cst_140 {dimension_numbers = #tpu.dot_dimension_numbers<[1], [0], [0], [1], [0, 0, 1, 1], [], []>} : vector<1x25xf32>, vector<25x128xf32>, vector<1x128xf32> -> vector<1x128xf32>
    %140 = arith.addf %135, %139 : vector<1x128xf32>
    %141 = vector.extract_strided_slice %129 {offsets = [2, 0], sizes = [1, 25], strides = [1, 1]} : vector<16x25xf32> to vector<1x25xf32>
    %c2_141 = arith.constant 2 : index
    %c0_142 = arith.constant 0 : index
    %c0_143 = arith.constant 0 : index
    %142 = vector.load %arg9[%c2_141, %c0_142, %c0_143] : memref<16x25x128xf32, #tpu.memory_space<vmem>>, vector<1x25x128xf32>
    %143 = vector.shape_cast %142 : vector<1x25x128xf32> to vector<25x128xf32>
    %cst_144 = arith.constant dense<0.000000e+00> : vector<1x128xf32>
    %144 = tpu.matmul %141, %143, %cst_144 {dimension_numbers = #tpu.dot_dimension_numbers<[1], [0], [0], [1], [0, 0, 1, 1], [], []>} : vector<1x25xf32>, vector<25x128xf32>, vector<1x128xf32> -> vector<1x128xf32>
    %145 = arith.addf %140, %144 : vector<1x128xf32>
    %146 = vector.extract_strided_slice %129 {offsets = [3, 0], sizes = [1, 25], strides = [1, 1]} : vector<16x25xf32> to vector<1x25xf32>
    %c3 = arith.constant 3 : index
    %c0_145 = arith.constant 0 : index
    %c0_146 = arith.constant 0 : index
    %147 = vector.load %arg9[%c3, %c0_145, %c0_146] : memref<16x25x128xf32, #tpu.memory_space<vmem>>, vector<1x25x128xf32>
    %148 = vector.shape_cast %147 : vector<1x25x128xf32> to vector<25x128xf32>
    %cst_147 = arith.constant dense<0.000000e+00> : vector<1x128xf32>
    %149 = tpu.matmul %146, %148, %cst_147 {dimension_numbers = #tpu.dot_dimension_numbers<[1], [0], [0], [1], [0, 0, 1, 1], [], []>} : vector<1x25xf32>, vector<25x128xf32>, vector<1x128xf32> -> vector<1x128xf32>
    %150 = arith.addf %145, %149 : vector<1x128xf32>
    %151 = vector.extract_strided_slice %129 {offsets = [4, 0], sizes = [1, 25], strides = [1, 1]} : vector<16x25xf32> to vector<1x25xf32>
    %c4_148 = arith.constant 4 : index
    %c0_149 = arith.constant 0 : index
    %c0_150 = arith.constant 0 : index
    %152 = vector.load %arg9[%c4_148, %c0_149, %c0_150] : memref<16x25x128xf32, #tpu.memory_space<vmem>>, vector<1x25x128xf32>
    %153 = vector.shape_cast %152 : vector<1x25x128xf32> to vector<25x128xf32>
    %cst_151 = arith.constant dense<0.000000e+00> : vector<1x128xf32>
    %154 = tpu.matmul %151, %153, %cst_151 {dimension_numbers = #tpu.dot_dimension_numbers<[1], [0], [0], [1], [0, 0, 1, 1], [], []>} : vector<1x25xf32>, vector<25x128xf32>, vector<1x128xf32> -> vector<1x128xf32>
    %155 = arith.addf %150, %154 : vector<1x128xf32>
    %156 = vector.extract_strided_slice %129 {offsets = [5, 0], sizes = [1, 25], strides = [1, 1]} : vector<16x25xf32> to vector<1x25xf32>
    %c5 = arith.constant 5 : index
    %c0_152 = arith.constant 0 : index
    %c0_153 = arith.constant 0 : index
    %157 = vector.load %arg9[%c5, %c0_152, %c0_153] : memref<16x25x128xf32, #tpu.memory_space<vmem>>, vector<1x25x128xf32>
    %158 = vector.shape_cast %157 : vector<1x25x128xf32> to vector<25x128xf32>
    %cst_154 = arith.constant dense<0.000000e+00> : vector<1x128xf32>
    %159 = tpu.matmul %156, %158, %cst_154 {dimension_numbers = #tpu.dot_dimension_numbers<[1], [0], [0], [1], [0, 0, 1, 1], [], []>} : vector<1x25xf32>, vector<25x128xf32>, vector<1x128xf32> -> vector<1x128xf32>
    %160 = arith.addf %155, %159 : vector<1x128xf32>
    %161 = vector.extract_strided_slice %129 {offsets = [6, 0], sizes = [1, 25], strides = [1, 1]} : vector<16x25xf32> to vector<1x25xf32>
    %c6_155 = arith.constant 6 : index
    %c0_156 = arith.constant 0 : index
    %c0_157 = arith.constant 0 : index
    %162 = vector.load %arg9[%c6_155, %c0_156, %c0_157] : memref<16x25x128xf32, #tpu.memory_space<vmem>>, vector<1x25x128xf32>
    %163 = vector.shape_cast %162 : vector<1x25x128xf32> to vector<25x128xf32>
    %cst_158 = arith.constant dense<0.000000e+00> : vector<1x128xf32>
    %164 = tpu.matmul %161, %163, %cst_158 {dimension_numbers = #tpu.dot_dimension_numbers<[1], [0], [0], [1], [0, 0, 1, 1], [], []>} : vector<1x25xf32>, vector<25x128xf32>, vector<1x128xf32> -> vector<1x128xf32>
    %165 = arith.addf %160, %164 : vector<1x128xf32>
    %166 = vector.extract_strided_slice %129 {offsets = [7, 0], sizes = [1, 25], strides = [1, 1]} : vector<16x25xf32> to vector<1x25xf32>
    %c7 = arith.constant 7 : index
    %c0_159 = arith.constant 0 : index
    %c0_160 = arith.constant 0 : index
    %167 = vector.load %arg9[%c7, %c0_159, %c0_160] : memref<16x25x128xf32, #tpu.memory_space<vmem>>, vector<1x25x128xf32>
    %168 = vector.shape_cast %167 : vector<1x25x128xf32> to vector<25x128xf32>
    %cst_161 = arith.constant dense<0.000000e+00> : vector<1x128xf32>
    %169 = tpu.matmul %166, %168, %cst_161 {dimension_numbers = #tpu.dot_dimension_numbers<[1], [0], [0], [1], [0, 0, 1, 1], [], []>} : vector<1x25xf32>, vector<25x128xf32>, vector<1x128xf32> -> vector<1x128xf32>
    %170 = arith.addf %165, %169 : vector<1x128xf32>
    %171 = vector.extract_strided_slice %129 {offsets = [8, 0], sizes = [1, 25], strides = [1, 1]} : vector<16x25xf32> to vector<1x25xf32>
    %c8_162 = arith.constant 8 : index
    %c0_163 = arith.constant 0 : index
    %c0_164 = arith.constant 0 : index
    %172 = vector.load %arg9[%c8_162, %c0_163, %c0_164] : memref<16x25x128xf32, #tpu.memory_space<vmem>>, vector<1x25x128xf32>
    %173 = vector.shape_cast %172 : vector<1x25x128xf32> to vector<25x128xf32>
    %cst_165 = arith.constant dense<0.000000e+00> : vector<1x128xf32>
    %174 = tpu.matmul %171, %173, %cst_165 {dimension_numbers = #tpu.dot_dimension_numbers<[1], [0], [0], [1], [0, 0, 1, 1], [], []>} : vector<1x25xf32>, vector<25x128xf32>, vector<1x128xf32> -> vector<1x128xf32>
    %175 = arith.addf %170, %174 : vector<1x128xf32>
    %176 = vector.extract_strided_slice %129 {offsets = [9, 0], sizes = [1, 25], strides = [1, 1]} : vector<16x25xf32> to vector<1x25xf32>
    %c9 = arith.constant 9 : index
    %c0_166 = arith.constant 0 : index
    %c0_167 = arith.constant 0 : index
    %177 = vector.load %arg9[%c9, %c0_166, %c0_167] : memref<16x25x128xf32, #tpu.memory_space<vmem>>, vector<1x25x128xf32>
    %178 = vector.shape_cast %177 : vector<1x25x128xf32> to vector<25x128xf32>
    %cst_168 = arith.constant dense<0.000000e+00> : vector<1x128xf32>
    %179 = tpu.matmul %176, %178, %cst_168 {dimension_numbers = #tpu.dot_dimension_numbers<[1], [0], [0], [1], [0, 0, 1, 1], [], []>} : vector<1x25xf32>, vector<25x128xf32>, vector<1x128xf32> -> vector<1x128xf32>
    %180 = arith.addf %175, %179 : vector<1x128xf32>
    %181 = vector.extract_strided_slice %129 {offsets = [10, 0], sizes = [1, 25], strides = [1, 1]} : vector<16x25xf32> to vector<1x25xf32>
    %c10 = arith.constant 10 : index
    %c0_169 = arith.constant 0 : index
    %c0_170 = arith.constant 0 : index
    %182 = vector.load %arg9[%c10, %c0_169, %c0_170] : memref<16x25x128xf32, #tpu.memory_space<vmem>>, vector<1x25x128xf32>
    %183 = vector.shape_cast %182 : vector<1x25x128xf32> to vector<25x128xf32>
    %cst_171 = arith.constant dense<0.000000e+00> : vector<1x128xf32>
    %184 = tpu.matmul %181, %183, %cst_171 {dimension_numbers = #tpu.dot_dimension_numbers<[1], [0], [0], [1], [0, 0, 1, 1], [], []>} : vector<1x25xf32>, vector<25x128xf32>, vector<1x128xf32> -> vector<1x128xf32>
    %185 = arith.addf %180, %184 : vector<1x128xf32>
    %186 = vector.extract_strided_slice %129 {offsets = [11, 0], sizes = [1, 25], strides = [1, 1]} : vector<16x25xf32> to vector<1x25xf32>
    %c11 = arith.constant 11 : index
    %c0_172 = arith.constant 0 : index
    %c0_173 = arith.constant 0 : index
    %187 = vector.load %arg9[%c11, %c0_172, %c0_173] : memref<16x25x128xf32, #tpu.memory_space<vmem>>, vector<1x25x128xf32>
    %188 = vector.shape_cast %187 : vector<1x25x128xf32> to vector<25x128xf32>
    %cst_174 = arith.constant dense<0.000000e+00> : vector<1x128xf32>
    %189 = tpu.matmul %186, %188, %cst_174 {dimension_numbers = #tpu.dot_dimension_numbers<[1], [0], [0], [1], [0, 0, 1, 1], [], []>} : vector<1x25xf32>, vector<25x128xf32>, vector<1x128xf32> -> vector<1x128xf32>
    %190 = arith.addf %185, %189 : vector<1x128xf32>
    %191 = vector.extract_strided_slice %129 {offsets = [12, 0], sizes = [1, 25], strides = [1, 1]} : vector<16x25xf32> to vector<1x25xf32>
    %c12 = arith.constant 12 : index
    %c0_175 = arith.constant 0 : index
    %c0_176 = arith.constant 0 : index
    %192 = vector.load %arg9[%c12, %c0_175, %c0_176] : memref<16x25x128xf32, #tpu.memory_space<vmem>>, vector<1x25x128xf32>
    %193 = vector.shape_cast %192 : vector<1x25x128xf32> to vector<25x128xf32>
    %cst_177 = arith.constant dense<0.000000e+00> : vector<1x128xf32>
    %194 = tpu.matmul %191, %193, %cst_177 {dimension_numbers = #tpu.dot_dimension_numbers<[1], [0], [0], [1], [0, 0, 1, 1], [], []>} : vector<1x25xf32>, vector<25x128xf32>, vector<1x128xf32> -> vector<1x128xf32>
    %195 = arith.addf %190, %194 : vector<1x128xf32>
    %196 = vector.extract_strided_slice %129 {offsets = [13, 0], sizes = [1, 25], strides = [1, 1]} : vector<16x25xf32> to vector<1x25xf32>
    %c13 = arith.constant 13 : index
    %c0_178 = arith.constant 0 : index
    %c0_179 = arith.constant 0 : index
    %197 = vector.load %arg9[%c13, %c0_178, %c0_179] : memref<16x25x128xf32, #tpu.memory_space<vmem>>, vector<1x25x128xf32>
    %198 = vector.shape_cast %197 : vector<1x25x128xf32> to vector<25x128xf32>
    %cst_180 = arith.constant dense<0.000000e+00> : vector<1x128xf32>
    %199 = tpu.matmul %196, %198, %cst_180 {dimension_numbers = #tpu.dot_dimension_numbers<[1], [0], [0], [1], [0, 0, 1, 1], [], []>} : vector<1x25xf32>, vector<25x128xf32>, vector<1x128xf32> -> vector<1x128xf32>
    %200 = arith.addf %195, %199 : vector<1x128xf32>
    %201 = vector.extract_strided_slice %129 {offsets = [14, 0], sizes = [1, 25], strides = [1, 1]} : vector<16x25xf32> to vector<1x25xf32>
    %c14 = arith.constant 14 : index
    %c0_181 = arith.constant 0 : index
    %c0_182 = arith.constant 0 : index
    %202 = vector.load %arg9[%c14, %c0_181, %c0_182] : memref<16x25x128xf32, #tpu.memory_space<vmem>>, vector<1x25x128xf32>
    %203 = vector.shape_cast %202 : vector<1x25x128xf32> to vector<25x128xf32>
    %cst_183 = arith.constant dense<0.000000e+00> : vector<1x128xf32>
    %204 = tpu.matmul %201, %203, %cst_183 {dimension_numbers = #tpu.dot_dimension_numbers<[1], [0], [0], [1], [0, 0, 1, 1], [], []>} : vector<1x25xf32>, vector<25x128xf32>, vector<1x128xf32> -> vector<1x128xf32>
    %205 = arith.addf %200, %204 : vector<1x128xf32>
    %206 = vector.extract_strided_slice %129 {offsets = [15, 0], sizes = [1, 25], strides = [1, 1]} : vector<16x25xf32> to vector<1x25xf32>
    %c15 = arith.constant 15 : index
    %c0_184 = arith.constant 0 : index
    %c0_185 = arith.constant 0 : index
    %207 = vector.load %arg9[%c15, %c0_184, %c0_185] : memref<16x25x128xf32, #tpu.memory_space<vmem>>, vector<1x25x128xf32>
    %208 = vector.shape_cast %207 : vector<1x25x128xf32> to vector<25x128xf32>
    %cst_186 = arith.constant dense<0.000000e+00> : vector<1x128xf32>
    %209 = tpu.matmul %206, %208, %cst_186 {dimension_numbers = #tpu.dot_dimension_numbers<[1], [0], [0], [1], [0, 0, 1, 1], [], []>} : vector<1x25xf32>, vector<25x128xf32>, vector<1x128xf32> -> vector<1x128xf32>
    %210 = arith.addf %205, %209 : vector<1x128xf32>
    %cst_187 = arith.constant 0.000000e+00 : f32
    %211 = vector.broadcast %cst_187 : f32 to vector<1x128xf32>
    %212 = arith.maximumf %210, %211 : vector<1x128xf32>
    %c0_188 = arith.constant 0 : index
    %c0_189 = arith.constant 0 : index
    %213 = vector.load %arg11[%c0_188, %c0_189] : memref<128x128xf32, #tpu.memory_space<vmem>>, vector<128x128xf32>
    %cst_190 = arith.constant dense<0.000000e+00> : vector<1x128xf32>
    %214 = tpu.matmul %212, %213, %cst_190 {dimension_numbers = #tpu.dot_dimension_numbers<[1], [0], [0], [1], [0, 0, 1, 1], [], []>} : vector<1x128xf32>, vector<128x128xf32>, vector<1x128xf32> -> vector<1x128xf32>
    %c0_191 = arith.constant 0 : index
    %c0_192 = arith.constant 0 : index
    %215 = vector.load %arg12[%c0_191, %c0_192] : memref<1x128xf32, #tpu.memory_space<vmem>>, vector<1x128xf32>
    %216 = arith.addf %214, %215 : vector<1x128xf32>
    %cst_193 = arith.constant 0.000000e+00 : f32
    %217 = vector.broadcast %cst_193 : f32 to vector<1x128xf32>
    %218 = arith.maximumf %216, %217 : vector<1x128xf32>
    %c0_194 = arith.constant 0 : index
    %c0_195 = arith.constant 0 : index
    %219 = vector.load %arg13[%c0_194, %c0_195] : memref<128x128xf32, #tpu.memory_space<vmem>>, vector<128x128xf32>
    %cst_196 = arith.constant dense<0.000000e+00> : vector<1x128xf32>
    %220 = tpu.matmul %218, %219, %cst_196 {dimension_numbers = #tpu.dot_dimension_numbers<[1], [0], [0], [1], [0, 0, 1, 1], [], []>} : vector<1x128xf32>, vector<128x128xf32>, vector<1x128xf32> -> vector<1x128xf32>
    %c0_197 = arith.constant 0 : index
    %c0_198 = arith.constant 0 : index
    %221 = vector.load %arg14[%c0_197, %c0_198] : memref<1x128xf32, #tpu.memory_space<vmem>>, vector<1x128xf32>
    %222 = arith.addf %220, %221 : vector<1x128xf32>
    %cst_199 = arith.constant 0.000000e+00 : f32
    %223 = vector.broadcast %cst_199 : f32 to vector<1x128xf32>
    %224 = arith.maximumf %222, %223 : vector<1x128xf32>
    %c0_200 = arith.constant 0 : index
    %c0_201 = arith.constant 0 : index
    %225 = vector.load %arg15[%c0_200, %c0_201] : memref<128x128xf32, #tpu.memory_space<vmem>>, vector<128x128xf32>
    %cst_202 = arith.constant dense<0.000000e+00> : vector<1x128xf32>
    %226 = tpu.matmul %224, %225, %cst_202 {dimension_numbers = #tpu.dot_dimension_numbers<[1], [0], [0], [1], [0, 0, 1, 1], [], []>} : vector<1x128xf32>, vector<128x128xf32>, vector<1x128xf32> -> vector<1x128xf32>
    %c0_203 = arith.constant 0 : index
    %c0_204 = arith.constant 0 : index
    %227 = vector.load %arg16[%c0_203, %c0_204] : memref<1x128xf32, #tpu.memory_space<vmem>>, vector<1x128xf32>
    %228 = arith.addf %226, %227 : vector<1x128xf32>
    %c0_205 = arith.constant 0 : index
    %c0_206 = arith.constant 0 : index
    %c0_207 = arith.constant 0 : index
    %229 = vector.load %arg17[%c0_205, %c0_206, %c0_207] : memref<1x1x128xf32, #tpu.memory_space<vmem>>, vector<1x1x128xf32>
    %230 = vector.shape_cast %229 : vector<1x1x128xf32> to vector<1x128xf32>
    %231 = vector.shape_cast %228 : vector<1x128xf32> to vector<1x1x128xf32>
    tpu.vector_store %arg17[%c0_205, %c0_206, %c0_207], %231 {strides = array<i32>} : memref<1x1x128xf32, #tpu.memory_space<vmem>>, vector<1x1x128xf32>,
    return
  }
  func.func @transform_0(%arg0: i32) -> (i32, i32, i32) {
    %c0_i32 = arith.constant 0 : i32
    %c0_i32_0 = arith.constant 0 : i32
    %c0_i32_1 = arith.constant 0 : i32
    return %arg0, %c0_i32, %c0_i32_0 : i32, i32, i32
  }
  func.func @transform_1(%arg0: i32) -> (i32, i32) {
    %c0_i32 = arith.constant 0 : i32
    %c0_i32_0 = arith.constant 0 : i32
    %c0_i32_1 = arith.constant 0 : i32
    return %c0_i32, %c0_i32_0 : i32, i32
  }
  func.func @transform_2(%arg0: i32) -> (i32, i32) {
    %c0_i32 = arith.constant 0 : i32
    %c0_i32_0 = arith.constant 0 : i32
    %c0_i32_1 = arith.constant 0 : i32
    return %c0_i32, %c0_i32_0 : i32, i32
  }
  func.func @transform_3(%arg0: i32) -> (i32, i32) {
    %c0_i32 = arith.constant 0 : i32
    %c0_i32_0 = arith.constant 0 : i32
    %c0_i32_1 = arith.constant 0 : i32
    return %c0_i32, %c0_i32_0 : i32, i32
  }
  func.func @transform_4(%arg0: i32) -> (i32, i32) {
    %c0_i32 = arith.constant 0 : i32
    %c0_i32_0 = arith.constant 0 : i32
    %c0_i32_1 = arith.constant 0 : i32
    return %c0_i32, %c0_i32_0 : i32, i32
  }
  func.func @transform_5(%arg0: i32) -> (i32, i32) {
    %c0_i32 = arith.constant 0 : i32
    %c0_i32_0 = arith.constant 0 : i32
    %c0_i32_1 = arith.constant 0 : i32
    return %c0_i32, %c0_i32_0 : i32, i32
  }
  func.func @transform_6(%arg0: i32) -> (i32, i32) {
    %c0_i32 = arith.constant 0 : i32
    %c0_i32_0 = arith.constant 0 : i32
    %c0_i32_1 = arith.constant 0 : i32
    return %c0_i32, %c0_i32_0 : i32, i32
  }
  func.func @transform_7(%arg0: i32) -> (i32, i32) {
    %c0_i32 = arith.constant 0 : i32
    %c0_i32_0 = arith.constant 0 : i32
    %c0_i32_1 = arith.constant 0 : i32
    return %c0_i32, %c0_i32_0 : i32, i32
  }
  func.func @transform_8(%arg0: i32) -> (i32, i32, i32) {
    %c0_i32 = arith.constant 0 : i32
    %c0_i32_0 = arith.constant 0 : i32
    %c0_i32_1 = arith.constant 0 : i32
    %c0_i32_2 = arith.constant 0 : i32
    return %c0_i32, %c0_i32_0, %c0_i32_1 : i32, i32, i32
  }
  func.func @transform_9(%arg0: i32) -> (i32, i32) {
    %c0_i32 = arith.constant 0 : i32
    %c0_i32_0 = arith.constant 0 : i32
    %c0_i32_1 = arith.constant 0 : i32
    return %c0_i32, %c0_i32_0 : i32, i32
  }
  func.func @transform_10(%arg0: i32) -> (i32, i32) {
    %c0_i32 = arith.constant 0 : i32
    %c0_i32_0 = arith.constant 0 : i32
    %c0_i32_1 = arith.constant 0 : i32
    return %c0_i32, %c0_i32_0 : i32, i32
  }
  func.func @transform_11(%arg0: i32) -> (i32, i32) {
    %c0_i32 = arith.constant 0 : i32
    %c0_i32_0 = arith.constant 0 : i32
    %c0_i32_1 = arith.constant 0 : i32
    return %c0_i32, %c0_i32_0 : i32, i32
  }
  func.func @transform_12(%arg0: i32) -> (i32, i32) {
    %c0_i32 = arith.constant 0 : i32
    %c0_i32_0 = arith.constant 0 : i32
    %c0_i32_1 = arith.constant 0 : i32
    return %c0_i32, %c0_i32_0 : i32, i32
  }
  func.func @transform_13(%arg0: i32) -> (i32, i32) {
    %c0_i32 = arith.constant 0 : i32
    %c0_i32_0 = arith.constant 0 : i32
    %c0_i32_1 = arith.constant 0 : i32
    return %c0_i32, %c0_i32_0 : i32, i32
  }
  func.func @transform_14(%arg0: i32) -> (i32, i32) {
    %c0_i32 = arith.constant 0 : i32
    %c0_i32_0 = arith.constant 0 : i32
    %c0_i32_1 = arith.constant 0 : i32
    return %c0_i32, %c0_i32_0 : i32, i32
  }
  func.func @transform_15(%arg0: i32) -> (i32, i32) {
    %c0_i32 = arith.constant 0 : i32
    %c0_i32_0 = arith.constant 0 : i32
    %c0_i32_1 = arith.constant 0 : i32
    return %c0_i32, %c0_i32_0 : i32, i32
  }
  func.func @transform_16(%arg0: i32) -> (i32, i32, i32) {
    %c0_i32 = arith.constant 0 : i32
    %c0_i32_0 = arith.constant 0 : i32
    %c0_i32_1 = arith.constant 0 : i32
    return %arg0, %c0_i32, %c0_i32_0 : i32, i32, i32
  }
}

</mosaic_0001>

<llo_original>
// kernel: lenet5_forward.1
$region0: #{lenet5_forward.1}
  #allocation0 [shape = 'u32[]', space=smem, size = 0x4, offset = 0x4, fixed_abs, tag = 'smem constant byte address 0x4 - core index']
  #allocation1 [shape = 'u32[144,128]{1,0:T(1,128)}', space=vmem, size = 0x12000, scoped, tag = 'internal scratch']
  #allocation2 [shape = 'f32[8,958]{1,0:T(8,128)}', space=vmem, size = 0x8000, scoped, tag = 'scratch operand']
  #allocation3 [shape = 'f32[8,892]{1,0:T(8,128)}', space=vmem, size = 0x7000, scoped, tag = 'scratch operand']
  #allocation4 [shape = 'f32[8,859]{1,0:T(8,128)}', space=vmem, size = 0x7000, scoped, tag = 'scratch operand']
  #allocation5 [shape = 'f32[16,595]{1,0:T(8,128)}', space=vmem, size = 0xa000, scoped, tag = 'scratch operand']
  #allocation6 [shape = 'f32[16,529]{1,0:T(8,128)}', space=vmem, size = 0xa000, scoped, tag = 'scratch operand']
  %s0 = inlined_call_operand.vmem [shape: f32[2,8,1024], index: 0, kind: input, shape index: {}]
  %s1 = inlined_call_operand.vmem [shape: f32[8,72], index: 1, kind: input, shape index: {}]
  %s2 = inlined_call_operand.vmem [shape: f32[8,1], index: 2, kind: input, shape index: {}]
  %s3 = inlined_call_operand.vmem [shape: f32[8,72], index: 3, kind: input, shape index: {}]
  %s4 = inlined_call_operand.vmem [shape: f32[8,1], index: 4, kind: input, shape index: {}]
  %s5 = inlined_call_operand.vmem [shape: f32[16,200], index: 5, kind: input, shape index: {}]
  %s6 = inlined_call_operand.vmem [shape: f32[16,1], index: 6, kind: input, shape index: {}]
  %s7 = inlined_call_operand.vmem [shape: f32[529,25], index: 7, kind: input, shape index: {}]
  %s8 = inlined_call_operand.vmem [shape: f32[16,25,128], index: 8, kind: input, shape index: {}]
  %s9 = inlined_call_operand.vmem [shape: f32[1,128], index: 9, kind: input, shape index: {}]
  %s10 = inlined_call_operand.vmem [shape: f32[128,128], index: 10, kind: input, shape index: {}]
  %s11 = inlined_call_operand.vmem [shape: f32[1,128], index: 11, kind: input, shape index: {}]
  %s12 = inlined_call_operand.vmem [shape: f32[128,128], index: 12, kind: input, shape index: {}]
  %s13 = inlined_call_operand.vmem [shape: f32[1,128], index: 13, kind: input, shape index: {}]
  %s14 = inlined_call_operand.vmem [shape: f32[128,128], index: 14, kind: input, shape index: {}]
  %s15 = inlined_call_operand.vmem [shape: f32[1,128], index: 15, kind: input, shape index: {}]
  %s16 = inlined_call_operand.hbm [shape: f32[2,1,128], index: 16, kind: output, shape index: {}]
  %s17 = sld [smem:[#allocation0]]
  $region97: #{lenet5_forward.1} parent=0
    _
  %s19 = ssub.s32 1, %s17
  %s20 = scalar_select 0, %s19, %s17
  $region1: #{lenet5_forward.1} parent=0
    #allocation7 [shape = 'u8[1024]{0}', space=vmem, size = 0x400, scoped, tag = 'output window, operand 0']
    #allocation8 [shape = 's32[2]{0}', space=sflag, size = 0x8, scoped, tag = 'scoped memory for lenet5_forward.1']
    %21 = vsyncpa [#allocation8], 0
    %s22 = scalar_lea.sflag [#allocation8], 1
    %23 = vsyncpa %s22, 0
    loop: start=0, step=1, limit=4
    $region2: #{lenet5_forward.1} parent=1 // loop_pre_header
      _
    $region3: #{lenet5_forward.1} parent=1 // loop_header
      %s25 = sphi 0, %s29
      %p26 = scmp.ge.s32.totalorder %s25, 4
      %s35 = sphi 0, %s37
      %s38 = sphi 0, %s35
      %s39 = sphi 0, %s38
      %s55 = sphi 0, %s39
      %s59 = sphi 0, %s59
      %s61 = sphi 0, %s59
      %s62 = sphi 0, %s61
      %s76 = sphi 0, %s62
      %s80 = sphi 0, %s80
      %s82 = sphi 0, %s80
      %s83 = sphi 0, %s82
      %s97 = sphi 0, %s83
      %s101 = sphi 0, %s101
      %s103 = sphi 0, %s101
      %s104 = sphi 0, %s103
      %s118 = sphi 0, %s104
      %s122 = sphi 0, %s122
      %s124 = sphi 0, %s122
      %s125 = sphi 0, %s124
      %s139 = sphi 0, %s125
      %s143 = sphi 0, %s143
      %s145 = sphi 0, %s143
      %s146 = sphi 0, %s145
      %s160 = sphi 0, %s146
      %s164 = sphi 0, %s164
      %s166 = sphi 0, %s164
      %s167 = sphi 0, %s166
      %s181 = sphi 0, %s167
      %s185 = sphi 0, %s185
      %s187 = sphi 0, %s185
      %s188 = sphi 0, %s187
      %s202 = sphi 0, %s188
      %s206 = sphi 0, %s206
      %s208 = sphi 0, %s206
      %s209 = sphi 0, %s208
      %s223 = sphi 0, %s209
      %s227 = sphi 0, %s227
      %s229 = sphi 0, %s227
      %s230 = sphi 0, %s229
      %s244 = sphi 0, %s230
      %s248 = sphi 0, %s248
      %s250 = sphi 0, %s248
      %s251 = sphi 0, %s250
      %s265 = sphi 0, %s251
      %s269 = sphi 0, %s269
      %s271 = sphi 0, %s269
      %s272 = sphi 0, %s271
      %s286 = sphi 0, %s272
      %s290 = sphi 0, %s290
      %s292 = sphi 0, %s290
      %s293 = sphi 0, %s292
      %s307 = sphi 0, %s293
      %s311 = sphi 0, %s311
      %s313 = sphi 0, %s311
      %s314 = sphi 0, %s313
      %s328 = sphi 0, %s314
      %s332 = sphi 0, %s332
      %s334 = sphi 0, %s332
      %s335 = sphi 0, %s334
      %s349 = sphi 0, %s335
      %s353 = sphi 0, %s353
      %s355 = sphi 0, %s353
      %s356 = sphi 0, %s355
      %s370 = sphi 0, %s356
      %s376 = sphi 0, %s378
      %s379 = sphi 0, %s376
      %s380 = sphi 0, %s379
      %s396 = sphi 0, %s380
    $region4: #{lenet5_forward.1} parent=1 // loop_header_branch
      %28 = sbr.rel (%p26) target = $region8
    $region5: #{lenet5_forward.1} parent=1 // loop_body
      %s30 = ssub.s32 %s25, 1
      %s31 = ssub.s32 %s25, 2
      %s32 = sadd.s32 %s25, 1
      %s33 = ssub.s32 %s25, %s32
      %p34 = scmp.eq.s32.totalorder %s33, 0
      %s36 = sadd.s32 %s35, 1
      %s37 = scalar_select %p34, %s35, %s36
      %p40 = pneg %p34
      %p41 = scmp.eq.s32.totalorder %s25, 1
      %p42 = por %p40, %p41
      %p43 = scmp.ne.s32.totalorder %s35, %s38
      %p44 = scmp.eq.s32.totalorder %s25, 0
      %p45 = por %p43, %p44
      %p46 = scmp.ne.s32.totalorder %s35, %s38
      %p47 = scmp.eq.s32.totalorder %s30, 1
      %p48 = por %p46, %p47
      %p49 = scmp.ne.s32.totalorder %s38, %s39
      %p50 = scmp.eq.s32.totalorder %s30, 0
      %p51 = por %p49, %p50
      %p52 = scmp.ne.s32.totalorder %s38, %s39
      %p53 = scmp.eq.s32.totalorder %s31, 1
      %p54 = por %p52, %p53
      %p56 = scmp.ne.s32.totalorder %s39, %s55
      %p57 = scmp.eq.s32.totalorder %s31, 0
      %p58 = por %p56, %p57
      %s60 = sadd.s32 %s59, 1
      %p63 = scmp.eq.s32.totalorder %s25, 1
      %p64 = scmp.ne.s32.totalorder %s59, %s61
      %p65 = scmp.eq.s32.totalorder %s25, 0
      %p66 = por %p64, %p65
      %p67 = scmp.ne.s32.totalorder %s59, %s61
      %p68 = scmp.eq.s32.totalorder %s30, 1
      %p69 = por %p67, %p68
      %p70 = scmp.ne.s32.totalorder %s61, %s62
      %p71 = scmp.eq.s32.totalorder %s30, 0
      %p72 = por %p70, %p71
      %p73 = scmp.ne.s32.totalorder %s61, %s62
      %p74 = scmp.eq.s32.totalorder %s31, 1
      %p75 = por %p73, %p74
      %p77 = scmp.ne.s32.totalorder %s62, %s76
      %p78 = scmp.eq.s32.totalorder %s31, 0
      %p79 = por %p77, %p78
      %s81 = sadd.s32 %s80, 1
      %p84 = scmp.eq.s32.totalorder %s25, 1
      %p85 = scmp.ne.s32.totalorder %s80, %s82
      %p86 = scmp.eq.s32.totalorder %s25, 0
      %p87 = por %p85, %p86
      %p88 = scmp.ne.s32.totalorder %s80, %s82
      %p89 = scmp.eq.s32.totalorder %s30, 1
      %p90 = por %p88, %p89
      %p91 = scmp.ne.s32.totalorder %s82, %s83
      %p92 = scmp.eq.s32.totalorder %s30, 0
      %p93 = por %p91, %p92
      %p94 = scmp.ne.s32.totalorder %s82, %s83
      %p95 = scmp.eq.s32.totalorder %s31, 1
      %p96 = por %p94, %p95
      %p98 = scmp.ne.s32.totalorder %s83, %s97
      %p99 = scmp.eq.s32.totalorder %s31, 0
      %p100 = por %p98, %p99
      %s102 = sadd.s32 %s101, 1
      %p105 = scmp.eq.s32.totalorder %s25, 1
      %p106 = scmp.ne.s32.totalorder %s101, %s103
      %p107 = scmp.eq.s32.totalorder %s25, 0
      %p108 = por %p106, %p107
      %p109 = scmp.ne.s32.totalorder %s101, %s103
      %p110 = scmp.eq.s32.totalorder %s30, 1
      %p111 = por %p109, %p110
      %p112 = scmp.ne.s32.totalorder %s103, %s104
      %p113 = scmp.eq.s32.totalorder %s30, 0
      %p114 = por %p112, %p113
      %p115 = scmp.ne.s32.totalorder %s103, %s104
      %p116 = scmp.eq.s32.totalorder %s31, 1
      %p117 = por %p115, %p116
      %p119 = scmp.ne.s32.totalorder %s104, %s118
      %p120 = scmp.eq.s32.totalorder %s31, 0
      %p121 = por %p119, %p120
      %s123 = sadd.s32 %s122, 1
      %p126 = scmp.eq.s32.totalorder %s25, 1
      %p127 = scmp.ne.s32.totalorder %s122, %s124
      %p128 = scmp.eq.s32.totalorder %s25, 0
      %p129 = por %p127, %p128
      %p130 = scmp.ne.s32.totalorder %s122, %s124
      %p131 = scmp.eq.s32.totalorder %s30, 1
      %p132 = por %p130, %p131
      %p133 = scmp.ne.s32.totalorder %s124, %s125
      %p134 = scmp.eq.s32.totalorder %s30, 0
      %p135 = por %p133, %p134
      %p136 = scmp.ne.s32.totalorder %s124, %s125
      %p137 = scmp.eq.s32.totalorder %s31, 1
      %p138 = por %p136, %p137
      %p140 = scmp.ne.s32.totalorder %s125, %s139
      %p141 = scmp.eq.s32.totalorder %s31, 0
      %p142 = por %p140, %p141
      %s144 = sadd.s32 %s143, 1
      %p147 = scmp.eq.s32.totalorder %s25, 1
      %p148 = scmp.ne.s32.totalorder %s143, %s145
      %p149 = scmp.eq.s32.totalorder %s25, 0
      %p150 = por %p148, %p149
      %p151 = scmp.ne.s32.totalorder %s143, %s145
      %p152 = scmp.eq.s32.totalorder %s30, 1
      %p153 = por %p151, %p152
      %p154 = scmp.ne.s32.totalorder %s145, %s146
      %p155 = scmp.eq.s32.totalorder %s30, 0
      %p156 = por %p154, %p155
      %p157 = scmp.ne.s32.totalorder %s145, %s146
      %p158 = scmp.eq.s32.totalorder %s31, 1
      %p159 = por %p157, %p158
      %p161 = scmp.ne.s32.totalorder %s146, %s160
      %p162 = scmp.eq.s32.totalorder %s31, 0
      %p163 = por %p161, %p162
      %s165 = sadd.s32 %s164, 1
      %p168 = scmp.eq.s32.totalorder %s25, 1
      %p169 = scmp.ne.s32.totalorder %s164, %s166
      %p170 = scmp.eq.s32.totalorder %s25, 0
      %p171 = por %p169, %p170
      %p172 = scmp.ne.s32.totalorder %s164, %s166
      %p173 = scmp.eq.s32.totalorder %s30, 1
      %p174 = por %p172, %p173
      %p175 = scmp.ne.s32.totalorder %s166, %s167
      %p176 = scmp.eq.s32.totalorder %s30, 0
      %p177 = por %p175, %p176
      %p178 = scmp.ne.s32.totalorder %s166, %s167
      %p179 = scmp.eq.s32.totalorder %s31, 1
      %p180 = por %p178, %p179
      %p182 = scmp.ne.s32.totalorder %s167, %s181
      %p183 = scmp.eq.s32.totalorder %s31, 0
      %p184 = por %p182, %p183
      %s186 = sadd.s32 %s185, 1
      %p189 = scmp.eq.s32.totalorder %s25, 1
      %p190 = scmp.ne.s32.totalorder %s185, %s187
      %p191 = scmp.eq.s32.totalorder %s25, 0
      %p192 = por %p190, %p191
      %p193 = scmp.ne.s32.totalorder %s185, %s187
      %p194 = scmp.eq.s32.totalorder %s30, 1
      %p195 = por %p193, %p194
      %p196 = scmp.ne.s32.totalorder %s187, %s188
      %p197 = scmp.eq.s32.totalorder %s30, 0
      %p198 = por %p196, %p197
      %p199 = scmp.ne.s32.totalorder %s187, %s188
      %p200 = scmp.eq.s32.totalorder %s31, 1
      %p201 = por %p199, %p200
      %p203 = scmp.ne.s32.totalorder %s188, %s202
      %p204 = scmp.eq.s32.totalorder %s31, 0
      %p205 = por %p203, %p204
      %s207 = sadd.s32 %s206, 1
      %p210 = scmp.eq.s32.totalorder %s25, 1
      %p211 = scmp.ne.s32.totalorder %s206, %s208
      %p212 = scmp.eq.s32.totalorder %s25, 0
      %p213 = por %p211, %p212
      %p214 = scmp.ne.s32.totalorder %s206, %s208
      %p215 = scmp.eq.s32.totalorder %s30, 1
      %p216 = por %p214, %p215
      %p217 = scmp.ne.s32.totalorder %s208, %s209
      %p218 = scmp.eq.s32.totalorder %s30, 0
      %p219 = por %p217, %p218
      %p220 = scmp.ne.s32.totalorder %s208, %s209
      %p221 = scmp.eq.s32.totalorder %s31, 1
      %p222 = por %p220, %p221
      %p224 = scmp.ne.s32.totalorder %s209, %s223
      %p225 = scmp.eq.s32.totalorder %s31, 0
      %p226 = por %p224, %p225
      %s228 = sadd.s32 %s227, 1
      %p231 = scmp.eq.s32.totalorder %s25, 1
      %p232 = scmp.ne.s32.totalorder %s227, %s229
      %p233 = scmp.eq.s32.totalorder %s25, 0
      %p234 = por %p232, %p233
      %p235 = scmp.ne.s32.totalorder %s227, %s229
      %p236 = scmp.eq.s32.totalorder %s30, 1
      %p237 = por %p235, %p236
      %p238 = scmp.ne.s32.totalorder %s229, %s230
      %p239 = scmp.eq.s32.totalorder %s30, 0
      %p240 = por %p238, %p239
      %p241 = scmp.ne.s32.totalorder %s229, %s230
      %p242 = scmp.eq.s32.totalorder %s31, 1
      %p243 = por %p241, %p242
      %p245 = scmp.ne.s32.totalorder %s230, %s244
      %p246 = scmp.eq.s32.totalorder %s31, 0
      %p247 = por %p245, %p246
      %s249 = sadd.s32 %s248, 1
      %p252 = scmp.eq.s32.totalorder %s25, 1
      %p253 = scmp.ne.s32.totalorder %s248, %s250
      %p254 = scmp.eq.s32.totalorder %s25, 0
      %p255 = por %p253, %p254
      %p256 = scmp.ne.s32.totalorder %s248, %s250
      %p257 = scmp.eq.s32.totalorder %s30, 1
      %p258 = por %p256, %p257
      %p259 = scmp.ne.s32.totalorder %s250, %s251
      %p260 = scmp.eq.s32.totalorder %s30, 0
      %p261 = por %p259, %p260
      %p262 = scmp.ne.s32.totalorder %s250, %s251
      %p263 = scmp.eq.s32.totalorder %s31, 1
      %p264 = por %p262, %p263
      %p266 = scmp.ne.s32.totalorder %s251, %s265
      %p267 = scmp.eq.s32.totalorder %s31, 0
      %p268 = por %p266, %p267
      %s270 = sadd.s32 %s269, 1
      %p273 = scmp.eq.s32.totalorder %s25, 1
      %p274 = scmp.ne.s32.totalorder %s269, %s271
      %p275 = scmp.eq.s32.totalorder %s25, 0
      %p276 = por %p274, %p275
      %p277 = scmp.ne.s32.totalorder %s269, %s271
      %p278 = scmp.eq.s32.totalorder %s30, 1
      %p279 = por %p277, %p278
      %p280 = scmp.ne.s32.totalorder %s271, %s272
      %p281 = scmp.eq.s32.totalorder %s30, 0
      %p282 = por %p280, %p281
      %p283 = scmp.ne.s32.totalorder %s271, %s272
      %p284 = scmp.eq.s32.totalorder %s31, 1
      %p285 = por %p283, %p284
      %p287 = scmp.ne.s32.totalorder %s272, %s286
      %p288 = scmp.eq.s32.totalorder %s31, 0
      %p289 = por %p287, %p288
      %s291 = sadd.s32 %s290, 1
      %p294 = scmp.eq.s32.totalorder %s25, 1
      %p295 = scmp.ne.s32.totalorder %s290, %s292
      %p296 = scmp.eq.s32.totalorder %s25, 0
      %p297 = por %p295, %p296
      %p298 = scmp.ne.s32.totalorder %s290, %s292
      %p299 = scmp.eq.s32.totalorder %s30, 1
      %p300 = por %p298, %p299
      %p301 = scmp.ne.s32.totalorder %s292, %s293
      %p302 = scmp.eq.s32.totalorder %s30, 0
      %p303 = por %p301, %p302
      %p304 = scmp.ne.s32.totalorder %s292, %s293
      %p305 = scmp.eq.s32.totalorder %s31, 1
      %p306 = por %p304, %p305
      %p308 = scmp.ne.s32.totalorder %s293, %s307
      %p309 = scmp.eq.s32.totalorder %s31, 0
      %p310 = por %p308, %p309
      %s312 = sadd.s32 %s311, 1
      %p315 = scmp.eq.s32.totalorder %s25, 1
      %p316 = scmp.ne.s32.totalorder %s311, %s313
      %p317 = scmp.eq.s32.totalorder %s25, 0
      %p318 = por %p316, %p317
      %p319 = scmp.ne.s32.totalorder %s311, %s313
      %p320 = scmp.eq.s32.totalorder %s30, 1
      %p321 = por %p319, %p320
      %p322 = scmp.ne.s32.totalorder %s313, %s314
      %p323 = scmp.eq.s32.totalorder %s30, 0
      %p324 = por %p322, %p323
      %p325 = scmp.ne.s32.totalorder %s313, %s314
      %p326 = scmp.eq.s32.totalorder %s31, 1
      %p327 = por %p325, %p326
      %p329 = scmp.ne.s32.totalorder %s314, %s328
      %p330 = scmp.eq.s32.totalorder %s31, 0
      %p331 = por %p329, %p330
      %s333 = sadd.s32 %s332, 1
      %p336 = scmp.eq.s32.totalorder %s25, 1
      %p337 = scmp.ne.s32.totalorder %s332, %s334
      %p338 = scmp.eq.s32.totalorder %s25, 0
      %p339 = por %p337, %p338
      %p340 = scmp.ne.s32.totalorder %s332, %s334
      %p341 = scmp.eq.s32.totalorder %s30, 1
      %p342 = por %p340, %p341
      %p343 = scmp.ne.s32.totalorder %s334, %s335
      %p344 = scmp.eq.s32.totalorder %s30, 0
      %p345 = por %p343, %p344
      %p346 = scmp.ne.s32.totalorder %s334, %s335
      %p347 = scmp.eq.s32.totalorder %s31, 1
      %p348 = por %p346, %p347
      %p350 = scmp.ne.s32.totalorder %s335, %s349
      %p351 = scmp.eq.s32.totalorder %s31, 0
      %p352 = por %p350, %p351
      %s354 = sadd.s32 %s353, 1
      %p357 = scmp.eq.s32.totalorder %s25, 1
      %p358 = scmp.ne.s32.totalorder %s353, %s355
      %p359 = scmp.eq.s32.totalorder %s25, 0
      %p360 = por %p358, %p359
      %p361 = scmp.ne.s32.totalorder %s353, %s355
      %p362 = scmp.eq.s32.totalorder %s30, 1
      %p363 = por %p361, %p362
      %p364 = scmp.ne.s32.totalorder %s355, %s356
      %p365 = scmp.eq.s32.totalorder %s30, 0
      %p366 = por %p364, %p365
      %p367 = scmp.ne.s32.totalorder %s355, %s356
      %p368 = scmp.eq.s32.totalorder %s31, 1
      %p369 = por %p367, %p368
      %p371 = scmp.ne.s32.totalorder %s356, %s370
      %p372 = scmp.eq.s32.totalorder %s31, 0
      %p373 = por %p371, %p372
      %s374 = ssub.s32 %s25, %s32
      %p375 = scmp.eq.s32.totalorder %s374, 0
      %s377 = sadd.s32 %s376, 1
      %s378 = scalar_select %p375, %s376, %s377
      %p381 = pneg %p375
      %p382 = scmp.eq.s32.totalorder %s25, 1
      %p383 = por %p381, %p382
      %p384 = scmp.ne.s32.totalorder %s376, %s379
      %p385 = scmp.eq.s32.totalorder %s25, 0
      %p386 = por %p384, %p385
      %p387 = scmp.ne.s32.totalorder %s376, %s379
      %p388 = scmp.eq.s32.totalorder %s30, 1
      %p389 = por %p387, %p388
      %p390 = scmp.ne.s32.totalorder %s379, %s380
      %p391 = scmp.eq.s32.totalorder %s30, 0
      %p392 = por %p390, %p391
      %p393 = scmp.ne.s32.totalorder %s379, %s380
      %p394 = scmp.eq.s32.totalorder %s31, 1
      %p395 = por %p393, %p394
      %p397 = scmp.ne.s32.totalorder %s380, %s396
      %p398 = scmp.eq.s32.totalorder %s31, 0
      %p399 = por %p397, %p398
      %p400 = scmp.le.s32.totalorder 1, %s25
      %p401 = scmp.lt.s32.totalorder %s25, 3
      %p402 = pnand %p400, %p401
      %p403 = pneg %p402
      // Predicated region
      $region9: #{lenet5_forward.1} parent=5 // pred_check
        _
      $region10: #{lenet5_forward.1} parent=5 // pred_check_branch
        %405 = sbr.rel (%p402) target = $region12
      $region11: #{lenet5_forward.1} parent=5 // pred_region
        %s406 = ssub.s32 %s25, 1
        // Predicated region
        $region13: #{lenet5_forward.1} parent=11 // pred_check
          %p407 = pneg %p72
        $region14: #{lenet5_forward.1} parent=11 // pred_check_branch
          %409 = sbr.rel (%p407) target = $region16
        $region15: #{lenet5_forward.1} parent=11 // pred_region
          _
        $region16: #{lenet5_forward.1} parent=11 // pred_fallthru
          _
        // Predicated region
        $region17: #{lenet5_forward.1} parent=11 // pred_check
          %p410 = pneg %p93
        $region18: #{lenet5_forward.1} parent=11 // pred_check_branch
          %412 = sbr.rel (%p410) target = $region20
        $region19: #{lenet5_forward.1} parent=11 // pred_region
          _
        $region20: #{lenet5_forward.1} parent=11 // pred_fallthru
          _
        // Predicated region
        $region21: #{lenet5_forward.1} parent=11 // pred_check
          %p413 = pneg %p114
        $region22: #{lenet5_forward.1} parent=11 // pred_check_branch
          %415 = sbr.rel (%p413) target = $region24
        $region23: #{lenet5_forward.1} parent=11 // pred_region
          _
        $region24: #{lenet5_forward.1} parent=11 // pred_fallthru
          _
        // Predicated region
        $region25: #{lenet5_forward.1} parent=11 // pred_check
          %p416 = pneg %p135
        $region26: #{lenet5_forward.1} parent=11 // pred_check_branch
          %418 = sbr.rel (%p416) target = $region28
        $region27: #{lenet5_forward.1} parent=11 // pred_region
          _
        $region28: #{lenet5_forward.1} parent=11 // pred_fallthru
          _
        // Predicated region
        $region29: #{lenet5_forward.1} parent=11 // pred_check
          %p419 = pneg %p156
        $region30: #{lenet5_forward.1} parent=11 // pred_check_branch
          %421 = sbr.rel (%p419) target = $region32
        $region31: #{lenet5_forward.1} parent=11 // pred_region
          _
        $region32: #{lenet5_forward.1} parent=11 // pred_fallthru
          _
        // Predicated region
        $region33: #{lenet5_forward.1} parent=11 // pred_check
          %p422 = pneg %p177
        $region34: #{lenet5_forward.1} parent=11 // pred_check_branch
          %424 = sbr.rel (%p422) target = $region36
        $region35: #{lenet5_forward.1} parent=11 // pred_region
          _
        $region36: #{lenet5_forward.1} parent=11 // pred_fallthru
          _
        // Predicated region
        $region37: #{lenet5_forward.1} parent=11 // pred_check
          %p425 = pneg %p198
        $region38: #{lenet5_forward.1} parent=11 // pred_check_branch
          %427 = sbr.rel (%p425) target = $region40
        $region39: #{lenet5_forward.1} parent=11 // pred_region
          _
        $region40: #{lenet5_forward.1} parent=11 // pred_fallthru
          _
        // Predicated region
        $region41: #{lenet5_forward.1} parent=11 // pred_check
          %p428 = pneg %p219
        $region42: #{lenet5_forward.1} parent=11 // pred_check_branch
          %430 = sbr.rel (%p428) target = $region44
        $region43: #{lenet5_forward.1} parent=11 // pred_region
          _
        $region44: #{lenet5_forward.1} parent=11 // pred_fallthru
          _
        // Predicated region
        $region45: #{lenet5_forward.1} parent=11 // pred_check
          %p431 = pneg %p240
        $region46: #{lenet5_forward.1} parent=11 // pred_check_branch
          %433 = sbr.rel (%p431) target = $region48
        $region47: #{lenet5_forward.1} parent=11 // pred_region
          _
        $region48: #{lenet5_forward.1} parent=11 // pred_fallthru
          _
        // Predicated region
        $region49: #{lenet5_forward.1} parent=11 // pred_check
          %p434 = pneg %p261
        $region50: #{lenet5_forward.1} parent=11 // pred_check_branch
          %436 = sbr.rel (%p434) target = $region52
        $region51: #{lenet5_forward.1} parent=11 // pred_region
          _
        $region52: #{lenet5_forward.1} parent=11 // pred_fallthru
          _
        // Predicated region
        $region53: #{lenet5_forward.1} parent=11 // pred_check
          %p437 = pneg %p282
        $region54: #{lenet5_forward.1} parent=11 // pred_check_branch
          %439 = sbr.rel (%p437) target = $region56
        $region55: #{lenet5_forward.1} parent=11 // pred_region
          _
        $region56: #{lenet5_forward.1} parent=11 // pred_fallthru
          _
        // Predicated region
        $region57: #{lenet5_forward.1} parent=11 // pred_check
          %p440 = pneg %p303
        $region58: #{lenet5_forward.1} parent=11 // pred_check_branch
          %442 = sbr.rel (%p440) target = $region60
        $region59: #{lenet5_forward.1} parent=11 // pred_region
          _
        $region60: #{lenet5_forward.1} parent=11 // pred_fallthru
          _
        // Predicated region
        $region61: #{lenet5_forward.1} parent=11 // pred_check
          %p443 = pneg %p324
        $region62: #{lenet5_forward.1} parent=11 // pred_check_branch
          %445 = sbr.rel (%p443) target = $region64
        $region63: #{lenet5_forward.1} parent=11 // pred_region
          _
        $region64: #{lenet5_forward.1} parent=11 // pred_fallthru
          _
        // Predicated region
        $region65: #{lenet5_forward.1} parent=11 // pred_check
          %p446 = pneg %p345
        $region66: #{lenet5_forward.1} parent=11 // pred_check_branch
          %448 = sbr.rel (%p446) target = $region68
        $region67: #{lenet5_forward.1} parent=11 // pred_region
          _
        $region68: #{lenet5_forward.1} parent=11 // pred_fallthru
          _
        // Predicated region
        $region69: #{lenet5_forward.1} parent=11 // pred_check
          %p449 = pneg %p366
        $region70: #{lenet5_forward.1} parent=11 // pred_check_branch
          %451 = sbr.rel (%p449) target = $region72
        $region71: #{lenet5_forward.1} parent=11 // pred_region
          _
        $region72: #{lenet5_forward.1} parent=11 // pred_fallthru
          _
      $region12: #{lenet5_forward.1} parent=5 // pred_fallthru
        _
      %p452 = scmp.lt.s32.totalorder %s25, 2
      // Predicated region
      $region73: #{lenet5_forward.1} parent=5 // pred_check
        %p453 = pneg %p452
      $region74: #{lenet5_forward.1} parent=5 // pred_check_branch
        %455 = sbr.rel (%p453) target = $region76
      $region75: #{lenet5_forward.1} parent=5 // pred_region
        // Predicated region
        $region77: #{lenet5_forward.1} parent=75 // pred_check
          %p456 = pneg %p45
        $region78: #{lenet5_forward.1} parent=75 // pred_check_branch
          %458 = sbr.rel (%p456) target = $region80
        $region79: #{lenet5_forward.1} parent=75 // pred_region
          %p459 = scmp.lt.s32.totalorder %s25, 1
          %s460 = scalar_select %p459, %s25, 1
          %s461 = smul.addr %s460, 8
          %s462 = smul.addr %s461, 8
          %s463 = scalar_lea.vmem %s0, %s462
        $region80: #{lenet5_forward.1} parent=75 // pred_fallthru
          _
      $region76: #{lenet5_forward.1} parent=5 // pred_fallthru
        _
      %p464 = scmp.le.s32.totalorder 1, %s25
      %p465 = scmp.lt.s32.totalorder %s25, 3
      %p466 = pnand %p464, %p465
      %p467 = pneg %p466
      // Predicated region
      $region81: #{lenet5_forward.1} parent=5 // pred_check
        _
      $region82: #{lenet5_forward.1} parent=5 // pred_check_branch
        %469 = sbr.rel (%p466) target = $region84
      $region83: #{lenet5_forward.1} parent=5 // pred_region
        %s470 = ssub.s32 %s25, 1
        %p471 = scmp.lt.s32.totalorder %s30, 1
        %s472 = scalar_select %p471, %s30, 1
        %s473 = smul.addr %s472, 8
        %s474 = smul.addr %s473, 8
        %s475 = scalar_lea.vmem %s0, %s474
        %p476 = pneg %p51
        %p477 = pneg %p48
        %p478 = pneg %p72
        %p479 = pneg %p69
        %p480 = pneg %p93
        %p481 = pneg %p90
        %p482 = pneg %p114
        %p483 = pneg %p111
        %p484 = pneg %p135
        %p485 = pneg %p132
        %p486 = pneg %p156
        %p487 = pneg %p153
        %p488 = pneg %p177
        %p489 = pneg %p174
        %p490 = pneg %p198
        %p491 = pneg %p195
        %p492 = pneg %p219
        %p493 = pneg %p216
        %p494 = pneg %p240
        %p495 = pneg %p237
        %p496 = pneg %p261
        %p497 = pneg %p258
        %p498 = pneg %p282
        %p499 = pneg %p279
        %p500 = pneg %p303
        %p501 = pneg %p300
        %p502 = pneg %p324
        %p503 = pneg %p321
        %p504 = pneg %p345
        %p505 = pneg %p342
        %p506 = pneg %p366
        %p507 = pneg %p363
        %p508 = pneg %p392
        %p509 = pneg %p389
        %s510 = sand.u32 %s379, 1
        %s511 = scalar_lea.sflag [#allocation8], %s510
        %s512 = sand.u32 %s379, 1
        %s513 = scalar_lea.vmem [#allocation7], %s512
        %p514 = scmp.lt.s32.totalorder %s30, 1
        %s515 = scalar_select %p514, %s30, 1
        %s516 = smul.addr %s515, 8
        %s517 = smul.addr %s516, 8
        %s518 = scalar_lea.vmem %s0, %s517
        %v519 = vld [vmem:[%s518] sm:$0xff]
        %v520 = vld [vmem:[%s518 + $0x8] sm:$0xff]
        %v521 = vld [vmem:[%s518 + $0x10] sm:$0xff]
        %v522 = vld [vmem:[%s518 + $0x18] sm:$0xff]
        %v523 = vld [vmem:[%s518 + $0x20] sm:$0xff]
        %v524 = vld [vmem:[%s518 + $0x28] sm:$0xff]
        %v525 = vld [vmem:[%s518 + $0x30] sm:$0xff]
        %v526 = vld [vmem:[%s518 + $0x38] sm:$0xff]
        %535 = vrot.lane.b32.xlu0 %v519, 127
        %v536 = vpop.permute.xlu0 %535
        %537 = vrot.lane.b32.xlu0 %v520, 127
        %v538 = vpop.permute.xlu0 %537
        %539 = vrot.lane.b32.xlu0 %v521, 127
        %v540 = vpop.permute.xlu0 %539
        %541 = vrot.lane.b32.xlu0 %v522, 127
        %v542 = vpop.permute.xlu0 %541
        %543 = vrot.lane.b32.xlu0 %v523, 127
        %v544 = vpop.permute.xlu0 %543
        %545 = vrot.lane.b32.xlu0 %v524, 127
        %v546 = vpop.permute.xlu0 %545
        %547 = vrot.lane.b32.xlu0 %v525, 127
        %v548 = vpop.permute.xlu0 %547
        %549 = vrot.lane.b32.xlu0 %v526, 127
        %v550 = vpop.permute.xlu0 %549
        %vm551 = vcmask 1039360
        %v552 = vsel %vm551, %v536, %v538
        %v553 = vsel %vm551, %v538, %v540
        %v554 = vsel %vm551, %v540, %v542
        %v555 = vsel %vm551, %v542, %v544
        %v556 = vsel %vm551, %v544, %v546
        %v557 = vsel %vm551, %v546, %v548
        %v558 = vsel %vm551, %v548, %v550
        %567 = vrot.lane.b32.xlu0 %v519, 126
        %v568 = vpop.permute.xlu0 %567
        %569 = vrot.lane.b32.xlu0 %v520, 126
        %v570 = vpop.permute.xlu0 %569
        %571 = vrot.lane.b32.xlu0 %v521, 126
        %v572 = vpop.permute.xlu0 %571
        %573 = vrot.lane.b32.xlu0 %v522, 126
        %v574 = vpop.permute.xlu0 %573
        %575 = vrot.lane.b32.xlu0 %v523, 126
        %v576 = vpop.permute.xlu0 %575
        %577 = vrot.lane.b32.xlu0 %v524, 126
        %v578 = vpop.permute.xlu0 %577
        %579 = vrot.lane.b32.xlu0 %v525, 126
        %v580 = vpop.permute.xlu0 %579
        %581 = vrot.lane.b32.xlu0 %v526, 126
        %v582 = vpop.permute.xlu0 %581
        %vm583 = vcmask 1031168
        %v584 = vsel %vm583, %v568, %v570
        %v585 = vsel %vm583, %v570, %v572
        %v586 = vsel %vm583, %v572, %v574
        %v587 = vsel %vm583, %v574, %v576
        %v588 = vsel %vm583, %v576, %v578
        %v589 = vsel %vm583, %v578, %v580
        %v590 = vsel %vm583, %v580, %v582
        %v599 = vld [vmem:[%s1] sm:$0xff]
        %601 = vrot.lane.b32.xlu0 %v599, 104
        %v602 = vpop.permute.xlu0 %601
        %603 = vrot.lane.b32.xlu0 %v519, 96
        %v604 = vpop.permute.xlu0 %603
        %605 = vrot.lane.b32.xlu0 %v520, 96
        %v606 = vpop.permute.xlu0 %605
        %607 = vrot.lane.b32.xlu0 %v521, 96
        %v608 = vpop.permute.xlu0 %607
        %609 = vrot.lane.b32.xlu0 %v522, 96
        %v610 = vpop.permute.xlu0 %609
        %611 = vrot.lane.b32.xlu0 %v523, 96
        %v612 = vpop.permute.xlu0 %611
        %613 = vrot.lane.b32.xlu0 %v524, 96
        %v614 = vpop.permute.xlu0 %613
        %615 = vrot.lane.b32.xlu0 %v525, 96
        %v616 = vpop.permute.xlu0 %615
        %617 = vrot.lane.b32.xlu0 %v526, 96
        %v618 = vpop.permute.xlu0 %617
        %619 = vrot.lane.b32.xlu0 %v552, 96
        %v620 = vpop.permute.xlu0 %619
        %621 = vrot.lane.b32.xlu0 %v553, 96
        %v622 = vpop.permute.xlu0 %621
        %623 = vrot.lane.b32.xlu0 %v554, 96
        %v624 = vpop.permute.xlu0 %623
        %625 = vrot.lane.b32.xlu0 %v555, 96
        %v626 = vpop.permute.xlu0 %625
        %627 = vrot.lane.b32.xlu0 %v556, 96
        %v628 = vpop.permute.xlu0 %627
        %629 = vrot.lane.b32.xlu0 %v557, 96
        %v630 = vpop.permute.xlu0 %629
        %631 = vrot.lane.b32.xlu0 %v558, 96
        %v632 = vpop.permute.xlu0 %631
        %633 = vrot.lane.b32.xlu0 %v550, 96
        %v634 = vpop.permute.xlu0 %633
        %635 = vrot.lane.b32.xlu0 %v584, 96
        %v636 = vpop.permute.xlu0 %635
        %637 = vrot.lane.b32.xlu0 %v585, 96
        %v638 = vpop.permute.xlu0 %637
        %639 = vrot.lane.b32.xlu0 %v586, 96
        %v640 = vpop.permute.xlu0 %639
        %641 = vrot.lane.b32.xlu0 %v587, 96
        %v642 = vpop.permute.xlu0 %641
        %643 = vrot.lane.b32.xlu0 %v588, 96
        %v644 = vpop.permute.xlu0 %643
        %645 = vrot.lane.b32.xlu0 %v589, 96
        %v646 = vpop.permute.xlu0 %645
        %647 = vrot.lane.b32.xlu0 %v590, 96
        %v648 = vpop.permute.xlu0 %647
        %649 = vrot.lane.b32.xlu0 %v582, 96
        %v650 = vpop.permute.xlu0 %649
        %vm651 = vcmask 785408
        %v652 = vsel %vm651, %v604, %v606
        %v653 = vsel %vm651, %v606, %v608
        %v654 = vsel %vm651, %v608, %v610
        %v655 = vsel %vm651, %v610, %v612
        %v656 = vsel %vm651, %v612, %v614
        %v657 = vsel %vm651, %v614, %v616
        %v658 = vsel %vm651, %v616, %v618
        %v659 = vsel %vm651, %v620, %v622
        %v660 = vsel %vm651, %v622, %v624
        %v661 = vsel %vm651, %v624, %v626
        %v662 = vsel %vm651, %v626, %v628
        %v663 = vsel %vm651, %v628, %v630
        %v664 = vsel %vm651, %v630, %v632
        %v665 = vsel %vm651, %v632, %v634
        %v666 = vsel %vm651, %v636, %v638
        %v667 = vsel %vm651, %v638, %v640
        %v668 = vsel %vm651, %v640, %v642
        %v669 = vsel %vm651, %v642, %v644
        %v670 = vsel %vm651, %v644, %v646
        %v671 = vsel %vm651, %v646, %v648
        %v672 = vsel %vm651, %v648, %v650
        %vm697 = vcmask 195584
        %v698 = vsel %vm697, %v602, 0
        %700 = vmatprep.subr.mxu0 %v653
        %701 = vmatpush1.msra.mxu0 %v652
        %702 = vmatprep.subr.mxu0 %v660
        %703 = vmatpush1.msra.mxu0 %v659
        %704 = vmatprep.subr.mxu0 %v667
        %705 = vmatpush1.msra.mxu0 %v666
        %706 = vmatprep.subr.mxu0 0.0
        %707 = vmatpush1.msra.mxu0 0.0
        %708 = vmatprep.subr.mxu0 0.0
        %709 = vmatpush1.msra.mxu0 0.0
        %710 = vmatprep.subr.mxu0 0.0
        %711 = vmatpush1.msra.mxu0 0.0
        %712 = vmatprep.subr.mxu0 0.0
        %713 = vmatpush1.msra.mxu0 0.0
        %714 = vmatprep.subr.mxu0 0.0
        %715 = vmatpush1.msra.mxu0 0.0
        %716 = vmatprep.subr.mxu0 0.0
        %717 = vmatpush1.msra.mxu0 0.0
        %718 = vmatprep.subr.mxu0 0.0
        %719 = vmatpush1.msra.mxu0 0.0
        %720 = vmatprep.subr.mxu0 0.0
        %721 = vmatpush1.msra.mxu0 0.0
        %722 = vmatprep.subr.mxu0 0.0
        %723 = vmatpush1.msra.mxu0 0.0
        %724 = vmatprep.subr.mxu0 0.0
        %725 = vmatpush1.msra.mxu0 0.0
        %726 = vmatprep.subr.mxu0 0.0
        %727 = vmatpush1.msra.mxu0 0.0
        %728 = vmatprep.subr.mxu0 0.0
        %729 = vmatpush1.msra.mxu0 0.0
        %730 = vmatprep.subr.mxu0 0.0
        %731 = vmatpush1.msra.mxu0 0.0
        %732 = vmatprep.subr.mxu0 0.0
        %733 = vmatpush1.msra.mxu0 0.0
        %734 = vmatprep.subr.mxu0 0.0
        %735 = vmatpush1.msra.mxu0 0.0
        %736 = vmatprep.subr.mxu0 0.0
        %737 = vmatpush1.msra.mxu0 0.0
        %738 = vmatprep.subr.mxu0 0.0
        %739 = vmatpush1.msra.mxu0 0.0
        %740 = vmatprep.subr.mxu0 0.0
        %741 = vmatpush1.msra.mxu0 0.0
        %742 = vmatprep.subr.mxu0 0.0
        %743 = vmatpush1.msra.mxu0 0.0
        %744 = vmatprep.subr.mxu0 0.0
        %745 = vmatpush1.msra.mxu0 0.0
        %746 = vmatprep.subr.mxu0 0.0
        %747 = vmatpush1.msra.mxu0 0.0
        %748 = vmatprep.subr.mxu0 0.0
        %749 = vmatpush1.msra.mxu0 0.0
        %750 = vmatprep.subr.mxu0 0.0
        %751 = vmatpush1.msra.mxu0 0.0
        %752 = vmatprep.subr.mxu0 0.0
        %753 = vmatpush1.msra.mxu0 0.0
        %754 = vmatprep.subr.mxu0 0.0
        %755 = vmatpush1.msra.mxu0 0.0
        %756 = vmatprep.subr.mxu0 0.0
        %757 = vmatpush1.msra.mxu0 0.0
        %758 = vmatprep.subr.mxu0 0.0
        %759 = vmatpush1.msra.mxu0 0.0
        %760 = vmatprep.subr.mxu0 0.0
        %761 = vmatpush1.msra.mxu0 0.0
        %762 = vmatprep.subr.mxu0 0.0
        %763 = vmatpush1.msra.mxu0 0.0
        %764 = vmatprep.mubr.f32.mxu0 0.0
        %765 = vmatmul.mubr.f32.gmra.mrb[0].mxu0 %v698
        %v766 = vpop.f32.mrb[0].mxu0
        %v767 = vadd.f32 0.0, %v766
        %v768 = vpop.f32.mrb[0].mxu0
        %v769 = vadd.f32 0.0, %v768
        %770 = vdwg.mxu0
        %771 = vmatprep.subr.mxu0 %v655
        %772 = vmatpush1.msra.mxu0 %v654
        %773 = vmatprep.subr.mxu0 %v662
        %774 = vmatpush1.msra.mxu0 %v661
        %775 = vmatprep.subr.mxu0 %v669
        %776 = vmatpush1.msra.mxu0 %v668
        %777 = vmatprep.subr.mxu0 0.0
        %778 = vmatpush1.msra.mxu0 0.0
        %779 = vmatprep.subr.mxu0 0.0
        %780 = vmatpush1.msra.mxu0 0.0
        %781 = vmatprep.subr.mxu0 0.0
        %782 = vmatpush1.msra.mxu0 0.0
        %783 = vmatprep.subr.mxu0 0.0
        %784 = vmatpush1.msra.mxu0 0.0
        %785 = vmatprep.subr.mxu0 0.0
        %786 = vmatpush1.msra.mxu0 0.0
        %787 = vmatprep.subr.mxu0 0.0
        %788 = vmatpush1.msra.mxu0 0.0
        %789 = vmatprep.subr.mxu0 0.0
        %790 = vmatpush1.msra.mxu0 0.0
        %791 = vmatprep.subr.mxu0 0.0
        %792 = vmatpush1.msra.mxu0 0.0
        %793 = vmatprep.subr.mxu0 0.0
        %794 = vmatpush1.msra.mxu0 0.0
        %795 = vmatprep.subr.mxu0 0.0
        %796 = vmatpush1.msra.mxu0 0.0
        %797 = vmatprep.subr.mxu0 0.0
        %798 = vmatpush1.msra.mxu0 0.0
        %799 = vmatprep.subr.mxu0 0.0
        %800 = vmatpush1.msra.mxu0 0.0
        %801 = vmatprep.subr.mxu0 0.0
        %802 = vmatpush1.msra.mxu0 0.0
        %803 = vmatprep.subr.mxu0 0.0
        %804 = vmatpush1.msra.mxu0 0.0
        %805 = vmatprep.subr.mxu0 0.0
        %806 = vmatpush1.msra.mxu0 0.0
        %807 = vmatprep.subr.mxu0 0.0
        %808 = vmatpush1.msra.mxu0 0.0
        %809 = vmatprep.subr.mxu0 0.0
        %810 = vmatpush1.msra.mxu0 0.0
        %811 = vmatprep.subr.mxu0 0.0
        %812 = vmatpush1.msra.mxu0 0.0
        %813 = vmatprep.subr.mxu0 0.0
        %814 = vmatpush1.msra.mxu0 0.0
        %815 = vmatprep.subr.mxu0 0.0
        %816 = vmatpush1.msra.mxu0 0.0
        %817 = vmatprep.subr.mxu0 0.0
        %818 = vmatpush1.msra.mxu0 0.0
        %819 = vmatprep.subr.mxu0 0.0
        %820 = vmatpush1.msra.mxu0 0.0
        %821 = vmatprep.subr.mxu0 0.0
        %822 = vmatpush1.msra.mxu0 0.0
        %823 = vmatprep.subr.mxu0 0.0
        %824 = vmatpush1.msra.mxu0 0.0
        %825 = vmatprep.subr.mxu0 0.0
        %826 = vmatpush1.msra.mxu0 0.0
        %827 = vmatprep.subr.mxu0 0.0
        %828 = vmatpush1.msra.mxu0 0.0
        %829 = vmatprep.subr.mxu0 0.0
        %830 = vmatpush1.msra.mxu0 0.0
        %831 = vmatprep.subr.mxu0 0.0
        %832 = vmatpush1.msra.mxu0 0.0
        %833 = vmatprep.subr.mxu0 0.0
        %834 = vmatpush1.msra.mxu0 0.0
        %835 = vmatprep.mubr.f32.mxu0 0.0
        %836 = vmatmul.mubr.f32.gmra.mrb[0].mxu0 %v698
        %v837 = vpop.f32.mrb[0].mxu0
        %v838 = vadd.f32 0.0, %v837
        %v839 = vpop.f32.mrb[0].mxu0
        %v840 = vadd.f32 0.0, %v839
        %841 = vdwg.mxu0
        %842 = vmatprep.subr.mxu0 %v657
        %843 = vmatpush1.msra.mxu0 %v656
        %844 = vmatprep.subr.mxu0 %v664
        %845 = vmatpush1.msra.mxu0 %v663
        %846 = vmatprep.subr.mxu0 %v671
        %847 = vmatpush1.msra.mxu0 %v670
        %848 = vmatprep.subr.mxu0 0.0
        %849 = vmatpush1.msra.mxu0 0.0
        %850 = vmatprep.subr.mxu0 0.0
        %851 = vmatpush1.msra.mxu0 0.0
        %852 = vmatprep.subr.mxu0 0.0
        %853 = vmatpush1.msra.mxu0 0.0
        %854 = vmatprep.subr.mxu0 0.0
        %855 = vmatpush1.msra.mxu0 0.0
        %856 = vmatprep.subr.mxu0 0.0
        %857 = vmatpush1.msra.mxu0 0.0
        %858 = vmatprep.subr.mxu0 0.0
        %859 = vmatpush1.msra.mxu0 0.0
        %860 = vmatprep.subr.mxu0 0.0
        %861 = vmatpush1.msra.mxu0 0.0
        %862 = vmatprep.subr.mxu0 0.0
        %863 = vmatpush1.msra.mxu0 0.0
        %864 = vmatprep.subr.mxu0 0.0
        %865 = vmatpush1.msra.mxu0 0.0
        %866 = vmatprep.subr.mxu0 0.0
        %867 = vmatpush1.msra.mxu0 0.0
        %868 = vmatprep.subr.mxu0 0.0
        %869 = vmatpush1.msra.mxu0 0.0
        %870 = vmatprep.subr.mxu0 0.0
        %871 = vmatpush1.msra.mxu0 0.0
        %872 = vmatprep.subr.mxu0 0.0
        %873 = vmatpush1.msra.mxu0 0.0
        %874 = vmatprep.subr.mxu0 0.0
        %875 = vmatpush1.msra.mxu0 0.0
        %876 = vmatprep.subr.mxu0 0.0
        %877 = vmatpush1.msra.mxu0 0.0
        %878 = vmatprep.subr.mxu0 0.0
        %879 = vmatpush1.msra.mxu0 0.0
        %880 = vmatprep.subr.mxu0 0.0
        %881 = vmatpush1.msra.mxu0 0.0
        %882 = vmatprep.subr.mxu0 0.0
        %883 = vmatpush1.msra.mxu0 0.0
        %884 = vmatprep.subr.mxu0 0.0
        %885 = vmatpush1.msra.mxu0 0.0
        %886 = vmatprep.subr.mxu0 0.0
        %887 = vmatpush1.msra.mxu0 0.0
        %888 = vmatprep.subr.mxu0 0.0
        %889 = vmatpush1.msra.mxu0 0.0
        %890 = vmatprep.subr.mxu0 0.0
        %891 = vmatpush1.msra.mxu0 0.0
        %892 = vmatprep.subr.mxu0 0.0
        %893 = vmatpush1.msra.mxu0 0.0
        %894 = vmatprep.subr.mxu0 0.0
        %895 = vmatpush1.msra.mxu0 0.0
        %896 = vmatprep.subr.mxu0 0.0
        %897 = vmatpush1.msra.mxu0 0.0
        %898 = vmatprep.subr.mxu0 0.0
        %899 = vmatpush1.msra.mxu0 0.0
        %900 = vmatprep.subr.mxu0 0.0
        %901 = vmatpush1.msra.mxu0 0.0
        %902 = vmatprep.subr.mxu0 0.0
        %903 = vmatpush1.msra.mxu0 0.0
        %904 = vmatprep.subr.mxu0 0.0
        %905 = vmatpush1.msra.mxu0 0.0
        %906 = vmatprep.mubr.f32.mxu0 0.0
        %907 = vmatmul.mubr.f32.gmra.mrb[0].mxu0 %v698
        %v908 = vpop.f32.mrb[0].mxu0
        %v909 = vadd.f32 0.0, %v908
        %v910 = vpop.f32.mrb[0].mxu0
        %v911 = vadd.f32 0.0, %v910
        %912 = vdwg.mxu0
        %913 = vmatprep.subr.mxu0 %v618
        %914 = vmatpush1.msra.mxu0 %v658
        %915 = vmatprep.subr.mxu0 %v634
        %916 = vmatpush1.msra.mxu0 %v665
        %917 = vmatprep.subr.mxu0 %v650
        %918 = vmatpush1.msra.mxu0 %v672
        %919 = vmatprep.subr.mxu0 0.0
        %920 = vmatpush1.msra.mxu0 0.0
        %921 = vmatprep.subr.mxu0 0.0
        %922 = vmatpush1.msra.mxu0 0.0
        %923 = vmatprep.subr.mxu0 0.0
        %924 = vmatpush1.msra.mxu0 0.0
        %925 = vmatprep.subr.mxu0 0.0
        %926 = vmatpush1.msra.mxu0 0.0
        %927 = vmatprep.subr.mxu0 0.0
        %928 = vmatpush1.msra.mxu0 0.0
        %929 = vmatprep.subr.mxu0 0.0
        %930 = vmatpush1.msra.mxu0 0.0
        %931 = vmatprep.subr.mxu0 0.0
        %932 = vmatpush1.msra.mxu0 0.0
        %933 = vmatprep.subr.mxu0 0.0
        %934 = vmatpush1.msra.mxu0 0.0
        %935 = vmatprep.subr.mxu0 0.0
        %936 = vmatpush1.msra.mxu0 0.0
        %937 = vmatprep.subr.mxu0 0.0
        %938 = vmatpush1.msra.mxu0 0.0
        %939 = vmatprep.subr.mxu0 0.0
        %940 = vmatpush1.msra.mxu0 0.0
        %941 = vmatprep.subr.mxu0 0.0
        %942 = vmatpush1.msra.mxu0 0.0
        %943 = vmatprep.subr.mxu0 0.0
        %944 = vmatpush1.msra.mxu0 0.0
        %945 = vmatprep.subr.mxu0 0.0
        %946 = vmatpush1.msra.mxu0 0.0
        %947 = vmatprep.subr.mxu0 0.0
        %948 = vmatpush1.msra.mxu0 0.0
        %949 = vmatprep.subr.mxu0 0.0
        %950 = vmatpush1.msra.mxu0 0.0
        %951 = vmatprep.subr.mxu0 0.0
        %952 = vmatpush1.msra.mxu0 0.0
        %953 = vmatprep.subr.mxu0 0.0
        %954 = vmatpush1.msra.mxu0 0.0
        %955 = vmatprep.subr.mxu0 0.0
        %956 = vmatpush1.msra.mxu0 0.0
        %957 = vmatprep.subr.mxu0 0.0
        %958 = vmatpush1.msra.mxu0 0.0
        %959 = vmatprep.subr.mxu0 0.0
        %960 = vmatpush1.msra.mxu0 0.0
        %961 = vmatprep.subr.mxu0 0.0
        %962 = vmatpush1.msra.mxu0 0.0
        %963 = vmatprep.subr.mxu0 0.0
        %964 = vmatpush1.msra.mxu0 0.0
        %965 = vmatprep.subr.mxu0 0.0
        %966 = vmatpush1.msra.mxu0 0.0
        %967 = vmatprep.subr.mxu0 0.0
        %968 = vmatpush1.msra.mxu0 0.0
        %969 = vmatprep.subr.mxu0 0.0
        %970 = vmatpush1.msra.mxu0 0.0
        %971 = vmatprep.subr.mxu0 0.0
        %972 = vmatpush1.msra.mxu0 0.0
        %973 = vmatprep.subr.mxu0 0.0
        %974 = vmatpush1.msra.mxu0 0.0
        %975 = vmatprep.subr.mxu0 0.0
        %976 = vmatpush1.msra.mxu0 0.0
        %977 = vmatprep.mubr.f32.mxu0 0.0
        %978 = vmatmul.mubr.f32.gmra.mrb[0].mxu0 %v698
        %v979 = vpop.f32.mrb[0].mxu0
        %v980 = vadd.f32 0.0, %v979
        %v981 = vpop.f32.mrb[0].mxu0
        %v982 = vadd.f32 0.0, %v981
        %983 = vdwg.mxu0
        %v984 = vsel %vm697, %v599, 0
        %986 = vmatprep.subr.mxu0 %v520
        %987 = vmatpush1.msra.mxu0 %v519
        %988 = vmatprep.subr.mxu0 %v553
        %989 = vmatpush1.msra.mxu0 %v552
        %990 = vmatprep.subr.mxu0 %v585
        %991 = vmatpush1.msra.mxu0 %v584
        %992 = vmatprep.subr.mxu0 0.0
        %993 = vmatpush1.msra.mxu0 0.0
        %994 = vmatprep.subr.mxu0 0.0
        %995 = vmatpush1.msra.mxu0 0.0
        %996 = vmatprep.subr.mxu0 0.0
        %997 = vmatpush1.msra.mxu0 0.0
        %998 = vmatprep.subr.mxu0 0.0
        %999 = vmatpush1.msra.mxu0 0.0
        %1000 = vmatprep.subr.mxu0 0.0
        %1001 = vmatpush1.msra.mxu0 0.0
        %1002 = vmatprep.subr.mxu0 0.0
        %1003 = vmatpush1.msra.mxu0 0.0
        %1004 = vmatprep.subr.mxu0 0.0
        %1005 = vmatpush1.msra.mxu0 0.0
        %1006 = vmatprep.subr.mxu0 0.0
        %1007 = vmatpush1.msra.mxu0 0.0
        %1008 = vmatprep.subr.mxu0 0.0
        %1009 = vmatpush1.msra.mxu0 0.0
        %1010 = vmatprep.subr.mxu0 0.0
        %1011 = vmatpush1.msra.mxu0 0.0
        %1012 = vmatprep.subr.mxu0 0.0
        %1013 = vmatpush1.msra.mxu0 0.0
        %1014 = vmatprep.subr.mxu0 0.0
        %1015 = vmatpush1.msra.mxu0 0.0
        %1016 = vmatprep.subr.mxu0 0.0
        %1017 = vmatpush1.msra.mxu0 0.0
        %1018 = vmatprep.subr.mxu0 0.0
        %1019 = vmatpush1.msra.mxu0 0.0
        %1020 = vmatprep.subr.mxu0 0.0
        %1021 = vmatpush1.msra.mxu0 0.0
        %1022 = vmatprep.subr.mxu0 0.0
        %1023 = vmatpush1.msra.mxu0 0.0
        %1024 = vmatprep.subr.mxu0 0.0
        %1025 = vmatpush1.msra.mxu0 0.0
        %1026 = vmatprep.subr.mxu0 0.0
        %1027 = vmatpush1.msra.mxu0 0.0
        %1028 = vmatprep.subr.mxu0 0.0
        %1029 = vmatpush1.msra.mxu0 0.0
        %1030 = vmatprep.subr.mxu0 0.0
        %1031 = vmatpush1.msra.mxu0 0.0
        %1032 = vmatprep.subr.mxu0 0.0
        %1033 = vmatpush1.msra.mxu0 0.0
        %1034 = vmatprep.subr.mxu0 0.0
        %1035 = vmatpush1.msra.mxu0 0.0
        %1036 = vmatprep.subr.mxu0 0.0
        %1037 = vmatpush1.msra.mxu0 0.0
        %1038 = vmatprep.subr.mxu0 0.0
        %1039 = vmatpush1.msra.mxu0 0.0
        %1040 = vmatprep.subr.mxu0 0.0
        %1041 = vmatpush1.msra.mxu0 0.0
        %1042 = vmatprep.subr.mxu0 0.0
        %1043 = vmatpush1.msra.mxu0 0.0
        %1044 = vmatprep.subr.mxu0 0.0
        %1045 = vmatpush1.msra.mxu0 0.0
        %1046 = vmatprep.subr.mxu0 0.0
        %1047 = vmatpush1.msra.mxu0 0.0
        %1048 = vmatprep.subr.mxu0 0.0
        %1049 = vmatpush1.msra.mxu0 0.0
        %1050 = vmatprep.mubr.f32.mxu0 0.0
        %1051 = vmatmul.mubr.f32.gmra.mrb[0].mxu0 %v984
        %v1052 = vpop.f32.mrb[0].mxu0
        %v1053 = vadd.f32 %v767, %v1052
        %v1054 = vpop.f32.mrb[0].mxu0
        %v1055 = vadd.f32 %v769, %v1054
        %1056 = vdwg.mxu0
        %1057 = vmatprep.subr.mxu0 %v522
        %1058 = vmatpush1.msra.mxu0 %v521
        %1059 = vmatprep.subr.mxu0 %v555
        %1060 = vmatpush1.msra.mxu0 %v554
        %1061 = vmatprep.subr.mxu0 %v587
        %1062 = vmatpush1.msra.mxu0 %v586
        %1063 = vmatprep.subr.mxu0 0.0
        %1064 = vmatpush1.msra.mxu0 0.0
        %1065 = vmatprep.subr.mxu0 0.0
        %1066 = vmatpush1.msra.mxu0 0.0
        %1067 = vmatprep.subr.mxu0 0.0
        %1068 = vmatpush1.msra.mxu0 0.0
        %1069 = vmatprep.subr.mxu0 0.0
        %1070 = vmatpush1.msra.mxu0 0.0
        %1071 = vmatprep.subr.mxu0 0.0
        %1072 = vmatpush1.msra.mxu0 0.0
        %1073 = vmatprep.subr.mxu0 0.0
        %1074 = vmatpush1.msra.mxu0 0.0
        %1075 = vmatprep.subr.mxu0 0.0
        %1076 = vmatpush1.msra.mxu0 0.0
        %1077 = vmatprep.subr.mxu0 0.0
        %1078 = vmatpush1.msra.mxu0 0.0
        %1079 = vmatprep.subr.mxu0 0.0
        %1080 = vmatpush1.msra.mxu0 0.0
        %1081 = vmatprep.subr.mxu0 0.0
        %1082 = vmatpush1.msra.mxu0 0.0
        %1083 = vmatprep.subr.mxu0 0.0
        %1084 = vmatpush1.msra.mxu0 0.0
        %1085 = vmatprep.subr.mxu0 0.0
        %1086 = vmatpush1.msra.mxu0 0.0
        %1087 = vmatprep.subr.mxu0 0.0
        %1088 = vmatpush1.msra.mxu0 0.0
        %1089 = vmatprep.subr.mxu0 0.0
        %1090 = vmatpush1.msra.mxu0 0.0
        %1091 = vmatprep.subr.mxu0 0.0
        %1092 = vmatpush1.msra.mxu0 0.0
        %1093 = vmatprep.subr.mxu0 0.0
        %1094 = vmatpush1.msra.mxu0 0.0
        %1095 = vmatprep.subr.mxu0 0.0
        %1096 = vmatpush1.msra.mxu0 0.0
        %1097 = vmatprep.subr.mxu0 0.0
        %1098 = vmatpush1.msra.mxu0 0.0
        %1099 = vmatprep.subr.mxu0 0.0
        %1100 = vmatpush1.msra.mxu0 0.0
        %1101 = vmatprep.subr.mxu0 0.0
        %1102 = vmatpush1.msra.mxu0 0.0
        %1103 = vmatprep.subr.mxu0 0.0
        %1104 = vmatpush1.msra.mxu0 0.0
        %1105 = vmatprep.subr.mxu0 0.0
        %1106 = vmatpush1.msra.mxu0 0.0
        %1107 = vmatprep.subr.mxu0 0.0
        %1108 = vmatpush1.msra.mxu0 0.0
        %1109 = vmatprep.subr.mxu0 0.0
        %1110 = vmatpush1.msra.mxu0 0.0
        %1111 = vmatprep.subr.mxu0 0.0
        %1112 = vmatpush1.msra.mxu0 0.0
        %1113 = vmatprep.subr.mxu0 0.0
        %1114 = vmatpush1.msra.mxu0 0.0
        %1115 = vmatprep.subr.mxu0 0.0
        %1116 = vmatpush1.msra.mxu0 0.0
        %1117 = vmatprep.subr.mxu0 0.0
        %1118 = vmatpush1.msra.mxu0 0.0
        %1119 = vmatprep.subr.mxu0 0.0
        %1120 = vmatpush1.msra.mxu0 0.0
        %1121 = vmatprep.mubr.f32.mxu0 0.0
        %1122 = vmatmul.mubr.f32.gmra.mrb[0].mxu0 %v984
        %v1123 = vpop.f32.mrb[0].mxu0
        %v1124 = vadd.f32 %v838, %v1123
        %v1125 = vpop.f32.mrb[0].mxu0
        %v1126 = vadd.f32 %v840, %v1125
        %1127 = vdwg.mxu0
        %1128 = vmatprep.subr.mxu0 %v524
        %1129 = vmatpush1.msra.mxu0 %v523
        %1130 = vmatprep.subr.mxu0 %v557
        %1131 = vmatpush1.msra.mxu0 %v556
        %1132 = vmatprep.subr.mxu0 %v589
        %1133 = vmatpush1.msra.mxu0 %v588
        %1134 = vmatprep.subr.mxu0 0.0
        %1135 = vmatpush1.msra.mxu0 0.0
        %1136 = vmatprep.subr.mxu0 0.0
        %1137 = vmatpush1.msra.mxu0 0.0
        %1138 = vmatprep.subr.mxu0 0.0
        %1139 = vmatpush1.msra.mxu0 0.0
        %1140 = vmatprep.subr.mxu0 0.0
        %1141 = vmatpush1.msra.mxu0 0.0
        %1142 = vmatprep.subr.mxu0 0.0
        %1143 = vmatpush1.msra.mxu0 0.0
        %1144 = vmatprep.subr.mxu0 0.0
        %1145 = vmatpush1.msra.mxu0 0.0
        %1146 = vmatprep.subr.mxu0 0.0
        %1147 = vmatpush1.msra.mxu0 0.0
        %1148 = vmatprep.subr.mxu0 0.0
        %1149 = vmatpush1.msra.mxu0 0.0
        %1150 = vmatprep.subr.mxu0 0.0
        %1151 = vmatpush1.msra.mxu0 0.0
        %1152 = vmatprep.subr.mxu0 0.0
        %1153 = vmatpush1.msra.mxu0 0.0
        %1154 = vmatprep.subr.mxu0 0.0
        %1155 = vmatpush1.msra.mxu0 0.0
        %1156 = vmatprep.subr.mxu0 0.0
        %1157 = vmatpush1.msra.mxu0 0.0
        %1158 = vmatprep.subr.mxu0 0.0
        %1159 = vmatpush1.msra.mxu0 0.0
        %1160 = vmatprep.subr.mxu0 0.0
        %1161 = vmatpush1.msra.mxu0 0.0
        %1162 = vmatprep.subr.mxu0 0.0
        %1163 = vmatpush1.msra.mxu0 0.0
        %1164 = vmatprep.subr.mxu0 0.0
        %1165 = vmatpush1.msra.mxu0 0.0
        %1166 = vmatprep.subr.mxu0 0.0
        %1167 = vmatpush1.msra.mxu0 0.0
        %1168 = vmatprep.subr.mxu0 0.0
        %1169 = vmatpush1.msra.mxu0 0.0
        %1170 = vmatprep.subr.mxu0 0.0
        %1171 = vmatpush1.msra.mxu0 0.0
        %1172 = vmatprep.subr.mxu0 0.0
        %1173 = vmatpush1.msra.mxu0 0.0
        %1174 = vmatprep.subr.mxu0 0.0
        %1175 = vmatpush1.msra.mxu0 0.0
        %1176 = vmatprep.subr.mxu0 0.0
        %1177 = vmatpush1.msra.mxu0 0.0
        %1178 = vmatprep.subr.mxu0 0.0
        %1179 = vmatpush1.msra.mxu0 0.0
        %1180 = vmatprep.subr.mxu0 0.0
        %1181 = vmatpush1.msra.mxu0 0.0
        %1182 = vmatprep.subr.mxu0 0.0
        %1183 = vmatpush1.msra.mxu0 0.0
        %1184 = vmatprep.subr.mxu0 0.0
        %1185 = vmatpush1.msra.mxu0 0.0
        %1186 = vmatprep.subr.mxu0 0.0
        %1187 = vmatpush1.msra.mxu0 0.0
        %1188 = vmatprep.subr.mxu0 0.0
        %1189 = vmatpush1.msra.mxu0 0.0
        %1190 = vmatprep.subr.mxu0 0.0
        %1191 = vmatpush1.msra.mxu0 0.0
        %1192 = vmatprep.mubr.f32.mxu0 0.0
        %1193 = vmatmul.mubr.f32.gmra.mrb[0].mxu0 %v984
        %v1194 = vpop.f32.mrb[0].mxu0
        %v1195 = vadd.f32 %v909, %v1194
        %v1196 = vpop.f32.mrb[0].mxu0
        %v1197 = vadd.f32 %v911, %v1196
        %1198 = vdwg.mxu0
        %1199 = vmatprep.subr.mxu0 %v526
        %1200 = vmatpush1.msra.mxu0 %v525
        %1201 = vmatprep.subr.mxu0 %v550
        %1202 = vmatpush1.msra.mxu0 %v558
        %1203 = vmatprep.subr.mxu0 %v582
        %1204 = vmatpush1.msra.mxu0 %v590
        %1205 = vmatprep.subr.mxu0 0.0
        %1206 = vmatpush1.msra.mxu0 0.0
        %1207 = vmatprep.subr.mxu0 0.0
        %1208 = vmatpush1.msra.mxu0 0.0
        %1209 = vmatprep.subr.mxu0 0.0
        %1210 = vmatpush1.msra.mxu0 0.0
        %1211 = vmatprep.subr.mxu0 0.0
        %1212 = vmatpush1.msra.mxu0 0.0
        %1213 = vmatprep.subr.mxu0 0.0
        %1214 = vmatpush1.msra.mxu0 0.0
        %1215 = vmatprep.subr.mxu0 0.0
        %1216 = vmatpush1.msra.mxu0 0.0
        %1217 = vmatprep.subr.mxu0 0.0
        %1218 = vmatpush1.msra.mxu0 0.0
        %1219 = vmatprep.subr.mxu0 0.0
        %1220 = vmatpush1.msra.mxu0 0.0
        %1221 = vmatprep.subr.mxu0 0.0
        %1222 = vmatpush1.msra.mxu0 0.0
        %1223 = vmatprep.subr.mxu0 0.0
        %1224 = vmatpush1.msra.mxu0 0.0
        %1225 = vmatprep.subr.mxu0 0.0
        %1226 = vmatpush1.msra.mxu0 0.0
        %1227 = vmatprep.subr.mxu0 0.0
        %1228 = vmatpush1.msra.mxu0 0.0
        %1229 = vmatprep.subr.mxu0 0.0
        %1230 = vmatpush1.msra.mxu0 0.0
        %1231 = vmatprep.subr.mxu0 0.0
        %1232 = vmatpush1.msra.mxu0 0.0
        %1233 = vmatprep.subr.mxu0 0.0
        %1234 = vmatpush1.msra.mxu0 0.0
        %1235 = vmatprep.subr.mxu0 0.0
        %1236 = vmatpush1.msra.mxu0 0.0
        %1237 = vmatprep.subr.mxu0 0.0
        %1238 = vmatpush1.msra.mxu0 0.0
        %1239 = vmatprep.subr.mxu0 0.0
        %1240 = vmatpush1.msra.mxu0 0.0
        %1241 = vmatprep.subr.mxu0 0.0
        %1242 = vmatpush1.msra.mxu0 0.0
        %1243 = vmatprep.subr.mxu0 0.0
        %1244 = vmatpush1.msra.mxu0 0.0
        %1245 = vmatprep.subr.mxu0 0.0
        %1246 = vmatpush1.msra.mxu0 0.0
        %1247 = vmatprep.subr.mxu0 0.0
        %1248 = vmatpush1.msra.mxu0 0.0
        %1249 = vmatprep.subr.mxu0 0.0
        %1250 = vmatpush1.msra.mxu0 0.0
        %1251 = vmatprep.subr.mxu0 0.0
        %1252 = vmatpush1.msra.mxu0 0.0
        %1253 = vmatprep.subr.mxu0 0.0
        %1254 = vmatpush1.msra.mxu0 0.0
        %1255 = vmatprep.subr.mxu0 0.0
        %1256 = vmatpush1.msra.mxu0 0.0
        %1257 = vmatprep.subr.mxu0 0.0
        %1258 = vmatpush1.msra.mxu0 0.0
        %1259 = vmatprep.subr.mxu0 0.0
        %1260 = vmatpush1.msra.mxu0 0.0
        %1261 = vmatprep.subr.mxu0 0.0
        %1262 = vmatpush1.msra.mxu0 0.0
        %1263 = vmatprep.mubr.f32.mxu0 0.0
        %1264 = vmatmul.mubr.f32.gmra.mrb[0].mxu0 %v984
        %v1265 = vpop.f32.mrb[0].mxu0
        %v1266 = vadd.f32 %v980, %v1265
        %v1267 = vpop.f32.mrb[0].mxu0
        %v1268 = vadd.f32 %v982, %v1267
        %1269 = vdwg.mxu0
        %1270 = vrot.lane.b32.xlu0 %v599, 80
        %v1271 = vpop.permute.xlu0 %1270
        %1272 = vrot.lane.b32.xlu0 %v519, 64
        %v1273 = vpop.permute.xlu0 %1272
        %1274 = vrot.lane.b32.xlu0 %v520, 64
        %v1275 = vpop.permute.xlu0 %1274
        %1276 = vrot.lane.b32.xlu0 %v521, 64
        %v1277 = vpop.permute.xlu0 %1276
        %1278 = vrot.lane.b32.xlu0 %v522, 64
        %v1279 = vpop.permute.xlu0 %1278
        %1280 = vrot.lane.b32.xlu0 %v523, 64
        %v1281 = vpop.permute.xlu0 %1280
        %1282 = vrot.lane.b32.xlu0 %v524, 64
        %v1283 = vpop.permute.xlu0 %1282
        %1284 = vrot.lane.b32.xlu0 %v525, 64
        %v1285 = vpop.permute.xlu0 %1284
        %1286 = vrot.lane.b32.xlu0 %v526, 64
        %v1287 = vpop.permute.xlu0 %1286
        %1288 = vrot.lane.b32.xlu0 %v552, 64
        %v1289 = vpop.permute.xlu0 %1288
        %1290 = vrot.lane.b32.xlu0 %v553, 64
        %v1291 = vpop.permute.xlu0 %1290
        %1292 = vrot.lane.b32.xlu0 %v554, 64
        %v1293 = vpop.permute.xlu0 %1292
        %1294 = vrot.lane.b32.xlu0 %v555, 64
        %v1295 = vpop.permute.xlu0 %1294
        %1296 = vrot.lane.b32.xlu0 %v556, 64
        %v1297 = vpop.permute.xlu0 %1296
        %1298 = vrot.lane.b32.xlu0 %v557, 64
        %v1299 = vpop.permute.xlu0 %1298
        %1300 = vrot.lane.b32.xlu0 %v558, 64
        %v1301 = vpop.permute.xlu0 %1300
        %1302 = vrot.lane.b32.xlu0 %v550, 64
        %v1303 = vpop.permute.xlu0 %1302
        %1304 = vrot.lane.b32.xlu0 %v584, 64
        %v1305 = vpop.permute.xlu0 %1304
        %1306 = vrot.lane.b32.xlu0 %v585, 64
        %v1307 = vpop.permute.xlu0 %1306
        %1308 = vrot.lane.b32.xlu0 %v586, 64
        %v1309 = vpop.permute.xlu0 %1308
        %1310 = vrot.lane.b32.xlu0 %v587, 64
        %v1311 = vpop.permute.xlu0 %1310
        %1312 = vrot.lane.b32.xlu0 %v588, 64
        %v1313 = vpop.permute.xlu0 %1312
        %1314 = vrot.lane.b32.xlu0 %v589, 64
        %v1315 = vpop.permute.xlu0 %1314
        %1316 = vrot.lane.b32.xlu0 %v590, 64
        %v1317 = vpop.permute.xlu0 %1316
        %1318 = vrot.lane.b32.xlu0 %v582, 64
        %v1319 = vpop.permute.xlu0 %1318
        %vm1320 = vcmask 523264
        %v1321 = vsel %vm1320, %v1273, %v1275
        %v1322 = vsel %vm1320, %v1275, %v1277
        %v1323 = vsel %vm1320, %v1277, %v1279
        %v1324 = vsel %vm1320, %v1279, %v1281
        %v1325 = vsel %vm1320, %v1281, %v1283
        %v1326 = vsel %vm1320, %v1283, %v1285
        %v1327 = vsel %vm1320, %v1285, %v1287
        %v1328 = vsel %vm1320, %v1289, %v1291
        %v1329 = vsel %vm1320, %v1291, %v1293
        %v1330 = vsel %vm1320, %v1293, %v1295
        %v1331 = vsel %vm1320, %v1295, %v1297
        %v1332 = vsel %vm1320, %v1297, %v1299
        %v1333 = vsel %vm1320, %v1299, %v1301
        %v1334 = vsel %vm1320, %v1301, %v1303
        %v1335 = vsel %vm1320, %v1305, %v1307
        %v1336 = vsel %vm1320, %v1307, %v1309
        %v1337 = vsel %vm1320, %v1309, %v1311
        %v1338 = vsel %vm1320, %v1311, %v1313
        %v1339 = vsel %vm1320, %v1313, %v1315
        %v1340 = vsel %vm1320, %v1315, %v1317
        %v1341 = vsel %vm1320, %v1317, %v1319
        %v1366 = vsel %vm697, %v1271, 0
        %1368 = vmatprep.subr.mxu0 %v1322
        %1369 = vmatpush1.msra.mxu0 %v1321
        %1370 = vmatprep.subr.mxu0 %v1329
        %1371 = vmatpush1.msra.mxu0 %v1328
        %1372 = vmatprep.subr.mxu0 %v1336
        %1373 = vmatpush1.msra.mxu0 %v1335
        %1374 = vmatprep.subr.mxu0 0.0
        %1375 = vmatpush1.msra.mxu0 0.0
        %1376 = vmatprep.subr.mxu0 0.0
        %1377 = vmatpush1.msra.mxu0 0.0
        %1378 = vmatprep.subr.mxu0 0.0
        %1379 = vmatpush1.msra.mxu0 0.0
        %1380 = vmatprep.subr.mxu0 0.0
        %1381 = vmatpush1.msra.mxu0 0.0
        %1382 = vmatprep.subr.mxu0 0.0
        %1383 = vmatpush1.msra.mxu0 0.0
        %1384 = vmatprep.subr.mxu0 0.0
        %1385 = vmatpush1.msra.mxu0 0.0
        %1386 = vmatprep.subr.mxu0 0.0
        %1387 = vmatpush1.msra.mxu0 0.0
        %1388 = vmatprep.subr.mxu0 0.0
        %1389 = vmatpush1.msra.mxu0 0.0
        %1390 = vmatprep.subr.mxu0 0.0
        %1391 = vmatpush1.msra.mxu0 0.0
        %1392 = vmatprep.subr.mxu0 0.0
        %1393 = vmatpush1.msra.mxu0 0.0
        %1394 = vmatprep.subr.mxu0 0.0
        %1395 = vmatpush1.msra.mxu0 0.0
        %1396 = vmatprep.subr.mxu0 0.0
        %1397 = vmatpush1.msra.mxu0 0.0
        %1398 = vmatprep.subr.mxu0 0.0
        %1399 = vmatpush1.msra.mxu0 0.0
        %1400 = vmatprep.subr.mxu0 0.0
        %1401 = vmatpush1.msra.mxu0 0.0
        %1402 = vmatprep.subr.mxu0 0.0
        %1403 = vmatpush1.msra.mxu0 0.0
        %1404 = vmatprep.subr.mxu0 0.0
        %1405 = vmatpush1.msra.mxu0 0.0
        %1406 = vmatprep.subr.mxu0 0.0
        %1407 = vmatpush1.msra.mxu0 0.0
        %1408 = vmatprep.subr.mxu0 0.0
        %1409 = vmatpush1.msra.mxu0 0.0
        %1410 = vmatprep.subr.mxu0 0.0
        %1411 = vmatpush1.msra.mxu0 0.0
        %1412 = vmatprep.subr.mxu0 0.0
        %1413 = vmatpush1.msra.mxu0 0.0
        %1414 = vmatprep.subr.mxu0 0.0
        %1415 = vmatpush1.msra.mxu0 0.0
        %1416 = vmatprep.subr.mxu0 0.0
        %1417 = vmatpush1.msra.mxu0 0.0
        %1418 = vmatprep.subr.mxu0 0.0
        %1419 = vmatpush1.msra.mxu0 0.0
        %1420 = vmatprep.subr.mxu0 0.0
        %1421 = vmatpush1.msra.mxu0 0.0
        %1422 = vmatprep.subr.mxu0 0.0
        %1423 = vmatpush1.msra.mxu0 0.0
        %1424 = vmatprep.subr.mxu0 0.0
        %1425 = vmatpush1.msra.mxu0 0.0
        %1426 = vmatprep.subr.mxu0 0.0
        %1427 = vmatpush1.msra.mxu0 0.0
        %1428 = vmatprep.subr.mxu0 0.0
        %1429 = vmatpush1.msra.mxu0 0.0
        %1430 = vmatprep.subr.mxu0 0.0
        %1431 = vmatpush1.msra.mxu0 0.0
        %1432 = vmatprep.mubr.f32.mxu0 0.0
        %1433 = vmatmul.mubr.f32.gmra.mrb[0].mxu0 %v1366
        %v1434 = vpop.f32.mrb[0].mxu0
        %v1435 = vadd.f32 0.0, %v1434
        %v1436 = vpop.f32.mrb[0].mxu0
        %v1437 = vadd.f32 0.0, %v1436
        %1438 = vdwg.mxu0
        %1439 = vmatprep.subr.mxu0 %v1324
        %1440 = vmatpush1.msra.mxu0 %v1323
        %1441 = vmatprep.subr.mxu0 %v1331
        %1442 = vmatpush1.msra.mxu0 %v1330
        %1443 = vmatprep.subr.mxu0 %v1338
        %1444 = vmatpush1.msra.mxu0 %v1337
        %1445 = vmatprep.subr.mxu0 0.0
        %1446 = vmatpush1.msra.mxu0 0.0
        %1447 = vmatprep.subr.mxu0 0.0
        %1448 = vmatpush1.msra.mxu0 0.0
        %1449 = vmatprep.subr.mxu0 0.0
        %1450 = vmatpush1.msra.mxu0 0.0
        %1451 = vmatprep.subr.mxu0 0.0
        %1452 = vmatpush1.msra.mxu0 0.0
        %1453 = vmatprep.subr.mxu0 0.0
        %1454 = vmatpush1.msra.mxu0 0.0
        %1455 = vmatprep.subr.mxu0 0.0
        %1456 = vmatpush1.msra.mxu0 0.0
        %1457 = vmatprep.subr.mxu0 0.0
        %1458 = vmatpush1.msra.mxu0 0.0
        %1459 = vmatprep.subr.mxu0 0.0
        %1460 = vmatpush1.msra.mxu0 0.0
        %1461 = vmatprep.subr.mxu0 0.0
        %1462 = vmatpush1.msra.mxu0 0.0
        %1463 = vmatprep.subr.mxu0 0.0
        %1464 = vmatpush1.msra.mxu0 0.0
        %1465 = vmatprep.subr.mxu0 0.0
        %1466 = vmatpush1.msra.mxu0 0.0
        %1467 = vmatprep.subr.mxu0 0.0
        %1468 = vmatpush1.msra.mxu0 0.0
        %1469 = vmatprep.subr.mxu0 0.0
        %1470 = vmatpush1.msra.mxu0 0.0
        %1471 = vmatprep.subr.mxu0 0.0
        %1472 = vmatpush1.msra.mxu0 0.0
        %1473 = vmatprep.subr.mxu0 0.0
        %1474 = vmatpush1.msra.mxu0 0.0
        %1475 = vmatprep.subr.mxu0 0.0
        %1476 = vmatpush1.msra.mxu0 0.0
        %1477 = vmatprep.subr.mxu0 0.0
        %1478 = vmatpush1.msra.mxu0 0.0
        %1479 = vmatprep.subr.mxu0 0.0
        %1480 = vmatpush1.msra.mxu0 0.0
        %1481 = vmatprep.subr.mxu0 0.0
        %1482 = vmatpush1.msra.mxu0 0.0
        %1483 = vmatprep.subr.mxu0 0.0
        %1484 = vmatpush1.msra.mxu0 0.0
        %1485 = vmatprep.subr.mxu0 0.0
        %1486 = vmatpush1.msra.mxu0 0.0
        %1487 = vmatprep.subr.mxu0 0.0
        %1488 = vmatpush1.msra.mxu0 0.0
        %1489 = vmatprep.subr.mxu0 0.0
        %1490 = vmatpush1.msra.mxu0 0.0
        %1491 = vmatprep.subr.mxu0 0.0
        %1492 = vmatpush1.msra.mxu0 0.0
        %1493 = vmatprep.subr.mxu0 0.0
        %1494 = vmatpush1.msra.mxu0 0.0
        %1495 = vmatprep.subr.mxu0 0.0
        %1496 = vmatpush1.msra.mxu0 0.0
        %1497 = vmatprep.subr.mxu0 0.0
        %1498 = vmatpush1.msra.mxu0 0.0
        %1499 = vmatprep.subr.mxu0 0.0
        %1500 = vmatpush1.msra.mxu0 0.0
        %1501 = vmatprep.subr.mxu0 0.0
        %1502 = vmatpush1.msra.mxu0 0.0
        %1503 = vmatprep.mubr.f32.mxu0 0.0
        %1504 = vmatmul.mubr.f32.gmra.mrb[0].mxu0 %v1366
        %v1505 = vpop.f32.mrb[0].mxu0
        %v1506 = vadd.f32 0.0, %v1505
        %v1507 = vpop.f32.mrb[0].mxu0
        %v1508 = vadd.f32 0.0, %v1507
        %1509 = vdwg.mxu0
        %1510 = vmatprep.subr.mxu0 %v1326
        %1511 = vmatpush1.msra.mxu0 %v1325
        %1512 = vmatprep.subr.mxu0 %v1333
        %1513 = vmatpush1.msra.mxu0 %v1332
        %1514 = vmatprep.subr.mxu0 %v1340
        %1515 = vmatpush1.msra.mxu0 %v1339
        %1516 = vmatprep.subr.mxu0 0.0
        %1517 = vmatpush1.msra.mxu0 0.0
        %1518 = vmatprep.subr.mxu0 0.0
        %1519 = vmatpush1.msra.mxu0 0.0
        %1520 = vmatprep.subr.mxu0 0.0
        %1521 = vmatpush1.msra.mxu0 0.0
        %1522 = vmatprep.subr.mxu0 0.0
        %1523 = vmatpush1.msra.mxu0 0.0
        %1524 = vmatprep.subr.mxu0 0.0
        %1525 = vmatpush1.msra.mxu0 0.0
        %1526 = vmatprep.subr.mxu0 0.0
        %1527 = vmatpush1.msra.mxu0 0.0
        %1528 = vmatprep.subr.mxu0 0.0
        %1529 = vmatpush1.msra.mxu0 0.0
        %1530 = vmatprep.subr.mxu0 0.0
        %1531 = vmatpush1.msra.mxu0 0.0
        %1532 = vmatprep.subr.mxu0 0.0
        %1533 = vmatpush1.msra.mxu0 0.0
        %1534 = vmatprep.subr.mxu0 0.0
        %1535 = vmatpush1.msra.mxu0 0.0
        %1536 = vmatprep.subr.mxu0 0.0
        %1537 = vmatpush1.msra.mxu0 0.0
        %1538 = vmatprep.subr.mxu0 0.0
        %1539 = vmatpush1.msra.mxu0 0.0
        %1540 = vmatprep.subr.mxu0 0.0
        %1541 = vmatpush1.msra.mxu0 0.0
        %1542 = vmatprep.subr.mxu0 0.0
        %1543 = vmatpush1.msra.mxu0 0.0
        %1544 = vmatprep.subr.mxu0 0.0
        %1545 = vmatpush1.msra.mxu0 0.0
        %1546 = vmatprep.subr.mxu0 0.0
        %1547 = vmatpush1.msra.mxu0 0.0
        %1548 = vmatprep.subr.mxu0 0.0
        %1549 = vmatpush1.msra.mxu0 0.0
        %1550 = vmatprep.subr.mxu0 0.0
        %1551 = vmatpush1.msra.mxu0 0.0
        %1552 = vmatprep.subr.mxu0 0.0
        %1553 = vmatpush1.msra.mxu0 0.0
        %1554 = vmatprep.subr.mxu0 0.0
        %1555 = vmatpush1.msra.mxu0 0.0
        %1556 = vmatprep.subr.mxu0 0.0
        %1557 = vmatpush1.msra.mxu0 0.0
        %1558 = vmatprep.subr.mxu0 0.0
        %1559 = vmatpush1.msra.mxu0 0.0
        %1560 = vmatprep.subr.mxu0 0.0
        %1561 = vmatpush1.msra.mxu0 0.0
        %1562 = vmatprep.subr.mxu0 0.0
        %1563 = vmatpush1.msra.mxu0 0.0
        %1564 = vmatprep.subr.mxu0 0.0
        %1565 = vmatpush1.msra.mxu0 0.0
        %1566 = vmatprep.subr.mxu0 0.0
        %1567 = vmatpush1.msra.mxu0 0.0
        %1568 = vmatprep.subr.mxu0 0.0
        %1569 = vmatpush1.msra.mxu0 0.0
        %1570 = vmatprep.subr.mxu0 0.0
        %1571 = vmatpush1.msra.mxu0 0.0
        %1572 = vmatprep.subr.mxu0 0.0
        %1573 = vmatpush1.msra.mxu0 0.0
        %1574 = vmatprep.mubr.f32.mxu0 0.0
        %1575 = vmatmul.mubr.f32.gmra.mrb[0].mxu0 %v1366
        %v1576 = vpop.f32.mrb[0].mxu0
        %v1577 = vadd.f32 0.0, %v1576
        %v1578 = vpop.f32.mrb[0].mxu0
        %v1579 = vadd.f32 0.0, %v1578
        %1580 = vdwg.mxu0
        %1581 = vmatprep.subr.mxu0 %v1287
        %1582 = vmatpush1.msra.mxu0 %v1327
        %1583 = vmatprep.subr.mxu0 %v1303
        %1584 = vmatpush1.msra.mxu0 %v1334
        %1585 = vmatprep.subr.mxu0 %v1319
        %1586 = vmatpush1.msra.mxu0 %v1341
        %1587 = vmatprep.subr.mxu0 0.0
        %1588 = vmatpush1.msra.mxu0 0.0
        %1589 = vmatprep.subr.mxu0 0.0
        %1590 = vmatpush1.msra.mxu0 0.0
        %1591 = vmatprep.subr.mxu0 0.0
        %1592 = vmatpush1.msra.mxu0 0.0
        %1593 = vmatprep.subr.mxu0 0.0
        %1594 = vmatpush1.msra.mxu0 0.0
        %1595 = vmatprep.subr.mxu0 0.0
        %1596 = vmatpush1.msra.mxu0 0.0
        %1597 = vmatprep.subr.mxu0 0.0
        %1598 = vmatpush1.msra.mxu0 0.0
        %1599 = vmatprep.subr.mxu0 0.0
        %1600 = vmatpush1.msra.mxu0 0.0
        %1601 = vmatprep.subr.mxu0 0.0
        %1602 = vmatpush1.msra.mxu0 0.0
        %1603 = vmatprep.subr.mxu0 0.0
        %1604 = vmatpush1.msra.mxu0 0.0
        %1605 = vmatprep.subr.mxu0 0.0
        %1606 = vmatpush1.msra.mxu0 0.0
        %1607 = vmatprep.subr.mxu0 0.0
        %1608 = vmatpush1.msra.mxu0 0.0
        %1609 = vmatprep.subr.mxu0 0.0
        %1610 = vmatpush1.msra.mxu0 0.0
        %1611 = vmatprep.subr.mxu0 0.0
        %1612 = vmatpush1.msra.mxu0 0.0
        %1613 = vmatprep.subr.mxu0 0.0
        %1614 = vmatpush1.msra.mxu0 0.0
        %1615 = vmatprep.subr.mxu0 0.0
        %1616 = vmatpush1.msra.mxu0 0.0
        %1617 = vmatprep.subr.mxu0 0.0
        %1618 = vmatpush1.msra.mxu0 0.0
        %1619 = vmatprep.subr.mxu0 0.0
        %1620 = vmatpush1.msra.mxu0 0.0
        %1621 = vmatprep.subr.mxu0 0.0
        %1622 = vmatpush1.msra.mxu0 0.0
        %1623 = vmatprep.subr.mxu0 0.0
        %1624 = vmatpush1.msra.mxu0 0.0
        %1625 = vmatprep.subr.mxu0 0.0
        %1626 = vmatpush1.msra.mxu0 0.0
        %1627 = vmatprep.subr.mxu0 0.0
        %1628 = vmatpush1.msra.mxu0 0.0
        %1629 = vmatprep.subr.mxu0 0.0
        %1630 = vmatpush1.msra.mxu0 0.0
        %1631 = vmatprep.subr.mxu0 0.0
        %1632 = vmatpush1.msra.mxu0 0.0
        %1633 = vmatprep.subr.mxu0 0.0
        %1634 = vmatpush1.msra.mxu0 0.0
        %1635 = vmatprep.subr.mxu0 0.0
        %1636 = vmatpush1.msra.mxu0 0.0
        %1637 = vmatprep.subr.mxu0 0.0
        %1638 = vmatpush1.msra.mxu0 0.0
        %1639 = vmatprep.subr.mxu0 0.0
        %1640 = vmatpush1.msra.mxu0 0.0
        %1641 = vmatprep.subr.mxu0 0.0
        %1642 = vmatpush1.msra.mxu0 0.0
        %1643 = vmatprep.subr.mxu0 0.0
        %1644 = vmatpush1.msra.mxu0 0.0
        %1645 = vmatprep.mubr.f32.mxu0 0.0
        %1646 = vmatmul.mubr.f32.gmra.mrb[0].mxu0 %v1366
        %v1647 = vpop.f32.mrb[0].mxu0
        %v1648 = vadd.f32 0.0, %v1647
        %v1649 = vpop.f32.mrb[0].mxu0
        %v1650 = vadd.f32 0.0, %v1649
        %1651 = vdwg.mxu0
        %v1652 = vadd.f32 %v1053, %v1435
        %v1653 = vadd.f32 %v1055, %v1437
        %v1654 = vadd.f32 %v1124, %v1506
        %v1655 = vadd.f32 %v1126, %v1508
        %v1656 = vadd.f32 %v1195, %v1577
        %v1657 = vadd.f32 %v1197, %v1579
        %v1658 = vadd.f32 %v1266, %v1648
        %v1659 = vadd.f32 %v1268, %v1650
        %v1660 = vld [vmem:[%s2] sm:$0xff]
        %1662 = vset.pattern.permute.xlu0 0
        %1663 = vperm.xlu0 %1662, %v1660
        %v1664 = vpop.permute.xlu0 %1663
        %v1666 = vadd.f32 %v1652, %v1664
        %v1667 = vadd.f32 %v1653, %v1664
        %v1668 = vadd.f32 %v1654, %v1664
        %v1669 = vadd.f32 %v1655, %v1664
        %v1670 = vadd.f32 %v1656, %v1664
        %v1671 = vadd.f32 %v1657, %v1664
        %v1672 = vadd.f32 %v1658, %v1664
        %v1673 = vadd.f32 %v1659, %v1664
        %v1674 = vmax.f32 %v1666, 0.0
        %v1675 = vmax.f32 %v1667, 0.0
        %v1676 = vmax.f32 %v1668, 0.0
        %v1677 = vmax.f32 %v1669, 0.0
        %v1678 = vmax.f32 %v1670, 0.0
        %v1679 = vmax.f32 %v1671, 0.0
        %v1680 = vmax.f32 %v1672, 0.0
        %v1681 = vmax.f32 %v1673, 0.0
        %1682 = vst [vmem:[#allocation2] sm:$0xff] %v1674
        %1683 = vst [vmem:[#allocation2 + $0x8] sm:$0xff] %v1675
        %1684 = vst [vmem:[#allocation2 + $0x10] sm:$0xff] %v1676
        %1685 = vst [vmem:[#allocation2 + $0x18] sm:$0xff] %v1677
        %1686 = vst [vmem:[#allocation2 + $0x20] sm:$0xff] %v1678
        %1687 = vst [vmem:[#allocation2 + $0x28] sm:$0xff] %v1679
        %1688 = vst [vmem:[#allocation2 + $0x30] sm:$0xff] %v1680
        %vm1689 = vcmask 506880
        %1690 = vst.msk [vmem:[#allocation2 + $0x38] sm:$0xff] %vm1689, %v1681
        %v1691 = vld [vmem:[#allocation2] sm:$0xff]
        %v1692 = vld [vmem:[#allocation2 + $0x8] sm:$0xff]
        %v1693 = vld [vmem:[#allocation2 + $0x10] sm:$0xff]
        %v1694 = vld [vmem:[#allocation2 + $0x18] sm:$0xff]
        %v1695 = vld [vmem:[#allocation2 + $0x20] sm:$0xff]
        %v1696 = vld [vmem:[#allocation2 + $0x28] sm:$0xff]
        %v1697 = vld [vmem:[#allocation2 + $0x30] sm:$0xff]
        %1705 = vrot.lane.b32.xlu0 %v1691, 127
        %v1706 = vpop.permute.xlu0 %1705
        %1707 = vrot.lane.b32.xlu0 %v1692, 127
        %v1708 = vpop.permute.xlu0 %1707
        %1709 = vrot.lane.b32.xlu0 %v1693, 127
        %v1710 = vpop.permute.xlu0 %1709
        %1711 = vrot.lane.b32.xlu0 %v1694, 127
        %v1712 = vpop.permute.xlu0 %1711
        %1713 = vrot.lane.b32.xlu0 %v1695, 127
        %v1714 = vpop.permute.xlu0 %1713
        %1715 = vrot.lane.b32.xlu0 %v1696, 127
        %v1716 = vpop.permute.xlu0 %1715
        %1717 = vrot.lane.b32.xlu0 %v1697, 127
        %v1718 = vpop.permute.xlu0 %1717
        %v1719 = vsel %vm551, %v1706, %v1708
        %v1720 = vsel %vm551, %v1708, %v1710
        %v1721 = vsel %vm551, %v1710, %v1712
        %v1722 = vsel %vm551, %v1712, %v1714
        %v1723 = vsel %vm551, %v1714, %v1716
        %v1724 = vsel %vm551, %v1716, %v1718
        %1732 = vrot.lane.b32.xlu0 %v1691, 126
        %v1733 = vpop.permute.xlu0 %1732
        %1734 = vrot.lane.b32.xlu0 %v1692, 126
        %v1735 = vpop.permute.xlu0 %1734
        %1736 = vrot.lane.b32.xlu0 %v1693, 126
        %v1737 = vpop.permute.xlu0 %1736
        %1738 = vrot.lane.b32.xlu0 %v1694, 126
        %v1739 = vpop.permute.xlu0 %1738
        %1740 = vrot.lane.b32.xlu0 %v1695, 126
        %v1741 = vpop.permute.xlu0 %1740
        %1742 = vrot.lane.b32.xlu0 %v1696, 126
        %v1743 = vpop.permute.xlu0 %1742
        %1744 = vrot.lane.b32.xlu0 %v1697, 126
        %v1745 = vpop.permute.xlu0 %1744
        %v1746 = vsel %vm583, %v1733, %v1735
        %v1747 = vsel %vm583, %v1735, %v1737
        %v1748 = vsel %vm583, %v1737, %v1739
        %v1749 = vsel %vm583, %v1739, %v1741
        %v1750 = vsel %vm583, %v1741, %v1743
        %v1751 = vsel %vm583, %v1743, %v1745
        %v1759 = vld [vmem:[%s3] sm:$0xff]
        %v1760 = vld [vmem:[#allocation2 + $0x38] sm:$0xff]
        %1762 = vrot.lane.b32.xlu0 %v1760, 127
        %v1763 = vpop.permute.xlu0 %1762
        %v1764 = vsel %vm551, %v1718, %v1763
        %1765 = vrot.lane.b32.xlu0 %v1760, 126
        %v1766 = vpop.permute.xlu0 %1765
        %v1767 = vsel %vm583, %v1745, %v1766
        %1769 = vrot.lane.b32.xlu0 %v1759, 104
        %v1770 = vpop.permute.xlu0 %1769
        %1771 = vrot.lane.b32.xlu0 %v1691, 96
        %v1772 = vpop.permute.xlu0 %1771
        %1773 = vrot.lane.b32.xlu0 %v1692, 96
        %v1774 = vpop.permute.xlu0 %1773
        %1775 = vrot.lane.b32.xlu0 %v1693, 96
        %v1776 = vpop.permute.xlu0 %1775
        %1777 = vrot.lane.b32.xlu0 %v1694, 96
        %v1778 = vpop.permute.xlu0 %1777
        %1779 = vrot.lane.b32.xlu0 %v1695, 96
        %v1780 = vpop.permute.xlu0 %1779
        %1781 = vrot.lane.b32.xlu0 %v1696, 96
        %v1782 = vpop.permute.xlu0 %1781
        %1783 = vrot.lane.b32.xlu0 %v1697, 96
        %v1784 = vpop.permute.xlu0 %1783
        %1785 = vrot.lane.b32.xlu0 %v1760, 96
        %v1786 = vpop.permute.xlu0 %1785
        %1787 = vrot.lane.b32.xlu0 %v1719, 96
        %v1788 = vpop.permute.xlu0 %1787
        %1789 = vrot.lane.b32.xlu0 %v1720, 96
        %v1790 = vpop.permute.xlu0 %1789
        %1791 = vrot.lane.b32.xlu0 %v1721, 96
        %v1792 = vpop.permute.xlu0 %1791
        %1793 = vrot.lane.b32.xlu0 %v1722, 96
        %v1794 = vpop.permute.xlu0 %1793
        %1795 = vrot.lane.b32.xlu0 %v1723, 96
        %v1796 = vpop.permute.xlu0 %1795
        %1797 = vrot.lane.b32.xlu0 %v1724, 96
        %v1798 = vpop.permute.xlu0 %1797
        %1799 = vrot.lane.b32.xlu0 %v1764, 96
        %v1800 = vpop.permute.xlu0 %1799
        %1801 = vrot.lane.b32.xlu0 %v1763, 96
        %v1802 = vpop.permute.xlu0 %1801
        %1803 = vrot.lane.b32.xlu0 %v1746, 96
        %v1804 = vpop.permute.xlu0 %1803
        %1805 = vrot.lane.b32.xlu0 %v1747, 96
        %v1806 = vpop.permute.xlu0 %1805
        %1807 = vrot.lane.b32.xlu0 %v1748, 96
        %v1808 = vpop.permute.xlu0 %1807
        %1809 = vrot.lane.b32.xlu0 %v1749, 96
        %v1810 = vpop.permute.xlu0 %1809
        %1811 = vrot.lane.b32.xlu0 %v1750, 96
        %v1812 = vpop.permute.xlu0 %1811
        %1813 = vrot.lane.b32.xlu0 %v1751, 96
        %v1814 = vpop.permute.xlu0 %1813
        %1815 = vrot.lane.b32.xlu0 %v1767, 96
        %v1816 = vpop.permute.xlu0 %1815
        %1817 = vrot.lane.b32.xlu0 %v1766, 96
        %v1818 = vpop.permute.xlu0 %1817
        %v1819 = vsel %vm651, %v1772, %v1774
        %v1820 = vsel %vm651, %v1774, %v1776
        %v1821 = vsel %vm651, %v1776, %v1778
        %v1822 = vsel %vm651, %v1778, %v1780
        %v1823 = vsel %vm651, %v1780, %v1782
        %v1824 = vsel %vm651, %v1782, %v1784
        %v1825 = vsel %vm651, %v1784, %v1786
        %v1826 = vsel %vm651, %v1788, %v1790
        %v1827 = vsel %vm651, %v1790, %v1792
        %v1828 = vsel %vm651, %v1792, %v1794
        %v1829 = vsel %vm651, %v1794, %v1796
        %v1830 = vsel %vm651, %v1796, %v1798
        %v1831 = vsel %vm651, %v1798, %v1800
        %v1832 = vsel %vm651, %v1800, %v1802
        %v1833 = vsel %vm651, %v1804, %v1806
        %v1834 = vsel %vm651, %v1806, %v1808
        %v1835 = vsel %vm651, %v1808, %v1810
        %v1836 = vsel %vm651, %v1810, %v1812
        %v1837 = vsel %vm651, %v1812, %v1814
        %v1838 = vsel %vm651, %v1814, %v1816
        %v1839 = vsel %vm651, %v1816, %v1818
        %v1861 = vsel %vm697, %v1770, 0
        %1863 = vmatprep.subr.mxu0 %v1820
        %1864 = vmatpush1.msra.mxu0 %v1819
        %1865 = vmatprep.subr.mxu0 %v1827
        %1866 = vmatpush1.msra.mxu0 %v1826
        %1867 = vmatprep.subr.mxu0 %v1834
        %1868 = vmatpush1.msra.mxu0 %v1833
        %1869 = vmatprep.subr.mxu0 0.0
        %1870 = vmatpush1.msra.mxu0 0.0
        %1871 = vmatprep.subr.mxu0 0.0
        %1872 = vmatpush1.msra.mxu0 0.0
        %1873 = vmatprep.subr.mxu0 0.0
        %1874 = vmatpush1.msra.mxu0 0.0
        %1875 = vmatprep.subr.mxu0 0.0
        %1876 = vmatpush1.msra.mxu0 0.0
        %1877 = vmatprep.subr.mxu0 0.0
        %1878 = vmatpush1.msra.mxu0 0.0
        %1879 = vmatprep.subr.mxu0 0.0
        %1880 = vmatpush1.msra.mxu0 0.0
        %1881 = vmatprep.subr.mxu0 0.0
        %1882 = vmatpush1.msra.mxu0 0.0
        %1883 = vmatprep.subr.mxu0 0.0
        %1884 = vmatpush1.msra.mxu0 0.0
        %1885 = vmatprep.subr.mxu0 0.0
        %1886 = vmatpush1.msra.mxu0 0.0
        %1887 = vmatprep.subr.mxu0 0.0
        %1888 = vmatpush1.msra.mxu0 0.0
        %1889 = vmatprep.subr.mxu0 0.0
        %1890 = vmatpush1.msra.mxu0 0.0
        %1891 = vmatprep.subr.mxu0 0.0
        %1892 = vmatpush1.msra.mxu0 0.0
        %1893 = vmatprep.subr.mxu0 0.0
        %1894 = vmatpush1.msra.mxu0 0.0
        %1895 = vmatprep.subr.mxu0 0.0
        %1896 = vmatpush1.msra.mxu0 0.0
        %1897 = vmatprep.subr.mxu0 0.0
        %1898 = vmatpush1.msra.mxu0 0.0
        %1899 = vmatprep.subr.mxu0 0.0
        %1900 = vmatpush1.msra.mxu0 0.0
        %1901 = vmatprep.subr.mxu0 0.0
        %1902 = vmatpush1.msra.mxu0 0.0
        %1903 = vmatprep.subr.mxu0 0.0
        %1904 = vmatpush1.msra.mxu0 0.0
        %1905 = vmatprep.subr.mxu0 0.0
        %1906 = vmatpush1.msra.mxu0 0.0
        %1907 = vmatprep.subr.mxu0 0.0
        %1908 = vmatpush1.msra.mxu0 0.0
        %1909 = vmatprep.subr.mxu0 0.0
        %1910 = vmatpush1.msra.mxu0 0.0
        %1911 = vmatprep.subr.mxu0 0.0
        %1912 = vmatpush1.msra.mxu0 0.0
        %1913 = vmatprep.subr.mxu0 0.0
        %1914 = vmatpush1.msra.mxu0 0.0
        %1915 = vmatprep.subr.mxu0 0.0
        %1916 = vmatpush1.msra.mxu0 0.0
        %1917 = vmatprep.subr.mxu0 0.0
        %1918 = vmatpush1.msra.mxu0 0.0
        %1919 = vmatprep.subr.mxu0 0.0
        %1920 = vmatpush1.msra.mxu0 0.0
        %1921 = vmatprep.subr.mxu0 0.0
        %1922 = vmatpush1.msra.mxu0 0.0
        %1923 = vmatprep.subr.mxu0 0.0
        %1924 = vmatpush1.msra.mxu0 0.0
        %1925 = vmatprep.subr.mxu0 0.0
        %1926 = vmatpush1.msra.mxu0 0.0
        %1927 = vmatprep.mubr.f32.mxu0 0.0
        %1928 = vmatmul.mubr.f32.gmra.mrb[0].mxu0 %v1861
        %v1929 = vpop.f32.mrb[0].mxu0
        %v1930 = vadd.f32 0.0, %v1929
        %v1931 = vpop.f32.mrb[0].mxu0
        %v1932 = vadd.f32 0.0, %v1931
        %1933 = vdwg.mxu0
        %1934 = vmatprep.subr.mxu0 %v1822
        %1935 = vmatpush1.msra.mxu0 %v1821
        %1936 = vmatprep.subr.mxu0 %v1829
        %1937 = vmatpush1.msra.mxu0 %v1828
        %1938 = vmatprep.subr.mxu0 %v1836
        %1939 = vmatpush1.msra.mxu0 %v1835
        %1940 = vmatprep.subr.mxu0 0.0
        %1941 = vmatpush1.msra.mxu0 0.0
        %1942 = vmatprep.subr.mxu0 0.0
        %1943 = vmatpush1.msra.mxu0 0.0
        %1944 = vmatprep.subr.mxu0 0.0
        %1945 = vmatpush1.msra.mxu0 0.0
        %1946 = vmatprep.subr.mxu0 0.0
        %1947 = vmatpush1.msra.mxu0 0.0
        %1948 = vmatprep.subr.mxu0 0.0
        %1949 = vmatpush1.msra.mxu0 0.0
        %1950 = vmatprep.subr.mxu0 0.0
        %1951 = vmatpush1.msra.mxu0 0.0
        %1952 = vmatprep.subr.mxu0 0.0
        %1953 = vmatpush1.msra.mxu0 0.0
        %1954 = vmatprep.subr.mxu0 0.0
        %1955 = vmatpush1.msra.mxu0 0.0
        %1956 = vmatprep.subr.mxu0 0.0
        %1957 = vmatpush1.msra.mxu0 0.0
        %1958 = vmatprep.subr.mxu0 0.0
        %1959 = vmatpush1.msra.mxu0 0.0
        %1960 = vmatprep.subr.mxu0 0.0
        %1961 = vmatpush1.msra.mxu0 0.0
        %1962 = vmatprep.subr.mxu0 0.0
        %1963 = vmatpush1.msra.mxu0 0.0
        %1964 = vmatprep.subr.mxu0 0.0
        %1965 = vmatpush1.msra.mxu0 0.0
        %1966 = vmatprep.subr.mxu0 0.0
        %1967 = vmatpush1.msra.mxu0 0.0
        %1968 = vmatprep.subr.mxu0 0.0
        %1969 = vmatpush1.msra.mxu0 0.0
        %1970 = vmatprep.subr.mxu0 0.0
        %1971 = vmatpush1.msra.mxu0 0.0
        %1972 = vmatprep.subr.mxu0 0.0
        %1973 = vmatpush1.msra.mxu0 0.0
        %1974 = vmatprep.subr.mxu0 0.0
        %1975 = vmatpush1.msra.mxu0 0.0
        %1976 = vmatprep.subr.mxu0 0.0
        %1977 = vmatpush1.msra.mxu0 0.0
        %1978 = vmatprep.subr.mxu0 0.0
        %1979 = vmatpush1.msra.mxu0 0.0
        %1980 = vmatprep.subr.mxu0 0.0
        %1981 = vmatpush1.msra.mxu0 0.0
        %1982 = vmatprep.subr.mxu0 0.0
        %1983 = vmatpush1.msra.mxu0 0.0
        %1984 = vmatprep.subr.mxu0 0.0
        %1985 = vmatpush1.msra.mxu0 0.0
        %1986 = vmatprep.subr.mxu0 0.0
        %1987 = vmatpush1.msra.mxu0 0.0
        %1988 = vmatprep.subr.mxu0 0.0
        %1989 = vmatpush1.msra.mxu0 0.0
        %1990 = vmatprep.subr.mxu0 0.0
        %1991 = vmatpush1.msra.mxu0 0.0
        %1992 = vmatprep.subr.mxu0 0.0
        %1993 = vmatpush1.msra.mxu0 0.0
        %1994 = vmatprep.subr.mxu0 0.0
        %1995 = vmatpush1.msra.mxu0 0.0
        %1996 = vmatprep.subr.mxu0 0.0
        %1997 = vmatpush1.msra.mxu0 0.0
        %1998 = vmatprep.mubr.f32.mxu0 0.0
        %1999 = vmatmul.mubr.f32.gmra.mrb[0].mxu0 %v1861
        %v2000 = vpop.f32.mrb[0].mxu0
        %v2001 = vadd.f32 0.0, %v2000
        %v2002 = vpop.f32.mrb[0].mxu0
        %v2003 = vadd.f32 0.0, %v2002
        %2004 = vdwg.mxu0
        %2005 = vmatprep.subr.mxu0 %v1824
        %2006 = vmatpush1.msra.mxu0 %v1823
        %2007 = vmatprep.subr.mxu0 %v1831
        %2008 = vmatpush1.msra.mxu0 %v1830
        %2009 = vmatprep.subr.mxu0 %v1838
        %2010 = vmatpush1.msra.mxu0 %v1837
        %2011 = vmatprep.subr.mxu0 0.0
        %2012 = vmatpush1.msra.mxu0 0.0
        %2013 = vmatprep.subr.mxu0 0.0
        %2014 = vmatpush1.msra.mxu0 0.0
        %2015 = vmatprep.subr.mxu0 0.0
        %2016 = vmatpush1.msra.mxu0 0.0
        %2017 = vmatprep.subr.mxu0 0.0
        %2018 = vmatpush1.msra.mxu0 0.0
        %2019 = vmatprep.subr.mxu0 0.0
        %2020 = vmatpush1.msra.mxu0 0.0
        %2021 = vmatprep.subr.mxu0 0.0
        %2022 = vmatpush1.msra.mxu0 0.0
        %2023 = vmatprep.subr.mxu0 0.0
        %2024 = vmatpush1.msra.mxu0 0.0
        %2025 = vmatprep.subr.mxu0 0.0
        %2026 = vmatpush1.msra.mxu0 0.0
        %2027 = vmatprep.subr.mxu0 0.0
        %2028 = vmatpush1.msra.mxu0 0.0
        %2029 = vmatprep.subr.mxu0 0.0
        %2030 = vmatpush1.msra.mxu0 0.0
        %2031 = vmatprep.subr.mxu0 0.0
        %2032 = vmatpush1.msra.mxu0 0.0
        %2033 = vmatprep.subr.mxu0 0.0
        %2034 = vmatpush1.msra.mxu0 0.0
        %2035 = vmatprep.subr.mxu0 0.0
        %2036 = vmatpush1.msra.mxu0 0.0
        %2037 = vmatprep.subr.mxu0 0.0
        %2038 = vmatpush1.msra.mxu0 0.0
        %2039 = vmatprep.subr.mxu0 0.0
        %2040 = vmatpush1.msra.mxu0 0.0
        %2041 = vmatprep.subr.mxu0 0.0
        %2042 = vmatpush1.msra.mxu0 0.0
        %2043 = vmatprep.subr.mxu0 0.0
        %2044 = vmatpush1.msra.mxu0 0.0
        %2045 = vmatprep.subr.mxu0 0.0
        %2046 = vmatpush1.msra.mxu0 0.0
        %2047 = vmatprep.subr.mxu0 0.0
        %2048 = vmatpush1.msra.mxu0 0.0
        %2049 = vmatprep.subr.mxu0 0.0
        %2050 = vmatpush1.msra.mxu0 0.0
        %2051 = vmatprep.subr.mxu0 0.0
        %2052 = vmatpush1.msra.mxu0 0.0
        %2053 = vmatprep.subr.mxu0 0.0
        %2054 = vmatpush1.msra.mxu0 0.0
        %2055 = vmatprep.subr.mxu0 0.0
        %2056 = vmatpush1.msra.mxu0 0.0
        %2057 = vmatprep.subr.mxu0 0.0
        %2058 = vmatpush1.msra.mxu0 0.0
        %2059 = vmatprep.subr.mxu0 0.0
        %2060 = vmatpush1.msra.mxu0 0.0
        %2061 = vmatprep.subr.mxu0 0.0
        %2062 = vmatpush1.msra.mxu0 0.0
        %2063 = vmatprep.subr.mxu0 0.0
        %2064 = vmatpush1.msra.mxu0 0.0
        %2065 = vmatprep.subr.mxu0 0.0
        %2066 = vmatpush1.msra.mxu0 0.0
        %2067 = vmatprep.subr.mxu0 0.0
        %2068 = vmatpush1.msra.mxu0 0.0
        %2069 = vmatprep.mubr.f32.mxu0 0.0
        %2070 = vmatmul.mubr.f32.gmra.mrb[0].mxu0 %v1861
        %v2071 = vpop.f32.mrb[0].mxu0
        %v2072 = vadd.f32 0.0, %v2071
        %v2073 = vpop.f32.mrb[0].mxu0
        %v2074 = vadd.f32 0.0, %v2073
        %2075 = vdwg.mxu0
        %2076 = vmatprep.subr.mxu0 0.0
        %2077 = vmatpush1.msra.mxu0 %v1825
        %2078 = vmatprep.subr.mxu0 0.0
        %2079 = vmatpush1.msra.mxu0 %v1832
        %2080 = vmatprep.subr.mxu0 0.0
        %2081 = vmatpush1.msra.mxu0 %v1839
        %2082 = vmatprep.subr.mxu0 0.0
        %2083 = vmatpush1.msra.mxu0 0.0
        %2084 = vmatprep.subr.mxu0 0.0
        %2085 = vmatpush1.msra.mxu0 0.0
        %2086 = vmatprep.subr.mxu0 0.0
        %2087 = vmatpush1.msra.mxu0 0.0
        %2088 = vmatprep.subr.mxu0 0.0
        %2089 = vmatpush1.msra.mxu0 0.0
        %2090 = vmatprep.subr.mxu0 0.0
        %2091 = vmatpush1.msra.mxu0 0.0
        %2092 = vmatprep.subr.mxu0 0.0
        %2093 = vmatpush1.msra.mxu0 0.0
        %2094 = vmatprep.subr.mxu0 0.0
        %2095 = vmatpush1.msra.mxu0 0.0
        %2096 = vmatprep.subr.mxu0 0.0
        %2097 = vmatpush1.msra.mxu0 0.0
        %2098 = vmatprep.subr.mxu0 0.0
        %2099 = vmatpush1.msra.mxu0 0.0
        %2100 = vmatprep.subr.mxu0 0.0
        %2101 = vmatpush1.msra.mxu0 0.0
        %2102 = vmatprep.subr.mxu0 0.0
        %2103 = vmatpush1.msra.mxu0 0.0
        %2104 = vmatprep.subr.mxu0 0.0
        %2105 = vmatpush1.msra.mxu0 0.0
        %2106 = vmatprep.subr.mxu0 0.0
        %2107 = vmatpush1.msra.mxu0 0.0
        %2108 = vmatprep.subr.mxu0 0.0
        %2109 = vmatpush1.msra.mxu0 0.0
        %2110 = vmatprep.subr.mxu0 0.0
        %2111 = vmatpush1.msra.mxu0 0.0
        %2112 = vmatprep.subr.mxu0 0.0
        %2113 = vmatpush1.msra.mxu0 0.0
        %2114 = vmatprep.subr.mxu0 0.0
        %2115 = vmatpush1.msra.mxu0 0.0
        %2116 = vmatprep.subr.mxu0 0.0
        %2117 = vmatpush1.msra.mxu0 0.0
        %2118 = vmatprep.subr.mxu0 0.0
        %2119 = vmatpush1.msra.mxu0 0.0
        %2120 = vmatprep.subr.mxu0 0.0
        %2121 = vmatpush1.msra.mxu0 0.0
        %2122 = vmatprep.subr.mxu0 0.0
        %2123 = vmatpush1.msra.mxu0 0.0
        %2124 = vmatprep.subr.mxu0 0.0
        %2125 = vmatpush1.msra.mxu0 0.0
        %2126 = vmatprep.subr.mxu0 0.0
        %2127 = vmatpush1.msra.mxu0 0.0
        %2128 = vmatprep.subr.mxu0 0.0
        %2129 = vmatpush1.msra.mxu0 0.0
        %2130 = vmatprep.subr.mxu0 0.0
        %2131 = vmatpush1.msra.mxu0 0.0
        %2132 = vmatprep.subr.mxu0 0.0
        %2133 = vmatpush1.msra.mxu0 0.0
        %2134 = vmatprep.subr.mxu0 0.0
        %2135 = vmatpush1.msra.mxu0 0.0
        %2136 = vmatprep.subr.mxu0 0.0
        %2137 = vmatpush1.msra.mxu0 0.0
        %2138 = vmatprep.subr.mxu0 0.0
        %2139 = vmatpush1.msra.mxu0 0.0
        %2140 = vmatprep.mubr.f32.mxu0 0.0
        %2141 = vmatmul.mubr.f32.gmra.mrb[0].mxu0 %v1861
        %v2142 = vpop.f32.mrb[0].mxu0
        %v2143 = vadd.f32 0.0, %v2142
        %v2144 = vpop.f32.mrb[0].mxu0
        %2145 = vdwg.mxu0
        %v2146 = vsel %vm697, %v1759, 0
        %2148 = vmatprep.subr.mxu0 %v1692
        %2149 = vmatpush1.msra.mxu0 %v1691
        %2150 = vmatprep.subr.mxu0 %v1720
        %2151 = vmatpush1.msra.mxu0 %v1719
        %2152 = vmatprep.subr.mxu0 %v1747
        %2153 = vmatpush1.msra.mxu0 %v1746
        %2154 = vmatprep.subr.mxu0 0.0
        %2155 = vmatpush1.msra.mxu0 0.0
        %2156 = vmatprep.subr.mxu0 0.0
        %2157 = vmatpush1.msra.mxu0 0.0
        %2158 = vmatprep.subr.mxu0 0.0
        %2159 = vmatpush1.msra.mxu0 0.0
        %2160 = vmatprep.subr.mxu0 0.0
        %2161 = vmatpush1.msra.mxu0 0.0
        %2162 = vmatprep.subr.mxu0 0.0
        %2163 = vmatpush1.msra.mxu0 0.0
        %2164 = vmatprep.subr.mxu0 0.0
        %2165 = vmatpush1.msra.mxu0 0.0
        %2166 = vmatprep.subr.mxu0 0.0
        %2167 = vmatpush1.msra.mxu0 0.0
        %2168 = vmatprep.subr.mxu0 0.0
        %2169 = vmatpush1.msra.mxu0 0.0
        %2170 = vmatprep.subr.mxu0 0.0
        %2171 = vmatpush1.msra.mxu0 0.0
        %2172 = vmatprep.subr.mxu0 0.0
        %2173 = vmatpush1.msra.mxu0 0.0
        %2174 = vmatprep.subr.mxu0 0.0
        %2175 = vmatpush1.msra.mxu0 0.0
        %2176 = vmatprep.subr.mxu0 0.0
        %2177 = vmatpush1.msra.mxu0 0.0
        %2178 = vmatprep.subr.mxu0 0.0
        %2179 = vmatpush1.msra.mxu0 0.0
        %2180 = vmatprep.subr.mxu0 0.0
        %2181 = vmatpush1.msra.mxu0 0.0
        %2182 = vmatprep.subr.mxu0 0.0
        %2183 = vmatpush1.msra.mxu0 0.0
        %2184 = vmatprep.subr.mxu0 0.0
        %2185 = vmatpush1.msra.mxu0 0.0
        %2186 = vmatprep.subr.mxu0 0.0
        %2187 = vmatpush1.msra.mxu0 0.0
        %2188 = vmatprep.subr.mxu0 0.0
        %2189 = vmatpush1.msra.mxu0 0.0
        %2190 = vmatprep.subr.mxu0 0.0
        %2191 = vmatpush1.msra.mxu0 0.0
        %2192 = vmatprep.subr.mxu0 0.0
        %2193 = vmatpush1.msra.mxu0 0.0
        %2194 = vmatprep.subr.mxu0 0.0
        %2195 = vmatpush1.msra.mxu0 0.0
        %2196 = vmatprep.subr.mxu0 0.0
        %2197 = vmatpush1.msra.mxu0 0.0
        %2198 = vmatprep.subr.mxu0 0.0
        %2199 = vmatpush1.msra.mxu0 0.0
        %2200 = vmatprep.subr.mxu0 0.0
        %2201 = vmatpush1.msra.mxu0 0.0
        %2202 = vmatprep.subr.mxu0 0.0
        %2203 = vmatpush1.msra.mxu0 0.0
        %2204 = vmatprep.subr.mxu0 0.0
        %2205 = vmatpush1.msra.mxu0 0.0
        %2206 = vmatprep.subr.mxu0 0.0
        %2207 = vmatpush1.msra.mxu0 0.0
        %2208 = vmatprep.subr.mxu0 0.0
        %2209 = vmatpush1.msra.mxu0 0.0
        %2210 = vmatprep.subr.mxu0 0.0
        %2211 = vmatpush1.msra.mxu0 0.0
        %2212 = vmatprep.mubr.f32.mxu0 0.0
        %2213 = vmatmul.mubr.f32.gmra.mrb[0].mxu0 %v2146
        %v2214 = vpop.f32.mrb[0].mxu0
        %v2215 = vadd.f32 %v1930, %v2214
        %v2216 = vpop.f32.mrb[0].mxu0
        %v2217 = vadd.f32 %v1932, %v2216
        %2218 = vdwg.mxu0
        %2219 = vmatprep.subr.mxu0 %v1694
        %2220 = vmatpush1.msra.mxu0 %v1693
        %2221 = vmatprep.subr.mxu0 %v1722
        %2222 = vmatpush1.msra.mxu0 %v1721
        %2223 = vmatprep.subr.mxu0 %v1749
        %2224 = vmatpush1.msra.mxu0 %v1748
        %2225 = vmatprep.subr.mxu0 0.0
        %2226 = vmatpush1.msra.mxu0 0.0
        %2227 = vmatprep.subr.mxu0 0.0
        %2228 = vmatpush1.msra.mxu0 0.0
        %2229 = vmatprep.subr.mxu0 0.0
        %2230 = vmatpush1.msra.mxu0 0.0
        %2231 = vmatprep.subr.mxu0 0.0
        %2232 = vmatpush1.msra.mxu0 0.0
        %2233 = vmatprep.subr.mxu0 0.0
        %2234 = vmatpush1.msra.mxu0 0.0
        %2235 = vmatprep.subr.mxu0 0.0
        %2236 = vmatpush1.msra.mxu0 0.0
        %2237 = vmatprep.subr.mxu0 0.0
        %2238 = vmatpush1.msra.mxu0 0.0
        %2239 = vmatprep.subr.mxu0 0.0
        %2240 = vmatpush1.msra.mxu0 0.0
        %2241 = vmatprep.subr.mxu0 0.0
        %2242 = vmatpush1.msra.mxu0 0.0
        %2243 = vmatprep.subr.mxu0 0.0
        %2244 = vmatpush1.msra.mxu0 0.0
        %2245 = vmatprep.subr.mxu0 0.0
        %2246 = vmatpush1.msra.mxu0 0.0
        %2247 = vmatprep.subr.mxu0 0.0
        %2248 = vmatpush1.msra.mxu0 0.0
        %2249 = vmatprep.subr.mxu0 0.0
        %2250 = vmatpush1.msra.mxu0 0.0
        %2251 = vmatprep.subr.mxu0 0.0
        %2252 = vmatpush1.msra.mxu0 0.0
        %2253 = vmatprep.subr.mxu0 0.0
        %2254 = vmatpush1.msra.mxu0 0.0
        %2255 = vmatprep.subr.mxu0 0.0
        %2256 = vmatpush1.msra.mxu0 0.0
        %2257 = vmatprep.subr.mxu0 0.0
        %2258 = vmatpush1.msra.mxu0 0.0
        %2259 = vmatprep.subr.mxu0 0.0
        %2260 = vmatpush1.msra.mxu0 0.0
        %2261 = vmatprep.subr.mxu0 0.0
        %2262 = vmatpush1.msra.mxu0 0.0
        %2263 = vmatprep.subr.mxu0 0.0
        %2264 = vmatpush1.msra.mxu0 0.0
        %2265 = vmatprep.subr.mxu0 0.0
        %2266 = vmatpush1.msra.mxu0 0.0
        %2267 = vmatprep.subr.mxu0 0.0
        %2268 = vmatpush1.msra.mxu0 0.0
        %2269 = vmatprep.subr.mxu0 0.0
        %2270 = vmatpush1.msra.mxu0 0.0
        %2271 = vmatprep.subr.mxu0 0.0
        %2272 = vmatpush1.msra.mxu0 0.0
        %2273 = vmatprep.subr.mxu0 0.0
        %2274 = vmatpush1.msra.mxu0 0.0
        %2275 = vmatprep.subr.mxu0 0.0
        %2276 = vmatpush1.msra.mxu0 0.0
        %2277 = vmatprep.subr.mxu0 0.0
        %2278 = vmatpush1.msra.mxu0 0.0
        %2279 = vmatprep.subr.mxu0 0.0
        %2280 = vmatpush1.msra.mxu0 0.0
        %2281 = vmatprep.subr.mxu0 0.0
        %2282 = vmatpush1.msra.mxu0 0.0
        %2283 = vmatprep.mubr.f32.mxu0 0.0
        %2284 = vmatmul.mubr.f32.gmra.mrb[0].mxu0 %v2146
        %v2285 = vpop.f32.mrb[0].mxu0
        %v2286 = vadd.f32 %v2001, %v2285
        %v2287 = vpop.f32.mrb[0].mxu0
        %v2288 = vadd.f32 %v2003, %v2287
        %2289 = vdwg.mxu0
        %2290 = vmatprep.subr.mxu0 %v1696
        %2291 = vmatpush1.msra.mxu0 %v1695
        %2292 = vmatprep.subr.mxu0 %v1724
        %2293 = vmatpush1.msra.mxu0 %v1723
        %2294 = vmatprep.subr.mxu0 %v1751
        %2295 = vmatpush1.msra.mxu0 %v1750
        %2296 = vmatprep.subr.mxu0 0.0
        %2297 = vmatpush1.msra.mxu0 0.0
        %2298 = vmatprep.subr.mxu0 0.0
        %2299 = vmatpush1.msra.mxu0 0.0
        %2300 = vmatprep.subr.mxu0 0.0
        %2301 = vmatpush1.msra.mxu0 0.0
        %2302 = vmatprep.subr.mxu0 0.0
        %2303 = vmatpush1.msra.mxu0 0.0
        %2304 = vmatprep.subr.mxu0 0.0
        %2305 = vmatpush1.msra.mxu0 0.0
        %2306 = vmatprep.subr.mxu0 0.0
        %2307 = vmatpush1.msra.mxu0 0.0
        %2308 = vmatprep.subr.mxu0 0.0
        %2309 = vmatpush1.msra.mxu0 0.0
        %2310 = vmatprep.subr.mxu0 0.0
        %2311 = vmatpush1.msra.mxu0 0.0
        %2312 = vmatprep.subr.mxu0 0.0
        %2313 = vmatpush1.msra.mxu0 0.0
        %2314 = vmatprep.subr.mxu0 0.0
        %2315 = vmatpush1.msra.mxu0 0.0
        %2316 = vmatprep.subr.mxu0 0.0
        %2317 = vmatpush1.msra.mxu0 0.0
        %2318 = vmatprep.subr.mxu0 0.0
        %2319 = vmatpush1.msra.mxu0 0.0
        %2320 = vmatprep.subr.mxu0 0.0
        %2321 = vmatpush1.msra.mxu0 0.0
        %2322 = vmatprep.subr.mxu0 0.0
        %2323 = vmatpush1.msra.mxu0 0.0
        %2324 = vmatprep.subr.mxu0 0.0
        %2325 = vmatpush1.msra.mxu0 0.0
        %2326 = vmatprep.subr.mxu0 0.0
        %2327 = vmatpush1.msra.mxu0 0.0
        %2328 = vmatprep.subr.mxu0 0.0
        %2329 = vmatpush1.msra.mxu0 0.0
        %2330 = vmatprep.subr.mxu0 0.0
        %2331 = vmatpush1.msra.mxu0 0.0
        %2332 = vmatprep.subr.mxu0 0.0
        %2333 = vmatpush1.msra.mxu0 0.0
        %2334 = vmatprep.subr.mxu0 0.0
        %2335 = vmatpush1.msra.mxu0 0.0
        %2336 = vmatprep.subr.mxu0 0.0
        %2337 = vmatpush1.msra.mxu0 0.0
        %2338 = vmatprep.subr.mxu0 0.0
        %2339 = vmatpush1.msra.mxu0 0.0
        %2340 = vmatprep.subr.mxu0 0.0
        %2341 = vmatpush1.msra.mxu0 0.0
        %2342 = vmatprep.subr.mxu0 0.0
        %2343 = vmatpush1.msra.mxu0 0.0
        %2344 = vmatprep.subr.mxu0 0.0
        %2345 = vmatpush1.msra.mxu0 0.0
        %2346 = vmatprep.subr.mxu0 0.0
        %2347 = vmatpush1.msra.mxu0 0.0
        %2348 = vmatprep.subr.mxu0 0.0
        %2349 = vmatpush1.msra.mxu0 0.0
        %2350 = vmatprep.subr.mxu0 0.0
        %2351 = vmatpush1.msra.mxu0 0.0
        %2352 = vmatprep.subr.mxu0 0.0
        %2353 = vmatpush1.msra.mxu0 0.0
        %2354 = vmatprep.mubr.f32.mxu0 0.0
        %2355 = vmatmul.mubr.f32.gmra.mrb[0].mxu0 %v2146
        %v2356 = vpop.f32.mrb[0].mxu0
        %v2357 = vadd.f32 %v2072, %v2356
        %v2358 = vpop.f32.mrb[0].mxu0
        %v2359 = vadd.f32 %v2074, %v2358
        %2360 = vdwg.mxu0
        %2361 = vmatprep.subr.mxu0 0.0
        %2362 = vmatpush1.msra.mxu0 %v1697
        %2363 = vmatprep.subr.mxu0 0.0
        %2364 = vmatpush1.msra.mxu0 %v1718
        %2365 = vmatprep.subr.mxu0 0.0
        %2366 = vmatpush1.msra.mxu0 %v1745
        %2367 = vmatprep.subr.mxu0 0.0
        %2368 = vmatpush1.msra.mxu0 0.0
        %2369 = vmatprep.subr.mxu0 0.0
        %2370 = vmatpush1.msra.mxu0 0.0
        %2371 = vmatprep.subr.mxu0 0.0
        %2372 = vmatpush1.msra.mxu0 0.0
        %2373 = vmatprep.subr.mxu0 0.0
        %2374 = vmatpush1.msra.mxu0 0.0
        %2375 = vmatprep.subr.mxu0 0.0
        %2376 = vmatpush1.msra.mxu0 0.0
        %2377 = vmatprep.subr.mxu0 0.0
        %2378 = vmatpush1.msra.mxu0 0.0
        %2379 = vmatprep.subr.mxu0 0.0
        %2380 = vmatpush1.msra.mxu0 0.0
        %2381 = vmatprep.subr.mxu0 0.0
        %2382 = vmatpush1.msra.mxu0 0.0
        %2383 = vmatprep.subr.mxu0 0.0
        %2384 = vmatpush1.msra.mxu0 0.0
        %2385 = vmatprep.subr.mxu0 0.0
        %2386 = vmatpush1.msra.mxu0 0.0
        %2387 = vmatprep.subr.mxu0 0.0
        %2388 = vmatpush1.msra.mxu0 0.0
        %2389 = vmatprep.subr.mxu0 0.0
        %2390 = vmatpush1.msra.mxu0 0.0
        %2391 = vmatprep.subr.mxu0 0.0
        %2392 = vmatpush1.msra.mxu0 0.0
        %2393 = vmatprep.subr.mxu0 0.0
        %2394 = vmatpush1.msra.mxu0 0.0
        %2395 = vmatprep.subr.mxu0 0.0
        %2396 = vmatpush1.msra.mxu0 0.0
        %2397 = vmatprep.subr.mxu0 0.0
        %2398 = vmatpush1.msra.mxu0 0.0
        %2399 = vmatprep.subr.mxu0 0.0
        %2400 = vmatpush1.msra.mxu0 0.0
        %2401 = vmatprep.subr.mxu0 0.0
        %2402 = vmatpush1.msra.mxu0 0.0
        %2403 = vmatprep.subr.mxu0 0.0
        %2404 = vmatpush1.msra.mxu0 0.0
        %2405 = vmatprep.subr.mxu0 0.0
        %2406 = vmatpush1.msra.mxu0 0.0
        %2407 = vmatprep.subr.mxu0 0.0
        %2408 = vmatpush1.msra.mxu0 0.0
        %2409 = vmatprep.subr.mxu0 0.0
        %2410 = vmatpush1.msra.mxu0 0.0
        %2411 = vmatprep.subr.mxu0 0.0
        %2412 = vmatpush1.msra.mxu0 0.0
        %2413 = vmatprep.subr.mxu0 0.0
        %2414 = vmatpush1.msra.mxu0 0.0
        %2415 = vmatprep.subr.mxu0 0.0
        %2416 = vmatpush1.msra.mxu0 0.0
        %2417 = vmatprep.subr.mxu0 0.0
        %2418 = vmatpush1.msra.mxu0 0.0
        %2419 = vmatprep.subr.mxu0 0.0
        %2420 = vmatpush1.msra.mxu0 0.0
        %2421 = vmatprep.subr.mxu0 0.0
        %2422 = vmatpush1.msra.mxu0 0.0
        %2423 = vmatprep.subr.mxu0 0.0
        %2424 = vmatpush1.msra.mxu0 0.0
        %2425 = vmatprep.mubr.f32.mxu0 0.0
        %2426 = vmatmul.mubr.f32.gmra.mrb[0].mxu0 %v2146
        %v2427 = vpop.f32.mrb[0].mxu0
        %v2428 = vadd.f32 %v2143, %v2427
        %v2429 = vpop.f32.mrb[0].mxu0
        %2430 = vdwg.mxu0
        %2431 = vrot.lane.b32.xlu0 %v1759, 80
        %v2432 = vpop.permute.xlu0 %2431
        %2433 = vrot.lane.b32.xlu0 %v1691, 64
        %v2434 = vpop.permute.xlu0 %2433
        %2435 = vrot.lane.b32.xlu0 %v1692, 64
        %v2436 = vpop.permute.xlu0 %2435
        %2437 = vrot.lane.b32.xlu0 %v1693, 64
        %v2438 = vpop.permute.xlu0 %2437
        %2439 = vrot.lane.b32.xlu0 %v1694, 64
        %v2440 = vpop.permute.xlu0 %2439
        %2441 = vrot.lane.b32.xlu0 %v1695, 64
        %v2442 = vpop.permute.xlu0 %2441
        %2443 = vrot.lane.b32.xlu0 %v1696, 64
        %v2444 = vpop.permute.xlu0 %2443
        %2445 = vrot.lane.b32.xlu0 %v1697, 64
        %v2446 = vpop.permute.xlu0 %2445
        %2447 = vrot.lane.b32.xlu0 %v1760, 64
        %v2448 = vpop.permute.xlu0 %2447
        %2449 = vrot.lane.b32.xlu0 %v1719, 64
        %v2450 = vpop.permute.xlu0 %2449
        %2451 = vrot.lane.b32.xlu0 %v1720, 64
        %v2452 = vpop.permute.xlu0 %2451
        %2453 = vrot.lane.b32.xlu0 %v1721, 64
        %v2454 = vpop.permute.xlu0 %2453
        %2455 = vrot.lane.b32.xlu0 %v1722, 64
        %v2456 = vpop.permute.xlu0 %2455
        %2457 = vrot.lane.b32.xlu0 %v1723, 64
        %v2458 = vpop.permute.xlu0 %2457
        %2459 = vrot.lane.b32.xlu0 %v1724, 64
        %v2460 = vpop.permute.xlu0 %2459
        %2461 = vrot.lane.b32.xlu0 %v1764, 64
        %v2462 = vpop.permute.xlu0 %2461
        %2463 = vrot.lane.b32.xlu0 %v1763, 64
        %v2464 = vpop.permute.xlu0 %2463
        %2465 = vrot.lane.b32.xlu0 %v1746, 64
        %v2466 = vpop.permute.xlu0 %2465
        %2467 = vrot.lane.b32.xlu0 %v1747, 64
        %v2468 = vpop.permute.xlu0 %2467
        %2469 = vrot.lane.b32.xlu0 %v1748, 64
        %v2470 = vpop.permute.xlu0 %2469
        %2471 = vrot.lane.b32.xlu0 %v1749, 64
        %v2472 = vpop.permute.xlu0 %2471
        %2473 = vrot.lane.b32.xlu0 %v1750, 64
        %v2474 = vpop.permute.xlu0 %2473
        %2475 = vrot.lane.b32.xlu0 %v1751, 64
        %v2476 = vpop.permute.xlu0 %2475
        %2477 = vrot.lane.b32.xlu0 %v1767, 64
        %v2478 = vpop.permute.xlu0 %2477
        %2479 = vrot.lane.b32.xlu0 %v1766, 64
        %v2480 = vpop.permute.xlu0 %2479
        %v2481 = vsel %vm1320, %v2434, %v2436
        %v2482 = vsel %vm1320, %v2436, %v2438
        %v2483 = vsel %vm1320, %v2438, %v2440
        %v2484 = vsel %vm1320, %v2440, %v2442
        %v2485 = vsel %vm1320, %v2442, %v2444
        %v2486 = vsel %vm1320, %v2444, %v2446
        %v2487 = vsel %vm1320, %v2446, %v2448
        %v2488 = vsel %vm1320, %v2450, %v2452
        %v2489 = vsel %vm1320, %v2452, %v2454
        %v2490 = vsel %vm1320, %v2454, %v2456
        %v2491 = vsel %vm1320, %v2456, %v2458
        %v2492 = vsel %vm1320, %v2458, %v2460
        %v2493 = vsel %vm1320, %v2460, %v2462
        %v2494 = vsel %vm1320, %v2462, %v2464
        %v2495 = vsel %vm1320, %v2466, %v2468
        %v2496 = vsel %vm1320, %v2468, %v2470
        %v2497 = vsel %vm1320, %v2470, %v2472
        %v2498 = vsel %vm1320, %v2472, %v2474
        %v2499 = vsel %vm1320, %v2474, %v2476
        %v2500 = vsel %vm1320, %v2476, %v2478
        %v2501 = vsel %vm1320, %v2478, %v2480
        %v2523 = vsel %vm697, %v2432, 0
        %2525 = vmatprep.subr.mxu0 %v2482
        %2526 = vmatpush1.msra.mxu0 %v2481
        %2527 = vmatprep.subr.mxu0 %v2489
        %2528 = vmatpush1.msra.mxu0 %v2488
        %2529 = vmatprep.subr.mxu0 %v2496
        %2530 = vmatpush1.msra.mxu0 %v2495
        %2531 = vmatprep.subr.mxu0 0.0
        %2532 = vmatpush1.msra.mxu0 0.0
        %2533 = vmatprep.subr.mxu0 0.0
        %2534 = vmatpush1.msra.mxu0 0.0
        %2535 = vmatprep.subr.mxu0 0.0
        %2536 = vmatpush1.msra.mxu0 0.0
        %2537 = vmatprep.subr.mxu0 0.0
        %2538 = vmatpush1.msra.mxu0 0.0
        %2539 = vmatprep.subr.mxu0 0.0
        %2540 = vmatpush1.msra.mxu0 0.0
        %2541 = vmatprep.subr.mxu0 0.0
        %2542 = vmatpush1.msra.mxu0 0.0
        %2543 = vmatprep.subr.mxu0 0.0
        %2544 = vmatpush1.msra.mxu0 0.0
        %2545 = vmatprep.subr.mxu0 0.0
        %2546 = vmatpush1.msra.mxu0 0.0
        %2547 = vmatprep.subr.mxu0 0.0
        %2548 = vmatpush1.msra.mxu0 0.0
        %2549 = vmatprep.subr.mxu0 0.0
        %2550 = vmatpush1.msra.mxu0 0.0
        %2551 = vmatprep.subr.mxu0 0.0
        %2552 = vmatpush1.msra.mxu0 0.0
        %2553 = vmatprep.subr.mxu0 0.0
        %2554 = vmatpush1.msra.mxu0 0.0
        %2555 = vmatprep.subr.mxu0 0.0
        %2556 = vmatpush1.msra.mxu0 0.0
        %2557 = vmatprep.subr.mxu0 0.0
        %2558 = vmatpush1.msra.mxu0 0.0
        %2559 = vmatprep.subr.mxu0 0.0
        %2560 = vmatpush1.msra.mxu0 0.0
        %2561 = vmatprep.subr.mxu0 0.0
        %2562 = vmatpush1.msra.mxu0 0.0
        %2563 = vmatprep.subr.mxu0 0.0
        %2564 = vmatpush1.msra.mxu0 0.0
        %2565 = vmatprep.subr.mxu0 0.0
        %2566 = vmatpush1.msra.mxu0 0.0
        %2567 = vmatprep.subr.mxu0 0.0
        %2568 = vmatpush1.msra.mxu0 0.0
        %2569 = vmatprep.subr.mxu0 0.0
        %2570 = vmatpush1.msra.mxu0 0.0
        %2571 = vmatprep.subr.mxu0 0.0
        %2572 = vmatpush1.msra.mxu0 0.0
        %2573 = vmatprep.subr.mxu0 0.0
        %2574 = vmatpush1.msra.mxu0 0.0
        %2575 = vmatprep.subr.mxu0 0.0
        %2576 = vmatpush1.msra.mxu0 0.0
        %2577 = vmatprep.subr.mxu0 0.0
        %2578 = vmatpush1.msra.mxu0 0.0
        %2579 = vmatprep.subr.mxu0 0.0
        %2580 = vmatpush1.msra.mxu0 0.0
        %2581 = vmatprep.subr.mxu0 0.0
        %2582 = vmatpush1.msra.mxu0 0.0
        %2583 = vmatprep.subr.mxu0 0.0
        %2584 = vmatpush1.msra.mxu0 0.0
        %2585 = vmatprep.subr.mxu0 0.0
        %2586 = vmatpush1.msra.mxu0 0.0
        %2587 = vmatprep.subr.mxu0 0.0
        %2588 = vmatpush1.msra.mxu0 0.0
        %2589 = vmatprep.mubr.f32.mxu0 0.0
        %2590 = vmatmul.mubr.f32.gmra.mrb[0].mxu0 %v2523
        %v2591 = vpop.f32.mrb[0].mxu0
        %v2592 = vadd.f32 0.0, %v2591
        %v2593 = vpop.f32.mrb[0].mxu0
        %v2594 = vadd.f32 0.0, %v2593
        %2595 = vdwg.mxu0
        %2596 = vmatprep.subr.mxu0 %v2484
        %2597 = vmatpush1.msra.mxu0 %v2483
        %2598 = vmatprep.subr.mxu0 %v2491
        %2599 = vmatpush1.msra.mxu0 %v2490
        %2600 = vmatprep.subr.mxu0 %v2498
        %2601 = vmatpush1.msra.mxu0 %v2497
        %2602 = vmatprep.subr.mxu0 0.0
        %2603 = vmatpush1.msra.mxu0 0.0
        %2604 = vmatprep.subr.mxu0 0.0
        %2605 = vmatpush1.msra.mxu0 0.0
        %2606 = vmatprep.subr.mxu0 0.0
        %2607 = vmatpush1.msra.mxu0 0.0
        %2608 = vmatprep.subr.mxu0 0.0
        %2609 = vmatpush1.msra.mxu0 0.0
        %2610 = vmatprep.subr.mxu0 0.0
        %2611 = vmatpush1.msra.mxu0 0.0
        %2612 = vmatprep.subr.mxu0 0.0
        %2613 = vmatpush1.msra.mxu0 0.0
        %2614 = vmatprep.subr.mxu0 0.0
        %2615 = vmatpush1.msra.mxu0 0.0
        %2616 = vmatprep.subr.mxu0 0.0
        %2617 = vmatpush1.msra.mxu0 0.0
        %2618 = vmatprep.subr.mxu0 0.0
        %2619 = vmatpush1.msra.mxu0 0.0
        %2620 = vmatprep.subr.mxu0 0.0
        %2621 = vmatpush1.msra.mxu0 0.0
        %2622 = vmatprep.subr.mxu0 0.0
        %2623 = vmatpush1.msra.mxu0 0.0
        %2624 = vmatprep.subr.mxu0 0.0
        %2625 = vmatpush1.msra.mxu0 0.0
        %2626 = vmatprep.subr.mxu0 0.0
        %2627 = vmatpush1.msra.mxu0 0.0
        %2628 = vmatprep.subr.mxu0 0.0
        %2629 = vmatpush1.msra.mxu0 0.0
        %2630 = vmatprep.subr.mxu0 0.0
        %2631 = vmatpush1.msra.mxu0 0.0
        %2632 = vmatprep.subr.mxu0 0.0
        %2633 = vmatpush1.msra.mxu0 0.0
        %2634 = vmatprep.subr.mxu0 0.0
        %2635 = vmatpush1.msra.mxu0 0.0
        %2636 = vmatprep.subr.mxu0 0.0
        %2637 = vmatpush1.msra.mxu0 0.0
        %2638 = vmatprep.subr.mxu0 0.0
        %2639 = vmatpush1.msra.mxu0 0.0
        %2640 = vmatprep.subr.mxu0 0.0
        %2641 = vmatpush1.msra.mxu0 0.0
        %2642 = vmatprep.subr.mxu0 0.0
        %2643 = vmatpush1.msra.mxu0 0.0
        %2644 = vmatprep.subr.mxu0 0.0
        %2645 = vmatpush1.msra.mxu0 0.0
        %2646 = vmatprep.subr.mxu0 0.0
        %2647 = vmatpush1.msra.mxu0 0.0
        %2648 = vmatprep.subr.mxu0 0.0
        %2649 = vmatpush1.msra.mxu0 0.0
        %2650 = vmatprep.subr.mxu0 0.0
        %2651 = vmatpush1.msra.mxu0 0.0
        %2652 = vmatprep.subr.mxu0 0.0
        %2653 = vmatpush1.msra.mxu0 0.0
        %2654 = vmatprep.subr.mxu0 0.0
        %2655 = vmatpush1.msra.mxu0 0.0
        %2656 = vmatprep.subr.mxu0 0.0
        %2657 = vmatpush1.msra.mxu0 0.0
        %2658 = vmatprep.subr.mxu0 0.0
        %2659 = vmatpush1.msra.mxu0 0.0
        %2660 = vmatprep.mubr.f32.mxu0 0.0
        %2661 = vmatmul.mubr.f32.gmra.mrb[0].mxu0 %v2523
        %v2662 = vpop.f32.mrb[0].mxu0
        %v2663 = vadd.f32 0.0, %v2662
        %v2664 = vpop.f32.mrb[0].mxu0
        %v2665 = vadd.f32 0.0, %v2664
        %2666 = vdwg.mxu0
        %2667 = vmatprep.subr.mxu0 %v2486
        %2668 = vmatpush1.msra.mxu0 %v2485
        %2669 = vmatprep.subr.mxu0 %v2493
        %2670 = vmatpush1.msra.mxu0 %v2492
        %2671 = vmatprep.subr.mxu0 %v2500
        %2672 = vmatpush1.msra.mxu0 %v2499
        %2673 = vmatprep.subr.mxu0 0.0
        %2674 = vmatpush1.msra.mxu0 0.0
        %2675 = vmatprep.subr.mxu0 0.0
        %2676 = vmatpush1.msra.mxu0 0.0
        %2677 = vmatprep.subr.mxu0 0.0
        %2678 = vmatpush1.msra.mxu0 0.0
        %2679 = vmatprep.subr.mxu0 0.0
        %2680 = vmatpush1.msra.mxu0 0.0
        %2681 = vmatprep.subr.mxu0 0.0
        %2682 = vmatpush1.msra.mxu0 0.0
        %2683 = vmatprep.subr.mxu0 0.0
        %2684 = vmatpush1.msra.mxu0 0.0
        %2685 = vmatprep.subr.mxu0 0.0
        %2686 = vmatpush1.msra.mxu0 0.0
        %2687 = vmatprep.subr.mxu0 0.0
        %2688 = vmatpush1.msra.mxu0 0.0
        %2689 = vmatprep.subr.mxu0 0.0
        %2690 = vmatpush1.msra.mxu0 0.0
        %2691 = vmatprep.subr.mxu0 0.0
        %2692 = vmatpush1.msra.mxu0 0.0
        %2693 = vmatprep.subr.mxu0 0.0
        %2694 = vmatpush1.msra.mxu0 0.0
        %2695 = vmatprep.subr.mxu0 0.0
        %2696 = vmatpush1.msra.mxu0 0.0
        %2697 = vmatprep.subr.mxu0 0.0
        %2698 = vmatpush1.msra.mxu0 0.0
        %2699 = vmatprep.subr.mxu0 0.0
        %2700 = vmatpush1.msra.mxu0 0.0
        %2701 = vmatprep.subr.mxu0 0.0
        %2702 = vmatpush1.msra.mxu0 0.0
        %2703 = vmatprep.subr.mxu0 0.0
        %2704 = vmatpush1.msra.mxu0 0.0
        %2705 = vmatprep.subr.mxu0 0.0
        %2706 = vmatpush1.msra.mxu0 0.0
        %2707 = vmatprep.subr.mxu0 0.0
        %2708 = vmatpush1.msra.mxu0 0.0
        %2709 = vmatprep.subr.mxu0 0.0
        %2710 = vmatpush1.msra.mxu0 0.0
        %2711 = vmatprep.subr.mxu0 0.0
        %2712 = vmatpush1.msra.mxu0 0.0
        %2713 = vmatprep.subr.mxu0 0.0
        %2714 = vmatpush1.msra.mxu0 0.0
        %2715 = vmatprep.subr.mxu0 0.0
        %2716 = vmatpush1.msra.mxu0 0.0
        %2717 = vmatprep.subr.mxu0 0.0
        %2718 = vmatpush1.msra.mxu0 0.0
        %2719 = vmatprep.subr.mxu0 0.0
        %2720 = vmatpush1.msra.mxu0 0.0
        %2721 = vmatprep.subr.mxu0 0.0
        %2722 = vmatpush1.msra.mxu0 0.0
        %2723 = vmatprep.subr.mxu0 0.0
        %2724 = vmatpush1.msra.mxu0 0.0
        %2725 = vmatprep.subr.mxu0 0.0
        %2726 = vmatpush1.msra.mxu0 0.0
        %2727 = vmatprep.subr.mxu0 0.0
        %2728 = vmatpush1.msra.mxu0 0.0
        %2729 = vmatprep.subr.mxu0 0.0
        %2730 = vmatpush1.msra.mxu0 0.0
        %2731 = vmatprep.mubr.f32.mxu0 0.0
        %2732 = vmatmul.mubr.f32.gmra.mrb[0].mxu0 %v2523
        %v2733 = vpop.f32.mrb[0].mxu0
        %v2734 = vadd.f32 0.0, %v2733
        %v2735 = vpop.f32.mrb[0].mxu0
        %v2736 = vadd.f32 0.0, %v2735
        %2737 = vdwg.mxu0
        %2738 = vmatprep.subr.mxu0 0.0
        %2739 = vmatpush1.msra.mxu0 %v2487
        %2740 = vmatprep.subr.mxu0 0.0
        %2741 = vmatpush1.msra.mxu0 %v2494
        %2742 = vmatprep.subr.mxu0 0.0
        %2743 = vmatpush1.msra.mxu0 %v2501
        %2744 = vmatprep.subr.mxu0 0.0
        %2745 = vmatpush1.msra.mxu0 0.0
        %2746 = vmatprep.subr.mxu0 0.0
        %2747 = vmatpush1.msra.mxu0 0.0
        %2748 = vmatprep.subr.mxu0 0.0
        %2749 = vmatpush1.msra.mxu0 0.0
        %2750 = vmatprep.subr.mxu0 0.0
        %2751 = vmatpush1.msra.mxu0 0.0
        %2752 = vmatprep.subr.mxu0 0.0
        %2753 = vmatpush1.msra.mxu0 0.0
        %2754 = vmatprep.subr.mxu0 0.0
        %2755 = vmatpush1.msra.mxu0 0.0
        %2756 = vmatprep.subr.mxu0 0.0
        %2757 = vmatpush1.msra.mxu0 0.0
        %2758 = vmatprep.subr.mxu0 0.0
        %2759 = vmatpush1.msra.mxu0 0.0
        %2760 = vmatprep.subr.mxu0 0.0
        %2761 = vmatpush1.msra.mxu0 0.0
        %2762 = vmatprep.subr.mxu0 0.0
        %2763 = vmatpush1.msra.mxu0 0.0
        %2764 = vmatprep.subr.mxu0 0.0
        %2765 = vmatpush1.msra.mxu0 0.0
        %2766 = vmatprep.subr.mxu0 0.0
        %2767 = vmatpush1.msra.mxu0 0.0
        %2768 = vmatprep.subr.mxu0 0.0
        %2769 = vmatpush1.msra.mxu0 0.0
        %2770 = vmatprep.subr.mxu0 0.0
        %2771 = vmatpush1.msra.mxu0 0.0
        %2772 = vmatprep.subr.mxu0 0.0
        %2773 = vmatpush1.msra.mxu0 0.0
        %2774 = vmatprep.subr.mxu0 0.0
        %2775 = vmatpush1.msra.mxu0 0.0
        %2776 = vmatprep.subr.mxu0 0.0
        %2777 = vmatpush1.msra.mxu0 0.0
        %2778 = vmatprep.subr.mxu0 0.0
        %2779 = vmatpush1.msra.mxu0 0.0
        %2780 = vmatprep.subr.mxu0 0.0
        %2781 = vmatpush1.msra.mxu0 0.0
        %2782 = vmatprep.subr.mxu0 0.0
        %2783 = vmatpush1.msra.mxu0 0.0
        %2784 = vmatprep.subr.mxu0 0.0
        %2785 = vmatpush1.msra.mxu0 0.0
        %2786 = vmatprep.subr.mxu0 0.0
        %2787 = vmatpush1.msra.mxu0 0.0
        %2788 = vmatprep.subr.mxu0 0.0
        %2789 = vmatpush1.msra.mxu0 0.0
        %2790 = vmatprep.subr.mxu0 0.0
        %2791 = vmatpush1.msra.mxu0 0.0
        %2792 = vmatprep.subr.mxu0 0.0
        %2793 = vmatpush1.msra.mxu0 0.0
        %2794 = vmatprep.subr.mxu0 0.0
        %2795 = vmatpush1.msra.mxu0 0.0
        %2796 = vmatprep.subr.mxu0 0.0
        %2797 = vmatpush1.msra.mxu0 0.0
        %2798 = vmatprep.subr.mxu0 0.0
        %2799 = vmatpush1.msra.mxu0 0.0
        %2800 = vmatprep.subr.mxu0 0.0
        %2801 = vmatpush1.msra.mxu0 0.0
        %2802 = vmatprep.mubr.f32.mxu0 0.0
        %2803 = vmatmul.mubr.f32.gmra.mrb[0].mxu0 %v2523
        %v2804 = vpop.f32.mrb[0].mxu0
        %v2805 = vadd.f32 0.0, %v2804
        %v2806 = vpop.f32.mrb[0].mxu0
        %2807 = vdwg.mxu0
        %v2808 = vadd.f32 %v2215, %v2592
        %v2809 = vadd.f32 %v2217, %v2594
        %v2810 = vadd.f32 %v2286, %v2663
        %v2811 = vadd.f32 %v2288, %v2665
        %v2812 = vadd.f32 %v2357, %v2734
        %v2813 = vadd.f32 %v2359, %v2736
        %v2814 = vadd.f32 %v2428, %v2805
        %v2815 = vld [vmem:[%s4] sm:$0xff]
        %2817 = vset.pattern.permute.xlu0 0
        %2818 = vperm.xlu0 %2817, %v2815
        %v2819 = vpop.permute.xlu0 %2818
        %v2821 = vadd.f32 %v2808, %v2819
        %v2822 = vadd.f32 %v2809, %v2819
        %v2823 = vadd.f32 %v2810, %v2819
        %v2824 = vadd.f32 %v2811, %v2819
        %v2825 = vadd.f32 %v2812, %v2819
        %v2826 = vadd.f32 %v2813, %v2819
        %v2827 = vadd.f32 %v2814, %v2819
        %v2828 = vmax.f32 %v2821, 0.0
        %v2829 = vmax.f32 %v2822, 0.0
        %v2830 = vmax.f32 %v2823, 0.0
        %v2831 = vmax.f32 %v2824, 0.0
        %v2832 = vmax.f32 %v2825, 0.0
        %v2833 = vmax.f32 %v2826, 0.0
        %v2834 = vmax.f32 %v2827, 0.0
        %2835 = vst [vmem:[#allocation3] sm:$0xff] %v2828
        %2836 = vst [vmem:[#allocation3 + $0x8] sm:$0xff] %v2829
        %2837 = vst [vmem:[#allocation3 + $0x10] sm:$0xff] %v2830
        %2838 = vst [vmem:[#allocation3 + $0x18] sm:$0xff] %v2831
        %2839 = vst [vmem:[#allocation3 + $0x20] sm:$0xff] %v2832
        %2840 = vst [vmem:[#allocation3 + $0x28] sm:$0xff] %v2833
        %vm2841 = vcmask 1014784
        %2842 = vst.msk [vmem:[#allocation3 + $0x30] sm:$0xff] %vm2841, %v2834
        %v2843 = vld [vmem:[#allocation3] sm:$0xff]
        %v2844 = vld [vmem:[#allocation3 + $0x8] sm:$0xff]
        %v2845 = vld [vmem:[#allocation3 + $0x10] sm:$0xff]
        %v2846 = vld [vmem:[#allocation3 + $0x18] sm:$0xff]
        %v2847 = vld [vmem:[#allocation3 + $0x20] sm:$0xff]
        %v2848 = vld [vmem:[#allocation3 + $0x28] sm:$0xff]
        %v2849 = vld [vmem:[#allocation3 + $0x30] sm:$0xff]
        %2857 = vrot.lane.b32.xlu0 %v2843, 127
        %v2858 = vpop.permute.xlu0 %2857
        %2859 = vrot.lane.b32.xlu0 %v2844, 127
        %v2860 = vpop.permute.xlu0 %2859
        %2861 = vrot.lane.b32.xlu0 %v2845, 127
        %v2862 = vpop.permute.xlu0 %2861
        %2863 = vrot.lane.b32.xlu0 %v2846, 127
        %v2864 = vpop.permute.xlu0 %2863
        %2865 = vrot.lane.b32.xlu0 %v2847, 127
        %v2866 = vpop.permute.xlu0 %2865
        %2867 = vrot.lane.b32.xlu0 %v2848, 127
        %v2868 = vpop.permute.xlu0 %2867
        %2869 = vrot.lane.b32.xlu0 %v2849, 127
        %v2870 = vpop.permute.xlu0 %2869
        %v2871 = vsel %vm551, %v2858, %v2860
        %v2872 = vsel %vm551, %v2860, %v2862
        %v2873 = vsel %vm551, %v2862, %v2864
        %v2874 = vsel %vm551, %v2864, %v2866
        %v2875 = vsel %vm551, %v2866, %v2868
        %v2876 = vsel %vm551, %v2868, %v2870
        %v2884 = vmax.f32 %v2843, %v2871
        %v2885 = vmax.f32 %v2844, %v2872
        %v2886 = vmax.f32 %v2845, %v2873
        %v2887 = vmax.f32 %v2846, %v2874
        %v2888 = vmax.f32 %v2847, %v2875
        %v2889 = vmax.f32 %v2848, %v2876
        %v2890 = vmax.f32 %v2849, %v2870
        %2898 = vrot.lane.b32.xlu0 %v2884, 96
        %v2899 = vpop.permute.xlu0 %2898
        %2900 = vrot.lane.b32.xlu0 %v2885, 96
        %v2901 = vpop.permute.xlu0 %2900
        %2902 = vrot.lane.b32.xlu0 %v2886, 96
        %v2903 = vpop.permute.xlu0 %2902
        %2904 = vrot.lane.b32.xlu0 %v2887, 96
        %v2905 = vpop.permute.xlu0 %2904
        %2906 = vrot.lane.b32.xlu0 %v2888, 96
        %v2907 = vpop.permute.xlu0 %2906
        %2908 = vrot.lane.b32.xlu0 %v2889, 96
        %v2909 = vpop.permute.xlu0 %2908
        %2910 = vrot.lane.b32.xlu0 %v2890, 96
        %v2911 = vpop.permute.xlu0 %2910
        %v2912 = vsel %vm651, %v2899, %v2901
        %v2913 = vsel %vm651, %v2901, %v2903
        %v2914 = vsel %vm651, %v2903, %v2905
        %v2915 = vsel %vm651, %v2905, %v2907
        %v2916 = vsel %vm651, %v2907, %v2909
        %v2917 = vsel %vm651, %v2909, %v2911
        %v2925 = vmax.f32 %v2884, %v2912
        %v2926 = vmax.f32 %v2885, %v2913
        %v2927 = vmax.f32 %v2886, %v2914
        %v2928 = vmax.f32 %v2887, %v2915
        %v2929 = vmax.f32 %v2888, %v2916
        %v2930 = vmax.f32 %v2889, %v2917
        %v2931 = vmax.f32 %v2890, %v2911
        %2932 = vst [vmem:[#allocation4] sm:$0xff] %v2925
        %2933 = vst [vmem:[#allocation4 + $0x8] sm:$0xff] %v2926
        %2934 = vst [vmem:[#allocation4 + $0x10] sm:$0xff] %v2927
        %2935 = vst [vmem:[#allocation4 + $0x18] sm:$0xff] %v2928
        %2936 = vst [vmem:[#allocation4 + $0x20] sm:$0xff] %v2929
        %2937 = vst [vmem:[#allocation4 + $0x28] sm:$0xff] %v2930
        %vm2938 = vcmask 744448
        %2939 = vst.msk [vmem:[#allocation4 + $0x30] sm:$0xff] %vm2938, %v2931
        %v2940 = vld [vmem:[#allocation4] sm:$0xff]
        %v2941 = vld [vmem:[#allocation4 + $0x8] sm:$0xff]
        %v2942 = vld [vmem:[#allocation4 + $0x10] sm:$0xff]
        %v2943 = vld [vmem:[#allocation4 + $0x18] sm:$0xff]
        %v2944 = vld [vmem:[#allocation4 + $0x20] sm:$0xff]
        %2950 = vrot.lane.b32.xlu0 %v2940, 126
        %v2951 = vpop.permute.xlu0 %2950
        %2952 = vrot.lane.b32.xlu0 %v2941, 126
        %v2953 = vpop.permute.xlu0 %2952
        %2954 = vrot.lane.b32.xlu0 %v2942, 126
        %v2955 = vpop.permute.xlu0 %2954
        %2956 = vrot.lane.b32.xlu0 %v2943, 126
        %v2957 = vpop.permute.xlu0 %2956
        %2958 = vrot.lane.b32.xlu0 %v2944, 126
        %v2959 = vpop.permute.xlu0 %2958
        %v2960 = vsel %vm583, %v2951, %v2953
        %v2961 = vsel %vm583, %v2953, %v2955
        %v2962 = vsel %vm583, %v2955, %v2957
        %v2963 = vsel %vm583, %v2957, %v2959
        %2969 = vrot.lane.b32.xlu0 %v2940, 124
        %v2970 = vpop.permute.xlu0 %2969
        %2971 = vrot.lane.b32.xlu0 %v2941, 124
        %v2972 = vpop.permute.xlu0 %2971
        %2973 = vrot.lane.b32.xlu0 %v2942, 124
        %v2974 = vpop.permute.xlu0 %2973
        %2975 = vrot.lane.b32.xlu0 %v2943, 124
        %v2976 = vpop.permute.xlu0 %2975
        %2977 = vrot.lane.b32.xlu0 %v2944, 124
        %v2978 = vpop.permute.xlu0 %2977
        %v2979 = vsel %vm2841, %v2970, %v2972
        %v2980 = vsel %vm2841, %v2972, %v2974
        %v2981 = vsel %vm2841, %v2974, %v2976
        %v2982 = vsel %vm2841, %v2976, %v2978
        %2988 = vrot.lane.b32.xlu0 %v2940, 122
        %v2989 = vpop.permute.xlu0 %2988
        %2990 = vrot.lane.b32.xlu0 %v2941, 122
        %v2991 = vpop.permute.xlu0 %2990
        %2992 = vrot.lane.b32.xlu0 %v2942, 122
        %v2993 = vpop.permute.xlu0 %2992
        %2994 = vrot.lane.b32.xlu0 %v2943, 122
        %v2995 = vpop.permute.xlu0 %2994
        %2996 = vrot.lane.b32.xlu0 %v2944, 122
        %v2997 = vpop.permute.xlu0 %2996
        %vm2998 = vcmask 998400
        %v2999 = vsel %vm2998, %v2989, %v2991
        %v3000 = vsel %vm2998, %v2991, %v2993
        %v3001 = vsel %vm2998, %v2993, %v2995
        %v3002 = vsel %vm2998, %v2995, %v2997
        %3008 = vrot.lane.b32.xlu0 %v2940, 120
        %v3009 = vpop.permute.xlu0 %3008
        %3010 = vrot.lane.b32.xlu0 %v2941, 120
        %v3011 = vpop.permute.xlu0 %3010
        %3012 = vrot.lane.b32.xlu0 %v2942, 120
        %v3013 = vpop.permute.xlu0 %3012
        %3014 = vrot.lane.b32.xlu0 %v2943, 120
        %v3015 = vpop.permute.xlu0 %3014
        %3016 = vrot.lane.b32.xlu0 %v2944, 120
        %v3017 = vpop.permute.xlu0 %3016
        %vm3018 = vcmask 982016
        %v3019 = vsel %vm3018, %v3009, %v3011
        %v3020 = vsel %vm3018, %v3011, %v3013
        %v3021 = vsel %vm3018, %v3013, %v3015
        %v3022 = vsel %vm3018, %v3015, %v3017
        %v3028 = vld [vmem:[%s5] sm:$0xff]
        %v3029 = vld [vmem:[%s5 + $0x10] sm:$0xff]
        %v3030 = vld [vmem:[#allocation4 + $0x28] sm:$0xff]
        %3032 = vrot.lane.b32.xlu0 %v3030, 126
        %v3033 = vpop.permute.xlu0 %3032
        %v3034 = vsel %vm583, %v2959, %v3033
        %3035 = vrot.lane.b32.xlu0 %v3030, 124
        %v3036 = vpop.permute.xlu0 %3035
        %v3037 = vsel %vm2841, %v2978, %v3036
        %3038 = vrot.lane.b32.xlu0 %v3030, 122
        %v3039 = vpop.permute.xlu0 %3038
        %v3040 = vsel %vm2998, %v2997, %v3039
        %3041 = vrot.lane.b32.xlu0 %v3030, 120
        %v3042 = vpop.permute.xlu0 %3041
        %v3043 = vsel %vm3018, %v3017, %v3042
        %3046 = vrot.lane.b32.xlu0 %v3028, 88
        %v3047 = vpop.permute.xlu0 %3046
        %3048 = vrot.lane.b32.xlu0 %v3029, 88
        %v3049 = vpop.permute.xlu0 %3048
        %3050 = vrot.lane.b32.xlu0 %v2940, 64
        %v3051 = vpop.permute.xlu0 %3050
        %3052 = vrot.lane.b32.xlu0 %v2941, 64
        %v3053 = vpop.permute.xlu0 %3052
        %3054 = vrot.lane.b32.xlu0 %v2942, 64
        %v3055 = vpop.permute.xlu0 %3054
        %3056 = vrot.lane.b32.xlu0 %v2943, 64
        %v3057 = vpop.permute.xlu0 %3056
        %3058 = vrot.lane.b32.xlu0 %v2944, 64
        %v3059 = vpop.permute.xlu0 %3058
        %3060 = vrot.lane.b32.xlu0 %v3030, 64
        %v3061 = vpop.permute.xlu0 %3060
        %3062 = vrot.lane.b32.xlu0 %v2960, 64
        %v3063 = vpop.permute.xlu0 %3062
        %3064 = vrot.lane.b32.xlu0 %v2961, 64
        %v3065 = vpop.permute.xlu0 %3064
        %3066 = vrot.lane.b32.xlu0 %v2962, 64
        %v3067 = vpop.permute.xlu0 %3066
        %3068 = vrot.lane.b32.xlu0 %v2963, 64
        %v3069 = vpop.permute.xlu0 %3068
        %3070 = vrot.lane.b32.xlu0 %v3034, 64
        %v3071 = vpop.permute.xlu0 %3070
        %3072 = vrot.lane.b32.xlu0 %v3033, 64
        %v3073 = vpop.permute.xlu0 %3072
        %3074 = vrot.lane.b32.xlu0 %v2979, 64
        %v3075 = vpop.permute.xlu0 %3074
        %3076 = vrot.lane.b32.xlu0 %v2980, 64
        %v3077 = vpop.permute.xlu0 %3076
        %3078 = vrot.lane.b32.xlu0 %v2981, 64
        %v3079 = vpop.permute.xlu0 %3078
        %3080 = vrot.lane.b32.xlu0 %v2982, 64
        %v3081 = vpop.permute.xlu0 %3080
        %3082 = vrot.lane.b32.xlu0 %v3037, 64
        %v3083 = vpop.permute.xlu0 %3082
        %3084 = vrot.lane.b32.xlu0 %v3036, 64
        %v3085 = vpop.permute.xlu0 %3084
        %3086 = vrot.lane.b32.xlu0 %v2999, 64
        %v3087 = vpop.permute.xlu0 %3086
        %3088 = vrot.lane.b32.xlu0 %v3000, 64
        %v3089 = vpop.permute.xlu0 %3088
        %3090 = vrot.lane.b32.xlu0 %v3001, 64
        %v3091 = vpop.permute.xlu0 %3090
        %3092 = vrot.lane.b32.xlu0 %v3002, 64
        %v3093 = vpop.permute.xlu0 %3092
        %3094 = vrot.lane.b32.xlu0 %v3040, 64
        %v3095 = vpop.permute.xlu0 %3094
        %3096 = vrot.lane.b32.xlu0 %v3039, 64
        %v3097 = vpop.permute.xlu0 %3096
        %3098 = vrot.lane.b32.xlu0 %v3019, 64
        %v3099 = vpop.permute.xlu0 %3098
        %3100 = vrot.lane.b32.xlu0 %v3020, 64
        %v3101 = vpop.permute.xlu0 %3100
        %3102 = vrot.lane.b32.xlu0 %v3021, 64
        %v3103 = vpop.permute.xlu0 %3102
        %3104 = vrot.lane.b32.xlu0 %v3022, 64
        %v3105 = vpop.permute.xlu0 %3104
        %3106 = vrot.lane.b32.xlu0 %v3043, 64
        %v3107 = vpop.permute.xlu0 %3106
        %3108 = vrot.lane.b32.xlu0 %v3042, 64
        %v3109 = vpop.permute.xlu0 %3108
        %v3110 = vsel %vm1320, %v3051, %v3053
        %v3111 = vsel %vm1320, %v3053, %v3055
        %v3112 = vsel %vm1320, %v3055, %v3057
        %v3113 = vsel %vm1320, %v3057, %v3059
        %v3114 = vsel %vm1320, %v3059, %v3061
        %v3115 = vsel %vm1320, %v3063, %v3065
        %v3116 = vsel %vm1320, %v3065, %v3067
        %v3117 = vsel %vm1320, %v3067, %v3069
        %v3118 = vsel %vm1320, %v3069, %v3071
        %v3119 = vsel %vm1320, %v3071, %v3073
        %v3120 = vsel %vm1320, %v3075, %v3077
        %v3121 = vsel %vm1320, %v3077, %v3079
        %v3122 = vsel %vm1320, %v3079, %v3081
        %v3123 = vsel %vm1320, %v3081, %v3083
        %v3124 = vsel %vm1320, %v3083, %v3085
        %v3125 = vsel %vm1320, %v3087, %v3089
        %v3126 = vsel %vm1320, %v3089, %v3091
        %v3127 = vsel %vm1320, %v3091, %v3093
        %v3128 = vsel %vm1320, %v3093, %v3095
        %v3129 = vsel %vm1320, %v3095, %v3097
        %v3130 = vsel %vm1320, %v3099, %v3101
        %v3131 = vsel %vm1320, %v3101, %v3103
        %v3132 = vsel %vm1320, %v3103, %v3105
        %v3133 = vsel %vm1320, %v3105, %v3107
        %v3134 = vsel %vm1320, %v3107, %v3109
        %vm3160 = vcmask 326656
        %v3161 = vsel %vm3160, %v3047, 0
        %v3163 = vsel %vm3160, %v3049, 0
        %3165 = vmatprep.subr.mxu0 %v3111
        %3166 = vmatpush1.msra.mxu0 %v3110
        %3167 = vmatprep.subr.mxu0 %v3116
        %3168 = vmatpush1.msra.mxu0 %v3115
        %3169 = vmatprep.subr.mxu0 %v3121
        %3170 = vmatpush1.msra.mxu0 %v3120
        %3171 = vmatprep.subr.mxu0 %v3126
        %3172 = vmatpush1.msra.mxu0 %v3125
        %3173 = vmatprep.subr.mxu0 %v3131
        %3174 = vmatpush1.msra.mxu0 %v3130
        %3175 = vmatprep.subr.mxu0 0.0
        %3176 = vmatpush1.msra.mxu0 0.0
        %3177 = vmatprep.subr.mxu0 0.0
        %3178 = vmatpush1.msra.mxu0 0.0
        %3179 = vmatprep.subr.mxu0 0.0
        %3180 = vmatpush1.msra.mxu0 0.0
        %3181 = vmatprep.subr.mxu0 0.0
        %3182 = vmatpush1.msra.mxu0 0.0
        %3183 = vmatprep.subr.mxu0 0.0
        %3184 = vmatpush1.msra.mxu0 0.0
        %3185 = vmatprep.subr.mxu0 0.0
        %3186 = vmatpush1.msra.mxu0 0.0
        %3187 = vmatprep.subr.mxu0 0.0
        %3188 = vmatpush1.msra.mxu0 0.0
        %3189 = vmatprep.subr.mxu0 0.0
        %3190 = vmatpush1.msra.mxu0 0.0
        %3191 = vmatprep.subr.mxu0 0.0
        %3192 = vmatpush1.msra.mxu0 0.0
        %3193 = vmatprep.subr.mxu0 0.0
        %3194 = vmatpush1.msra.mxu0 0.0
        %3195 = vmatprep.subr.mxu0 0.0
        %3196 = vmatpush1.msra.mxu0 0.0
        %3197 = vmatprep.subr.mxu0 0.0
        %3198 = vmatpush1.msra.mxu0 0.0
        %3199 = vmatprep.subr.mxu0 0.0
        %3200 = vmatpush1.msra.mxu0 0.0
        %3201 = vmatprep.subr.mxu0 0.0
        %3202 = vmatpush1.msra.mxu0 0.0
        %3203 = vmatprep.subr.mxu0 0.0
        %3204 = vmatpush1.msra.mxu0 0.0
        %3205 = vmatprep.subr.mxu0 0.0
        %3206 = vmatpush1.msra.mxu0 0.0
        %3207 = vmatprep.subr.mxu0 0.0
        %3208 = vmatpush1.msra.mxu0 0.0
        %3209 = vmatprep.subr.mxu0 0.0
        %3210 = vmatpush1.msra.mxu0 0.0
        %3211 = vmatprep.subr.mxu0 0.0
        %3212 = vmatpush1.msra.mxu0 0.0
        %3213 = vmatprep.subr.mxu0 0.0
        %3214 = vmatpush1.msra.mxu0 0.0
        %3215 = vmatprep.subr.mxu0 0.0
        %3216 = vmatpush1.msra.mxu0 0.0
        %3217 = vmatprep.subr.mxu0 0.0
        %3218 = vmatpush1.msra.mxu0 0.0
        %3219 = vmatprep.subr.mxu0 0.0
        %3220 = vmatpush1.msra.mxu0 0.0
        %3221 = vmatprep.subr.mxu0 0.0
        %3222 = vmatpush1.msra.mxu0 0.0
        %3223 = vmatprep.subr.mxu0 0.0
        %3224 = vmatpush1.msra.mxu0 0.0
        %3225 = vmatprep.subr.mxu0 0.0
        %3226 = vmatpush1.msra.mxu0 0.0
        %3227 = vmatprep.subr.mxu0 0.0
        %3228 = vmatpush1.msra.mxu0 0.0
        %3229 = vmatprep.mubr.f32.mxu0 0.0
        %3230 = vmatmul.mubr.f32.gmra.mrb[0].mxu0 %v3161
        %v3231 = vpop.f32.mrb[0].mxu0
        %v3232 = vadd.f32 0.0, %v3231
        %v3233 = vpop.f32.mrb[0].mxu0
        %v3234 = vadd.f32 0.0, %v3233
        %3235 = vmatprep.mubr.f32.mxu0 0.0
        %3236 = vmatmul.mubr.f32.gmra.mrb[0].mxu0 %v3163
        %v3237 = vpop.f32.mrb[0].mxu0
        %v3238 = vadd.f32 0.0, %v3237
        %v3239 = vpop.f32.mrb[0].mxu0
        %v3240 = vadd.f32 0.0, %v3239
        %3241 = vdwg.mxu0
        %3242 = vmatprep.subr.mxu0 %v3113
        %3243 = vmatpush1.msra.mxu0 %v3112
        %3244 = vmatprep.subr.mxu0 %v3118
        %3245 = vmatpush1.msra.mxu0 %v3117
        %3246 = vmatprep.subr.mxu0 %v3123
        %3247 = vmatpush1.msra.mxu0 %v3122
        %3248 = vmatprep.subr.mxu0 %v3128
        %3249 = vmatpush1.msra.mxu0 %v3127
        %3250 = vmatprep.subr.mxu0 %v3133
        %3251 = vmatpush1.msra.mxu0 %v3132
        %3252 = vmatprep.subr.mxu0 0.0
        %3253 = vmatpush1.msra.mxu0 0.0
        %3254 = vmatprep.subr.mxu0 0.0
        %3255 = vmatpush1.msra.mxu0 0.0
        %3256 = vmatprep.subr.mxu0 0.0
        %3257 = vmatpush1.msra.mxu0 0.0
        %3258 = vmatprep.subr.mxu0 0.0
        %3259 = vmatpush1.msra.mxu0 0.0
        %3260 = vmatprep.subr.mxu0 0.0
        %3261 = vmatpush1.msra.mxu0 0.0
        %3262 = vmatprep.subr.mxu0 0.0
        %3263 = vmatpush1.msra.mxu0 0.0
        %3264 = vmatprep.subr.mxu0 0.0
        %3265 = vmatpush1.msra.mxu0 0.0
        %3266 = vmatprep.subr.mxu0 0.0
        %3267 = vmatpush1.msra.mxu0 0.0
        %3268 = vmatprep.subr.mxu0 0.0
        %3269 = vmatpush1.msra.mxu0 0.0
        %3270 = vmatprep.subr.mxu0 0.0
        %3271 = vmatpush1.msra.mxu0 0.0
        %3272 = vmatprep.subr.mxu0 0.0
        %3273 = vmatpush1.msra.mxu0 0.0
        %3274 = vmatprep.subr.mxu0 0.0
        %3275 = vmatpush1.msra.mxu0 0.0
        %3276 = vmatprep.subr.mxu0 0.0
        %3277 = vmatpush1.msra.mxu0 0.0
        %3278 = vmatprep.subr.mxu0 0.0
        %3279 = vmatpush1.msra.mxu0 0.0
        %3280 = vmatprep.subr.mxu0 0.0
        %3281 = vmatpush1.msra.mxu0 0.0
        %3282 = vmatprep.subr.mxu0 0.0
        %3283 = vmatpush1.msra.mxu0 0.0
        %3284 = vmatprep.subr.mxu0 0.0
        %3285 = vmatpush1.msra.mxu0 0.0
        %3286 = vmatprep.subr.mxu0 0.0
        %3287 = vmatpush1.msra.mxu0 0.0
        %3288 = vmatprep.subr.mxu0 0.0
        %3289 = vmatpush1.msra.mxu0 0.0
        %3290 = vmatprep.subr.mxu0 0.0
        %3291 = vmatpush1.msra.mxu0 0.0
        %3292 = vmatprep.subr.mxu0 0.0
        %3293 = vmatpush1.msra.mxu0 0.0
        %3294 = vmatprep.subr.mxu0 0.0
        %3295 = vmatpush1.msra.mxu0 0.0
        %3296 = vmatprep.subr.mxu0 0.0
        %3297 = vmatpush1.msra.mxu0 0.0
        %3298 = vmatprep.subr.mxu0 0.0
        %3299 = vmatpush1.msra.mxu0 0.0
        %3300 = vmatprep.subr.mxu0 0.0
        %3301 = vmatpush1.msra.mxu0 0.0
        %3302 = vmatprep.subr.mxu0 0.0
        %3303 = vmatpush1.msra.mxu0 0.0
        %3304 = vmatprep.subr.mxu0 0.0
        %3305 = vmatpush1.msra.mxu0 0.0
        %3306 = vmatprep.mubr.f32.mxu0 0.0
        %3307 = vmatmul.mubr.f32.gmra.mrb[0].mxu0 %v3161
        %v3308 = vpop.f32.mrb[0].mxu0
        %v3309 = vadd.f32 0.0, %v3308
        %v3310 = vpop.f32.mrb[0].mxu0
        %v3311 = vadd.f32 0.0, %v3310
        %3312 = vmatprep.mubr.f32.mxu0 0.0
        %3313 = vmatmul.mubr.f32.gmra.mrb[0].mxu0 %v3163
        %v3314 = vpop.f32.mrb[0].mxu0
        %v3315 = vadd.f32 0.0, %v3314
        %v3316 = vpop.f32.mrb[0].mxu0
        %v3317 = vadd.f32 0.0, %v3316
        %3318 = vdwg.mxu0
        %3319 = vmatprep.subr.mxu0 0.0
        %3320 = vmatpush1.msra.mxu0 %v3114
        %3321 = vmatprep.subr.mxu0 0.0
        %3322 = vmatpush1.msra.mxu0 %v3119
        %3323 = vmatprep.subr.mxu0 0.0
        %3324 = vmatpush1.msra.mxu0 %v3124
        %3325 = vmatprep.subr.mxu0 0.0
        %3326 = vmatpush1.msra.mxu0 %v3129
        %3327 = vmatprep.subr.mxu0 0.0
        %3328 = vmatpush1.msra.mxu0 %v3134
        %3329 = vmatprep.subr.mxu0 0.0
        %3330 = vmatpush1.msra.mxu0 0.0
        %3331 = vmatprep.subr.mxu0 0.0
        %3332 = vmatpush1.msra.mxu0 0.0
        %3333 = vmatprep.subr.mxu0 0.0
        %3334 = vmatpush1.msra.mxu0 0.0
        %3335 = vmatprep.subr.mxu0 0.0
        %3336 = vmatpush1.msra.mxu0 0.0
        %3337 = vmatprep.subr.mxu0 0.0
        %3338 = vmatpush1.msra.mxu0 0.0
        %3339 = vmatprep.subr.mxu0 0.0
        %3340 = vmatpush1.msra.mxu0 0.0
        %3341 = vmatprep.subr.mxu0 0.0
        %3342 = vmatpush1.msra.mxu0 0.0
        %3343 = vmatprep.subr.mxu0 0.0
        %3344 = vmatpush1.msra.mxu0 0.0
        %3345 = vmatprep.subr.mxu0 0.0
        %3346 = vmatpush1.msra.mxu0 0.0
        %3347 = vmatprep.subr.mxu0 0.0
        %3348 = vmatpush1.msra.mxu0 0.0
        %3349 = vmatprep.subr.mxu0 0.0
        %3350 = vmatpush1.msra.mxu0 0.0
        %3351 = vmatprep.subr.mxu0 0.0
        %3352 = vmatpush1.msra.mxu0 0.0
        %3353 = vmatprep.subr.mxu0 0.0
        %3354 = vmatpush1.msra.mxu0 0.0
        %3355 = vmatprep.subr.mxu0 0.0
        %3356 = vmatpush1.msra.mxu0 0.0
        %3357 = vmatprep.subr.mxu0 0.0
        %3358 = vmatpush1.msra.mxu0 0.0
        %3359 = vmatprep.subr.mxu0 0.0
        %3360 = vmatpush1.msra.mxu0 0.0
        %3361 = vmatprep.subr.mxu0 0.0
        %3362 = vmatpush1.msra.mxu0 0.0
        %3363 = vmatprep.subr.mxu0 0.0
        %3364 = vmatpush1.msra.mxu0 0.0
        %3365 = vmatprep.subr.mxu0 0.0
        %3366 = vmatpush1.msra.mxu0 0.0
        %3367 = vmatprep.subr.mxu0 0.0
        %3368 = vmatpush1.msra.mxu0 0.0
        %3369 = vmatprep.subr.mxu0 0.0
        %3370 = vmatpush1.msra.mxu0 0.0
        %3371 = vmatprep.subr.mxu0 0.0
        %3372 = vmatpush1.msra.mxu0 0.0
        %3373 = vmatprep.subr.mxu0 0.0
        %3374 = vmatpush1.msra.mxu0 0.0
        %3375 = vmatprep.subr.mxu0 0.0
        %3376 = vmatpush1.msra.mxu0 0.0
        %3377 = vmatprep.subr.mxu0 0.0
        %3378 = vmatpush1.msra.mxu0 0.0
        %3379 = vmatprep.subr.mxu0 0.0
        %3380 = vmatpush1.msra.mxu0 0.0
        %3381 = vmatprep.subr.mxu0 0.0
        %3382 = vmatpush1.msra.mxu0 0.0
        %3383 = vmatprep.mubr.f32.mxu0 0.0
        %3384 = vmatmul.mubr.f32.gmra.mrb[0].mxu0 %v3161
        %v3385 = vpop.f32.mrb[0].mxu0
        %v3386 = vadd.f32 0.0, %v3385
        %v3387 = vpop.f32.mrb[0].mxu0
        %3388 = vmatprep.mubr.f32.mxu0 0.0
        %3389 = vmatmul.mubr.f32.gmra.mrb[0].mxu0 %v3163
        %v3390 = vpop.f32.mrb[0].mxu0
        %v3391 = vadd.f32 0.0, %v3390
        %v3392 = vpop.f32.mrb[0].mxu0
        %3393 = vdwg.mxu0
        %v3394 = vsel %vm3160, %v3028, 0
        %v3396 = vsel %vm3160, %v3029, 0
        %3398 = vmatprep.subr.mxu0 %v2941
        %3399 = vmatpush1.msra.mxu0 %v2940
        %3400 = vmatprep.subr.mxu0 %v2961
        %3401 = vmatpush1.msra.mxu0 %v2960
        %3402 = vmatprep.subr.mxu0 %v2980
        %3403 = vmatpush1.msra.mxu0 %v2979
        %3404 = vmatprep.subr.mxu0 %v3000
        %3405 = vmatpush1.msra.mxu0 %v2999
        %3406 = vmatprep.subr.mxu0 %v3020
        %3407 = vmatpush1.msra.mxu0 %v3019
        %3408 = vmatprep.subr.mxu0 0.0
        %3409 = vmatpush1.msra.mxu0 0.0
        %3410 = vmatprep.subr.mxu0 0.0
        %3411 = vmatpush1.msra.mxu0 0.0
        %3412 = vmatprep.subr.mxu0 0.0
        %3413 = vmatpush1.msra.mxu0 0.0
        %3414 = vmatprep.subr.mxu0 0.0
        %3415 = vmatpush1.msra.mxu0 0.0
        %3416 = vmatprep.subr.mxu0 0.0
        %3417 = vmatpush1.msra.mxu0 0.0
        %3418 = vmatprep.subr.mxu0 0.0
        %3419 = vmatpush1.msra.mxu0 0.0
        %3420 = vmatprep.subr.mxu0 0.0
        %3421 = vmatpush1.msra.mxu0 0.0
        %3422 = vmatprep.subr.mxu0 0.0
        %3423 = vmatpush1.msra.mxu0 0.0
        %3424 = vmatprep.subr.mxu0 0.0
        %3425 = vmatpush1.msra.mxu0 0.0
        %3426 = vmatprep.subr.mxu0 0.0
        %3427 = vmatpush1.msra.mxu0 0.0
        %3428 = vmatprep.subr.mxu0 0.0
        %3429 = vmatpush1.msra.mxu0 0.0
        %3430 = vmatprep.subr.mxu0 0.0
        %3431 = vmatpush1.msra.mxu0 0.0
        %3432 = vmatprep.subr.mxu0 0.0
        %3433 = vmatpush1.msra.mxu0 0.0
        %3434 = vmatprep.subr.mxu0 0.0
        %3435 = vmatpush1.msra.mxu0 0.0
        %3436 = vmatprep.subr.mxu0 0.0
        %3437 = vmatpush1.msra.mxu0 0.0
        %3438 = vmatprep.subr.mxu0 0.0
        %3439 = vmatpush1.msra.mxu0 0.0
        %3440 = vmatprep.subr.mxu0 0.0
        %3441 = vmatpush1.msra.mxu0 0.0
        %3442 = vmatprep.subr.mxu0 0.0
        %3443 = vmatpush1.msra.mxu0 0.0
        %3444 = vmatprep.subr.mxu0 0.0
        %3445 = vmatpush1.msra.mxu0 0.0
        %3446 = vmatprep.subr.mxu0 0.0
        %3447 = vmatpush1.msra.mxu0 0.0
        %3448 = vmatprep.subr.mxu0 0.0
        %3449 = vmatpush1.msra.mxu0 0.0
        %3450 = vmatprep.subr.mxu0 0.0
        %3451 = vmatpush1.msra.mxu0 0.0
        %3452 = vmatprep.subr.mxu0 0.0
        %3453 = vmatpush1.msra.mxu0 0.0
        %3454 = vmatprep.subr.mxu0 0.0
        %3455 = vmatpush1.msra.mxu0 0.0
        %3456 = vmatprep.subr.mxu0 0.0
        %3457 = vmatpush1.msra.mxu0 0.0
        %3458 = vmatprep.subr.mxu0 0.0
        %3459 = vmatpush1.msra.mxu0 0.0
        %3460 = vmatprep.subr.mxu0 0.0
        %3461 = vmatpush1.msra.mxu0 0.0
        %3462 = vmatprep.mubr.f32.mxu0 0.0
        %3463 = vmatmul.mubr.f32.gmra.mrb[0].mxu0 %v3394
        %v3464 = vpop.f32.mrb[0].mxu0
        %v3465 = vadd.f32 %v3232, %v3464
        %v3466 = vpop.f32.mrb[0].mxu0
        %v3467 = vadd.f32 %v3234, %v3466
        %3468 = vmatprep.mubr.f32.mxu0 0.0
        %3469 = vmatmul.mubr.f32.gmra.mrb[0].mxu0 %v3396
        %v3470 = vpop.f32.mrb[0].mxu0
        %v3471 = vadd.f32 %v3238, %v3470
        %v3472 = vpop.f32.mrb[0].mxu0
        %v3473 = vadd.f32 %v3240, %v3472
        %3474 = vdwg.mxu0
        %3475 = vmatprep.subr.mxu0 %v2943
        %3476 = vmatpush1.msra.mxu0 %v2942
        %3477 = vmatprep.subr.mxu0 %v2963
        %3478 = vmatpush1.msra.mxu0 %v2962
        %3479 = vmatprep.subr.mxu0 %v2982
        %3480 = vmatpush1.msra.mxu0 %v2981
        %3481 = vmatprep.subr.mxu0 %v3002
        %3482 = vmatpush1.msra.mxu0 %v3001
        %3483 = vmatprep.subr.mxu0 %v3022
        %3484 = vmatpush1.msra.mxu0 %v3021
        %3485 = vmatprep.subr.mxu0 0.0
        %3486 = vmatpush1.msra.mxu0 0.0
        %3487 = vmatprep.subr.mxu0 0.0
        %3488 = vmatpush1.msra.mxu0 0.0
        %3489 = vmatprep.subr.mxu0 0.0
        %3490 = vmatpush1.msra.mxu0 0.0
        %3491 = vmatprep.subr.mxu0 0.0
        %3492 = vmatpush1.msra.mxu0 0.0
        %3493 = vmatprep.subr.mxu0 0.0
        %3494 = vmatpush1.msra.mxu0 0.0
        %3495 = vmatprep.subr.mxu0 0.0
        %3496 = vmatpush1.msra.mxu0 0.0
        %3497 = vmatprep.subr.mxu0 0.0
        %3498 = vmatpush1.msra.mxu0 0.0
        %3499 = vmatprep.subr.mxu0 0.0
        %3500 = vmatpush1.msra.mxu0 0.0
        %3501 = vmatprep.subr.mxu0 0.0
        %3502 = vmatpush1.msra.mxu0 0.0
        %3503 = vmatprep.subr.mxu0 0.0
        %3504 = vmatpush1.msra.mxu0 0.0
        %3505 = vmatprep.subr.mxu0 0.0
        %3506 = vmatpush1.msra.mxu0 0.0
        %3507 = vmatprep.subr.mxu0 0.0
        %3508 = vmatpush1.msra.mxu0 0.0
        %3509 = vmatprep.subr.mxu0 0.0
        %3510 = vmatpush1.msra.mxu0 0.0
        %3511 = vmatprep.subr.mxu0 0.0
        %3512 = vmatpush1.msra.mxu0 0.0
        %3513 = vmatprep.subr.mxu0 0.0
        %3514 = vmatpush1.msra.mxu0 0.0
        %3515 = vmatprep.subr.mxu0 0.0
        %3516 = vmatpush1.msra.mxu0 0.0
        %3517 = vmatprep.subr.mxu0 0.0
        %3518 = vmatpush1.msra.mxu0 0.0
        %3519 = vmatprep.subr.mxu0 0.0
        %3520 = vmatpush1.msra.mxu0 0.0
        %3521 = vmatprep.subr.mxu0 0.0
        %3522 = vmatpush1.msra.mxu0 0.0
        %3523 = vmatprep.subr.mxu0 0.0
        %3524 = vmatpush1.msra.mxu0 0.0
        %3525 = vmatprep.subr.mxu0 0.0
        %3526 = vmatpush1.msra.mxu0 0.0
        %3527 = vmatprep.subr.mxu0 0.0
        %3528 = vmatpush1.msra.mxu0 0.0
        %3529 = vmatprep.subr.mxu0 0.0
        %3530 = vmatpush1.msra.mxu0 0.0
        %3531 = vmatprep.subr.mxu0 0.0
        %3532 = vmatpush1.msra.mxu0 0.0
        %3533 = vmatprep.subr.mxu0 0.0
        %3534 = vmatpush1.msra.mxu0 0.0
        %3535 = vmatprep.subr.mxu0 0.0
        %3536 = vmatpush1.msra.mxu0 0.0
        %3537 = vmatprep.subr.mxu0 0.0
        %3538 = vmatpush1.msra.mxu0 0.0
        %3539 = vmatprep.mubr.f32.mxu0 0.0
        %3540 = vmatmul.mubr.f32.gmra.mrb[0].mxu0 %v3394
        %v3541 = vpop.f32.mrb[0].mxu0
        %v3542 = vadd.f32 %v3309, %v3541
        %v3543 = vpop.f32.mrb[0].mxu0
        %v3544 = vadd.f32 %v3311, %v3543
        %3545 = vmatprep.mubr.f32.mxu0 0.0
        %3546 = vmatmul.mubr.f32.gmra.mrb[0].mxu0 %v3396
        %v3547 = vpop.f32.mrb[0].mxu0
        %v3548 = vadd.f32 %v3315, %v3547
        %v3549 = vpop.f32.mrb[0].mxu0
        %v3550 = vadd.f32 %v3317, %v3549
        %3551 = vdwg.mxu0
        %3552 = vmatprep.subr.mxu0 0.0
        %3553 = vmatpush1.msra.mxu0 %v2944
        %3554 = vmatprep.subr.mxu0 0.0
        %3555 = vmatpush1.msra.mxu0 %v2959
        %3556 = vmatprep.subr.mxu0 0.0
        %3557 = vmatpush1.msra.mxu0 %v2978
        %3558 = vmatprep.subr.mxu0 0.0
        %3559 = vmatpush1.msra.mxu0 %v2997
        %3560 = vmatprep.subr.mxu0 0.0
        %3561 = vmatpush1.msra.mxu0 %v3017
        %3562 = vmatprep.subr.mxu0 0.0
        %3563 = vmatpush1.msra.mxu0 0.0
        %3564 = vmatprep.subr.mxu0 0.0
        %3565 = vmatpush1.msra.mxu0 0.0
        %3566 = vmatprep.subr.mxu0 0.0
        %3567 = vmatpush1.msra.mxu0 0.0
        %3568 = vmatprep.subr.mxu0 0.0
        %3569 = vmatpush1.msra.mxu0 0.0
        %3570 = vmatprep.subr.mxu0 0.0
        %3571 = vmatpush1.msra.mxu0 0.0
        %3572 = vmatprep.subr.mxu0 0.0
        %3573 = vmatpush1.msra.mxu0 0.0
        %3574 = vmatprep.subr.mxu0 0.0
        %3575 = vmatpush1.msra.mxu0 0.0
        %3576 = vmatprep.subr.mxu0 0.0
        %3577 = vmatpush1.msra.mxu0 0.0
        %3578 = vmatprep.subr.mxu0 0.0
        %3579 = vmatpush1.msra.mxu0 0.0
        %3580 = vmatprep.subr.mxu0 0.0
        %3581 = vmatpush1.msra.mxu0 0.0
        %3582 = vmatprep.subr.mxu0 0.0
        %3583 = vmatpush1.msra.mxu0 0.0
        %3584 = vmatprep.subr.mxu0 0.0
        %3585 = vmatpush1.msra.mxu0 0.0
        %3586 = vmatprep.subr.mxu0 0.0
        %3587 = vmatpush1.msra.mxu0 0.0
        %3588 = vmatprep.subr.mxu0 0.0
        %3589 = vmatpush1.msra.mxu0 0.0
        %3590 = vmatprep.subr.mxu0 0.0
        %3591 = vmatpush1.msra.mxu0 0.0
        %3592 = vmatprep.subr.mxu0 0.0
        %3593 = vmatpush1.msra.mxu0 0.0
        %3594 = vmatprep.subr.mxu0 0.0
        %3595 = vmatpush1.msra.mxu0 0.0
        %3596 = vmatprep.subr.mxu0 0.0
        %3597 = vmatpush1.msra.mxu0 0.0
        %3598 = vmatprep.subr.mxu0 0.0
        %3599 = vmatpush1.msra.mxu0 0.0
        %3600 = vmatprep.subr.mxu0 0.0
        %3601 = vmatpush1.msra.mxu0 0.0
        %3602 = vmatprep.subr.mxu0 0.0
        %3603 = vmatpush1.msra.mxu0 0.0
        %3604 = vmatprep.subr.mxu0 0.0
        %3605 = vmatpush1.msra.mxu0 0.0
        %3606 = vmatprep.subr.mxu0 0.0
        %3607 = vmatpush1.msra.mxu0 0.0
        %3608 = vmatprep.subr.mxu0 0.0
        %3609 = vmatpush1.msra.mxu0 0.0
        %3610 = vmatprep.subr.mxu0 0.0
        %3611 = vmatpush1.msra.mxu0 0.0
        %3612 = vmatprep.subr.mxu0 0.0
        %3613 = vmatpush1.msra.mxu0 0.0
        %3614 = vmatprep.subr.mxu0 0.0
        %3615 = vmatpush1.msra.mxu0 0.0
        %3616 = vmatprep.mubr.f32.mxu0 0.0
        %3617 = vmatmul.mubr.f32.gmra.mrb[0].mxu0 %v3394
        %v3618 = vpop.f32.mrb[0].mxu0
        %v3619 = vadd.f32 %v3386, %v3618
        %v3620 = vpop.f32.mrb[0].mxu0
        %3621 = vmatprep.mubr.f32.mxu0 0.0
        %3622 = vmatmul.mubr.f32.gmra.mrb[0].mxu0 %v3396
        %v3623 = vpop.f32.mrb[0].mxu0
        %v3624 = vadd.f32 %v3391, %v3623
        %v3625 = vpop.f32.mrb[0].mxu0
        %3626 = vdwg.mxu0
        %3635 = vrot.lane.b32.xlu0 %v3028, 48
        %v3636 = vpop.permute.xlu0 %3635
        %3637 = vrot.lane.b32.xlu0 %v3029, 48
        %v3638 = vpop.permute.xlu0 %3637
        %v3639 = vsel %vm3160, %v3636, 0
        %v3641 = vsel %vm3160, %v3638, 0
        %3643 = vmatprep.subr.mxu0 %v2942
        %3644 = vmatpush1.msra.mxu0 %v2941
        %3645 = vmatprep.subr.mxu0 %v2962
        %3646 = vmatpush1.msra.mxu0 %v2961
        %3647 = vmatprep.subr.mxu0 %v2981
        %3648 = vmatpush1.msra.mxu0 %v2980
        %3649 = vmatprep.subr.mxu0 %v3001
        %3650 = vmatpush1.msra.mxu0 %v3000
        %3651 = vmatprep.subr.mxu0 %v3021
        %3652 = vmatpush1.msra.mxu0 %v3020
        %3653 = vmatprep.subr.mxu0 0.0
        %3654 = vmatpush1.msra.mxu0 0.0
        %3655 = vmatprep.subr.mxu0 0.0
        %3656 = vmatpush1.msra.mxu0 0.0
        %3657 = vmatprep.subr.mxu0 0.0
        %3658 = vmatpush1.msra.mxu0 0.0
        %3659 = vmatprep.subr.mxu0 0.0
        %3660 = vmatpush1.msra.mxu0 0.0
        %3661 = vmatprep.subr.mxu0 0.0
        %3662 = vmatpush1.msra.mxu0 0.0
        %3663 = vmatprep.subr.mxu0 0.0
        %3664 = vmatpush1.msra.mxu0 0.0
        %3665 = vmatprep.subr.mxu0 0.0
        %3666 = vmatpush1.msra.mxu0 0.0
        %3667 = vmatprep.subr.mxu0 0.0
        %3668 = vmatpush1.msra.mxu0 0.0
        %3669 = vmatprep.subr.mxu0 0.0
        %3670 = vmatpush1.msra.mxu0 0.0
        %3671 = vmatprep.subr.mxu0 0.0
        %3672 = vmatpush1.msra.mxu0 0.0
        %3673 = vmatprep.subr.mxu0 0.0
        %3674 = vmatpush1.msra.mxu0 0.0
        %3675 = vmatprep.subr.mxu0 0.0
        %3676 = vmatpush1.msra.mxu0 0.0
        %3677 = vmatprep.subr.mxu0 0.0
        %3678 = vmatpush1.msra.mxu0 0.0
        %3679 = vmatprep.subr.mxu0 0.0
        %3680 = vmatpush1.msra.mxu0 0.0
        %3681 = vmatprep.subr.mxu0 0.0
        %3682 = vmatpush1.msra.mxu0 0.0
        %3683 = vmatprep.subr.mxu0 0.0
        %3684 = vmatpush1.msra.mxu0 0.0
        %3685 = vmatprep.subr.mxu0 0.0
        %3686 = vmatpush1.msra.mxu0 0.0
        %3687 = vmatprep.subr.mxu0 0.0
        %3688 = vmatpush1.msra.mxu0 0.0
        %3689 = vmatprep.subr.mxu0 0.0
        %3690 = vmatpush1.msra.mxu0 0.0
        %3691 = vmatprep.subr.mxu0 0.0
        %3692 = vmatpush1.msra.mxu0 0.0
        %3693 = vmatprep.subr.mxu0 0.0
        %3694 = vmatpush1.msra.mxu0 0.0
        %3695 = vmatprep.subr.mxu0 0.0
        %3696 = vmatpush1.msra.mxu0 0.0
        %3697 = vmatprep.subr.mxu0 0.0
        %3698 = vmatpush1.msra.mxu0 0.0
        %3699 = vmatprep.subr.mxu0 0.0
        %3700 = vmatpush1.msra.mxu0 0.0
        %3701 = vmatprep.subr.mxu0 0.0
        %3702 = vmatpush1.msra.mxu0 0.0
        %3703 = vmatprep.subr.mxu0 0.0
        %3704 = vmatpush1.msra.mxu0 0.0
        %3705 = vmatprep.subr.mxu0 0.0
        %3706 = vmatpush1.msra.mxu0 0.0
        %3707 = vmatprep.mubr.f32.mxu0 0.0
        %3708 = vmatmul.mubr.f32.gmra.mrb[0].mxu0 %v3639
        %v3709 = vpop.f32.mrb[0].mxu0
        %v3710 = vadd.f32 0.0, %v3709
        %v3711 = vpop.f32.mrb[0].mxu0
        %v3712 = vadd.f32 0.0, %v3711
        %3713 = vmatprep.mubr.f32.mxu0 0.0
        %3714 = vmatmul.mubr.f32.gmra.mrb[0].mxu0 %v3641
        %v3715 = vpop.f32.mrb[0].mxu0
        %v3716 = vadd.f32 0.0, %v3715
        %v3717 = vpop.f32.mrb[0].mxu0
        %v3718 = vadd.f32 0.0, %v3717
        %3719 = vdwg.mxu0
        %3720 = vmatprep.subr.mxu0 %v2944
        %3721 = vmatpush1.msra.mxu0 %v2943
        %3722 = vmatprep.subr.mxu0 %v3034
        %3723 = vmatpush1.msra.mxu0 %v2963
        %3724 = vmatprep.subr.mxu0 %v3037
        %3725 = vmatpush1.msra.mxu0 %v2982
        %3726 = vmatprep.subr.mxu0 %v3040
        %3727 = vmatpush1.msra.mxu0 %v3002
        %3728 = vmatprep.subr.mxu0 %v3043
        %3729 = vmatpush1.msra.mxu0 %v3022
        %3730 = vmatprep.subr.mxu0 0.0
        %3731 = vmatpush1.msra.mxu0 0.0
        %3732 = vmatprep.subr.mxu0 0.0
        %3733 = vmatpush1.msra.mxu0 0.0
        %3734 = vmatprep.subr.mxu0 0.0
        %3735 = vmatpush1.msra.mxu0 0.0
        %3736 = vmatprep.subr.mxu0 0.0
        %3737 = vmatpush1.msra.mxu0 0.0
        %3738 = vmatprep.subr.mxu0 0.0
        %3739 = vmatpush1.msra.mxu0 0.0
        %3740 = vmatprep.subr.mxu0 0.0
        %3741 = vmatpush1.msra.mxu0 0.0
        %3742 = vmatprep.subr.mxu0 0.0
        %3743 = vmatpush1.msra.mxu0 0.0
        %3744 = vmatprep.subr.mxu0 0.0
        %3745 = vmatpush1.msra.mxu0 0.0
        %3746 = vmatprep.subr.mxu0 0.0
        %3747 = vmatpush1.msra.mxu0 0.0
        %3748 = vmatprep.subr.mxu0 0.0
        %3749 = vmatpush1.msra.mxu0 0.0
        %3750 = vmatprep.subr.mxu0 0.0
        %3751 = vmatpush1.msra.mxu0 0.0
        %3752 = vmatprep.subr.mxu0 0.0
        %3753 = vmatpush1.msra.mxu0 0.0
        %3754 = vmatprep.subr.mxu0 0.0
        %3755 = vmatpush1.msra.mxu0 0.0
        %3756 = vmatprep.subr.mxu0 0.0
        %3757 = vmatpush1.msra.mxu0 0.0
        %3758 = vmatprep.subr.mxu0 0.0
        %3759 = vmatpush1.msra.mxu0 0.0
        %3760 = vmatprep.subr.mxu0 0.0
        %3761 = vmatpush1.msra.mxu0 0.0
        %3762 = vmatprep.subr.mxu0 0.0
        %3763 = vmatpush1.msra.mxu0 0.0
        %3764 = vmatprep.subr.mxu0 0.0
        %3765 = vmatpush1.msra.mxu0 0.0
        %3766 = vmatprep.subr.mxu0 0.0
        %3767 = vmatpush1.msra.mxu0 0.0
        %3768 = vmatprep.subr.mxu0 0.0
        %3769 = vmatpush1.msra.mxu0 0.0
        %3770 = vmatprep.subr.mxu0 0.0
        %3771 = vmatpush1.msra.mxu0 0.0
        %3772 = vmatprep.subr.mxu0 0.0
        %3773 = vmatpush1.msra.mxu0 0.0
        %3774 = vmatprep.subr.mxu0 0.0
        %3775 = vmatpush1.msra.mxu0 0.0
        %3776 = vmatprep.subr.mxu0 0.0
        %3777 = vmatpush1.msra.mxu0 0.0
        %3778 = vmatprep.subr.mxu0 0.0
        %3779 = vmatpush1.msra.mxu0 0.0
        %3780 = vmatprep.subr.mxu0 0.0
        %3781 = vmatpush1.msra.mxu0 0.0
        %3782 = vmatprep.subr.mxu0 0.0
        %3783 = vmatpush1.msra.mxu0 0.0
        %3784 = vmatprep.mubr.f32.mxu0 0.0
        %3785 = vmatmul.mubr.f32.gmra.mrb[0].mxu0 %v3639
        %v3786 = vpop.f32.mrb[0].mxu0
        %v3787 = vadd.f32 0.0, %v3786
        %v3788 = vpop.f32.mrb[0].mxu0
        %v3789 = vadd.f32 0.0, %v3788
        %3790 = vmatprep.mubr.f32.mxu0 0.0
        %3791 = vmatmul.mubr.f32.gmra.mrb[0].mxu0 %v3641
        %v3792 = vpop.f32.mrb[0].mxu0
        %v3793 = vadd.f32 0.0, %v3792
        %v3794 = vpop.f32.mrb[0].mxu0
        %v3795 = vadd.f32 0.0, %v3794
        %3796 = vdwg.mxu0
        %3797 = vmatprep.subr.mxu0 0.0
        %3798 = vmatpush1.msra.mxu0 %v3030
        %3799 = vmatprep.subr.mxu0 0.0
        %3800 = vmatpush1.msra.mxu0 %v3033
        %3801 = vmatprep.subr.mxu0 0.0
        %3802 = vmatpush1.msra.mxu0 %v3036
        %3803 = vmatprep.subr.mxu0 0.0
        %3804 = vmatpush1.msra.mxu0 %v3039
        %3805 = vmatprep.subr.mxu0 0.0
        %3806 = vmatpush1.msra.mxu0 %v3042
        %3807 = vmatprep.subr.mxu0 0.0
        %3808 = vmatpush1.msra.mxu0 0.0
        %3809 = vmatprep.subr.mxu0 0.0
        %3810 = vmatpush1.msra.mxu0 0.0
        %3811 = vmatprep.subr.mxu0 0.0
        %3812 = vmatpush1.msra.mxu0 0.0
        %3813 = vmatprep.subr.mxu0 0.0
        %3814 = vmatpush1.msra.mxu0 0.0
        %3815 = vmatprep.subr.mxu0 0.0
        %3816 = vmatpush1.msra.mxu0 0.0
        %3817 = vmatprep.subr.mxu0 0.0
        %3818 = vmatpush1.msra.mxu0 0.0
        %3819 = vmatprep.subr.mxu0 0.0
        %3820 = vmatpush1.msra.mxu0 0.0
        %3821 = vmatprep.subr.mxu0 0.0
        %3822 = vmatpush1.msra.mxu0 0.0
        %3823 = vmatprep.subr.mxu0 0.0
        %3824 = vmatpush1.msra.mxu0 0.0
        %3825 = vmatprep.subr.mxu0 0.0
        %3826 = vmatpush1.msra.mxu0 0.0
        %3827 = vmatprep.subr.mxu0 0.0
        %3828 = vmatpush1.msra.mxu0 0.0
        %3829 = vmatprep.subr.mxu0 0.0
        %3830 = vmatpush1.msra.mxu0 0.0
        %3831 = vmatprep.subr.mxu0 0.0
        %3832 = vmatpush1.msra.mxu0 0.0
        %3833 = vmatprep.subr.mxu0 0.0
        %3834 = vmatpush1.msra.mxu0 0.0
        %3835 = vmatprep.subr.mxu0 0.0
        %3836 = vmatpush1.msra.mxu0 0.0
        %3837 = vmatprep.subr.mxu0 0.0
        %3838 = vmatpush1.msra.mxu0 0.0
        %3839 = vmatprep.subr.mxu0 0.0
        %3840 = vmatpush1.msra.mxu0 0.0
        %3841 = vmatprep.subr.mxu0 0.0
        %3842 = vmatpush1.msra.mxu0 0.0
        %3843 = vmatprep.subr.mxu0 0.0
        %3844 = vmatpush1.msra.mxu0 0.0
        %3845 = vmatprep.subr.mxu0 0.0
        %3846 = vmatpush1.msra.mxu0 0.0
        %3847 = vmatprep.subr.mxu0 0.0
        %3848 = vmatpush1.msra.mxu0 0.0
        %3849 = vmatprep.subr.mxu0 0.0
        %3850 = vmatpush1.msra.mxu0 0.0
        %3851 = vmatprep.subr.mxu0 0.0
        %3852 = vmatpush1.msra.mxu0 0.0
        %3853 = vmatprep.subr.mxu0 0.0
        %3854 = vmatpush1.msra.mxu0 0.0
        %3855 = vmatprep.subr.mxu0 0.0
        %3856 = vmatpush1.msra.mxu0 0.0
        %3857 = vmatprep.subr.mxu0 0.0
        %3858 = vmatpush1.msra.mxu0 0.0
        %3859 = vmatprep.subr.mxu0 0.0
        %3860 = vmatpush1.msra.mxu0 0.0
        %3861 = vmatprep.mubr.f32.mxu0 0.0
        %3862 = vmatmul.mubr.f32.gmra.mrb[0].mxu0 %v3639
        %v3863 = vpop.f32.mrb[0].mxu0
        %v3864 = vadd.f32 0.0, %v3863
        %v3865 = vpop.f32.mrb[0].mxu0
        %3866 = vmatprep.mubr.f32.mxu0 0.0
        %3867 = vmatmul.mubr.f32.gmra.mrb[0].mxu0 %v3641
        %v3868 = vpop.f32.mrb[0].mxu0
        %v3869 = vadd.f32 0.0, %v3868
        %v3870 = vpop.f32.mrb[0].mxu0
        %3871 = vdwg.mxu0
        %v3872 = vadd.f32 %v3465, %v3710
        %v3873 = vadd.f32 %v3467, %v3712
        %v3874 = vadd.f32 %v3542, %v3787
        %v3875 = vadd.f32 %v3544, %v3789
        %v3876 = vadd.f32 %v3619, %v3864
        %v3877 = vadd.f32 %v3471, %v3716
        %v3878 = vadd.f32 %v3473, %v3718
        %v3879 = vadd.f32 %v3548, %v3793
        %v3880 = vadd.f32 %v3550, %v3795
        %v3881 = vadd.f32 %v3624, %v3869
        %v3882 = vld [vmem:[#allocation4 + $0x8] sm:$0xff]
        %v3883 = vld [vmem:[#allocation4 + $0x10] sm:$0xff]
        %v3884 = vld [vmem:[#allocation4 + $0x18] sm:$0xff]
        %v3885 = vld [vmem:[#allocation4 + $0x20] sm:$0xff]
        %v3886 = vld [vmem:[#allocation4 + $0x28] sm:$0xff]
        %v3887 = vld [vmem:[#allocation4 + $0x30] sm:$0xff]
        %3894 = vrot.lane.b32.xlu0 %v3882, 126
        %v3895 = vpop.permute.xlu0 %3894
        %3896 = vrot.lane.b32.xlu0 %v3883, 126
        %v3897 = vpop.permute.xlu0 %3896
        %3898 = vrot.lane.b32.xlu0 %v3884, 126
        %v3899 = vpop.permute.xlu0 %3898
        %3900 = vrot.lane.b32.xlu0 %v3885, 126
        %v3901 = vpop.permute.xlu0 %3900
        %3902 = vrot.lane.b32.xlu0 %v3886, 126
        %v3903 = vpop.permute.xlu0 %3902
        %3904 = vrot.lane.b32.xlu0 %v3887, 126
        %v3905 = vpop.permute.xlu0 %3904
        %v3906 = vsel %vm583, %v3895, %v3897
        %v3907 = vsel %vm583, %v3897, %v3899
        %v3908 = vsel %vm583, %v3899, %v3901
        %v3909 = vsel %vm583, %v3901, %v3903
        %v3910 = vsel %vm583, %v3903, %v3905
        %3911 = vrot.lane.b32.xlu0 %v3882, 124
        %v3912 = vpop.permute.xlu0 %3911
        %3913 = vrot.lane.b32.xlu0 %v3883, 124
        %v3914 = vpop.permute.xlu0 %3913
        %3915 = vrot.lane.b32.xlu0 %v3884, 124
        %v3916 = vpop.permute.xlu0 %3915
        %3917 = vrot.lane.b32.xlu0 %v3885, 124
        %v3918 = vpop.permute.xlu0 %3917
        %3919 = vrot.lane.b32.xlu0 %v3886, 124
        %v3920 = vpop.permute.xlu0 %3919
        %3921 = vrot.lane.b32.xlu0 %v3887, 124
        %v3922 = vpop.permute.xlu0 %3921
        %v3923 = vsel %vm2841, %v3912, %v3914
        %v3924 = vsel %vm2841, %v3914, %v3916
        %v3925 = vsel %vm2841, %v3916, %v3918
        %v3926 = vsel %vm2841, %v3918, %v3920
        %v3927 = vsel %vm2841, %v3920, %v3922
        %3928 = vrot.lane.b32.xlu0 %v3882, 122
        %v3929 = vpop.permute.xlu0 %3928
        %3930 = vrot.lane.b32.xlu0 %v3883, 122
        %v3931 = vpop.permute.xlu0 %3930
        %3932 = vrot.lane.b32.xlu0 %v3884, 122
        %v3933 = vpop.permute.xlu0 %3932
        %3934 = vrot.lane.b32.xlu0 %v3885, 122
        %v3935 = vpop.permute.xlu0 %3934
        %3936 = vrot.lane.b32.xlu0 %v3886, 122
        %v3937 = vpop.permute.xlu0 %3936
        %3938 = vrot.lane.b32.xlu0 %v3887, 122
        %v3939 = vpop.permute.xlu0 %3938
        %v3940 = vsel %vm2998, %v3929, %v3931
        %v3941 = vsel %vm2998, %v3931, %v3933
        %v3942 = vsel %vm2998, %v3933, %v3935
        %v3943 = vsel %vm2998, %v3935, %v3937
        %v3944 = vsel %vm2998, %v3937, %v3939
        %3945 = vrot.lane.b32.xlu0 %v3882, 120
        %v3946 = vpop.permute.xlu0 %3945
        %3947 = vrot.lane.b32.xlu0 %v3883, 120
        %v3948 = vpop.permute.xlu0 %3947
        %3949 = vrot.lane.b32.xlu0 %v3884, 120
        %v3950 = vpop.permute.xlu0 %3949
        %3951 = vrot.lane.b32.xlu0 %v3885, 120
        %v3952 = vpop.permute.xlu0 %3951
        %3953 = vrot.lane.b32.xlu0 %v3886, 120
        %v3954 = vpop.permute.xlu0 %3953
        %3955 = vrot.lane.b32.xlu0 %v3887, 120
        %v3956 = vpop.permute.xlu0 %3955
        %v3957 = vsel %vm3018, %v3946, %v3948
        %v3958 = vsel %vm3018, %v3948, %v3950
        %v3959 = vsel %vm3018, %v3950, %v3952
        %v3960 = vsel %vm3018, %v3952, %v3954
        %v3961 = vsel %vm3018, %v3954, %v3956
        %v3962 = vld [vmem:[%s5] sm:$0xff]
        %v3963 = vld [vmem:[%s5 + $0x8] sm:$0xff]
        %v3964 = vld [vmem:[%s5 + $0x10] sm:$0xff]
        %v3965 = vld [vmem:[%s5 + $0x18] sm:$0xff]
        %3970 = vrot.lane.b32.xlu0 %v3962, 8
        %v3971 = vpop.permute.xlu0 %3970
        %3972 = vrot.lane.b32.xlu0 %v3963, 8
        %v3973 = vpop.permute.xlu0 %3972
        %3974 = vrot.lane.b32.xlu0 %v3964, 8
        %v3975 = vpop.permute.xlu0 %3974
        %3976 = vrot.lane.b32.xlu0 %v3965, 8
        %v3977 = vpop.permute.xlu0 %3976
        %vm3978 = vcmask 64512
        %v3979 = vsel %vm3978, %v3971, %v3973
        %v3980 = vsel %vm3978, %v3975, %v3977
        %3981 = vrot.lane.b32.xlu0 %v3882, 64
        %v3982 = vpop.permute.xlu0 %3981
        %3983 = vrot.lane.b32.xlu0 %v3883, 64
        %v3984 = vpop.permute.xlu0 %3983
        %3985 = vrot.lane.b32.xlu0 %v3884, 64
        %v3986 = vpop.permute.xlu0 %3985
        %3987 = vrot.lane.b32.xlu0 %v3885, 64
        %v3988 = vpop.permute.xlu0 %3987
        %3989 = vrot.lane.b32.xlu0 %v3886, 64
        %v3990 = vpop.permute.xlu0 %3989
        %3991 = vrot.lane.b32.xlu0 %v3887, 64
        %v3992 = vpop.permute.xlu0 %3991
        %3993 = vrot.lane.b32.xlu0 %v3906, 64
        %v3994 = vpop.permute.xlu0 %3993
        %3995 = vrot.lane.b32.xlu0 %v3907, 64
        %v3996 = vpop.permute.xlu0 %3995
        %3997 = vrot.lane.b32.xlu0 %v3908, 64
        %v3998 = vpop.permute.xlu0 %3997
        %3999 = vrot.lane.b32.xlu0 %v3909, 64
        %v4000 = vpop.permute.xlu0 %3999
        %4001 = vrot.lane.b32.xlu0 %v3910, 64
        %v4002 = vpop.permute.xlu0 %4001
        %4003 = vrot.lane.b32.xlu0 %v3905, 64
        %v4004 = vpop.permute.xlu0 %4003
        %4005 = vrot.lane.b32.xlu0 %v3923, 64
        %v4006 = vpop.permute.xlu0 %4005
        %4007 = vrot.lane.b32.xlu0 %v3924, 64
        %v4008 = vpop.permute.xlu0 %4007
        %4009 = vrot.lane.b32.xlu0 %v3925, 64
        %v4010 = vpop.permute.xlu0 %4009
        %4011 = vrot.lane.b32.xlu0 %v3926, 64
        %v4012 = vpop.permute.xlu0 %4011
        %4013 = vrot.lane.b32.xlu0 %v3927, 64
        %v4014 = vpop.permute.xlu0 %4013
        %4015 = vrot.lane.b32.xlu0 %v3922, 64
        %v4016 = vpop.permute.xlu0 %4015
        %4017 = vrot.lane.b32.xlu0 %v3940, 64
        %v4018 = vpop.permute.xlu0 %4017
        %4019 = vrot.lane.b32.xlu0 %v3941, 64
        %v4020 = vpop.permute.xlu0 %4019
        %4021 = vrot.lane.b32.xlu0 %v3942, 64
        %v4022 = vpop.permute.xlu0 %4021
        %4023 = vrot.lane.b32.xlu0 %v3943, 64
        %v4024 = vpop.permute.xlu0 %4023
        %4025 = vrot.lane.b32.xlu0 %v3944, 64
        %v4026 = vpop.permute.xlu0 %4025
        %4027 = vrot.lane.b32.xlu0 %v3939, 64
        %v4028 = vpop.permute.xlu0 %4027
        %4029 = vrot.lane.b32.xlu0 %v3957, 64
        %v4030 = vpop.permute.xlu0 %4029
        %4031 = vrot.lane.b32.xlu0 %v3958, 64
        %v4032 = vpop.permute.xlu0 %4031
        %4033 = vrot.lane.b32.xlu0 %v3959, 64
        %v4034 = vpop.permute.xlu0 %4033
        %4035 = vrot.lane.b32.xlu0 %v3960, 64
        %v4036 = vpop.permute.xlu0 %4035
        %4037 = vrot.lane.b32.xlu0 %v3961, 64
        %v4038 = vpop.permute.xlu0 %4037
        %4039 = vrot.lane.b32.xlu0 %v3956, 64
        %v4040 = vpop.permute.xlu0 %4039
        %v4041 = vsel %vm1320, %v3982, %v3984
        %v4042 = vsel %vm1320, %v3984, %v3986
        %v4043 = vsel %vm1320, %v3986, %v3988
        %v4044 = vsel %vm1320, %v3988, %v3990
        %v4045 = vsel %vm1320, %v3990, %v3992
        %v4046 = vsel %vm1320, %v3994, %v3996
        %v4047 = vsel %vm1320, %v3996, %v3998
        %v4048 = vsel %vm1320, %v3998, %v4000
        %v4049 = vsel %vm1320, %v4000, %v4002
        %v4050 = vsel %vm1320, %v4002, %v4004
        %v4051 = vsel %vm1320, %v4006, %v4008
        %v4052 = vsel %vm1320, %v4008, %v4010
        %v4053 = vsel %vm1320, %v4010, %v4012
        %v4054 = vsel %vm1320, %v4012, %v4014
        %v4055 = vsel %vm1320, %v4014, %v4016
        %v4056 = vsel %vm1320, %v4018, %v4020
        %v4057 = vsel %vm1320, %v4020, %v4022
        %v4058 = vsel %vm1320, %v4022, %v4024
        %v4059 = vsel %vm1320, %v4024, %v4026
        %v4060 = vsel %vm1320, %v4026, %v4028
        %v4061 = vsel %vm1320, %v4030, %v4032
        %v4062 = vsel %vm1320, %v4032, %v4034
        %v4063 = vsel %vm1320, %v4034, %v4036
        %v4064 = vsel %vm1320, %v4036, %v4038
        %v4065 = vsel %vm1320, %v4038, %v4040
        %v4091 = vsel %vm3160, %v3979, 0
        %v4093 = vsel %vm3160, %v3980, 0
        %4095 = vmatprep.subr.mxu0 %v4042
        %4096 = vmatpush1.msra.mxu0 %v4041
        %4097 = vmatprep.subr.mxu0 %v4047
        %4098 = vmatpush1.msra.mxu0 %v4046
        %4099 = vmatprep.subr.mxu0 %v4052
        %4100 = vmatpush1.msra.mxu0 %v4051
        %4101 = vmatprep.subr.mxu0 %v4057
        %4102 = vmatpush1.msra.mxu0 %v4056
        %4103 = vmatprep.subr.mxu0 %v4062
        %4104 = vmatpush1.msra.mxu0 %v4061
        %4105 = vmatprep.subr.mxu0 0.0
        %4106 = vmatpush1.msra.mxu0 0.0
        %4107 = vmatprep.subr.mxu0 0.0
        %4108 = vmatpush1.msra.mxu0 0.0
        %4109 = vmatprep.subr.mxu0 0.0
        %4110 = vmatpush1.msra.mxu0 0.0
        %4111 = vmatprep.subr.mxu0 0.0
        %4112 = vmatpush1.msra.mxu0 0.0
        %4113 = vmatprep.subr.mxu0 0.0
        %4114 = vmatpush1.msra.mxu0 0.0
        %4115 = vmatprep.subr.mxu0 0.0
        %4116 = vmatpush1.msra.mxu0 0.0
        %4117 = vmatprep.subr.mxu0 0.0
        %4118 = vmatpush1.msra.mxu0 0.0
        %4119 = vmatprep.subr.mxu0 0.0
        %4120 = vmatpush1.msra.mxu0 0.0
        %4121 = vmatprep.subr.mxu0 0.0
        %4122 = vmatpush1.msra.mxu0 0.0
        %4123 = vmatprep.subr.mxu0 0.0
        %4124 = vmatpush1.msra.mxu0 0.0
        %4125 = vmatprep.subr.mxu0 0.0
        %4126 = vmatpush1.msra.mxu0 0.0
        %4127 = vmatprep.subr.mxu0 0.0
        %4128 = vmatpush1.msra.mxu0 0.0
        %4129 = vmatprep.subr.mxu0 0.0
        %4130 = vmatpush1.msra.mxu0 0.0
        %4131 = vmatprep.subr.mxu0 0.0
        %4132 = vmatpush1.msra.mxu0 0.0
        %4133 = vmatprep.subr.mxu0 0.0
        %4134 = vmatpush1.msra.mxu0 0.0
        %4135 = vmatprep.subr.mxu0 0.0
        %4136 = vmatpush1.msra.mxu0 0.0
        %4137 = vmatprep.subr.mxu0 0.0
        %4138 = vmatpush1.msra.mxu0 0.0
        %4139 = vmatprep.subr.mxu0 0.0
        %4140 = vmatpush1.msra.mxu0 0.0
        %4141 = vmatprep.subr.mxu0 0.0
        %4142 = vmatpush1.msra.mxu0 0.0
        %4143 = vmatprep.subr.mxu0 0.0
        %4144 = vmatpush1.msra.mxu0 0.0
        %4145 = vmatprep.subr.mxu0 0.0
        %4146 = vmatpush1.msra.mxu0 0.0
        %4147 = vmatprep.subr.mxu0 0.0
        %4148 = vmatpush1.msra.mxu0 0.0
        %4149 = vmatprep.subr.mxu0 0.0
        %4150 = vmatpush1.msra.mxu0 0.0
        %4151 = vmatprep.subr.mxu0 0.0
        %4152 = vmatpush1.msra.mxu0 0.0
        %4153 = vmatprep.subr.mxu0 0.0
        %4154 = vmatpush1.msra.mxu0 0.0
        %4155 = vmatprep.subr.mxu0 0.0
        %4156 = vmatpush1.msra.mxu0 0.0
        %4157 = vmatprep.subr.mxu0 0.0
        %4158 = vmatpush1.msra.mxu0 0.0
        %4159 = vmatprep.mubr.f32.mxu0 0.0
        %4160 = vmatmul.mubr.f32.gmra.mrb[0].mxu0 %v4091
        %v4161 = vpop.f32.mrb[0].mxu0
        %v4162 = vadd.f32 0.0, %v4161
        %v4163 = vpop.f32.mrb[0].mxu0
        %v4164 = vadd.f32 0.0, %v4163
        %4165 = vmatprep.mubr.f32.mxu0 0.0
        %4166 = vmatmul.mubr.f32.gmra.mrb[0].mxu0 %v4093
        %v4167 = vpop.f32.mrb[0].mxu0
        %v4168 = vadd.f32 0.0, %v4167
        %v4169 = vpop.f32.mrb[0].mxu0
        %v4170 = vadd.f32 0.0, %v4169
        %4171 = vdwg.mxu0
        %4172 = vmatprep.subr.mxu0 %v4044
        %4173 = vmatpush1.msra.mxu0 %v4043
        %4174 = vmatprep.subr.mxu0 %v4049
        %4175 = vmatpush1.msra.mxu0 %v4048
        %4176 = vmatprep.subr.mxu0 %v4054
        %4177 = vmatpush1.msra.mxu0 %v4053
        %4178 = vmatprep.subr.mxu0 %v4059
        %4179 = vmatpush1.msra.mxu0 %v4058
        %4180 = vmatprep.subr.mxu0 %v4064
        %4181 = vmatpush1.msra.mxu0 %v4063
        %4182 = vmatprep.subr.mxu0 0.0
        %4183 = vmatpush1.msra.mxu0 0.0
        %4184 = vmatprep.subr.mxu0 0.0
        %4185 = vmatpush1.msra.mxu0 0.0
        %4186 = vmatprep.subr.mxu0 0.0
        %4187 = vmatpush1.msra.mxu0 0.0
        %4188 = vmatprep.subr.mxu0 0.0
        %4189 = vmatpush1.msra.mxu0 0.0
        %4190 = vmatprep.subr.mxu0 0.0
        %4191 = vmatpush1.msra.mxu0 0.0
        %4192 = vmatprep.subr.mxu0 0.0
        %4193 = vmatpush1.msra.mxu0 0.0
        %4194 = vmatprep.subr.mxu0 0.0
        %4195 = vmatpush1.msra.mxu0 0.0
        %4196 = vmatprep.subr.mxu0 0.0
        %4197 = vmatpush1.msra.mxu0 0.0
        %4198 = vmatprep.subr.mxu0 0.0
        %4199 = vmatpush1.msra.mxu0 0.0
        %4200 = vmatprep.subr.mxu0 0.0
        %4201 = vmatpush1.msra.mxu0 0.0
        %4202 = vmatprep.subr.mxu0 0.0
        %4203 = vmatpush1.msra.mxu0 0.0
        %4204 = vmatprep.subr.mxu0 0.0
        %4205 = vmatpush1.msra.mxu0 0.0
        %4206 = vmatprep.subr.mxu0 0.0
        %4207 = vmatpush1.msra.mxu0 0.0
        %4208 = vmatprep.subr.mxu0 0.0
        %4209 = vmatpush1.msra.mxu0 0.0
        %4210 = vmatprep.subr.mxu0 0.0
        %4211 = vmatpush1.msra.mxu0 0.0
        %4212 = vmatprep.subr.mxu0 0.0
        %4213 = vmatpush1.msra.mxu0 0.0
        %4214 = vmatprep.subr.mxu0 0.0
        %4215 = vmatpush1.msra.mxu0 0.0
        %4216 = vmatprep.subr.mxu0 0.0
        %4217 = vmatpush1.msra.mxu0 0.0
        %4218 = vmatprep.subr.mxu0 0.0
        %4219 = vmatpush1.msra.mxu0 0.0
        %4220 = vmatprep.subr.mxu0 0.0
        %4221 = vmatpush1.msra.mxu0 0.0
        %4222 = vmatprep.subr.mxu0 0.0
        %4223 = vmatpush1.msra.mxu0 0.0
        %4224 = vmatprep.subr.mxu0 0.0
        %4225 = vmatpush1.msra.mxu0 0.0
        %4226 = vmatprep.subr.mxu0 0.0
        %4227 = vmatpush1.msra.mxu0 0.0
        %4228 = vmatprep.subr.mxu0 0.0
        %4229 = vmatpush1.msra.mxu0 0.0
        %4230 = vmatprep.subr.mxu0 0.0
        %4231 = vmatpush1.msra.mxu0 0.0
        %4232 = vmatprep.subr.mxu0 0.0
        %4233 = vmatpush1.msra.mxu0 0.0
        %4234 = vmatprep.subr.mxu0 0.0
        %4235 = vmatpush1.msra.mxu0 0.0
        %4236 = vmatprep.mubr.f32.mxu0 0.0
        %4237 = vmatmul.mubr.f32.gmra.mrb[0].mxu0 %v4091
        %v4238 = vpop.f32.mrb[0].mxu0
        %v4239 = vadd.f32 0.0, %v4238
        %v4240 = vpop.f32.mrb[0].mxu0
        %v4241 = vadd.f32 0.0, %v4240
        %4242 = vmatprep.mubr.f32.mxu0 0.0
        %4243 = vmatmul.mubr.f32.gmra.mrb[0].mxu0 %v4093
        %v4244 = vpop.f32.mrb[0].mxu0
        %v4245 = vadd.f32 0.0, %v4244
        %v4246 = vpop.f32.mrb[0].mxu0
        %v4247 = vadd.f32 0.0, %v4246
        %4248 = vdwg.mxu0
        %4249 = vmatprep.subr.mxu0 0.0
        %4250 = vmatpush1.msra.mxu0 %v4045
        %4251 = vmatprep.subr.mxu0 0.0
        %4252 = vmatpush1.msra.mxu0 %v4050
        %4253 = vmatprep.subr.mxu0 0.0
        %4254 = vmatpush1.msra.mxu0 %v4055
        %4255 = vmatprep.subr.mxu0 0.0
        %4256 = vmatpush1.msra.mxu0 %v4060
        %4257 = vmatprep.subr.mxu0 0.0
        %4258 = vmatpush1.msra.mxu0 %v4065
        %4259 = vmatprep.subr.mxu0 0.0
        %4260 = vmatpush1.msra.mxu0 0.0
        %4261 = vmatprep.subr.mxu0 0.0
        %4262 = vmatpush1.msra.mxu0 0.0
        %4263 = vmatprep.subr.mxu0 0.0
        %4264 = vmatpush1.msra.mxu0 0.0
        %4265 = vmatprep.subr.mxu0 0.0
        %4266 = vmatpush1.msra.mxu0 0.0
        %4267 = vmatprep.subr.mxu0 0.0
        %4268 = vmatpush1.msra.mxu0 0.0
        %4269 = vmatprep.subr.mxu0 0.0
        %4270 = vmatpush1.msra.mxu0 0.0
        %4271 = vmatprep.subr.mxu0 0.0
        %4272 = vmatpush1.msra.mxu0 0.0
        %4273 = vmatprep.subr.mxu0 0.0
        %4274 = vmatpush1.msra.mxu0 0.0
        %4275 = vmatprep.subr.mxu0 0.0
        %4276 = vmatpush1.msra.mxu0 0.0
        %4277 = vmatprep.subr.mxu0 0.0
        %4278 = vmatpush1.msra.mxu0 0.0
        %4279 = vmatprep.subr.mxu0 0.0
        %4280 = vmatpush1.msra.mxu0 0.0
        %4281 = vmatprep.subr.mxu0 0.0
        %4282 = vmatpush1.msra.mxu0 0.0
        %4283 = vmatprep.subr.mxu0 0.0
        %4284 = vmatpush1.msra.mxu0 0.0
        %4285 = vmatprep.subr.mxu0 0.0
        %4286 = vmatpush1.msra.mxu0 0.0
        %4287 = vmatprep.subr.mxu0 0.0
        %4288 = vmatpush1.msra.mxu0 0.0
        %4289 = vmatprep.subr.mxu0 0.0
        %4290 = vmatpush1.msra.mxu0 0.0
        %4291 = vmatprep.subr.mxu0 0.0
        %4292 = vmatpush1.msra.mxu0 0.0
        %4293 = vmatprep.subr.mxu0 0.0
        %4294 = vmatpush1.msra.mxu0 0.0
        %4295 = vmatprep.subr.mxu0 0.0
        %4296 = vmatpush1.msra.mxu0 0.0
        %4297 = vmatprep.subr.mxu0 0.0
        %4298 = vmatpush1.msra.mxu0 0.0
        %4299 = vmatprep.subr.mxu0 0.0
        %4300 = vmatpush1.msra.mxu0 0.0
        %4301 = vmatprep.subr.mxu0 0.0
        %4302 = vmatpush1.msra.mxu0 0.0
        %4303 = vmatprep.subr.mxu0 0.0
        %4304 = vmatpush1.msra.mxu0 0.0
        %4305 = vmatprep.subr.mxu0 0.0
        %4306 = vmatpush1.msra.mxu0 0.0
        %4307 = vmatprep.subr.mxu0 0.0
        %4308 = vmatpush1.msra.mxu0 0.0
        %4309 = vmatprep.subr.mxu0 0.0
        %4310 = vmatpush1.msra.mxu0 0.0
        %4311 = vmatprep.subr.mxu0 0.0
        %4312 = vmatpush1.msra.mxu0 0.0
        %4313 = vmatprep.mubr.f32.mxu0 0.0
        %4314 = vmatmul.mubr.f32.gmra.mrb[0].mxu0 %v4091
        %v4315 = vpop.f32.mrb[0].mxu0
        %v4316 = vadd.f32 0.0, %v4315
        %v4317 = vpop.f32.mrb[0].mxu0
        %4318 = vmatprep.mubr.f32.mxu0 0.0
        %4319 = vmatmul.mubr.f32.gmra.mrb[0].mxu0 %v4093
        %v4320 = vpop.f32.mrb[0].mxu0
        %v4321 = vadd.f32 0.0, %v4320
        %v4322 = vpop.f32.mrb[0].mxu0
        %4323 = vdwg.mxu0
        %v4324 = vadd.f32 %v3872, %v4162
        %v4325 = vadd.f32 %v3873, %v4164
        %v4326 = vadd.f32 %v3874, %v4239
        %v4327 = vadd.f32 %v3875, %v4241
        %v4328 = vadd.f32 %v3876, %v4316
        %v4329 = vadd.f32 %v3877, %v4168
        %v4330 = vadd.f32 %v3878, %v4170
        %v4331 = vadd.f32 %v3879, %v4245
        %v4332 = vadd.f32 %v3880, %v4247
        %v4333 = vadd.f32 %v3881, %v4321
        %4354 = vrot.lane.b32.xlu0 %v3963, 96
        %v4355 = vpop.permute.xlu0 %4354
        %4356 = vrot.lane.b32.xlu0 %v3965, 96
        %v4357 = vpop.permute.xlu0 %4356
        %v4358 = vsel %vm3160, %v4355, 0
        %v4360 = vsel %vm3160, %v4357, 0
        %4362 = vmatprep.subr.mxu0 %v3884
        %4363 = vmatpush1.msra.mxu0 %v3883
        %4364 = vmatprep.subr.mxu0 %v3908
        %4365 = vmatpush1.msra.mxu0 %v3907
        %4366 = vmatprep.subr.mxu0 %v3925
        %4367 = vmatpush1.msra.mxu0 %v3924
        %4368 = vmatprep.subr.mxu0 %v3942
        %4369 = vmatpush1.msra.mxu0 %v3941
        %4370 = vmatprep.subr.mxu0 %v3959
        %4371 = vmatpush1.msra.mxu0 %v3958
        %4372 = vmatprep.subr.mxu0 0.0
        %4373 = vmatpush1.msra.mxu0 0.0
        %4374 = vmatprep.subr.mxu0 0.0
        %4375 = vmatpush1.msra.mxu0 0.0
        %4376 = vmatprep.subr.mxu0 0.0
        %4377 = vmatpush1.msra.mxu0 0.0
        %4378 = vmatprep.subr.mxu0 0.0
        %4379 = vmatpush1.msra.mxu0 0.0
        %4380 = vmatprep.subr.mxu0 0.0
        %4381 = vmatpush1.msra.mxu0 0.0
        %4382 = vmatprep.subr.mxu0 0.0
        %4383 = vmatpush1.msra.mxu0 0.0
        %4384 = vmatprep.subr.mxu0 0.0
        %4385 = vmatpush1.msra.mxu0 0.0
        %4386 = vmatprep.subr.mxu0 0.0
        %4387 = vmatpush1.msra.mxu0 0.0
        %4388 = vmatprep.subr.mxu0 0.0
        %4389 = vmatpush1.msra.mxu0 0.0
        %4390 = vmatprep.subr.mxu0 0.0
        %4391 = vmatpush1.msra.mxu0 0.0
        %4392 = vmatprep.subr.mxu0 0.0
        %4393 = vmatpush1.msra.mxu0 0.0
        %4394 = vmatprep.subr.mxu0 0.0
        %4395 = vmatpush1.msra.mxu0 0.0
        %4396 = vmatprep.subr.mxu0 0.0
        %4397 = vmatpush1.msra.mxu0 0.0
        %4398 = vmatprep.subr.mxu0 0.0
        %4399 = vmatpush1.msra.mxu0 0.0
        %4400 = vmatprep.subr.mxu0 0.0
        %4401 = vmatpush1.msra.mxu0 0.0
        %4402 = vmatprep.subr.mxu0 0.0
        %4403 = vmatpush1.msra.mxu0 0.0
        %4404 = vmatprep.subr.mxu0 0.0
        %4405 = vmatpush1.msra.mxu0 0.0
        %4406 = vmatprep.subr.mxu0 0.0
        %4407 = vmatpush1.msra.mxu0 0.0
        %4408 = vmatprep.subr.mxu0 0.0
        %4409 = vmatpush1.msra.mxu0 0.0
        %4410 = vmatprep.subr.mxu0 0.0
        %4411 = vmatpush1.msra.mxu0 0.0
        %4412 = vmatprep.subr.mxu0 0.0
        %4413 = vmatpush1.msra.mxu0 0.0
        %4414 = vmatprep.subr.mxu0 0.0
        %4415 = vmatpush1.msra.mxu0 0.0
        %4416 = vmatprep.subr.mxu0 0.0
        %4417 = vmatpush1.msra.mxu0 0.0
        %4418 = vmatprep.subr.mxu0 0.0
        %4419 = vmatpush1.msra.mxu0 0.0
        %4420 = vmatprep.subr.mxu0 0.0
        %4421 = vmatpush1.msra.mxu0 0.0
        %4422 = vmatprep.subr.mxu0 0.0
        %4423 = vmatpush1.msra.mxu0 0.0
        %4424 = vmatprep.subr.mxu0 0.0
        %4425 = vmatpush1.msra.mxu0 0.0
        %4426 = vmatprep.mubr.f32.mxu0 0.0
        %4427 = vmatmul.mubr.f32.gmra.mrb[0].mxu0 %v4358
        %v4428 = vpop.f32.mrb[0].mxu0
        %v4429 = vadd.f32 0.0, %v4428
        %v4430 = vpop.f32.mrb[0].mxu0
        %v4431 = vadd.f32 0.0, %v4430
        %4432 = vmatprep.mubr.f32.mxu0 0.0
        %4433 = vmatmul.mubr.f32.gmra.mrb[0].mxu0 %v4360
        %v4434 = vpop.f32.mrb[0].mxu0
        %v4435 = vadd.f32 0.0, %v4434
        %v4436 = vpop.f32.mrb[0].mxu0
        %v4437 = vadd.f32 0.0, %v4436
        %4438 = vdwg.mxu0
        %4439 = vmatprep.subr.mxu0 %v3886
        %4440 = vmatpush1.msra.mxu0 %v3885
        %4441 = vmatprep.subr.mxu0 %v3910
        %4442 = vmatpush1.msra.mxu0 %v3909
        %4443 = vmatprep.subr.mxu0 %v3927
        %4444 = vmatpush1.msra.mxu0 %v3926
        %4445 = vmatprep.subr.mxu0 %v3944
        %4446 = vmatpush1.msra.mxu0 %v3943
        %4447 = vmatprep.subr.mxu0 %v3961
        %4448 = vmatpush1.msra.mxu0 %v3960
        %4449 = vmatprep.subr.mxu0 0.0
        %4450 = vmatpush1.msra.mxu0 0.0
        %4451 = vmatprep.subr.mxu0 0.0
        %4452 = vmatpush1.msra.mxu0 0.0
        %4453 = vmatprep.subr.mxu0 0.0
        %4454 = vmatpush1.msra.mxu0 0.0
        %4455 = vmatprep.subr.mxu0 0.0
        %4456 = vmatpush1.msra.mxu0 0.0
        %4457 = vmatprep.subr.mxu0 0.0
        %4458 = vmatpush1.msra.mxu0 0.0
        %4459 = vmatprep.subr.mxu0 0.0
        %4460 = vmatpush1.msra.mxu0 0.0
        %4461 = vmatprep.subr.mxu0 0.0
        %4462 = vmatpush1.msra.mxu0 0.0
        %4463 = vmatprep.subr.mxu0 0.0
        %4464 = vmatpush1.msra.mxu0 0.0
        %4465 = vmatprep.subr.mxu0 0.0
        %4466 = vmatpush1.msra.mxu0 0.0
        %4467 = vmatprep.subr.mxu0 0.0
        %4468 = vmatpush1.msra.mxu0 0.0
        %4469 = vmatprep.subr.mxu0 0.0
        %4470 = vmatpush1.msra.mxu0 0.0
        %4471 = vmatprep.subr.mxu0 0.0
        %4472 = vmatpush1.msra.mxu0 0.0
        %4473 = vmatprep.subr.mxu0 0.0
        %4474 = vmatpush1.msra.mxu0 0.0
        %4475 = vmatprep.subr.mxu0 0.0
        %4476 = vmatpush1.msra.mxu0 0.0
        %4477 = vmatprep.subr.mxu0 0.0
        %4478 = vmatpush1.msra.mxu0 0.0
        %4479 = vmatprep.subr.mxu0 0.0
        %4480 = vmatpush1.msra.mxu0 0.0
        %4481 = vmatprep.subr.mxu0 0.0
        %4482 = vmatpush1.msra.mxu0 0.0
        %4483 = vmatprep.subr.mxu0 0.0
        %4484 = vmatpush1.msra.mxu0 0.0
        %4485 = vmatprep.subr.mxu0 0.0
        %4486 = vmatpush1.msra.mxu0 0.0
        %4487 = vmatprep.subr.mxu0 0.0
        %4488 = vmatpush1.msra.mxu0 0.0
        %4489 = vmatprep.subr.mxu0 0.0
        %4490 = vmatpush1.msra.mxu0 0.0
        %4491 = vmatprep.subr.mxu0 0.0
        %4492 = vmatpush1.msra.mxu0 0.0
        %4493 = vmatprep.subr.mxu0 0.0
        %4494 = vmatpush1.msra.mxu0 0.0
        %4495 = vmatprep.subr.mxu0 0.0
        %4496 = vmatpush1.msra.mxu0 0.0
        %4497 = vmatprep.subr.mxu0 0.0
        %4498 = vmatpush1.msra.mxu0 0.0
        %4499 = vmatprep.subr.mxu0 0.0
        %4500 = vmatpush1.msra.mxu0 0.0
        %4501 = vmatprep.subr.mxu0 0.0
        %4502 = vmatpush1.msra.mxu0 0.0
        %4503 = vmatprep.mubr.f32.mxu0 0.0
        %4504 = vmatmul.mubr.f32.gmra.mrb[0].mxu0 %v4358
        %v4505 = vpop.f32.mrb[0].mxu0
        %v4506 = vadd.f32 0.0, %v4505
        %v4507 = vpop.f32.mrb[0].mxu0
        %v4508 = vadd.f32 0.0, %v4507
        %4509 = vmatprep.mubr.f32.mxu0 0.0
        %4510 = vmatmul.mubr.f32.gmra.mrb[0].mxu0 %v4360
        %v4511 = vpop.f32.mrb[0].mxu0
        %v4512 = vadd.f32 0.0, %v4511
        %v4513 = vpop.f32.mrb[0].mxu0
        %v4514 = vadd.f32 0.0, %v4513
        %4515 = vdwg.mxu0
        %4516 = vmatprep.subr.mxu0 0.0
        %4517 = vmatpush1.msra.mxu0 %v3887
        %4518 = vmatprep.subr.mxu0 0.0
        %4519 = vmatpush1.msra.mxu0 %v3905
        %4520 = vmatprep.subr.mxu0 0.0
        %4521 = vmatpush1.msra.mxu0 %v3922
        %4522 = vmatprep.subr.mxu0 0.0
        %4523 = vmatpush1.msra.mxu0 %v3939
        %4524 = vmatprep.subr.mxu0 0.0
        %4525 = vmatpush1.msra.mxu0 %v3956
        %4526 = vmatprep.subr.mxu0 0.0
        %4527 = vmatpush1.msra.mxu0 0.0
        %4528 = vmatprep.subr.mxu0 0.0
        %4529 = vmatpush1.msra.mxu0 0.0
        %4530 = vmatprep.subr.mxu0 0.0
        %4531 = vmatpush1.msra.mxu0 0.0
        %4532 = vmatprep.subr.mxu0 0.0
        %4533 = vmatpush1.msra.mxu0 0.0
        %4534 = vmatprep.subr.mxu0 0.0
        %4535 = vmatpush1.msra.mxu0 0.0
        %4536 = vmatprep.subr.mxu0 0.0
        %4537 = vmatpush1.msra.mxu0 0.0
        %4538 = vmatprep.subr.mxu0 0.0
        %4539 = vmatpush1.msra.mxu0 0.0
        %4540 = vmatprep.subr.mxu0 0.0
        %4541 = vmatpush1.msra.mxu0 0.0
        %4542 = vmatprep.subr.mxu0 0.0
        %4543 = vmatpush1.msra.mxu0 0.0
        %4544 = vmatprep.subr.mxu0 0.0
        %4545 = vmatpush1.msra.mxu0 0.0
        %4546 = vmatprep.subr.mxu0 0.0
        %4547 = vmatpush1.msra.mxu0 0.0
        %4548 = vmatprep.subr.mxu0 0.0
        %4549 = vmatpush1.msra.mxu0 0.0
        %4550 = vmatprep.subr.mxu0 0.0
        %4551 = vmatpush1.msra.mxu0 0.0
        %4552 = vmatprep.subr.mxu0 0.0
        %4553 = vmatpush1.msra.mxu0 0.0
        %4554 = vmatprep.subr.mxu0 0.0
        %4555 = vmatpush1.msra.mxu0 0.0
        %4556 = vmatprep.subr.mxu0 0.0
        %4557 = vmatpush1.msra.mxu0 0.0
        %4558 = vmatprep.subr.mxu0 0.0
        %4559 = vmatpush1.msra.mxu0 0.0
        %4560 = vmatprep.subr.mxu0 0.0
        %4561 = vmatpush1.msra.mxu0 0.0
        %4562 = vmatprep.subr.mxu0 0.0
        %4563 = vmatpush1.msra.mxu0 0.0
        %4564 = vmatprep.subr.mxu0 0.0
        %4565 = vmatpush1.msra.mxu0 0.0
        %4566 = vmatprep.subr.mxu0 0.0
        %4567 = vmatpush1.msra.mxu0 0.0
        %4568 = vmatprep.subr.mxu0 0.0
        %4569 = vmatpush1.msra.mxu0 0.0
        %4570 = vmatprep.subr.mxu0 0.0
        %4571 = vmatpush1.msra.mxu0 0.0
        %4572 = vmatprep.subr.mxu0 0.0
        %4573 = vmatpush1.msra.mxu0 0.0
        %4574 = vmatprep.subr.mxu0 0.0
        %4575 = vmatpush1.msra.mxu0 0.0
        %4576 = vmatprep.subr.mxu0 0.0
        %4577 = vmatpush1.msra.mxu0 0.0
        %4578 = vmatprep.subr.mxu0 0.0
        %4579 = vmatpush1.msra.mxu0 0.0
        %4580 = vmatprep.mubr.f32.mxu0 0.0
        %4581 = vmatmul.mubr.f32.gmra.mrb[0].mxu0 %v4358
        %v4582 = vpop.f32.mrb[0].mxu0
        %v4583 = vadd.f32 0.0, %v4582
        %v4584 = vpop.f32.mrb[0].mxu0
        %4585 = vmatprep.mubr.f32.mxu0 0.0
        %4586 = vmatmul.mubr.f32.gmra.mrb[0].mxu0 %v4360
        %v4587 = vpop.f32.mrb[0].mxu0
        %v4588 = vadd.f32 0.0, %v4587
        %v4589 = vpop.f32.mrb[0].mxu0
        %4590 = vdwg.mxu0
        %v4591 = vadd.f32 %v4324, %v4429
        %v4592 = vadd.f32 %v4325, %v4431
        %v4593 = vadd.f32 %v4326, %v4506
        %v4594 = vadd.f32 %v4327, %v4508
        %v4595 = vadd.f32 %v4328, %v4583
        %v4596 = vadd.f32 %v4329, %v4435
        %v4597 = vadd.f32 %v4330, %v4437
        %v4598 = vadd.f32 %v4331, %v4512
        %v4599 = vadd.f32 %v4332, %v4514
        %v4600 = vadd.f32 %v4333, %v4588
        %v4601 = vld [vmem:[%s6] sm:$0xff]
        %v4602 = vld [vmem:[%s6 + $0x8] sm:$0xff]
        %4604 = vset.pattern.permute.xlu0 0
        %4605 = vperm.xlu0 %4604, %v4601
        %v4606 = vpop.permute.xlu0 %4605
        %4609 = vset.pattern.permute.xlu0 0
        %4610 = vperm.xlu0 %4609, %v4602
        %v4611 = vpop.permute.xlu0 %4610
        %v4613 = vadd.f32 %v4591, %v4606
        %v4614 = vadd.f32 %v4592, %v4606
        %v4615 = vadd.f32 %v4593, %v4606
        %v4616 = vadd.f32 %v4594, %v4606
        %v4617 = vadd.f32 %v4595, %v4606
        %v4618 = vadd.f32 %v4596, %v4611
        %v4619 = vadd.f32 %v4597, %v4611
        %v4620 = vadd.f32 %v4598, %v4611
        %v4621 = vadd.f32 %v4599, %v4611
        %v4622 = vadd.f32 %v4600, %v4611
        %v4623 = vmax.f32 %v4613, 0.0
        %v4624 = vmax.f32 %v4614, 0.0
        %v4625 = vmax.f32 %v4615, 0.0
        %v4626 = vmax.f32 %v4616, 0.0
        %v4627 = vmax.f32 %v4617, 0.0
        %v4628 = vmax.f32 %v4618, 0.0
        %v4629 = vmax.f32 %v4619, 0.0
        %v4630 = vmax.f32 %v4620, 0.0
        %v4631 = vmax.f32 %v4621, 0.0
        %v4632 = vmax.f32 %v4622, 0.0
        %4633 = vst [vmem:[#allocation5] sm:$0xff] %v4623
        %4634 = vst [vmem:[#allocation5 + $0x8] sm:$0xff] %v4624
        %4635 = vst [vmem:[#allocation5 + $0x10] sm:$0xff] %v4625
        %4636 = vst [vmem:[#allocation5 + $0x18] sm:$0xff] %v4626
        %vm4637 = vcmask 678912
        %4638 = vst.msk [vmem:[#allocation5 + $0x20] sm:$0xff] %vm4637, %v4627
        %4639 = vst [vmem:[#allocation5 + $0x28] sm:$0xff] %v4628
        %4640 = vst [vmem:[#allocation5 + $0x30] sm:$0xff] %v4629
        %4641 = vst [vmem:[#allocation5 + $0x38] sm:$0xff] %v4630
        %4642 = vst [vmem:[#allocation5 + $0x40] sm:$0xff] %v4631
        %4643 = vst.msk [vmem:[#allocation5 + $0x48] sm:$0xff] %vm4637, %v4632
        %v4644 = vld [vmem:[#allocation5] sm:$0xff]
        %v4645 = vld [vmem:[#allocation5 + $0x8] sm:$0xff]
        %v4646 = vld [vmem:[#allocation5 + $0x10] sm:$0xff]
        %v4647 = vld [vmem:[#allocation5 + $0x18] sm:$0xff]
        %v4648 = vld [vmem:[#allocation5 + $0x20] sm:$0xff]
        %v4649 = vld [vmem:[#allocation5 + $0x28] sm:$0xff]
        %v4650 = vld [vmem:[#allocation5 + $0x30] sm:$0xff]
        %v4651 = vld [vmem:[#allocation5 + $0x38] sm:$0xff]
        %v4652 = vld [vmem:[#allocation5 + $0x40] sm:$0xff]
        %v4653 = vld [vmem:[#allocation5 + $0x48] sm:$0xff]
        %4664 = vrot.lane.b32.xlu0 %v4644, 126
        %v4665 = vpop.permute.xlu0 %4664
        %4666 = vrot.lane.b32.xlu0 %v4645, 126
        %v4667 = vpop.permute.xlu0 %4666
        %4668 = vrot.lane.b32.xlu0 %v4646, 126
        %v4669 = vpop.permute.xlu0 %4668
        %4670 = vrot.lane.b32.xlu0 %v4647, 126
        %v4671 = vpop.permute.xlu0 %4670
        %4672 = vrot.lane.b32.xlu0 %v4648, 126
        %v4673 = vpop.permute.xlu0 %4672
        %4674 = vrot.lane.b32.xlu0 %v4649, 126
        %v4675 = vpop.permute.xlu0 %4674
        %4676 = vrot.lane.b32.xlu0 %v4650, 126
        %v4677 = vpop.permute.xlu0 %4676
        %4678 = vrot.lane.b32.xlu0 %v4651, 126
        %v4679 = vpop.permute.xlu0 %4678
        %4680 = vrot.lane.b32.xlu0 %v4652, 126
        %v4681 = vpop.permute.xlu0 %4680
        %4682 = vrot.lane.b32.xlu0 %v4653, 126
        %v4683 = vpop.permute.xlu0 %4682
        %v4684 = vsel %vm583, %v4665, %v4667
        %v4685 = vsel %vm583, %v4667, %v4669
        %v4686 = vsel %vm583, %v4669, %v4671
        %v4687 = vsel %vm583, %v4671, %v4673
        %v4688 = vsel %vm583, %v4675, %v4677
        %v4689 = vsel %vm583, %v4677, %v4679
        %v4690 = vsel %vm583, %v4679, %v4681
        %v4691 = vsel %vm583, %v4681, %v4683
        %v4702 = vmax.f32 %v4644, %v4684
        %v4703 = vmax.f32 %v4645, %v4685
        %v4704 = vmax.f32 %v4646, %v4686
        %v4705 = vmax.f32 %v4647, %v4687
        %v4706 = vmax.f32 %v4648, %v4673
        %v4707 = vmax.f32 %v4649, %v4688
        %v4708 = vmax.f32 %v4650, %v4689
        %v4709 = vmax.f32 %v4651, %v4690
        %v4710 = vmax.f32 %v4652, %v4691
        %v4711 = vmax.f32 %v4653, %v4683
        %4722 = vrot.lane.b32.xlu0 %v4702, 64
        %v4723 = vpop.permute.xlu0 %4722
        %4724 = vrot.lane.b32.xlu0 %v4703, 64
        %v4725 = vpop.permute.xlu0 %4724
        %4726 = vrot.lane.b32.xlu0 %v4704, 64
        %v4727 = vpop.permute.xlu0 %4726
        %4728 = vrot.lane.b32.xlu0 %v4705, 64
        %v4729 = vpop.permute.xlu0 %4728
        %4730 = vrot.lane.b32.xlu0 %v4706, 64
        %v4731 = vpop.permute.xlu0 %4730
        %4732 = vrot.lane.b32.xlu0 %v4707, 64
        %v4733 = vpop.permute.xlu0 %4732
        %4734 = vrot.lane.b32.xlu0 %v4708, 64
        %v4735 = vpop.permute.xlu0 %4734
        %4736 = vrot.lane.b32.xlu0 %v4709, 64
        %v4737 = vpop.permute.xlu0 %4736
        %4738 = vrot.lane.b32.xlu0 %v4710, 64
        %v4739 = vpop.permute.xlu0 %4738
        %4740 = vrot.lane.b32.xlu0 %v4711, 64
        %v4741 = vpop.permute.xlu0 %4740
        %v4742 = vsel %vm1320, %v4723, %v4725
        %v4743 = vsel %vm1320, %v4725, %v4727
        %v4744 = vsel %vm1320, %v4727, %v4729
        %v4745 = vsel %vm1320, %v4729, %v4731
        %v4746 = vsel %vm1320, %v4733, %v4735
        %v4747 = vsel %vm1320, %v4735, %v4737
        %v4748 = vsel %vm1320, %v4737, %v4739
        %v4749 = vsel %vm1320, %v4739, %v4741
        %v4760 = vmax.f32 %v4702, %v4742
        %v4761 = vmax.f32 %v4703, %v4743
        %v4762 = vmax.f32 %v4704, %v4744
        %v4763 = vmax.f32 %v4705, %v4745
        %v4764 = vmax.f32 %v4706, %v4731
        %v4765 = vmax.f32 %v4707, %v4746
        %v4766 = vmax.f32 %v4708, %v4747
        %v4767 = vmax.f32 %v4709, %v4748
        %v4768 = vmax.f32 %v4710, %v4749
        %v4769 = vmax.f32 %v4711, %v4741
        %4770 = vst [vmem:[#allocation6] sm:$0xff] %v4760
        %4771 = vst [vmem:[#allocation6 + $0x8] sm:$0xff] %v4761
        %4772 = vst [vmem:[#allocation6 + $0x10] sm:$0xff] %v4762
        %4773 = vst [vmem:[#allocation6 + $0x18] sm:$0xff] %v4763
        %vm4774 = vcmask 138240
        %4775 = vst.msk [vmem:[#allocation6 + $0x20] sm:$0xff] %vm4774, %v4764
        %4776 = vst [vmem:[#allocation6 + $0x28] sm:$0xff] %v4765
        %4777 = vst [vmem:[#allocation6 + $0x30] sm:$0xff] %v4766
        %4778 = vst [vmem:[#allocation6 + $0x38] sm:$0xff] %v4767
        %4779 = vst [vmem:[#allocation6 + $0x40] sm:$0xff] %v4768
        %4780 = vst.msk [vmem:[#allocation6 + $0x48] sm:$0xff] %vm4774, %v4769
        %v4781 = vld [vmem:[#allocation6] sm:$0xff]
        %v4782 = vld [vmem:[#allocation6 + $0x8] sm:$0xff]
        %v4783 = vld [vmem:[#allocation6 + $0x10] sm:$0xff]
        %v4784 = vld [vmem:[#allocation6 + $0x18] sm:$0xff]
        %v4785 = vld [vmem:[#allocation6 + $0x20] sm:$0xff]
        %v4786 = vld [vmem:[#allocation6 + $0x28] sm:$0xff]
        %v4787 = vld [vmem:[#allocation6 + $0x30] sm:$0xff]
        %v4788 = vld [vmem:[#allocation6 + $0x38] sm:$0xff]
        %v4789 = vld [vmem:[#allocation6 + $0x40] sm:$0xff]
        %v4790 = vld [vmem:[#allocation6 + $0x48] sm:$0xff]
        %v4791 = vld [vmem:[%s7] sm:$0xff]
        %v4792 = vld [vmem:[%s7 + $0x8] sm:$0xff]
        %v4793 = vld [vmem:[%s7 + $0x10] sm:$0xff]
        %v4794 = vld [vmem:[%s7 + $0x18] sm:$0xff]
        %v4795 = vld [vmem:[%s7 + $0x20] sm:$0xff]
        %v4796 = vld [vmem:[%s7 + $0x28] sm:$0xff]
        %v4797 = vld [vmem:[%s7 + $0x30] sm:$0xff]
        %v4798 = vld [vmem:[%s7 + $0x38] sm:$0xff]
        %v4799 = vld [vmem:[%s7 + $0x40] sm:$0xff]
        %v4800 = vld [vmem:[%s7 + $0x48] sm:$0xff]
        %v4801 = vld [vmem:[%s7 + $0x50] sm:$0xff]
        %v4802 = vld [vmem:[%s7 + $0x58] sm:$0xff]
        %v4803 = vld [vmem:[%s7 + $0x60] sm:$0xff]
        %v4804 = vld [vmem:[%s7 + $0x68] sm:$0xff]
        %v4805 = vld [vmem:[%s7 + $0x70] sm:$0xff]
        %v4806 = vld [vmem:[%s7 + $0x78] sm:$0xff]
        %v4807 = vld [vmem:[%s7 + $0x80] sm:$0xff]
        %v4808 = vld [vmem:[%s7 + $0x88] sm:$0xff]
        %v4809 = vld [vmem:[%s7 + $0x90] sm:$0xff]
        %v4810 = vld [vmem:[%s7 + $0x98] sm:$0xff]
        %v4811 = vld [vmem:[%s7 + $0xa0] sm:$0xff]
        %v4812 = vld [vmem:[%s7 + $0xa8] sm:$0xff]
        %v4813 = vld [vmem:[%s7 + $0xb0] sm:$0xff]
        %v4814 = vld [vmem:[%s7 + $0xb8] sm:$0xff]
        %v4815 = vld [vmem:[%s7 + $0xc0] sm:$0xff]
        %v4816 = vld [vmem:[%s7 + $0xc8] sm:$0xff]
        %v4817 = vld [vmem:[%s7 + $0xd0] sm:$0xff]
        %v4818 = vld [vmem:[%s7 + $0xd8] sm:$0xff]
        %v4819 = vld [vmem:[%s7 + $0xe0] sm:$0xff]
        %v4820 = vld [vmem:[%s7 + $0xe8] sm:$0xff]
        %v4821 = vld [vmem:[%s7 + $0xf0] sm:$0xff]
        %v4822 = vld [vmem:[%s7 + $0xf8] sm:$0xff]
        %v4823 = vld [vmem:[%s7 + $0x100] sm:$0xff]
        %v4824 = vld [vmem:[%s7 + $0x108] sm:$0xff]
        %v4825 = vld [vmem:[%s7 + $0x110] sm:$0xff]
        %v4826 = vld [vmem:[%s7 + $0x118] sm:$0xff]
        %v4827 = vld [vmem:[%s7 + $0x120] sm:$0xff]
        %v4828 = vld [vmem:[%s7 + $0x128] sm:$0xff]
        %v4829 = vld [vmem:[%s7 + $0x130] sm:$0xff]
        %v4830 = vld [vmem:[%s7 + $0x138] sm:$0xff]
        %v4831 = vld [vmem:[%s7 + $0x140] sm:$0xff]
        %v4832 = vld [vmem:[%s7 + $0x148] sm:$0xff]
        %v4833 = vld [vmem:[%s7 + $0x150] sm:$0xff]
        %v4834 = vld [vmem:[%s7 + $0x158] sm:$0xff]
        %v4835 = vld [vmem:[%s7 + $0x160] sm:$0xff]
        %v4836 = vld [vmem:[%s7 + $0x168] sm:$0xff]
        %v4837 = vld [vmem:[%s7 + $0x170] sm:$0xff]
        %v4838 = vld [vmem:[%s7 + $0x178] sm:$0xff]
        %v4839 = vld [vmem:[%s7 + $0x180] sm:$0xff]
        %v4840 = vld [vmem:[%s7 + $0x188] sm:$0xff]
        %v4841 = vld [vmem:[%s7 + $0x190] sm:$0xff]
        %v4842 = vld [vmem:[%s7 + $0x198] sm:$0xff]
        %v4843 = vld [vmem:[%s7 + $0x1a0] sm:$0xff]
        %v4844 = vld [vmem:[%s7 + $0x1a8] sm:$0xff]
        %v4845 = vld [vmem:[%s7 + $0x1b0] sm:$0xff]
        %v4846 = vld [vmem:[%s7 + $0x1b8] sm:$0xff]
        %v4847 = vld [vmem:[%s7 + $0x1c0] sm:$0xff]
        %v4848 = vld [vmem:[%s7 + $0x1c8] sm:$0xff]
        %v4849 = vld [vmem:[%s7 + $0x1d0] sm:$0xff]
        %v4850 = vld [vmem:[%s7 + $0x1d8] sm:$0xff]
        %v4851 = vld [vmem:[%s7 + $0x1e0] sm:$0xff]
        %v4852 = vld [vmem:[%s7 + $0x1e8] sm:$0xff]
        %v4853 = vld [vmem:[%s7 + $0x1f0] sm:$0xff]
        %v4854 = vld [vmem:[%s7 + $0x1f8] sm:$0xff]
        %v4855 = vld [vmem:[%s7 + $0x200] sm:$0xff]
        %v4856 = vld [vmem:[%s7 + $0x208] sm:$0xff]
        %v4857 = vld [vmem:[%s7 + $0x210] sm:$0x1]
        %v4859 = vsel %vm4774, %v4785, 0
        %v4862 = vsel %vm4774, %v4790, 0
        %vm4864 = vcmask 1040384
        %v4866 = vsel %vm4864, %v4857, 0
        %4868 = vmatprep.subr.mxu0 0.0
        %4869 = vmatpush1.msra.mxu0 %v4791
        %4870 = vmatprep.subr.mxu0 0.0
        %4871 = vmatpush1.msra.mxu0 %v4792
        %4872 = vmatprep.subr.mxu0 0.0
        %4873 = vmatpush1.msra.mxu0 %v4793
        %4874 = vmatprep.subr.mxu0 0.0
        %4875 = vmatpush1.msra.mxu0 %v4794
        %4876 = vmatprep.subr.mxu0 0.0
        %4877 = vmatpush1.msra.mxu0 %v4795
        %4878 = vmatprep.subr.mxu0 0.0
        %4879 = vmatpush1.msra.mxu0 %v4796
        %4880 = vmatprep.subr.mxu0 0.0
        %4881 = vmatpush1.msra.mxu0 %v4797
        %4882 = vmatprep.subr.mxu0 0.0
        %4883 = vmatpush1.msra.mxu0 %v4798
        %4884 = vmatprep.subr.mxu0 0.0
        %4885 = vmatpush1.msra.mxu0 %v4799
        %4886 = vmatprep.subr.mxu0 0.0
        %4887 = vmatpush1.msra.mxu0 %v4800
        %4888 = vmatprep.subr.mxu0 0.0
        %4889 = vmatpush1.msra.mxu0 %v4801
        %4890 = vmatprep.subr.mxu0 0.0
        %4891 = vmatpush1.msra.mxu0 %v4802
        %4892 = vmatprep.subr.mxu0 0.0
        %4893 = vmatpush1.msra.mxu0 %v4803
        %4894 = vmatprep.subr.mxu0 0.0
        %4895 = vmatpush1.msra.mxu0 %v4804
        %4896 = vmatprep.subr.mxu0 0.0
        %4897 = vmatpush1.msra.mxu0 %v4805
        %4898 = vmatprep.subr.mxu0 0.0
        %4899 = vmatpush1.msra.mxu0 %v4806
        %4900 = vmatprep.subr.mxu0 0.0
        %4901 = vmatpush1.msra.mxu0 %v4807
        %4902 = vmatprep.subr.mxu0 0.0
        %4903 = vmatpush1.msra.mxu0 %v4808
        %4904 = vmatprep.subr.mxu0 0.0
        %4905 = vmatpush1.msra.mxu0 %v4809
        %4906 = vmatprep.subr.mxu0 0.0
        %4907 = vmatpush1.msra.mxu0 %v4810
        %4908 = vmatprep.subr.mxu0 0.0
        %4909 = vmatpush1.msra.mxu0 %v4811
        %4910 = vmatprep.subr.mxu0 0.0
        %4911 = vmatpush1.msra.mxu0 %v4812
        %4912 = vmatprep.subr.mxu0 0.0
        %4913 = vmatpush1.msra.mxu0 %v4813
        %4914 = vmatprep.subr.mxu0 0.0
        %4915 = vmatpush1.msra.mxu0 %v4814
        %4916 = vmatprep.subr.mxu0 0.0
        %4917 = vmatpush1.msra.mxu0 %v4815
        %4918 = vmatprep.subr.mxu0 0.0
        %4919 = vmatpush1.msra.mxu0 %v4816
        %4920 = vmatprep.subr.mxu0 0.0
        %4921 = vmatpush1.msra.mxu0 %v4817
        %4922 = vmatprep.subr.mxu0 0.0
        %4923 = vmatpush1.msra.mxu0 %v4818
        %4924 = vmatprep.subr.mxu0 0.0
        %4925 = vmatpush1.msra.mxu0 %v4819
        %4926 = vmatprep.subr.mxu0 0.0
        %4927 = vmatpush1.msra.mxu0 %v4820
        %4928 = vmatprep.subr.mxu0 0.0
        %4929 = vmatpush1.msra.mxu0 %v4821
        %4930 = vmatprep.subr.mxu0 0.0
        %4931 = vmatpush1.msra.mxu0 %v4822
        %4932 = vmatprep.mubr.f32.mxu0 %v4782
        %4933 = vmatmul.mubr.f32.gmra.mrb[0].mxu0 %v4781
        %v4934 = vpop.f32.mrb[0].mxu0
        %v4935 = vadd.f32 0.0, %v4934
        %v4936 = vpop.f32.mrb[0].mxu0
        %4937 = vmatprep.mubr.f32.mxu0 %v4787
        %4938 = vmatmul.mubr.f32.gmra.mrb[0].mxu0 %v4786
        %v4939 = vpop.f32.mrb[0].mxu0
        %v4940 = vadd.f32 0.0, %v4939
        %v4941 = vpop.f32.mrb[0].mxu0
        %4942 = vdwg.mxu0
        %4943 = vmatprep.subr.mxu0 0.0
        %4944 = vmatpush1.msra.mxu0 %v4823
        %4945 = vmatprep.subr.mxu0 0.0
        %4946 = vmatpush1.msra.mxu0 %v4824
        %4947 = vmatprep.subr.mxu0 0.0
        %4948 = vmatpush1.msra.mxu0 %v4825
        %4949 = vmatprep.subr.mxu0 0.0
        %4950 = vmatpush1.msra.mxu0 %v4826
        %4951 = vmatprep.subr.mxu0 0.0
        %4952 = vmatpush1.msra.mxu0 %v4827
        %4953 = vmatprep.subr.mxu0 0.0
        %4954 = vmatpush1.msra.mxu0 %v4828
        %4955 = vmatprep.subr.mxu0 0.0
        %4956 = vmatpush1.msra.mxu0 %v4829
        %4957 = vmatprep.subr.mxu0 0.0
        %4958 = vmatpush1.msra.mxu0 %v4830
        %4959 = vmatprep.subr.mxu0 0.0
        %4960 = vmatpush1.msra.mxu0 %v4831
        %4961 = vmatprep.subr.mxu0 0.0
        %4962 = vmatpush1.msra.mxu0 %v4832
        %4963 = vmatprep.subr.mxu0 0.0
        %4964 = vmatpush1.msra.mxu0 %v4833
        %4965 = vmatprep.subr.mxu0 0.0
        %4966 = vmatpush1.msra.mxu0 %v4834
        %4967 = vmatprep.subr.mxu0 0.0
        %4968 = vmatpush1.msra.mxu0 %v4835
        %4969 = vmatprep.subr.mxu0 0.0
        %4970 = vmatpush1.msra.mxu0 %v4836
        %4971 = vmatprep.subr.mxu0 0.0
        %4972 = vmatpush1.msra.mxu0 %v4837
        %4973 = vmatprep.subr.mxu0 0.0
        %4974 = vmatpush1.msra.mxu0 %v4838
        %4975 = vmatprep.subr.mxu0 0.0
        %4976 = vmatpush1.msra.mxu0 %v4839
        %4977 = vmatprep.subr.mxu0 0.0
        %4978 = vmatpush1.msra.mxu0 %v4840
        %4979 = vmatprep.subr.mxu0 0.0
        %4980 = vmatpush1.msra.mxu0 %v4841
        %4981 = vmatprep.subr.mxu0 0.0
        %4982 = vmatpush1.msra.mxu0 %v4842
        %4983 = vmatprep.subr.mxu0 0.0
        %4984 = vmatpush1.msra.mxu0 %v4843
        %4985 = vmatprep.subr.mxu0 0.0
        %4986 = vmatpush1.msra.mxu0 %v4844
        %4987 = vmatprep.subr.mxu0 0.0
        %4988 = vmatpush1.msra.mxu0 %v4845
        %4989 = vmatprep.subr.mxu0 0.0
        %4990 = vmatpush1.msra.mxu0 %v4846
        %4991 = vmatprep.subr.mxu0 0.0
        %4992 = vmatpush1.msra.mxu0 %v4847
        %4993 = vmatprep.subr.mxu0 0.0
        %4994 = vmatpush1.msra.mxu0 %v4848
        %4995 = vmatprep.subr.mxu0 0.0
        %4996 = vmatpush1.msra.mxu0 %v4849
        %4997 = vmatprep.subr.mxu0 0.0
        %4998 = vmatpush1.msra.mxu0 %v4850
        %4999 = vmatprep.subr.mxu0 0.0
        %5000 = vmatpush1.msra.mxu0 %v4851
        %5001 = vmatprep.subr.mxu0 0.0
        %5002 = vmatpush1.msra.mxu0 %v4852
        %5003 = vmatprep.subr.mxu0 0.0
        %5004 = vmatpush1.msra.mxu0 %v4853
        %5005 = vmatprep.subr.mxu0 0.0
        %5006 = vmatpush1.msra.mxu0 %v4854
        %5007 = vmatprep.mubr.f32.mxu0 %v4784
        %5008 = vmatmul.mubr.f32.gmra.mrb[0].mxu0 %v4783
        %v5009 = vpop.f32.mrb[0].mxu0
        %v5010 = vadd.f32 %v4935, %v5009
        %v5011 = vpop.f32.mrb[0].mxu0
        %5012 = vmatprep.mubr.f32.mxu0 %v4789
        %5013 = vmatmul.mubr.f32.gmra.mrb[0].mxu0 %v4788
        %v5014 = vpop.f32.mrb[0].mxu0
        %v5015 = vadd.f32 %v4940, %v5014
        %v5016 = vpop.f32.mrb[0].mxu0
        %5017 = vdwg.mxu0
        %5018 = vmatprep.subr.mxu0 0.0
        %5019 = vmatpush1.msra.mxu0 %v4855
        %5020 = vmatprep.subr.mxu0 0.0
        %5021 = vmatpush1.msra.mxu0 %v4856
        %5022 = vmatprep.subr.mxu0 0.0
        %5023 = vmatpush1.msra.mxu0 %v4866
        %5024 = vmatprep.subr.mxu0 0.0
        %5025 = vmatpush1.msra.mxu0 0.0
        %5026 = vmatprep.subr.mxu0 0.0
        %5027 = vmatpush1.msra.mxu0 0.0
        %5028 = vmatprep.subr.mxu0 0.0
        %5029 = vmatpush1.msra.mxu0 0.0
        %5030 = vmatprep.subr.mxu0 0.0
        %5031 = vmatpush1.msra.mxu0 0.0
        %5032 = vmatprep.subr.mxu0 0.0
        %5033 = vmatpush1.msra.mxu0 0.0
        %5034 = vmatprep.subr.mxu0 0.0
        %5035 = vmatpush1.msra.mxu0 0.0
        %5036 = vmatprep.subr.mxu0 0.0
        %5037 = vmatpush1.msra.mxu0 0.0
        %5038 = vmatprep.subr.mxu0 0.0
        %5039 = vmatpush1.msra.mxu0 0.0
        %5040 = vmatprep.subr.mxu0 0.0
        %5041 = vmatpush1.msra.mxu0 0.0
        %5042 = vmatprep.subr.mxu0 0.0
        %5043 = vmatpush1.msra.mxu0 0.0
        %5044 = vmatprep.subr.mxu0 0.0
        %5045 = vmatpush1.msra.mxu0 0.0
        %5046 = vmatprep.subr.mxu0 0.0
        %5047 = vmatpush1.msra.mxu0 0.0
        %5048 = vmatprep.subr.mxu0 0.0
        %5049 = vmatpush1.msra.mxu0 0.0
        %5050 = vmatprep.subr.mxu0 0.0
        %5051 = vmatpush1.msra.mxu0 0.0
        %5052 = vmatprep.subr.mxu0 0.0
        %5053 = vmatpush1.msra.mxu0 0.0
        %5054 = vmatprep.subr.mxu0 0.0
        %5055 = vmatpush1.msra.mxu0 0.0
        %5056 = vmatprep.subr.mxu0 0.0
        %5057 = vmatpush1.msra.mxu0 0.0
        %5058 = vmatprep.subr.mxu0 0.0
        %5059 = vmatpush1.msra.mxu0 0.0
        %5060 = vmatprep.subr.mxu0 0.0
        %5061 = vmatpush1.msra.mxu0 0.0
        %5062 = vmatprep.subr.mxu0 0.0
        %5063 = vmatpush1.msra.mxu0 0.0
        %5064 = vmatprep.subr.mxu0 0.0
        %5065 = vmatpush1.msra.mxu0 0.0
        %5066 = vmatprep.subr.mxu0 0.0
        %5067 = vmatpush1.msra.mxu0 0.0
        %5068 = vmatprep.subr.mxu0 0.0
        %5069 = vmatpush1.msra.mxu0 0.0
        %5070 = vmatprep.subr.mxu0 0.0
        %5071 = vmatpush1.msra.mxu0 0.0
        %5072 = vmatprep.subr.mxu0 0.0
        %5073 = vmatpush1.msra.mxu0 0.0
        %5074 = vmatprep.subr.mxu0 0.0
        %5075 = vmatpush1.msra.mxu0 0.0
        %5076 = vmatprep.subr.mxu0 0.0
        %5077 = vmatpush1.msra.mxu0 0.0
        %5078 = vmatprep.subr.mxu0 0.0
        %5079 = vmatpush1.msra.mxu0 0.0
        %5080 = vmatprep.subr.mxu0 0.0
        %5081 = vmatpush1.msra.mxu0 0.0
        %5082 = vmatprep.mubr.f32.mxu0 0.0
        %5083 = vmatmul.mubr.f32.gmra.mrb[0].mxu0 %v4859
        %v5084 = vpop.f32.mrb[0].mxu0
        %v5085 = vadd.f32 %v5010, %v5084
        %v5086 = vpop.f32.mrb[0].mxu0
        %5087 = vmatprep.mubr.f32.mxu0 0.0
        %5088 = vmatmul.mubr.f32.gmra.mrb[0].mxu0 %v4862
        %v5089 = vpop.f32.mrb[0].mxu0
        %v5090 = vadd.f32 %v5015, %v5089
        %v5091 = vpop.f32.mrb[0].mxu0
        %5092 = vdwg.mxu0
        %v5093 = vld [vmem:[%s9] sm:$0x1]
        %v5094 = vld [vmem:[%s8] sm:$0xff]
        %v5095 = vld [vmem:[%s8 + $0x8] sm:$0xff]
        %v5096 = vld [vmem:[%s8 + $0x10] sm:$0xff]
        %v5097 = vld [vmem:[%s8 + $0x18] sm:$0x1]
        %vm5098 = vcmask 203776
        %v5100 = vsel %vm5098, %v5085, 0
        %v5103 = vsel %vm4864, %v5097, 0
        %5105 = vmatprep.subr.mxu0 0.0
        %5106 = vmatpush1.msra.mxu0 %v5094
        %5107 = vmatprep.subr.mxu0 0.0
        %5108 = vmatpush1.msra.mxu0 %v5095
        %5109 = vmatprep.subr.mxu0 0.0
        %5110 = vmatpush1.msra.mxu0 %v5096
        %5111 = vmatprep.subr.mxu0 0.0
        %5112 = vmatpush1.msra.mxu0 %v5103
        %5113 = vmatprep.subr.mxu0 0.0
        %5114 = vmatpush1.msra.mxu0 0.0
        %5115 = vmatprep.subr.mxu0 0.0
        %5116 = vmatpush1.msra.mxu0 0.0
        %5117 = vmatprep.subr.mxu0 0.0
        %5118 = vmatpush1.msra.mxu0 0.0
        %5119 = vmatprep.subr.mxu0 0.0
        %5120 = vmatpush1.msra.mxu0 0.0
        %5121 = vmatprep.subr.mxu0 0.0
        %5122 = vmatpush1.msra.mxu0 0.0
        %5123 = vmatprep.subr.mxu0 0.0
        %5124 = vmatpush1.msra.mxu0 0.0
        %5125 = vmatprep.subr.mxu0 0.0
        %5126 = vmatpush1.msra.mxu0 0.0
        %5127 = vmatprep.subr.mxu0 0.0
        %5128 = vmatpush1.msra.mxu0 0.0
        %5129 = vmatprep.subr.mxu0 0.0
        %5130 = vmatpush1.msra.mxu0 0.0
        %5131 = vmatprep.subr.mxu0 0.0
        %5132 = vmatpush1.msra.mxu0 0.0
        %5133 = vmatprep.subr.mxu0 0.0
        %5134 = vmatpush1.msra.mxu0 0.0
        %5135 = vmatprep.subr.mxu0 0.0
        %5136 = vmatpush1.msra.mxu0 0.0
        %5137 = vmatprep.subr.mxu0 0.0
        %5138 = vmatpush1.msra.mxu0 0.0
        %5139 = vmatprep.subr.mxu0 0.0
        %5140 = vmatpush1.msra.mxu0 0.0
        %5141 = vmatprep.subr.mxu0 0.0
        %5142 = vmatpush1.msra.mxu0 0.0
        %5143 = vmatprep.subr.mxu0 0.0
        %5144 = vmatpush1.msra.mxu0 0.0
        %5145 = vmatprep.subr.mxu0 0.0
        %5146 = vmatpush1.msra.mxu0 0.0
        %5147 = vmatprep.subr.mxu0 0.0
        %5148 = vmatpush1.msra.mxu0 0.0
        %5149 = vmatprep.subr.mxu0 0.0
        %5150 = vmatpush1.msra.mxu0 0.0
        %5151 = vmatprep.subr.mxu0 0.0
        %5152 = vmatpush1.msra.mxu0 0.0
        %5153 = vmatprep.subr.mxu0 0.0
        %5154 = vmatpush1.msra.mxu0 0.0
        %5155 = vmatprep.subr.mxu0 0.0
        %5156 = vmatpush1.msra.mxu0 0.0
        %5157 = vmatprep.subr.mxu0 0.0
        %5158 = vmatpush1.msra.mxu0 0.0
        %5159 = vmatprep.subr.mxu0 0.0
        %5160 = vmatpush1.msra.mxu0 0.0
        %5161 = vmatprep.subr.mxu0 0.0
        %5162 = vmatpush1.msra.mxu0 0.0
        %5163 = vmatprep.subr.mxu0 0.0
        %5164 = vmatpush1.msra.mxu0 0.0
        %5165 = vmatprep.subr.mxu0 0.0
        %5166 = vmatpush1.msra.mxu0 0.0
        %5167 = vmatprep.subr.mxu0 0.0
        %5168 = vmatpush1.msra.mxu0 0.0
        %5169 = vmatprep.mubr.f32.mxu0 0.0
        %5170 = vmatmul.mubr.f32.gmra.mrb[0].mxu0 %v5100
        %v5171 = vpop.f32.mrb[0].mxu0
        %v5172 = vadd.f32 0.0, %v5171
        %v5173 = vpop.f32.mrb[0].mxu0
        %5174 = vdwg.mxu0
        %v5175 = vadd.f32 %v5093, %v5172
        %s5176 = scalar_lea.vmem %s8, 32
        %v5177 = vld [vmem:[%s5176] sm:$0xff]
        %v5178 = vld [vmem:[%s5176 + $0x8] sm:$0xff]
        %v5179 = vld [vmem:[%s5176 + $0x10] sm:$0xff]
        %v5180 = vld [vmem:[%s5176 + $0x18] sm:$0x1]
        %v5181 = vrot.slane %v5085, 1
        %v5182 = vsel %vm5098, %v5181, 0
        %v5185 = vsel %vm4864, %v5180, 0
        %5187 = vmatprep.subr.mxu0 0.0
        %5188 = vmatpush1.msra.mxu0 %v5177
        %5189 = vmatprep.subr.mxu0 0.0
        %5190 = vmatpush1.msra.mxu0 %v5178
        %5191 = vmatprep.subr.mxu0 0.0
        %5192 = vmatpush1.msra.mxu0 %v5179
        %5193 = vmatprep.subr.mxu0 0.0
        %5194 = vmatpush1.msra.mxu0 %v5185
        %5195 = vmatprep.subr.mxu0 0.0
        %5196 = vmatpush1.msra.mxu0 0.0
        %5197 = vmatprep.subr.mxu0 0.0
        %5198 = vmatpush1.msra.mxu0 0.0
        %5199 = vmatprep.subr.mxu0 0.0
        %5200 = vmatpush1.msra.mxu0 0.0
        %5201 = vmatprep.subr.mxu0 0.0
        %5202 = vmatpush1.msra.mxu0 0.0
        %5203 = vmatprep.subr.mxu0 0.0
        %5204 = vmatpush1.msra.mxu0 0.0
        %5205 = vmatprep.subr.mxu0 0.0
        %5206 = vmatpush1.msra.mxu0 0.0
        %5207 = vmatprep.subr.mxu0 0.0
        %5208 = vmatpush1.msra.mxu0 0.0
        %5209 = vmatprep.subr.mxu0 0.0
        %5210 = vmatpush1.msra.mxu0 0.0
        %5211 = vmatprep.subr.mxu0 0.0
        %5212 = vmatpush1.msra.mxu0 0.0
        %5213 = vmatprep.subr.mxu0 0.0
        %5214 = vmatpush1.msra.mxu0 0.0
        %5215 = vmatprep.subr.mxu0 0.0
        %5216 = vmatpush1.msra.mxu0 0.0
        %5217 = vmatprep.subr.mxu0 0.0
        %5218 = vmatpush1.msra.mxu0 0.0
        %5219 = vmatprep.subr.mxu0 0.0
        %5220 = vmatpush1.msra.mxu0 0.0
        %5221 = vmatprep.subr.mxu0 0.0
        %5222 = vmatpush1.msra.mxu0 0.0
        %5223 = vmatprep.subr.mxu0 0.0
        %5224 = vmatpush1.msra.mxu0 0.0
        %5225 = vmatprep.subr.mxu0 0.0
        %5226 = vmatpush1.msra.mxu0 0.0
        %5227 = vmatprep.subr.mxu0 0.0
        %5228 = vmatpush1.msra.mxu0 0.0
        %5229 = vmatprep.subr.mxu0 0.0
        %5230 = vmatpush1.msra.mxu0 0.0
        %5231 = vmatprep.subr.mxu0 0.0
        %5232 = vmatpush1.msra.mxu0 0.0
        %5233 = vmatprep.subr.mxu0 0.0
        %5234 = vmatpush1.msra.mxu0 0.0
        %5235 = vmatprep.subr.mxu0 0.0
        %5236 = vmatpush1.msra.mxu0 0.0
        %5237 = vmatprep.subr.mxu0 0.0
        %5238 = vmatpush1.msra.mxu0 0.0
        %5239 = vmatprep.subr.mxu0 0.0
        %5240 = vmatpush1.msra.mxu0 0.0
        %5241 = vmatprep.subr.mxu0 0.0
        %5242 = vmatpush1.msra.mxu0 0.0
        %5243 = vmatprep.subr.mxu0 0.0
        %5244 = vmatpush1.msra.mxu0 0.0
        %5245 = vmatprep.subr.mxu0 0.0
        %5246 = vmatpush1.msra.mxu0 0.0
        %5247 = vmatprep.subr.mxu0 0.0
        %5248 = vmatpush1.msra.mxu0 0.0
        %5249 = vmatprep.subr.mxu0 0.0
        %5250 = vmatpush1.msra.mxu0 0.0
        %5251 = vmatprep.mubr.f32.mxu0 0.0
        %5252 = vmatmul.mubr.f32.gmra.mrb[0].mxu0 %v5182
        %v5253 = vpop.f32.mrb[0].mxu0
        %v5254 = vadd.f32 0.0, %v5253
        %v5255 = vpop.f32.mrb[0].mxu0
        %5256 = vdwg.mxu0
        %v5257 = vadd.f32 %v5175, %v5254
        %s5258 = scalar_lea.vmem %s8, 64
        %v5259 = vld [vmem:[%s5258] sm:$0xff]
        %v5260 = vld [vmem:[%s5258 + $0x8] sm:$0xff]
        %v5261 = vld [vmem:[%s5258 + $0x10] sm:$0xff]
        %v5262 = vld [vmem:[%s5258 + $0x18] sm:$0x1]
        %v5263 = vrot.slane %v5085, 2
        %v5264 = vsel %vm5098, %v5263, 0
        %v5267 = vsel %vm4864, %v5262, 0
        %5269 = vmatprep.subr.mxu0 0.0
        %5270 = vmatpush1.msra.mxu0 %v5259
        %5271 = vmatprep.subr.mxu0 0.0
        %5272 = vmatpush1.msra.mxu0 %v5260
        %5273 = vmatprep.subr.mxu0 0.0
        %5274 = vmatpush1.msra.mxu0 %v5261
        %5275 = vmatprep.subr.mxu0 0.0
        %5276 = vmatpush1.msra.mxu0 %v5267
        %5277 = vmatprep.subr.mxu0 0.0
        %5278 = vmatpush1.msra.mxu0 0.0
        %5279 = vmatprep.subr.mxu0 0.0
        %5280 = vmatpush1.msra.mxu0 0.0
        %5281 = vmatprep.subr.mxu0 0.0
        %5282 = vmatpush1.msra.mxu0 0.0
        %5283 = vmatprep.subr.mxu0 0.0
        %5284 = vmatpush1.msra.mxu0 0.0
        %5285 = vmatprep.subr.mxu0 0.0
        %5286 = vmatpush1.msra.mxu0 0.0
        %5287 = vmatprep.subr.mxu0 0.0
        %5288 = vmatpush1.msra.mxu0 0.0
        %5289 = vmatprep.subr.mxu0 0.0
        %5290 = vmatpush1.msra.mxu0 0.0
        %5291 = vmatprep.subr.mxu0 0.0
        %5292 = vmatpush1.msra.mxu0 0.0
        %5293 = vmatprep.subr.mxu0 0.0
        %5294 = vmatpush1.msra.mxu0 0.0
        %5295 = vmatprep.subr.mxu0 0.0
        %5296 = vmatpush1.msra.mxu0 0.0
        %5297 = vmatprep.subr.mxu0 0.0
        %5298 = vmatpush1.msra.mxu0 0.0
        %5299 = vmatprep.subr.mxu0 0.0
        %5300 = vmatpush1.msra.mxu0 0.0
        %5301 = vmatprep.subr.mxu0 0.0
        %5302 = vmatpush1.msra.mxu0 0.0
        %5303 = vmatprep.subr.mxu0 0.0
        %5304 = vmatpush1.msra.mxu0 0.0
        %5305 = vmatprep.subr.mxu0 0.0
        %5306 = vmatpush1.msra.mxu0 0.0
        %5307 = vmatprep.subr.mxu0 0.0
        %5308 = vmatpush1.msra.mxu0 0.0
        %5309 = vmatprep.subr.mxu0 0.0
        %5310 = vmatpush1.msra.mxu0 0.0
        %5311 = vmatprep.subr.mxu0 0.0
        %5312 = vmatpush1.msra.mxu0 0.0
        %5313 = vmatprep.subr.mxu0 0.0
        %5314 = vmatpush1.msra.mxu0 0.0
        %5315 = vmatprep.subr.mxu0 0.0
        %5316 = vmatpush1.msra.mxu0 0.0
        %5317 = vmatprep.subr.mxu0 0.0
        %5318 = vmatpush1.msra.mxu0 0.0
        %5319 = vmatprep.subr.mxu0 0.0
        %5320 = vmatpush1.msra.mxu0 0.0
        %5321 = vmatprep.subr.mxu0 0.0
        %5322 = vmatpush1.msra.mxu0 0.0
        %5323 = vmatprep.subr.mxu0 0.0
        %5324 = vmatpush1.msra.mxu0 0.0
        %5325 = vmatprep.subr.mxu0 0.0
        %5326 = vmatpush1.msra.mxu0 0.0
        %5327 = vmatprep.subr.mxu0 0.0
        %5328 = vmatpush1.msra.mxu0 0.0
        %5329 = vmatprep.subr.mxu0 0.0
        %5330 = vmatpush1.msra.mxu0 0.0
        %5331 = vmatprep.subr.mxu0 0.0
        %5332 = vmatpush1.msra.mxu0 0.0
        %5333 = vmatprep.mubr.f32.mxu0 0.0
        %5334 = vmatmul.mubr.f32.gmra.mrb[0].mxu0 %v5264
        %v5335 = vpop.f32.mrb[0].mxu0
        %v5336 = vadd.f32 0.0, %v5335
        %v5337 = vpop.f32.mrb[0].mxu0
        %5338 = vdwg.mxu0
        %v5339 = vadd.f32 %v5257, %v5336
        %s5340 = scalar_lea.vmem %s8, 96
        %v5341 = vld [vmem:[%s5340] sm:$0xff]
        %v5342 = vld [vmem:[%s5340 + $0x8] sm:$0xff]
        %v5343 = vld [vmem:[%s5340 + $0x10] sm:$0xff]
        %v5344 = vld [vmem:[%s5340 + $0x18] sm:$0x1]
        %v5345 = vrot.slane %v5085, 3
        %v5346 = vsel %vm5098, %v5345, 0
        %v5349 = vsel %vm4864, %v5344, 0
        %5351 = vmatprep.subr.mxu0 0.0
        %5352 = vmatpush1.msra.mxu0 %v5341
        %5353 = vmatprep.subr.mxu0 0.0
        %5354 = vmatpush1.msra.mxu0 %v5342
        %5355 = vmatprep.subr.mxu0 0.0
        %5356 = vmatpush1.msra.mxu0 %v5343
        %5357 = vmatprep.subr.mxu0 0.0
        %5358 = vmatpush1.msra.mxu0 %v5349
        %5359 = vmatprep.subr.mxu0 0.0
        %5360 = vmatpush1.msra.mxu0 0.0
        %5361 = vmatprep.subr.mxu0 0.0
        %5362 = vmatpush1.msra.mxu0 0.0
        %5363 = vmatprep.subr.mxu0 0.0
        %5364 = vmatpush1.msra.mxu0 0.0
        %5365 = vmatprep.subr.mxu0 0.0
        %5366 = vmatpush1.msra.mxu0 0.0
        %5367 = vmatprep.subr.mxu0 0.0
        %5368 = vmatpush1.msra.mxu0 0.0
        %5369 = vmatprep.subr.mxu0 0.0
        %5370 = vmatpush1.msra.mxu0 0.0
        %5371 = vmatprep.subr.mxu0 0.0
        %5372 = vmatpush1.msra.mxu0 0.0
        %5373 = vmatprep.subr.mxu0 0.0
        %5374 = vmatpush1.msra.mxu0 0.0
        %5375 = vmatprep.subr.mxu0 0.0
        %5376 = vmatpush1.msra.mxu0 0.0
        %5377 = vmatprep.subr.mxu0 0.0
        %5378 = vmatpush1.msra.mxu0 0.0
        %5379 = vmatprep.subr.mxu0 0.0
        %5380 = vmatpush1.msra.mxu0 0.0
        %5381 = vmatprep.subr.mxu0 0.0
        %5382 = vmatpush1.msra.mxu0 0.0
        %5383 = vmatprep.subr.mxu0 0.0
        %5384 = vmatpush1.msra.mxu0 0.0
        %5385 = vmatprep.subr.mxu0 0.0
        %5386 = vmatpush1.msra.mxu0 0.0
        %5387 = vmatprep.subr.mxu0 0.0
        %5388 = vmatpush1.msra.mxu0 0.0
        %5389 = vmatprep.subr.mxu0 0.0
        %5390 = vmatpush1.msra.mxu0 0.0
        %5391 = vmatprep.subr.mxu0 0.0
        %5392 = vmatpush1.msra.mxu0 0.0
        %5393 = vmatprep.subr.mxu0 0.0
        %5394 = vmatpush1.msra.mxu0 0.0
        %5395 = vmatprep.subr.mxu0 0.0
        %5396 = vmatpush1.msra.mxu0 0.0
        %5397 = vmatprep.subr.mxu0 0.0
        %5398 = vmatpush1.msra.mxu0 0.0
        %5399 = vmatprep.subr.mxu0 0.0
        %5400 = vmatpush1.msra.mxu0 0.0
        %5401 = vmatprep.subr.mxu0 0.0
        %5402 = vmatpush1.msra.mxu0 0.0
        %5403 = vmatprep.subr.mxu0 0.0
        %5404 = vmatpush1.msra.mxu0 0.0
        %5405 = vmatprep.subr.mxu0 0.0
        %5406 = vmatpush1.msra.mxu0 0.0
        %5407 = vmatprep.subr.mxu0 0.0
        %5408 = vmatpush1.msra.mxu0 0.0
        %5409 = vmatprep.subr.mxu0 0.0
        %5410 = vmatpush1.msra.mxu0 0.0
        %5411 = vmatprep.subr.mxu0 0.0
        %5412 = vmatpush1.msra.mxu0 0.0
        %5413 = vmatprep.subr.mxu0 0.0
        %5414 = vmatpush1.msra.mxu0 0.0
        %5415 = vmatprep.mubr.f32.mxu0 0.0
        %5416 = vmatmul.mubr.f32.gmra.mrb[0].mxu0 %v5346
        %v5417 = vpop.f32.mrb[0].mxu0
        %v5418 = vadd.f32 0.0, %v5417
        %v5419 = vpop.f32.mrb[0].mxu0
        %5420 = vdwg.mxu0
        %v5421 = vadd.f32 %v5339, %v5418
        %s5422 = scalar_lea.vmem %s8, 128
        %v5423 = vld [vmem:[%s5422] sm:$0xff]
        %v5424 = vld [vmem:[%s5422 + $0x8] sm:$0xff]
        %v5425 = vld [vmem:[%s5422 + $0x10] sm:$0xff]
        %v5426 = vld [vmem:[%s5422 + $0x18] sm:$0x1]
        %v5427 = vrot.slane %v5085, 4
        %v5428 = vsel %vm5098, %v5427, 0
        %v5431 = vsel %vm4864, %v5426, 0
        %5433 = vmatprep.subr.mxu0 0.0
        %5434 = vmatpush1.msra.mxu0 %v5423
        %5435 = vmatprep.subr.mxu0 0.0
        %5436 = vmatpush1.msra.mxu0 %v5424
        %5437 = vmatprep.subr.mxu0 0.0
        %5438 = vmatpush1.msra.mxu0 %v5425
        %5439 = vmatprep.subr.mxu0 0.0
        %5440 = vmatpush1.msra.mxu0 %v5431
        %5441 = vmatprep.subr.mxu0 0.0
        %5442 = vmatpush1.msra.mxu0 0.0
        %5443 = vmatprep.subr.mxu0 0.0
        %5444 = vmatpush1.msra.mxu0 0.0
        %5445 = vmatprep.subr.mxu0 0.0
        %5446 = vmatpush1.msra.mxu0 0.0
        %5447 = vmatprep.subr.mxu0 0.0
        %5448 = vmatpush1.msra.mxu0 0.0
        %5449 = vmatprep.subr.mxu0 0.0
        %5450 = vmatpush1.msra.mxu0 0.0
        %5451 = vmatprep.subr.mxu0 0.0
        %5452 = vmatpush1.msra.mxu0 0.0
        %5453 = vmatprep.subr.mxu0 0.0
        %5454 = vmatpush1.msra.mxu0 0.0
        %5455 = vmatprep.subr.mxu0 0.0
        %5456 = vmatpush1.msra.mxu0 0.0
        %5457 = vmatprep.subr.mxu0 0.0
        %5458 = vmatpush1.msra.mxu0 0.0
        %5459 = vmatprep.subr.mxu0 0.0
        %5460 = vmatpush1.msra.mxu0 0.0
        %5461 = vmatprep.subr.mxu0 0.0
        %5462 = vmatpush1.msra.mxu0 0.0
        %5463 = vmatprep.subr.mxu0 0.0
        %5464 = vmatpush1.msra.mxu0 0.0
        %5465 = vmatprep.subr.mxu0 0.0
        %5466 = vmatpush1.msra.mxu0 0.0
        %5467 = vmatprep.subr.mxu0 0.0
        %5468 = vmatpush1.msra.mxu0 0.0
        %5469 = vmatprep.subr.mxu0 0.0
        %5470 = vmatpush1.msra.mxu0 0.0
        %5471 = vmatprep.subr.mxu0 0.0
        %5472 = vmatpush1.msra.mxu0 0.0
        %5473 = vmatprep.subr.mxu0 0.0
        %5474 = vmatpush1.msra.mxu0 0.0
        %5475 = vmatprep.subr.mxu0 0.0
        %5476 = vmatpush1.msra.mxu0 0.0
        %5477 = vmatprep.subr.mxu0 0.0
        %5478 = vmatpush1.msra.mxu0 0.0
        %5479 = vmatprep.subr.mxu0 0.0
        %5480 = vmatpush1.msra.mxu0 0.0
        %5481 = vmatprep.subr.mxu0 0.0
        %5482 = vmatpush1.msra.mxu0 0.0
        %5483 = vmatprep.subr.mxu0 0.0
        %5484 = vmatpush1.msra.mxu0 0.0
        %5485 = vmatprep.subr.mxu0 0.0
        %5486 = vmatpush1.msra.mxu0 0.0
        %5487 = vmatprep.subr.mxu0 0.0
        %5488 = vmatpush1.msra.mxu0 0.0
        %5489 = vmatprep.subr.mxu0 0.0
        %5490 = vmatpush1.msra.mxu0 0.0
        %5491 = vmatprep.subr.mxu0 0.0
        %5492 = vmatpush1.msra.mxu0 0.0
        %5493 = vmatprep.subr.mxu0 0.0
        %5494 = vmatpush1.msra.mxu0 0.0
        %5495 = vmatprep.subr.mxu0 0.0
        %5496 = vmatpush1.msra.mxu0 0.0
        %5497 = vmatprep.mubr.f32.mxu0 0.0
        %5498 = vmatmul.mubr.f32.gmra.mrb[0].mxu0 %v5428
        %v5499 = vpop.f32.mrb[0].mxu0
        %v5500 = vadd.f32 0.0, %v5499
        %v5501 = vpop.f32.mrb[0].mxu0
        %5502 = vdwg.mxu0
        %v5503 = vadd.f32 %v5421, %v5500
        %s5504 = scalar_lea.vmem %s8, 160
        %v5505 = vld [vmem:[%s5504] sm:$0xff]
        %v5506 = vld [vmem:[%s5504 + $0x8] sm:$0xff]
        %v5507 = vld [vmem:[%s5504 + $0x10] sm:$0xff]
        %v5508 = vld [vmem:[%s5504 + $0x18] sm:$0x1]
        %v5509 = vrot.slane %v5085, 5
        %v5510 = vsel %vm5098, %v5509, 0
        %v5513 = vsel %vm4864, %v5508, 0
        %5515 = vmatprep.subr.mxu0 0.0
        %5516 = vmatpush1.msra.mxu0 %v5505
        %5517 = vmatprep.subr.mxu0 0.0
        %5518 = vmatpush1.msra.mxu0 %v5506
        %5519 = vmatprep.subr.mxu0 0.0
        %5520 = vmatpush1.msra.mxu0 %v5507
        %5521 = vmatprep.subr.mxu0 0.0
        %5522 = vmatpush1.msra.mxu0 %v5513
        %5523 = vmatprep.subr.mxu0 0.0
        %5524 = vmatpush1.msra.mxu0 0.0
        %5525 = vmatprep.subr.mxu0 0.0
        %5526 = vmatpush1.msra.mxu0 0.0
        %5527 = vmatprep.subr.mxu0 0.0
        %5528 = vmatpush1.msra.mxu0 0.0
        %5529 = vmatprep.subr.mxu0 0.0
        %5530 = vmatpush1.msra.mxu0 0.0
        %5531 = vmatprep.subr.mxu0 0.0
        %5532 = vmatpush1.msra.mxu0 0.0
        %5533 = vmatprep.subr.mxu0 0.0
        %5534 = vmatpush1.msra.mxu0 0.0
        %5535 = vmatprep.subr.mxu0 0.0
        %5536 = vmatpush1.msra.mxu0 0.0
        %5537 = vmatprep.subr.mxu0 0.0
        %5538 = vmatpush1.msra.mxu0 0.0
        %5539 = vmatprep.subr.mxu0 0.0
        %5540 = vmatpush1.msra.mxu0 0.0
        %5541 = vmatprep.subr.mxu0 0.0
        %5542 = vmatpush1.msra.mxu0 0.0
        %5543 = vmatprep.subr.mxu0 0.0
        %5544 = vmatpush1.msra.mxu0 0.0
        %5545 = vmatprep.subr.mxu0 0.0
        %5546 = vmatpush1.msra.mxu0 0.0
        %5547 = vmatprep.subr.mxu0 0.0
        %5548 = vmatpush1.msra.mxu0 0.0
        %5549 = vmatprep.subr.mxu0 0.0
        %5550 = vmatpush1.msra.mxu0 0.0
        %5551 = vmatprep.subr.mxu0 0.0
        %5552 = vmatpush1.msra.mxu0 0.0
        %5553 = vmatprep.subr.mxu0 0.0
        %5554 = vmatpush1.msra.mxu0 0.0
        %5555 = vmatprep.subr.mxu0 0.0
        %5556 = vmatpush1.msra.mxu0 0.0
        %5557 = vmatprep.subr.mxu0 0.0
        %5558 = vmatpush1.msra.mxu0 0.0
        %5559 = vmatprep.subr.mxu0 0.0
        %5560 = vmatpush1.msra.mxu0 0.0
        %5561 = vmatprep.subr.mxu0 0.0
        %5562 = vmatpush1.msra.mxu0 0.0
        %5563 = vmatprep.subr.mxu0 0.0
        %5564 = vmatpush1.msra.mxu0 0.0
        %5565 = vmatprep.subr.mxu0 0.0
        %5566 = vmatpush1.msra.mxu0 0.0
        %5567 = vmatprep.subr.mxu0 0.0
        %5568 = vmatpush1.msra.mxu0 0.0
        %5569 = vmatprep.subr.mxu0 0.0
        %5570 = vmatpush1.msra.mxu0 0.0
        %5571 = vmatprep.subr.mxu0 0.0
        %5572 = vmatpush1.msra.mxu0 0.0
        %5573 = vmatprep.subr.mxu0 0.0
        %5574 = vmatpush1.msra.mxu0 0.0
        %5575 = vmatprep.subr.mxu0 0.0
        %5576 = vmatpush1.msra.mxu0 0.0
        %5577 = vmatprep.subr.mxu0 0.0
        %5578 = vmatpush1.msra.mxu0 0.0
        %5579 = vmatprep.mubr.f32.mxu0 0.0
        %5580 = vmatmul.mubr.f32.gmra.mrb[0].mxu0 %v5510
        %v5581 = vpop.f32.mrb[0].mxu0
        %v5582 = vadd.f32 0.0, %v5581
        %v5583 = vpop.f32.mrb[0].mxu0
        %5584 = vdwg.mxu0
        %v5585 = vadd.f32 %v5503, %v5582
        %s5586 = scalar_lea.vmem %s8, 192
        %v5587 = vld [vmem:[%s5586] sm:$0xff]
        %v5588 = vld [vmem:[%s5586 + $0x8] sm:$0xff]
        %v5589 = vld [vmem:[%s5586 + $0x10] sm:$0xff]
        %v5590 = vld [vmem:[%s5586 + $0x18] sm:$0x1]
        %v5591 = vrot.slane %v5085, 6
        %v5592 = vsel %vm5098, %v5591, 0
        %v5595 = vsel %vm4864, %v5590, 0
        %5597 = vmatprep.subr.mxu0 0.0
        %5598 = vmatpush1.msra.mxu0 %v5587
        %5599 = vmatprep.subr.mxu0 0.0
        %5600 = vmatpush1.msra.mxu0 %v5588
        %5601 = vmatprep.subr.mxu0 0.0
        %5602 = vmatpush1.msra.mxu0 %v5589
        %5603 = vmatprep.subr.mxu0 0.0
        %5604 = vmatpush1.msra.mxu0 %v5595
        %5605 = vmatprep.subr.mxu0 0.0
        %5606 = vmatpush1.msra.mxu0 0.0
        %5607 = vmatprep.subr.mxu0 0.0
        %5608 = vmatpush1.msra.mxu0 0.0
        %5609 = vmatprep.subr.mxu0 0.0
        %5610 = vmatpush1.msra.mxu0 0.0
        %5611 = vmatprep.subr.mxu0 0.0
        %5612 = vmatpush1.msra.mxu0 0.0
        %5613 = vmatprep.subr.mxu0 0.0
        %5614 = vmatpush1.msra.mxu0 0.0
        %5615 = vmatprep.subr.mxu0 0.0
        %5616 = vmatpush1.msra.mxu0 0.0
        %5617 = vmatprep.subr.mxu0 0.0
        %5618 = vmatpush1.msra.mxu0 0.0
        %5619 = vmatprep.subr.mxu0 0.0
        %5620 = vmatpush1.msra.mxu0 0.0
        %5621 = vmatprep.subr.mxu0 0.0
        %5622 = vmatpush1.msra.mxu0 0.0
        %5623 = vmatprep.subr.mxu0 0.0
        %5624 = vmatpush1.msra.mxu0 0.0
        %5625 = vmatprep.subr.mxu0 0.0
        %5626 = vmatpush1.msra.mxu0 0.0
        %5627 = vmatprep.subr.mxu0 0.0
        %5628 = vmatpush1.msra.mxu0 0.0
        %5629 = vmatprep.subr.mxu0 0.0
        %5630 = vmatpush1.msra.mxu0 0.0
        %5631 = vmatprep.subr.mxu0 0.0
        %5632 = vmatpush1.msra.mxu0 0.0
        %5633 = vmatprep.subr.mxu0 0.0
        %5634 = vmatpush1.msra.mxu0 0.0
        %5635 = vmatprep.subr.mxu0 0.0
        %5636 = vmatpush1.msra.mxu0 0.0
        %5637 = vmatprep.subr.mxu0 0.0
        %5638 = vmatpush1.msra.mxu0 0.0
        %5639 = vmatprep.subr.mxu0 0.0
        %5640 = vmatpush1.msra.mxu0 0.0
        %5641 = vmatprep.subr.mxu0 0.0
        %5642 = vmatpush1.msra.mxu0 0.0
        %5643 = vmatprep.subr.mxu0 0.0
        %5644 = vmatpush1.msra.mxu0 0.0
        %5645 = vmatprep.subr.mxu0 0.0
        %5646 = vmatpush1.msra.mxu0 0.0
        %5647 = vmatprep.subr.mxu0 0.0
        %5648 = vmatpush1.msra.mxu0 0.0
        %5649 = vmatprep.subr.mxu0 0.0
        %5650 = vmatpush1.msra.mxu0 0.0
        %5651 = vmatprep.subr.mxu0 0.0
        %5652 = vmatpush1.msra.mxu0 0.0
        %5653 = vmatprep.subr.mxu0 0.0
        %5654 = vmatpush1.msra.mxu0 0.0
        %5655 = vmatprep.subr.mxu0 0.0
        %5656 = vmatpush1.msra.mxu0 0.0
        %5657 = vmatprep.subr.mxu0 0.0
        %5658 = vmatpush1.msra.mxu0 0.0
        %5659 = vmatprep.subr.mxu0 0.0
        %5660 = vmatpush1.msra.mxu0 0.0
        %5661 = vmatprep.mubr.f32.mxu0 0.0
        %5662 = vmatmul.mubr.f32.gmra.mrb[0].mxu0 %v5592
        %v5663 = vpop.f32.mrb[0].mxu0
        %v5664 = vadd.f32 0.0, %v5663
        %v5665 = vpop.f32.mrb[0].mxu0
        %5666 = vdwg.mxu0
        %v5667 = vadd.f32 %v5585, %v5664
        %s5668 = scalar_lea.vmem %s8, 224
        %v5669 = vld [vmem:[%s5668] sm:$0xff]
        %v5670 = vld [vmem:[%s5668 + $0x8] sm:$0xff]
        %v5671 = vld [vmem:[%s5668 + $0x10] sm:$0xff]
        %v5672 = vld [vmem:[%s5668 + $0x18] sm:$0x1]
        %v5673 = vrot.slane %v5085, 7
        %v5674 = vsel %vm5098, %v5673, 0
        %v5677 = vsel %vm4864, %v5672, 0
        %5679 = vmatprep.subr.mxu0 0.0
        %5680 = vmatpush1.msra.mxu0 %v5669
        %5681 = vmatprep.subr.mxu0 0.0
        %5682 = vmatpush1.msra.mxu0 %v5670
        %5683 = vmatprep.subr.mxu0 0.0
        %5684 = vmatpush1.msra.mxu0 %v5671
        %5685 = vmatprep.subr.mxu0 0.0
        %5686 = vmatpush1.msra.mxu0 %v5677
        %5687 = vmatprep.subr.mxu0 0.0
        %5688 = vmatpush1.msra.mxu0 0.0
        %5689 = vmatprep.subr.mxu0 0.0
        %5690 = vmatpush1.msra.mxu0 0.0
        %5691 = vmatprep.subr.mxu0 0.0
        %5692 = vmatpush1.msra.mxu0 0.0
        %5693 = vmatprep.subr.mxu0 0.0
        %5694 = vmatpush1.msra.mxu0 0.0
        %5695 = vmatprep.subr.mxu0 0.0
        %5696 = vmatpush1.msra.mxu0 0.0
        %5697 = vmatprep.subr.mxu0 0.0
        %5698 = vmatpush1.msra.mxu0 0.0
        %5699 = vmatprep.subr.mxu0 0.0
        %5700 = vmatpush1.msra.mxu0 0.0
        %5701 = vmatprep.subr.mxu0 0.0
        %5702 = vmatpush1.msra.mxu0 0.0
        %5703 = vmatprep.subr.mxu0 0.0
        %5704 = vmatpush1.msra.mxu0 0.0
        %5705 = vmatprep.subr.mxu0 0.0
        %5706 = vmatpush1.msra.mxu0 0.0
        %5707 = vmatprep.subr.mxu0 0.0
        %5708 = vmatpush1.msra.mxu0 0.0
        %5709 = vmatprep.subr.mxu0 0.0
        %5710 = vmatpush1.msra.mxu0 0.0
        %5711 = vmatprep.subr.mxu0 0.0
        %5712 = vmatpush1.msra.mxu0 0.0
        %5713 = vmatprep.subr.mxu0 0.0
        %5714 = vmatpush1.msra.mxu0 0.0
        %5715 = vmatprep.subr.mxu0 0.0
        %5716 = vmatpush1.msra.mxu0 0.0
        %5717 = vmatprep.subr.mxu0 0.0
        %5718 = vmatpush1.msra.mxu0 0.0
        %5719 = vmatprep.subr.mxu0 0.0
        %5720 = vmatpush1.msra.mxu0 0.0
        %5721 = vmatprep.subr.mxu0 0.0
        %5722 = vmatpush1.msra.mxu0 0.0
        %5723 = vmatprep.subr.mxu0 0.0
        %5724 = vmatpush1.msra.mxu0 0.0
        %5725 = vmatprep.subr.mxu0 0.0
        %5726 = vmatpush1.msra.mxu0 0.0
        %5727 = vmatprep.subr.mxu0 0.0
        %5728 = vmatpush1.msra.mxu0 0.0
        %5729 = vmatprep.subr.mxu0 0.0
        %5730 = vmatpush1.msra.mxu0 0.0
        %5731 = vmatprep.subr.mxu0 0.0
        %5732 = vmatpush1.msra.mxu0 0.0
        %5733 = vmatprep.subr.mxu0 0.0
        %5734 = vmatpush1.msra.mxu0 0.0
        %5735 = vmatprep.subr.mxu0 0.0
        %5736 = vmatpush1.msra.mxu0 0.0
        %5737 = vmatprep.subr.mxu0 0.0
        %5738 = vmatpush1.msra.mxu0 0.0
        %5739 = vmatprep.subr.mxu0 0.0
        %5740 = vmatpush1.msra.mxu0 0.0
        %5741 = vmatprep.subr.mxu0 0.0
        %5742 = vmatpush1.msra.mxu0 0.0
        %5743 = vmatprep.mubr.f32.mxu0 0.0
        %5744 = vmatmul.mubr.f32.gmra.mrb[0].mxu0 %v5674
        %v5745 = vpop.f32.mrb[0].mxu0
        %v5746 = vadd.f32 0.0, %v5745
        %v5747 = vpop.f32.mrb[0].mxu0
        %5748 = vdwg.mxu0
        %v5749 = vadd.f32 %v5667, %v5746
        %s5750 = scalar_lea.vmem %s8, 256
        %v5751 = vld [vmem:[%s5750] sm:$0xff]
        %v5752 = vld [vmem:[%s5750 + $0x8] sm:$0xff]
        %v5753 = vld [vmem:[%s5750 + $0x10] sm:$0xff]
        %v5754 = vld [vmem:[%s5750 + $0x18] sm:$0x1]
        %v5756 = vsel %vm5098, %v5090, 0
        %v5759 = vsel %vm4864, %v5754, 0
        %5761 = vmatprep.subr.mxu0 0.0
        %5762 = vmatpush1.msra.mxu0 %v5751
        %5763 = vmatprep.subr.mxu0 0.0
        %5764 = vmatpush1.msra.mxu0 %v5752
        %5765 = vmatprep.subr.mxu0 0.0
        %5766 = vmatpush1.msra.mxu0 %v5753
        %5767 = vmatprep.subr.mxu0 0.0
        %5768 = vmatpush1.msra.mxu0 %v5759
        %5769 = vmatprep.subr.mxu0 0.0
        %5770 = vmatpush1.msra.mxu0 0.0
        %5771 = vmatprep.subr.mxu0 0.0
        %5772 = vmatpush1.msra.mxu0 0.0
        %5773 = vmatprep.subr.mxu0 0.0
        %5774 = vmatpush1.msra.mxu0 0.0
        %5775 = vmatprep.subr.mxu0 0.0
        %5776 = vmatpush1.msra.mxu0 0.0
        %5777 = vmatprep.subr.mxu0 0.0
        %5778 = vmatpush1.msra.mxu0 0.0
        %5779 = vmatprep.subr.mxu0 0.0
        %5780 = vmatpush1.msra.mxu0 0.0
        %5781 = vmatprep.subr.mxu0 0.0
        %5782 = vmatpush1.msra.mxu0 0.0
        %5783 = vmatprep.subr.mxu0 0.0
        %5784 = vmatpush1.msra.mxu0 0.0
        %5785 = vmatprep.subr.mxu0 0.0
        %5786 = vmatpush1.msra.mxu0 0.0
        %5787 = vmatprep.subr.mxu0 0.0
        %5788 = vmatpush1.msra.mxu0 0.0
        %5789 = vmatprep.subr.mxu0 0.0
        %5790 = vmatpush1.msra.mxu0 0.0
        %5791 = vmatprep.subr.mxu0 0.0
        %5792 = vmatpush1.msra.mxu0 0.0
        %5793 = vmatprep.subr.mxu0 0.0
        %5794 = vmatpush1.msra.mxu0 0.0
        %5795 = vmatprep.subr.mxu0 0.0
        %5796 = vmatpush1.msra.mxu0 0.0
        %5797 = vmatprep.subr.mxu0 0.0
        %5798 = vmatpush1.msra.mxu0 0.0
        %5799 = vmatprep.subr.mxu0 0.0
        %5800 = vmatpush1.msra.mxu0 0.0
        %5801 = vmatprep.subr.mxu0 0.0
        %5802 = vmatpush1.msra.mxu0 0.0
        %5803 = vmatprep.subr.mxu0 0.0
        %5804 = vmatpush1.msra.mxu0 0.0
        %5805 = vmatprep.subr.mxu0 0.0
        %5806 = vmatpush1.msra.mxu0 0.0
        %5807 = vmatprep.subr.mxu0 0.0
        %5808 = vmatpush1.msra.mxu0 0.0
        %5809 = vmatprep.subr.mxu0 0.0
        %5810 = vmatpush1.msra.mxu0 0.0
        %5811 = vmatprep.subr.mxu0 0.0
        %5812 = vmatpush1.msra.mxu0 0.0
        %5813 = vmatprep.subr.mxu0 0.0
        %5814 = vmatpush1.msra.mxu0 0.0
        %5815 = vmatprep.subr.mxu0 0.0
        %5816 = vmatpush1.msra.mxu0 0.0
        %5817 = vmatprep.subr.mxu0 0.0
        %5818 = vmatpush1.msra.mxu0 0.0
        %5819 = vmatprep.subr.mxu0 0.0
        %5820 = vmatpush1.msra.mxu0 0.0
        %5821 = vmatprep.subr.mxu0 0.0
        %5822 = vmatpush1.msra.mxu0 0.0
        %5823 = vmatprep.subr.mxu0 0.0
        %5824 = vmatpush1.msra.mxu0 0.0
        %5825 = vmatprep.mubr.f32.mxu0 0.0
        %5826 = vmatmul.mubr.f32.gmra.mrb[0].mxu0 %v5756
        %v5827 = vpop.f32.mrb[0].mxu0
        %v5828 = vadd.f32 0.0, %v5827
        %v5829 = vpop.f32.mrb[0].mxu0
        %5830 = vdwg.mxu0
        %v5831 = vadd.f32 %v5749, %v5828
        %s5832 = scalar_lea.vmem %s8, 288
        %v5833 = vld [vmem:[%s5832] sm:$0xff]
        %v5834 = vld [vmem:[%s5832 + $0x8] sm:$0xff]
        %v5835 = vld [vmem:[%s5832 + $0x10] sm:$0xff]
        %v5836 = vld [vmem:[%s5832 + $0x18] sm:$0x1]
        %v5837 = vrot.slane %v5090, 1
        %v5838 = vsel %vm5098, %v5837, 0
        %v5841 = vsel %vm4864, %v5836, 0
        %5843 = vmatprep.subr.mxu0 0.0
        %5844 = vmatpush1.msra.mxu0 %v5833
        %5845 = vmatprep.subr.mxu0 0.0
        %5846 = vmatpush1.msra.mxu0 %v5834
        %5847 = vmatprep.subr.mxu0 0.0
        %5848 = vmatpush1.msra.mxu0 %v5835
        %5849 = vmatprep.subr.mxu0 0.0
        %5850 = vmatpush1.msra.mxu0 %v5841
        %5851 = vmatprep.subr.mxu0 0.0
        %5852 = vmatpush1.msra.mxu0 0.0
        %5853 = vmatprep.subr.mxu0 0.0
        %5854 = vmatpush1.msra.mxu0 0.0
        %5855 = vmatprep.subr.mxu0 0.0
        %5856 = vmatpush1.msra.mxu0 0.0
        %5857 = vmatprep.subr.mxu0 0.0
        %5858 = vmatpush1.msra.mxu0 0.0
        %5859 = vmatprep.subr.mxu0 0.0
        %5860 = vmatpush1.msra.mxu0 0.0
        %5861 = vmatprep.subr.mxu0 0.0
        %5862 = vmatpush1.msra.mxu0 0.0
        %5863 = vmatprep.subr.mxu0 0.0
        %5864 = vmatpush1.msra.mxu0 0.0
        %5865 = vmatprep.subr.mxu0 0.0
        %5866 = vmatpush1.msra.mxu0 0.0
        %5867 = vmatprep.subr.mxu0 0.0
        %5868 = vmatpush1.msra.mxu0 0.0
        %5869 = vmatprep.subr.mxu0 0.0
        %5870 = vmatpush1.msra.mxu0 0.0
        %5871 = vmatprep.subr.mxu0 0.0
        %5872 = vmatpush1.msra.mxu0 0.0
        %5873 = vmatprep.subr.mxu0 0.0
        %5874 = vmatpush1.msra.mxu0 0.0
        %5875 = vmatprep.subr.mxu0 0.0
        %5876 = vmatpush1.msra.mxu0 0.0
        %5877 = vmatprep.subr.mxu0 0.0
        %5878 = vmatpush1.msra.mxu0 0.0
        %5879 = vmatprep.subr.mxu0 0.0
        %5880 = vmatpush1.msra.mxu0 0.0
        %5881 = vmatprep.subr.mxu0 0.0
        %5882 = vmatpush1.msra.mxu0 0.0
        %5883 = vmatprep.subr.mxu0 0.0
        %5884 = vmatpush1.msra.mxu0 0.0
        %5885 = vmatprep.subr.mxu0 0.0
        %5886 = vmatpush1.msra.mxu0 0.0
        %5887 = vmatprep.subr.mxu0 0.0
        %5888 = vmatpush1.msra.mxu0 0.0
        %5889 = vmatprep.subr.mxu0 0.0
        %5890 = vmatpush1.msra.mxu0 0.0
        %5891 = vmatprep.subr.mxu0 0.0
        %5892 = vmatpush1.msra.mxu0 0.0
        %5893 = vmatprep.subr.mxu0 0.0
        %5894 = vmatpush1.msra.mxu0 0.0
        %5895 = vmatprep.subr.mxu0 0.0
        %5896 = vmatpush1.msra.mxu0 0.0
        %5897 = vmatprep.subr.mxu0 0.0
        %5898 = vmatpush1.msra.mxu0 0.0
        %5899 = vmatprep.subr.mxu0 0.0
        %5900 = vmatpush1.msra.mxu0 0.0
        %5901 = vmatprep.subr.mxu0 0.0
        %5902 = vmatpush1.msra.mxu0 0.0
        %5903 = vmatprep.subr.mxu0 0.0
        %5904 = vmatpush1.msra.mxu0 0.0
        %5905 = vmatprep.subr.mxu0 0.0
        %5906 = vmatpush1.msra.mxu0 0.0
        %5907 = vmatprep.mubr.f32.mxu0 0.0
        %5908 = vmatmul.mubr.f32.gmra.mrb[0].mxu0 %v5838
        %v5909 = vpop.f32.mrb[0].mxu0
        %v5910 = vadd.f32 0.0, %v5909
        %v5911 = vpop.f32.mrb[0].mxu0
        %5912 = vdwg.mxu0
        %v5913 = vadd.f32 %v5831, %v5910
        %s5914 = scalar_lea.vmem %s8, 320
        %v5915 = vld [vmem:[%s5914] sm:$0xff]
        %v5916 = vld [vmem:[%s5914 + $0x8] sm:$0xff]
        %v5917 = vld [vmem:[%s5914 + $0x10] sm:$0xff]
        %v5918 = vld [vmem:[%s5914 + $0x18] sm:$0x1]
        %v5919 = vrot.slane %v5090, 2
        %v5920 = vsel %vm5098, %v5919, 0
        %v5923 = vsel %vm4864, %v5918, 0
        %5925 = vmatprep.subr.mxu0 0.0
        %5926 = vmatpush1.msra.mxu0 %v5915
        %5927 = vmatprep.subr.mxu0 0.0
        %5928 = vmatpush1.msra.mxu0 %v5916
        %5929 = vmatprep.subr.mxu0 0.0
        %5930 = vmatpush1.msra.mxu0 %v5917
        %5931 = vmatprep.subr.mxu0 0.0
        %5932 = vmatpush1.msra.mxu0 %v5923
        %5933 = vmatprep.subr.mxu0 0.0
        %5934 = vmatpush1.msra.mxu0 0.0
        %5935 = vmatprep.subr.mxu0 0.0
        %5936 = vmatpush1.msra.mxu0 0.0
        %5937 = vmatprep.subr.mxu0 0.0
        %5938 = vmatpush1.msra.mxu0 0.0
        %5939 = vmatprep.subr.mxu0 0.0
        %5940 = vmatpush1.msra.mxu0 0.0
        %5941 = vmatprep.subr.mxu0 0.0
        %5942 = vmatpush1.msra.mxu0 0.0
        %5943 = vmatprep.subr.mxu0 0.0
        %5944 = vmatpush1.msra.mxu0 0.0
        %5945 = vmatprep.subr.mxu0 0.0
        %5946 = vmatpush1.msra.mxu0 0.0
        %5947 = vmatprep.subr.mxu0 0.0
        %5948 = vmatpush1.msra.mxu0 0.0
        %5949 = vmatprep.subr.mxu0 0.0
        %5950 = vmatpush1.msra.mxu0 0.0
        %5951 = vmatprep.subr.mxu0 0.0
        %5952 = vmatpush1.msra.mxu0 0.0
        %5953 = vmatprep.subr.mxu0 0.0
        %5954 = vmatpush1.msra.mxu0 0.0
        %5955 = vmatprep.subr.mxu0 0.0
        %5956 = vmatpush1.msra.mxu0 0.0
        %5957 = vmatprep.subr.mxu0 0.0
        %5958 = vmatpush1.msra.mxu0 0.0
        %5959 = vmatprep.subr.mxu0 0.0
        %5960 = vmatpush1.msra.mxu0 0.0
        %5961 = vmatprep.subr.mxu0 0.0
        %5962 = vmatpush1.msra.mxu0 0.0
        %5963 = vmatprep.subr.mxu0 0.0
        %5964 = vmatpush1.msra.mxu0 0.0
        %5965 = vmatprep.subr.mxu0 0.0
        %5966 = vmatpush1.msra.mxu0 0.0
        %5967 = vmatprep.subr.mxu0 0.0
        %5968 = vmatpush1.msra.mxu0 0.0
        %5969 = vmatprep.subr.mxu0 0.0
        %5970 = vmatpush1.msra.mxu0 0.0
        %5971 = vmatprep.subr.mxu0 0.0
        %5972 = vmatpush1.msra.mxu0 0.0
        %5973 = vmatprep.subr.mxu0 0.0
        %5974 = vmatpush1.msra.mxu0 0.0
        %5975 = vmatprep.subr.mxu0 0.0
        %5976 = vmatpush1.msra.mxu0 0.0
        %5977 = vmatprep.subr.mxu0 0.0
        %5978 = vmatpush1.msra.mxu0 0.0
        %5979 = vmatprep.subr.mxu0 0.0
        %5980 = vmatpush1.msra.mxu0 0.0
        %5981 = vmatprep.subr.mxu0 0.0
        %5982 = vmatpush1.msra.mxu0 0.0
        %5983 = vmatprep.subr.mxu0 0.0
        %5984 = vmatpush1.msra.mxu0 0.0
        %5985 = vmatprep.subr.mxu0 0.0
        %5986 = vmatpush1.msra.mxu0 0.0
        %5987 = vmatprep.subr.mxu0 0.0
        %5988 = vmatpush1.msra.mxu0 0.0
        %5989 = vmatprep.mubr.f32.mxu0 0.0
        %5990 = vmatmul.mubr.f32.gmra.mrb[0].mxu0 %v5920
        %v5991 = vpop.f32.mrb[0].mxu0
        %v5992 = vadd.f32 0.0, %v5991
        %v5993 = vpop.f32.mrb[0].mxu0
        %5994 = vdwg.mxu0
        %v5995 = vadd.f32 %v5913, %v5992
        %s5996 = scalar_lea.vmem %s8, 352
        %v5997 = vld [vmem:[%s5996] sm:$0xff]
        %v5998 = vld [vmem:[%s5996 + $0x8] sm:$0xff]
        %v5999 = vld [vmem:[%s5996 + $0x10] sm:$0xff]
        %v6000 = vld [vmem:[%s5996 + $0x18] sm:$0x1]
        %v6001 = vrot.slane %v5090, 3
        %v6002 = vsel %vm5098, %v6001, 0
        %v6005 = vsel %vm4864, %v6000, 0
        %6007 = vmatprep.subr.mxu0 0.0
        %6008 = vmatpush1.msra.mxu0 %v5997
        %6009 = vmatprep.subr.mxu0 0.0
        %6010 = vmatpush1.msra.mxu0 %v5998
        %6011 = vmatprep.subr.mxu0 0.0
        %6012 = vmatpush1.msra.mxu0 %v5999
        %6013 = vmatprep.subr.mxu0 0.0
        %6014 = vmatpush1.msra.mxu0 %v6005
        %6015 = vmatprep.subr.mxu0 0.0
        %6016 = vmatpush1.msra.mxu0 0.0
        %6017 = vmatprep.subr.mxu0 0.0
        %6018 = vmatpush1.msra.mxu0 0.0
        %6019 = vmatprep.subr.mxu0 0.0
        %6020 = vmatpush1.msra.mxu0 0.0
        %6021 = vmatprep.subr.mxu0 0.0
        %6022 = vmatpush1.msra.mxu0 0.0
        %6023 = vmatprep.subr.mxu0 0.0
        %6024 = vmatpush1.msra.mxu0 0.0
        %6025 = vmatprep.subr.mxu0 0.0
        %6026 = vmatpush1.msra.mxu0 0.0
        %6027 = vmatprep.subr.mxu0 0.0
        %6028 = vmatpush1.msra.mxu0 0.0
        %6029 = vmatprep.subr.mxu0 0.0
        %6030 = vmatpush1.msra.mxu0 0.0
        %6031 = vmatprep.subr.mxu0 0.0
        %6032 = vmatpush1.msra.mxu0 0.0
        %6033 = vmatprep.subr.mxu0 0.0
        %6034 = vmatpush1.msra.mxu0 0.0
        %6035 = vmatprep.subr.mxu0 0.0
        %6036 = vmatpush1.msra.mxu0 0.0
        %6037 = vmatprep.subr.mxu0 0.0
        %6038 = vmatpush1.msra.mxu0 0.0
        %6039 = vmatprep.subr.mxu0 0.0
        %6040 = vmatpush1.msra.mxu0 0.0
        %6041 = vmatprep.subr.mxu0 0.0
        %6042 = vmatpush1.msra.mxu0 0.0
        %6043 = vmatprep.subr.mxu0 0.0
        %6044 = vmatpush1.msra.mxu0 0.0
        %6045 = vmatprep.subr.mxu0 0.0
        %6046 = vmatpush1.msra.mxu0 0.0
        %6047 = vmatprep.subr.mxu0 0.0
        %6048 = vmatpush1.msra.mxu0 0.0
        %6049 = vmatprep.subr.mxu0 0.0
        %6050 = vmatpush1.msra.mxu0 0.0
        %6051 = vmatprep.subr.mxu0 0.0
        %6052 = vmatpush1.msra.mxu0 0.0
        %6053 = vmatprep.subr.mxu0 0.0
        %6054 = vmatpush1.msra.mxu0 0.0
        %6055 = vmatprep.subr.mxu0 0.0
        %6056 = vmatpush1.msra.mxu0 0.0
        %6057 = vmatprep.subr.mxu0 0.0
        %6058 = vmatpush1.msra.mxu0 0.0
        %6059 = vmatprep.subr.mxu0 0.0
        %6060 = vmatpush1.msra.mxu0 0.0
        %6061 = vmatprep.subr.mxu0 0.0
        %6062 = vmatpush1.msra.mxu0 0.0
        %6063 = vmatprep.subr.mxu0 0.0
        %6064 = vmatpush1.msra.mxu0 0.0
        %6065 = vmatprep.subr.mxu0 0.0
        %6066 = vmatpush1.msra.mxu0 0.0
        %6067 = vmatprep.subr.mxu0 0.0
        %6068 = vmatpush1.msra.mxu0 0.0
        %6069 = vmatprep.subr.mxu0 0.0
        %6070 = vmatpush1.msra.mxu0 0.0
        %6071 = vmatprep.mubr.f32.mxu0 0.0
        %6072 = vmatmul.mubr.f32.gmra.mrb[0].mxu0 %v6002
        %v6073 = vpop.f32.mrb[0].mxu0
        %v6074 = vadd.f32 0.0, %v6073
        %v6075 = vpop.f32.mrb[0].mxu0
        %6076 = vdwg.mxu0
        %v6077 = vadd.f32 %v5995, %v6074
        %s6078 = scalar_lea.vmem %s8, 384
        %v6079 = vld [vmem:[%s6078] sm:$0xff]
        %v6080 = vld [vmem:[%s6078 + $0x8] sm:$0xff]
        %v6081 = vld [vmem:[%s6078 + $0x10] sm:$0xff]
        %v6082 = vld [vmem:[%s6078 + $0x18] sm:$0x1]
        %v6083 = vrot.slane %v5090, 4
        %v6084 = vsel %vm5098, %v6083, 0
        %v6087 = vsel %vm4864, %v6082, 0
        %6089 = vmatprep.subr.mxu0 0.0
        %6090 = vmatpush1.msra.mxu0 %v6079
        %6091 = vmatprep.subr.mxu0 0.0
        %6092 = vmatpush1.msra.mxu0 %v6080
        %6093 = vmatprep.subr.mxu0 0.0
        %6094 = vmatpush1.msra.mxu0 %v6081
        %6095 = vmatprep.subr.mxu0 0.0
        %6096 = vmatpush1.msra.mxu0 %v6087
        %6097 = vmatprep.subr.mxu0 0.0
        %6098 = vmatpush1.msra.mxu0 0.0
        %6099 = vmatprep.subr.mxu0 0.0
        %6100 = vmatpush1.msra.mxu0 0.0
        %6101 = vmatprep.subr.mxu0 0.0
        %6102 = vmatpush1.msra.mxu0 0.0
        %6103 = vmatprep.subr.mxu0 0.0
        %6104 = vmatpush1.msra.mxu0 0.0
        %6105 = vmatprep.subr.mxu0 0.0
        %6106 = vmatpush1.msra.mxu0 0.0
        %6107 = vmatprep.subr.mxu0 0.0
        %6108 = vmatpush1.msra.mxu0 0.0
        %6109 = vmatprep.subr.mxu0 0.0
        %6110 = vmatpush1.msra.mxu0 0.0
        %6111 = vmatprep.subr.mxu0 0.0
        %6112 = vmatpush1.msra.mxu0 0.0
        %6113 = vmatprep.subr.mxu0 0.0
        %6114 = vmatpush1.msra.mxu0 0.0
        %6115 = vmatprep.subr.mxu0 0.0
        %6116 = vmatpush1.msra.mxu0 0.0
        %6117 = vmatprep.subr.mxu0 0.0
        %6118 = vmatpush1.msra.mxu0 0.0
        %6119 = vmatprep.subr.mxu0 0.0
        %6120 = vmatpush1.msra.mxu0 0.0
        %6121 = vmatprep.subr.mxu0 0.0
        %6122 = vmatpush1.msra.mxu0 0.0
        %6123 = vmatprep.subr.mxu0 0.0
        %6124 = vmatpush1.msra.mxu0 0.0
        %6125 = vmatprep.subr.mxu0 0.0
        %6126 = vmatpush1.msra.mxu0 0.0
        %6127 = vmatprep.subr.mxu0 0.0
        %6128 = vmatpush1.msra.mxu0 0.0
        %6129 = vmatprep.subr.mxu0 0.0
        %6130 = vmatpush1.msra.mxu0 0.0
        %6131 = vmatprep.subr.mxu0 0.0
        %6132 = vmatpush1.msra.mxu0 0.0
        %6133 = vmatprep.subr.mxu0 0.0
        %6134 = vmatpush1.msra.mxu0 0.0
        %6135 = vmatprep.subr.mxu0 0.0
        %6136 = vmatpush1.msra.mxu0 0.0
        %6137 = vmatprep.subr.mxu0 0.0
        %6138 = vmatpush1.msra.mxu0 0.0
        %6139 = vmatprep.subr.mxu0 0.0
        %6140 = vmatpush1.msra.mxu0 0.0
        %6141 = vmatprep.subr.mxu0 0.0
        %6142 = vmatpush1.msra.mxu0 0.0
        %6143 = vmatprep.subr.mxu0 0.0
        %6144 = vmatpush1.msra.mxu0 0.0
        %6145 = vmatprep.subr.mxu0 0.0
        %6146 = vmatpush1.msra.mxu0 0.0
        %6147 = vmatprep.subr.mxu0 0.0
        %6148 = vmatpush1.msra.mxu0 0.0
        %6149 = vmatprep.subr.mxu0 0.0
        %6150 = vmatpush1.msra.mxu0 0.0
        %6151 = vmatprep.subr.mxu0 0.0
        %6152 = vmatpush1.msra.mxu0 0.0
        %6153 = vmatprep.mubr.f32.mxu0 0.0
        %6154 = vmatmul.mubr.f32.gmra.mrb[0].mxu0 %v6084
        %v6155 = vpop.f32.mrb[0].mxu0
        %v6156 = vadd.f32 0.0, %v6155
        %v6157 = vpop.f32.mrb[0].mxu0
        %6158 = vdwg.mxu0
        %v6159 = vadd.f32 %v6077, %v6156
        %s6160 = scalar_lea.vmem %s8, 416
        %v6161 = vld [vmem:[%s6160] sm:$0xff]
        %v6162 = vld [vmem:[%s6160 + $0x8] sm:$0xff]
        %v6163 = vld [vmem:[%s6160 + $0x10] sm:$0xff]
        %v6164 = vld [vmem:[%s6160 + $0x18] sm:$0x1]
        %v6165 = vrot.slane %v5090, 5
        %v6166 = vsel %vm5098, %v6165, 0
        %v6169 = vsel %vm4864, %v6164, 0
        %6171 = vmatprep.subr.mxu0 0.0
        %6172 = vmatpush1.msra.mxu0 %v6161
        %6173 = vmatprep.subr.mxu0 0.0
        %6174 = vmatpush1.msra.mxu0 %v6162
        %6175 = vmatprep.subr.mxu0 0.0
        %6176 = vmatpush1.msra.mxu0 %v6163
        %6177 = vmatprep.subr.mxu0 0.0
        %6178 = vmatpush1.msra.mxu0 %v6169
        %6179 = vmatprep.subr.mxu0 0.0
        %6180 = vmatpush1.msra.mxu0 0.0
        %6181 = vmatprep.subr.mxu0 0.0
        %6182 = vmatpush1.msra.mxu0 0.0
        %6183 = vmatprep.subr.mxu0 0.0
        %6184 = vmatpush1.msra.mxu0 0.0
        %6185 = vmatprep.subr.mxu0 0.0
        %6186 = vmatpush1.msra.mxu0 0.0
        %6187 = vmatprep.subr.mxu0 0.0
        %6188 = vmatpush1.msra.mxu0 0.0
        %6189 = vmatprep.subr.mxu0 0.0
        %6190 = vmatpush1.msra.mxu0 0.0
        %6191 = vmatprep.subr.mxu0 0.0
        %6192 = vmatpush1.msra.mxu0 0.0
        %6193 = vmatprep.subr.mxu0 0.0
        %6194 = vmatpush1.msra.mxu0 0.0
        %6195 = vmatprep.subr.mxu0 0.0
        %6196 = vmatpush1.msra.mxu0 0.0
        %6197 = vmatprep.subr.mxu0 0.0
        %6198 = vmatpush1.msra.mxu0 0.0
        %6199 = vmatprep.subr.mxu0 0.0
        %6200 = vmatpush1.msra.mxu0 0.0
        %6201 = vmatprep.subr.mxu0 0.0
        %6202 = vmatpush1.msra.mxu0 0.0
        %6203 = vmatprep.subr.mxu0 0.0
        %6204 = vmatpush1.msra.mxu0 0.0
        %6205 = vmatprep.subr.mxu0 0.0
        %6206 = vmatpush1.msra.mxu0 0.0
        %6207 = vmatprep.subr.mxu0 0.0
        %6208 = vmatpush1.msra.mxu0 0.0
        %6209 = vmatprep.subr.mxu0 0.0
        %6210 = vmatpush1.msra.mxu0 0.0
        %6211 = vmatprep.subr.mxu0 0.0
        %6212 = vmatpush1.msra.mxu0 0.0
        %6213 = vmatprep.subr.mxu0 0.0
        %6214 = vmatpush1.msra.mxu0 0.0
        %6215 = vmatprep.subr.mxu0 0.0
        %6216 = vmatpush1.msra.mxu0 0.0
        %6217 = vmatprep.subr.mxu0 0.0
        %6218 = vmatpush1.msra.mxu0 0.0
        %6219 = vmatprep.subr.mxu0 0.0
        %6220 = vmatpush1.msra.mxu0 0.0
        %6221 = vmatprep.subr.mxu0 0.0
        %6222 = vmatpush1.msra.mxu0 0.0
        %6223 = vmatprep.subr.mxu0 0.0
        %6224 = vmatpush1.msra.mxu0 0.0
        %6225 = vmatprep.subr.mxu0 0.0
        %6226 = vmatpush1.msra.mxu0 0.0
        %6227 = vmatprep.subr.mxu0 0.0
        %6228 = vmatpush1.msra.mxu0 0.0
        %6229 = vmatprep.subr.mxu0 0.0
        %6230 = vmatpush1.msra.mxu0 0.0
        %6231 = vmatprep.subr.mxu0 0.0
        %6232 = vmatpush1.msra.mxu0 0.0
        %6233 = vmatprep.subr.mxu0 0.0
        %6234 = vmatpush1.msra.mxu0 0.0
        %6235 = vmatprep.mubr.f32.mxu0 0.0
        %6236 = vmatmul.mubr.f32.gmra.mrb[0].mxu0 %v6166
        %v6237 = vpop.f32.mrb[0].mxu0
        %v6238 = vadd.f32 0.0, %v6237
        %v6239 = vpop.f32.mrb[0].mxu0
        %6240 = vdwg.mxu0
        %v6241 = vadd.f32 %v6159, %v6238
        %s6242 = scalar_lea.vmem %s8, 448
        %v6243 = vld [vmem:[%s6242] sm:$0xff]
        %v6244 = vld [vmem:[%s6242 + $0x8] sm:$0xff]
        %v6245 = vld [vmem:[%s6242 + $0x10] sm:$0xff]
        %v6246 = vld [vmem:[%s6242 + $0x18] sm:$0x1]
        %v6247 = vrot.slane %v5090, 6
        %v6248 = vsel %vm5098, %v6247, 0
        %v6251 = vsel %vm4864, %v6246, 0
        %6253 = vmatprep.subr.mxu0 0.0
        %6254 = vmatpush1.msra.mxu0 %v6243
        %6255 = vmatprep.subr.mxu0 0.0
        %6256 = vmatpush1.msra.mxu0 %v6244
        %6257 = vmatprep.subr.mxu0 0.0
        %6258 = vmatpush1.msra.mxu0 %v6245
        %6259 = vmatprep.subr.mxu0 0.0
        %6260 = vmatpush1.msra.mxu0 %v6251
        %6261 = vmatprep.subr.mxu0 0.0
        %6262 = vmatpush1.msra.mxu0 0.0
        %6263 = vmatprep.subr.mxu0 0.0
        %6264 = vmatpush1.msra.mxu0 0.0
        %6265 = vmatprep.subr.mxu0 0.0
        %6266 = vmatpush1.msra.mxu0 0.0
        %6267 = vmatprep.subr.mxu0 0.0
        %6268 = vmatpush1.msra.mxu0 0.0
        %6269 = vmatprep.subr.mxu0 0.0
        %6270 = vmatpush1.msra.mxu0 0.0
        %6271 = vmatprep.subr.mxu0 0.0
        %6272 = vmatpush1.msra.mxu0 0.0
        %6273 = vmatprep.subr.mxu0 0.0
        %6274 = vmatpush1.msra.mxu0 0.0
        %6275 = vmatprep.subr.mxu0 0.0
        %6276 = vmatpush1.msra.mxu0 0.0
        %6277 = vmatprep.subr.mxu0 0.0
        %6278 = vmatpush1.msra.mxu0 0.0
        %6279 = vmatprep.subr.mxu0 0.0
        %6280 = vmatpush1.msra.mxu0 0.0
        %6281 = vmatprep.subr.mxu0 0.0
        %6282 = vmatpush1.msra.mxu0 0.0
        %6283 = vmatprep.subr.mxu0 0.0
        %6284 = vmatpush1.msra.mxu0 0.0
        %6285 = vmatprep.subr.mxu0 0.0
        %6286 = vmatpush1.msra.mxu0 0.0
        %6287 = vmatprep.subr.mxu0 0.0
        %6288 = vmatpush1.msra.mxu0 0.0
        %6289 = vmatprep.subr.mxu0 0.0
        %6290 = vmatpush1.msra.mxu0 0.0
        %6291 = vmatprep.subr.mxu0 0.0
        %6292 = vmatpush1.msra.mxu0 0.0
        %6293 = vmatprep.subr.mxu0 0.0
        %6294 = vmatpush1.msra.mxu0 0.0
        %6295 = vmatprep.subr.mxu0 0.0
        %6296 = vmatpush1.msra.mxu0 0.0
        %6297 = vmatprep.subr.mxu0 0.0
        %6298 = vmatpush1.msra.mxu0 0.0
        %6299 = vmatprep.subr.mxu0 0.0
        %6300 = vmatpush1.msra.mxu0 0.0
        %6301 = vmatprep.subr.mxu0 0.0
        %6302 = vmatpush1.msra.mxu0 0.0
        %6303 = vmatprep.subr.mxu0 0.0
        %6304 = vmatpush1.msra.mxu0 0.0
        %6305 = vmatprep.subr.mxu0 0.0
        %6306 = vmatpush1.msra.mxu0 0.0
        %6307 = vmatprep.subr.mxu0 0.0
        %6308 = vmatpush1.msra.mxu0 0.0
        %6309 = vmatprep.subr.mxu0 0.0
        %6310 = vmatpush1.msra.mxu0 0.0
        %6311 = vmatprep.subr.mxu0 0.0
        %6312 = vmatpush1.msra.mxu0 0.0
        %6313 = vmatprep.subr.mxu0 0.0
        %6314 = vmatpush1.msra.mxu0 0.0
        %6315 = vmatprep.subr.mxu0 0.0
        %6316 = vmatpush1.msra.mxu0 0.0
        %6317 = vmatprep.mubr.f32.mxu0 0.0
        %6318 = vmatmul.mubr.f32.gmra.mrb[0].mxu0 %v6248
        %v6319 = vpop.f32.mrb[0].mxu0
        %v6320 = vadd.f32 0.0, %v6319
        %v6321 = vpop.f32.mrb[0].mxu0
        %6322 = vdwg.mxu0
        %v6323 = vadd.f32 %v6241, %v6320
        %s6324 = scalar_lea.vmem %s8, 480
        %v6325 = vld [vmem:[%s6324] sm:$0xff]
        %v6326 = vld [vmem:[%s6324 + $0x8] sm:$0xff]
        %v6327 = vld [vmem:[%s6324 + $0x10] sm:$0xff]
        %v6328 = vld [vmem:[%s6324 + $0x18] sm:$0x1]
        %v6329 = vrot.slane %v5090, 7
        %v6330 = vsel %vm5098, %v6329, 0
        %v6333 = vsel %vm4864, %v6328, 0
        %6335 = vmatprep.subr.mxu0 0.0
        %6336 = vmatpush1.msra.mxu0 %v6325
        %6337 = vmatprep.subr.mxu0 0.0
        %6338 = vmatpush1.msra.mxu0 %v6326
        %6339 = vmatprep.subr.mxu0 0.0
        %6340 = vmatpush1.msra.mxu0 %v6327
        %6341 = vmatprep.subr.mxu0 0.0
        %6342 = vmatpush1.msra.mxu0 %v6333
        %6343 = vmatprep.subr.mxu0 0.0
        %6344 = vmatpush1.msra.mxu0 0.0
        %6345 = vmatprep.subr.mxu0 0.0
        %6346 = vmatpush1.msra.mxu0 0.0
        %6347 = vmatprep.subr.mxu0 0.0
        %6348 = vmatpush1.msra.mxu0 0.0
        %6349 = vmatprep.subr.mxu0 0.0
        %6350 = vmatpush1.msra.mxu0 0.0
        %6351 = vmatprep.subr.mxu0 0.0
        %6352 = vmatpush1.msra.mxu0 0.0
        %6353 = vmatprep.subr.mxu0 0.0
        %6354 = vmatpush1.msra.mxu0 0.0
        %6355 = vmatprep.subr.mxu0 0.0
        %6356 = vmatpush1.msra.mxu0 0.0
        %6357 = vmatprep.subr.mxu0 0.0
        %6358 = vmatpush1.msra.mxu0 0.0
        %6359 = vmatprep.subr.mxu0 0.0
        %6360 = vmatpush1.msra.mxu0 0.0
        %6361 = vmatprep.subr.mxu0 0.0
        %6362 = vmatpush1.msra.mxu0 0.0
        %6363 = vmatprep.subr.mxu0 0.0
        %6364 = vmatpush1.msra.mxu0 0.0
        %6365 = vmatprep.subr.mxu0 0.0
        %6366 = vmatpush1.msra.mxu0 0.0
        %6367 = vmatprep.subr.mxu0 0.0
        %6368 = vmatpush1.msra.mxu0 0.0
        %6369 = vmatprep.subr.mxu0 0.0
        %6370 = vmatpush1.msra.mxu0 0.0
        %6371 = vmatprep.subr.mxu0 0.0
        %6372 = vmatpush1.msra.mxu0 0.0
        %6373 = vmatprep.subr.mxu0 0.0
        %6374 = vmatpush1.msra.mxu0 0.0
        %6375 = vmatprep.subr.mxu0 0.0
        %6376 = vmatpush1.msra.mxu0 0.0
        %6377 = vmatprep.subr.mxu0 0.0
        %6378 = vmatpush1.msra.mxu0 0.0
        %6379 = vmatprep.subr.mxu0 0.0
        %6380 = vmatpush1.msra.mxu0 0.0
        %6381 = vmatprep.subr.mxu0 0.0
        %6382 = vmatpush1.msra.mxu0 0.0
        %6383 = vmatprep.subr.mxu0 0.0
        %6384 = vmatpush1.msra.mxu0 0.0
        %6385 = vmatprep.subr.mxu0 0.0
        %6386 = vmatpush1.msra.mxu0 0.0
        %6387 = vmatprep.subr.mxu0 0.0
        %6388 = vmatpush1.msra.mxu0 0.0
        %6389 = vmatprep.subr.mxu0 0.0
        %6390 = vmatpush1.msra.mxu0 0.0
        %6391 = vmatprep.subr.mxu0 0.0
        %6392 = vmatpush1.msra.mxu0 0.0
        %6393 = vmatprep.subr.mxu0 0.0
        %6394 = vmatpush1.msra.mxu0 0.0
        %6395 = vmatprep.subr.mxu0 0.0
        %6396 = vmatpush1.msra.mxu0 0.0
        %6397 = vmatprep.subr.mxu0 0.0
        %6398 = vmatpush1.msra.mxu0 0.0
        %6399 = vmatprep.mubr.f32.mxu0 0.0
        %6400 = vmatmul.mubr.f32.gmra.mrb[0].mxu0 %v6330
        %v6401 = vpop.f32.mrb[0].mxu0
        %v6402 = vadd.f32 0.0, %v6401
        %v6403 = vpop.f32.mrb[0].mxu0
        %6404 = vdwg.mxu0
        %v6405 = vadd.f32 %v6323, %v6402
        %v6406 = vmax.f32 %v6405, 0.0
        %v6407 = vld [vmem:[%s10] sm:$0xff]
        %v6408 = vld [vmem:[%s10 + $0x8] sm:$0xff]
        %v6409 = vld [vmem:[%s10 + $0x10] sm:$0xff]
        %v6410 = vld [vmem:[%s10 + $0x18] sm:$0xff]
        %v6411 = vld [vmem:[%s10 + $0x20] sm:$0xff]
        %v6412 = vld [vmem:[%s10 + $0x28] sm:$0xff]
        %v6413 = vld [vmem:[%s10 + $0x30] sm:$0xff]
        %v6414 = vld [vmem:[%s10 + $0x38] sm:$0xff]
        %v6415 = vld [vmem:[%s10 + $0x40] sm:$0xff]
        %v6416 = vld [vmem:[%s10 + $0x48] sm:$0xff]
        %v6417 = vld [vmem:[%s10 + $0x50] sm:$0xff]
        %v6418 = vld [vmem:[%s10 + $0x58] sm:$0xff]
        %v6419 = vld [vmem:[%s10 + $0x60] sm:$0xff]
        %v6420 = vld [vmem:[%s10 + $0x68] sm:$0xff]
        %v6421 = vld [vmem:[%s10 + $0x70] sm:$0xff]
        %v6422 = vld [vmem:[%s10 + $0x78] sm:$0xff]
        %v6423 = vld [vmem:[%s11] sm:$0x1]
        %6424 = vmatprep.subr.mxu0 0.0
        %6425 = vmatpush1.msra.mxu0 %v6407
        %6426 = vmatprep.subr.mxu0 0.0
        %6427 = vmatpush1.msra.mxu0 %v6408
        %6428 = vmatprep.subr.mxu0 0.0
        %6429 = vmatpush1.msra.mxu0 %v6409
        %6430 = vmatprep.subr.mxu0 0.0
        %6431 = vmatpush1.msra.mxu0 %v6410
        %6432 = vmatprep.subr.mxu0 0.0
        %6433 = vmatpush1.msra.mxu0 %v6411
        %6434 = vmatprep.subr.mxu0 0.0
        %6435 = vmatpush1.msra.mxu0 %v6412
        %6436 = vmatprep.subr.mxu0 0.0
        %6437 = vmatpush1.msra.mxu0 %v6413
        %6438 = vmatprep.subr.mxu0 0.0
        %6439 = vmatpush1.msra.mxu0 %v6414
        %6440 = vmatprep.subr.mxu0 0.0
        %6441 = vmatpush1.msra.mxu0 %v6415
        %6442 = vmatprep.subr.mxu0 0.0
        %6443 = vmatpush1.msra.mxu0 %v6416
        %6444 = vmatprep.subr.mxu0 0.0
        %6445 = vmatpush1.msra.mxu0 %v6417
        %6446 = vmatprep.subr.mxu0 0.0
        %6447 = vmatpush1.msra.mxu0 %v6418
        %6448 = vmatprep.subr.mxu0 0.0
        %6449 = vmatpush1.msra.mxu0 %v6419
        %6450 = vmatprep.subr.mxu0 0.0
        %6451 = vmatpush1.msra.mxu0 %v6420
        %6452 = vmatprep.subr.mxu0 0.0
        %6453 = vmatpush1.msra.mxu0 %v6421
        %6454 = vmatprep.subr.mxu0 0.0
        %6455 = vmatpush1.msra.mxu0 %v6422
        %6456 = vmatprep.subr.mxu0 0.0
        %6457 = vmatpush1.msra.mxu0 0.0
        %6458 = vmatprep.subr.mxu0 0.0
        %6459 = vmatpush1.msra.mxu0 0.0
        %6460 = vmatprep.subr.mxu0 0.0
        %6461 = vmatpush1.msra.mxu0 0.0
        %6462 = vmatprep.subr.mxu0 0.0
        %6463 = vmatpush1.msra.mxu0 0.0
        %6464 = vmatprep.subr.mxu0 0.0
        %6465 = vmatpush1.msra.mxu0 0.0
        %6466 = vmatprep.subr.mxu0 0.0
        %6467 = vmatpush1.msra.mxu0 0.0
        %6468 = vmatprep.subr.mxu0 0.0
        %6469 = vmatpush1.msra.mxu0 0.0
        %6470 = vmatprep.subr.mxu0 0.0
        %6471 = vmatpush1.msra.mxu0 0.0
        %6472 = vmatprep.subr.mxu0 0.0
        %6473 = vmatpush1.msra.mxu0 0.0
        %6474 = vmatprep.subr.mxu0 0.0
        %6475 = vmatpush1.msra.mxu0 0.0
        %6476 = vmatprep.subr.mxu0 0.0
        %6477 = vmatpush1.msra.mxu0 0.0
        %6478 = vmatprep.subr.mxu0 0.0
        %6479 = vmatpush1.msra.mxu0 0.0
        %6480 = vmatprep.subr.mxu0 0.0
        %6481 = vmatpush1.msra.mxu0 0.0
        %6482 = vmatprep.subr.mxu0 0.0
        %6483 = vmatpush1.msra.mxu0 0.0
        %6484 = vmatprep.subr.mxu0 0.0
        %6485 = vmatpush1.msra.mxu0 0.0
        %6486 = vmatprep.subr.mxu0 0.0
        %6487 = vmatpush1.msra.mxu0 0.0
        %6488 = vmatprep.mubr.f32.mxu0 0.0
        %6489 = vmatmul.mubr.f32.gmra.mrb[0].mxu0 %v6406
        %v6490 = vpop.f32.mrb[0].mxu0
        %v6491 = vadd.f32 %v6423, %v6490
        %v6492 = vpop.f32.mrb[0].mxu0
        %6493 = vdwg.mxu0
        %v6494 = vmax.f32 %v6491, 0.0
        %v6495 = vld [vmem:[%s12] sm:$0xff]
        %v6496 = vld [vmem:[%s12 + $0x8] sm:$0xff]
        %v6497 = vld [vmem:[%s12 + $0x10] sm:$0xff]
        %v6498 = vld [vmem:[%s12 + $0x18] sm:$0xff]
        %v6499 = vld [vmem:[%s12 + $0x20] sm:$0xff]
        %v6500 = vld [vmem:[%s12 + $0x28] sm:$0xff]
        %v6501 = vld [vmem:[%s12 + $0x30] sm:$0xff]
        %v6502 = vld [vmem:[%s12 + $0x38] sm:$0xff]
        %v6503 = vld [vmem:[%s12 + $0x40] sm:$0xff]
        %v6504 = vld [vmem:[%s12 + $0x48] sm:$0xff]
        %v6505 = vld [vmem:[%s12 + $0x50] sm:$0xff]
        %v6506 = vld [vmem:[%s12 + $0x58] sm:$0xff]
        %v6507 = vld [vmem:[%s12 + $0x60] sm:$0xff]
        %v6508 = vld [vmem:[%s12 + $0x68] sm:$0xff]
        %v6509 = vld [vmem:[%s12 + $0x70] sm:$0xff]
        %v6510 = vld [vmem:[%s12 + $0x78] sm:$0xff]
        %v6511 = vld [vmem:[%s13] sm:$0x1]
        %6512 = vmatprep.subr.mxu0 0.0
        %6513 = vmatpush1.msra.mxu0 %v6495
        %6514 = vmatprep.subr.mxu0 0.0
        %6515 = vmatpush1.msra.mxu0 %v6496
        %6516 = vmatprep.subr.mxu0 0.0
        %6517 = vmatpush1.msra.mxu0 %v6497
        %6518 = vmatprep.subr.mxu0 0.0
        %6519 = vmatpush1.msra.mxu0 %v6498
        %6520 = vmatprep.subr.mxu0 0.0
        %6521 = vmatpush1.msra.mxu0 %v6499
        %6522 = vmatprep.subr.mxu0 0.0
        %6523 = vmatpush1.msra.mxu0 %v6500
        %6524 = vmatprep.subr.mxu0 0.0
        %6525 = vmatpush1.msra.mxu0 %v6501
        %6526 = vmatprep.subr.mxu0 0.0
        %6527 = vmatpush1.msra.mxu0 %v6502
        %6528 = vmatprep.subr.mxu0 0.0
        %6529 = vmatpush1.msra.mxu0 %v6503
        %6530 = vmatprep.subr.mxu0 0.0
        %6531 = vmatpush1.msra.mxu0 %v6504
        %6532 = vmatprep.subr.mxu0 0.0
        %6533 = vmatpush1.msra.mxu0 %v6505
        %6534 = vmatprep.subr.mxu0 0.0
        %6535 = vmatpush1.msra.mxu0 %v6506
        %6536 = vmatprep.subr.mxu0 0.0
        %6537 = vmatpush1.msra.mxu0 %v6507
        %6538 = vmatprep.subr.mxu0 0.0
        %6539 = vmatpush1.msra.mxu0 %v6508
        %6540 = vmatprep.subr.mxu0 0.0
        %6541 = vmatpush1.msra.mxu0 %v6509
        %6542 = vmatprep.subr.mxu0 0.0
        %6543 = vmatpush1.msra.mxu0 %v6510
        %6544 = vmatprep.subr.mxu0 0.0
        %6545 = vmatpush1.msra.mxu0 0.0
        %6546 = vmatprep.subr.mxu0 0.0
        %6547 = vmatpush1.msra.mxu0 0.0
        %6548 = vmatprep.subr.mxu0 0.0
        %6549 = vmatpush1.msra.mxu0 0.0
        %6550 = vmatprep.subr.mxu0 0.0
        %6551 = vmatpush1.msra.mxu0 0.0
        %6552 = vmatprep.subr.mxu0 0.0
        %6553 = vmatpush1.msra.mxu0 0.0
        %6554 = vmatprep.subr.mxu0 0.0
        %6555 = vmatpush1.msra.mxu0 0.0
        %6556 = vmatprep.subr.mxu0 0.0
        %6557 = vmatpush1.msra.mxu0 0.0
        %6558 = vmatprep.subr.mxu0 0.0
        %6559 = vmatpush1.msra.mxu0 0.0
        %6560 = vmatprep.subr.mxu0 0.0
        %6561 = vmatpush1.msra.mxu0 0.0
        %6562 = vmatprep.subr.mxu0 0.0
        %6563 = vmatpush1.msra.mxu0 0.0
        %6564 = vmatprep.subr.mxu0 0.0
        %6565 = vmatpush1.msra.mxu0 0.0
        %6566 = vmatprep.subr.mxu0 0.0
        %6567 = vmatpush1.msra.mxu0 0.0
        %6568 = vmatprep.subr.mxu0 0.0
        %6569 = vmatpush1.msra.mxu0 0.0
        %6570 = vmatprep.subr.mxu0 0.0
        %6571 = vmatpush1.msra.mxu0 0.0
        %6572 = vmatprep.subr.mxu0 0.0
        %6573 = vmatpush1.msra.mxu0 0.0
        %6574 = vmatprep.subr.mxu0 0.0
        %6575 = vmatpush1.msra.mxu0 0.0
        %6576 = vmatprep.mubr.f32.mxu0 0.0
        %6577 = vmatmul.mubr.f32.gmra.mrb[0].mxu0 %v6494
        %v6578 = vpop.f32.mrb[0].mxu0
        %v6579 = vadd.f32 %v6511, %v6578
        %v6580 = vpop.f32.mrb[0].mxu0
        %6581 = vdwg.mxu0
        %v6582 = vmax.f32 %v6579, 0.0
        %v6583 = vld [vmem:[%s14] sm:$0xff]
        %v6584 = vld [vmem:[%s14 + $0x8] sm:$0xff]
        %v6585 = vld [vmem:[%s14 + $0x10] sm:$0xff]
        %v6586 = vld [vmem:[%s14 + $0x18] sm:$0xff]
        %v6587 = vld [vmem:[%s14 + $0x20] sm:$0xff]
        %v6588 = vld [vmem:[%s14 + $0x28] sm:$0xff]
        %v6589 = vld [vmem:[%s14 + $0x30] sm:$0xff]
        %v6590 = vld [vmem:[%s14 + $0x38] sm:$0xff]
        %v6591 = vld [vmem:[%s14 + $0x40] sm:$0xff]
        %v6592 = vld [vmem:[%s14 + $0x48] sm:$0xff]
        %v6593 = vld [vmem:[%s14 + $0x50] sm:$0xff]
        %v6594 = vld [vmem:[%s14 + $0x58] sm:$0xff]
        %v6595 = vld [vmem:[%s14 + $0x60] sm:$0xff]
        %v6596 = vld [vmem:[%s14 + $0x68] sm:$0xff]
        %v6597 = vld [vmem:[%s14 + $0x70] sm:$0xff]
        %v6598 = vld [vmem:[%s14 + $0x78] sm:$0xff]
        %v6599 = vld [vmem:[%s15] sm:$0x1]
        %6600 = vmatprep.subr.mxu0 0.0
        %6601 = vmatpush1.msra.mxu0 %v6583
        %6602 = vmatprep.subr.mxu0 0.0
        %6603 = vmatpush1.msra.mxu0 %v6584
        %6604 = vmatprep.subr.mxu0 0.0
        %6605 = vmatpush1.msra.mxu0 %v6585
        %6606 = vmatprep.subr.mxu0 0.0
        %6607 = vmatpush1.msra.mxu0 %v6586
        %6608 = vmatprep.subr.mxu0 0.0
        %6609 = vmatpush1.msra.mxu0 %v6587
        %6610 = vmatprep.subr.mxu0 0.0
        %6611 = vmatpush1.msra.mxu0 %v6588
        %6612 = vmatprep.subr.mxu0 0.0
        %6613 = vmatpush1.msra.mxu0 %v6589
        %6614 = vmatprep.subr.mxu0 0.0
        %6615 = vmatpush1.msra.mxu0 %v6590
        %6616 = vmatprep.subr.mxu0 0.0
        %6617 = vmatpush1.msra.mxu0 %v6591
        %6618 = vmatprep.subr.mxu0 0.0
        %6619 = vmatpush1.msra.mxu0 %v6592
        %6620 = vmatprep.subr.mxu0 0.0
        %6621 = vmatpush1.msra.mxu0 %v6593
        %6622 = vmatprep.subr.mxu0 0.0
        %6623 = vmatpush1.msra.mxu0 %v6594
        %6624 = vmatprep.subr.mxu0 0.0
        %6625 = vmatpush1.msra.mxu0 %v6595
        %6626 = vmatprep.subr.mxu0 0.0
        %6627 = vmatpush1.msra.mxu0 %v6596
        %6628 = vmatprep.subr.mxu0 0.0
        %6629 = vmatpush1.msra.mxu0 %v6597
        %6630 = vmatprep.subr.mxu0 0.0
        %6631 = vmatpush1.msra.mxu0 %v6598
        %6632 = vmatprep.subr.mxu0 0.0
        %6633 = vmatpush1.msra.mxu0 0.0
        %6634 = vmatprep.subr.mxu0 0.0
        %6635 = vmatpush1.msra.mxu0 0.0
        %6636 = vmatprep.subr.mxu0 0.0
        %6637 = vmatpush1.msra.mxu0 0.0
        %6638 = vmatprep.subr.mxu0 0.0
        %6639 = vmatpush1.msra.mxu0 0.0
        %6640 = vmatprep.subr.mxu0 0.0
        %6641 = vmatpush1.msra.mxu0 0.0
        %6642 = vmatprep.subr.mxu0 0.0
        %6643 = vmatpush1.msra.mxu0 0.0
        %6644 = vmatprep.subr.mxu0 0.0
        %6645 = vmatpush1.msra.mxu0 0.0
        %6646 = vmatprep.subr.mxu0 0.0
        %6647 = vmatpush1.msra.mxu0 0.0
        %6648 = vmatprep.subr.mxu0 0.0
        %6649 = vmatpush1.msra.mxu0 0.0
        %6650 = vmatprep.subr.mxu0 0.0
        %6651 = vmatpush1.msra.mxu0 0.0
        %6652 = vmatprep.subr.mxu0 0.0
        %6653 = vmatpush1.msra.mxu0 0.0
        %6654 = vmatprep.subr.mxu0 0.0
        %6655 = vmatpush1.msra.mxu0 0.0
        %6656 = vmatprep.subr.mxu0 0.0
        %6657 = vmatpush1.msra.mxu0 0.0
        %6658 = vmatprep.subr.mxu0 0.0
        %6659 = vmatpush1.msra.mxu0 0.0
        %6660 = vmatprep.subr.mxu0 0.0
        %6661 = vmatpush1.msra.mxu0 0.0
        %6662 = vmatprep.subr.mxu0 0.0
        %6663 = vmatpush1.msra.mxu0 0.0
        %6664 = vmatprep.mubr.f32.mxu0 0.0
        %6665 = vmatmul.mubr.f32.gmra.mrb[0].mxu0 %v6582
        %v6666 = vpop.f32.mrb[0].mxu0
        %v6667 = vadd.f32 %v6599, %v6666
        %v6668 = vpop.f32.mrb[0].mxu0
        %6669 = vdwg.mxu0
        %6670 = vst [vmem:[%s513] sm:$0x1] %v6667
        %s6671 = sand.u32 %s379, 1
        %s6672 = scalar_lea.sflag [#allocation8], %s6671
        %s6673 = sand.u32 %s379, 1
        %s6674 = scalar_lea.vmem [#allocation7], %s6673
        // Predicated region
        $region85: #{lenet5_forward.1} parent=83 // pred_check
          %p6675 = pneg %p389
        $region86: #{lenet5_forward.1} parent=83 // pred_check_branch
          %6677 = sbr.rel (%p6675) target = $region88
        $region87: #{lenet5_forward.1} parent=83 // pred_region
          %s6679 = ssub.s32 16, 16
          %6680 = vsyncadd %s6672, %s6679
          %s6681 = smul.addr %s30, 16
          %s6682 = scalar_lea.hbm %s16, %s6681
          %s6684 = sshll.u32 %s6674, 4
          %s6685 = int_to_ptr.vmem [resolvable:$true] %s6684
          %6687 = dma.vmem_to_hbm [thread:$0]  %s6685, 16, %s6682, %s6672
        $region88: #{lenet5_forward.1} parent=83 // pred_fallthru
          _
      $region84: #{lenet5_forward.1} parent=5 // pred_fallthru
        _
      %p6688 = scmp.le.s32.totalorder 2, %s25
      // Predicated region
      $region89: #{lenet5_forward.1} parent=5 // pred_check
        %p6689 = pneg %p6688
      $region90: #{lenet5_forward.1} parent=5 // pred_check_branch
        %6691 = sbr.rel (%p6689) target = $region92
      $region91: #{lenet5_forward.1} parent=5 // pred_region
        %s6692 = ssub.s32 %s25, 2
        // Predicated region
        $region93: #{lenet5_forward.1} parent=91 // pred_check
          %p6693 = pneg %p395
        $region94: #{lenet5_forward.1} parent=91 // pred_check_branch
          %6695 = sbr.rel (%p6693) target = $region96
        $region95: #{lenet5_forward.1} parent=91 // pred_region
          %s6696 = sand.u32 %s380, 1
          %s6697 = scalar_lea.sflag [#allocation8], %s6696
          %s6698 = sand.u32 %s380, 1
          %s6699 = scalar_lea.vmem [#allocation7], %s6698
          %6700 = dma.done %s6697, 16
        $region96: #{lenet5_forward.1} parent=91 // pred_fallthru
          _
      $region92: #{lenet5_forward.1} parent=5 // pred_fallthru
        _
    $region6: #{lenet5_forward.1} parent=1 // loop_footer
      %s29 = sadd.s32 1, %s25
    $region7: #{lenet5_forward.1} parent=1 // loop_footer_branch
      %24 = sbr.rel target = $region3
    $region8: #{lenet5_forward.1} parent=1 // loop_exit
      _
    %6701 = vsyncpa [#allocation8], 1
    %s6702 = scalar_lea.sflag [#allocation8], 1
    %6703 = vsyncpa %s6702, 1

</llo_original>
